<compile_context>
chip_gen: v7x
topology: tpu7x:2x2x1
jax: 0.10.0
libtpu: 0.0.40
codegen_flags: <defaults>
</compile_context>

<pallas_src>
import functools
import math

import jax
import jax.numpy as jnp
from jax import lax
from jax.experimental import pallas as pl
from jax.experimental.pallas import tpu as pltpu

# ---------------- config (mirrors PatientRNN.__init__) ----------------
CONFIG = dict(size=512, num_first=30, num_second=20, use_gru=False,
              dropout=0.1, gru_layers=1)
D_MODEL = CONFIG["size"]      # 512
NHEAD = 8
NUM_LAYERS = 12
DFF = 2048
HEAD_DIM = D_MODEL // NHEAD   # 64
LN_EPS = 1e-5
ACT_DTYPE = jnp.bfloat16                 # inter-kernel activation dtype
VMEM_LIMIT = 32 * 1024 * 1024            # raises v5e's 16 MiB default; safe on v6e/v7x


def _row_tile(m, pref):
    """Largest row tile <= pref dividing m; multiples of 16 (bf16 packing)."""
    if m <= pref:
        return m
    t = pref - (pref % 16)
    while t > 16 and m % t:
        t -= 16
    return t


def _gelu_tanh_f32(x):
    # tanh-approx GELU: the tanh goes to the EUP slot (idle during the GEMM),
    # so the epilogue is near-free instead of competing for the 4 VALU slots.
    c = math.sqrt(2.0 / math.pi)
    return 0.5 * x * (1.0 + jnp.tanh(c * (x + 0.044715 * x * x * x)))


# ============================= Pallas kernels =============================

def _linear_kernel(x_ref, w_ref, b_ref, o_ref, *, activation):
    acc = jnp.dot(x_ref[...], w_ref[...], preferred_element_type=jnp.float32)
    acc = acc + b_ref[...].astype(jnp.float32)
    if activation == "gelu":                           # fused ff1 epilogue
        acc = _gelu_tanh_f32(acc)
    o_ref[...] = acc.astype(o_ref.dtype)


def linear(x, w, b, activation=None):
    """x:(M,K) bf16 @ w:(K,N) bf16 + b:(N,) f32 -> (M,N) bf16."""
    M, K = x.shape
    N = w.shape[1]
    tm = _row_tile(M, 512 if K <= 1024 else 256)
    tn = 512 if (N % 512 == 0) else N
    return pl.pallas_call(
        functools.partial(_linear_kernel, activation=activation),
        out_shape=jax.ShapeDtypeStruct((M, N), ACT_DTYPE),
        grid=(M // tm, N // tn),
        in_specs=[pl.BlockSpec((tm, K), lambda i, j: (i, 0)),
                  pl.BlockSpec((K, tn), lambda i, j: (0, j)),
                  pl.BlockSpec((1, tn), lambda i, j: (0, j))],
        out_specs=pl.BlockSpec((tm, tn), lambda i, j: (i, j)),
        compiler_params=pltpu.CompilerParams(
            dimension_semantics=("parallel", "parallel"),
            vmem_limit_bytes=VMEM_LIMIT),
    )(x, w, b.reshape(1, N))


def _linear_res_ln_kernel(x_ref, w_ref, b_ref, r_ref, g_ref, be_ref, o_ref, *, eps):
    acc = jnp.dot(x_ref[...], w_ref[...], preferred_element_type=jnp.float32)
    acc = acc + b_ref[...].astype(jnp.float32) + r_ref[...].astype(jnp.float32)
    mean = jnp.mean(acc, axis=-1, keepdims=True)
    var = jnp.mean(jnp.square(acc - mean), axis=-1, keepdims=True)
    inv = lax.rsqrt(var + eps)
    o_ref[...] = ((acc - mean) * inv * g_ref[...] + be_ref[...]).astype(o_ref.dtype)


def linear_residual_layernorm(x, w, b, residual, gamma, beta, eps=LN_EPS):
    """LayerNorm(residual + (x @ w + b)) fused into the GEMM epilogue.
    Requires the full output row (N) to live in one tile (N == 512 here)."""
    M, K = x.shape
    N = w.shape[1]
    tm = _row_tile(M, 512 if K <= 1024 else 256)
    return pl.pallas_call(
        functools.partial(_linear_res_ln_kernel, eps=eps),
        out_shape=jax.ShapeDtypeStruct((M, N), ACT_DTYPE),
        grid=(M // tm,),
        in_specs=[pl.BlockSpec((tm, K), lambda i: (i, 0)),
                  pl.BlockSpec((K, N), lambda i: (0, 0)),
                  pl.BlockSpec((1, N), lambda i: (0, 0)),
                  pl.BlockSpec((tm, N), lambda i: (i, 0)),
                  pl.BlockSpec((1, N), lambda i: (0, 0)),
                  pl.BlockSpec((1, N), lambda i: (0, 0))],
        out_specs=pl.BlockSpec((tm, N), lambda i: (i, 0)),
        compiler_params=pltpu.CompilerParams(
            dimension_semantics=("parallel",),
            vmem_limit_bytes=VMEM_LIMIT),
    )(x, w, b.reshape(1, N), residual, gamma.reshape(1, N), beta.reshape(1, N))


def _layernorm_kernel(x_ref, g_ref, b_ref, o_ref, *, eps):
    x = x_ref[...].astype(jnp.float32)
    mean = jnp.mean(x, axis=-1, keepdims=True)
    var = jnp.mean(jnp.square(x - mean), axis=-1, keepdims=True)
    inv = lax.rsqrt(var + eps)
    o_ref[...] = ((x - mean) * inv * g_ref[...] + b_ref[...]).astype(o_ref.dtype)


def layernorm(x, gamma, beta, out_dtype=ACT_DTYPE, eps=LN_EPS):
    """Standalone LN (used only for self.norm and the final encoder norm)."""
    M, D = x.shape
    tm = _row_tile(M, 1024)
    row = pl.BlockSpec((tm, D), lambda i: (i, 0))
    vec = pl.BlockSpec((1, D), lambda i: (0, 0))
    return pl.pallas_call(
        functools.partial(_layernorm_kernel, eps=eps),
        out_shape=jax.ShapeDtypeStruct((M, D), out_dtype),
        grid=(M // tm,),
        in_specs=[row, vec, vec],
        out_specs=row,
        compiler_params=pltpu.CompilerParams(
            dimension_semantics=("parallel",),
            vmem_limit_bytes=VMEM_LIMIT),
    )(x, gamma.reshape(1, D), beta.reshape(1, D))


def _attn_kernel(q_ref, k_ref, v_ref, o_ref, *, nhead, scale, tq):
    qi = pl.program_id(1)
    q = (q_ref[0].astype(jnp.float32) * scale).astype(jnp.bfloat16)   # (tq, D)
    k = k_ref[0]                                                      # (T, D) bf16
    v = v_ref[0]
    T = k.shape[0]
    dh = q.shape[1] // nhead
    # causal mask for this q tile only — never a full (T,T) bias
    row = qi * tq + lax.broadcasted_iota(jnp.int32, (tq, T), 0)
    col = lax.broadcasted_iota(jnp.int32, (tq, T), 1)
    mask = col <= row
    neg = jnp.float32(-1e30)
    for p in range(nhead // 2):           # heads in pairs -> 128-lane stores
        pair = []
        for h in (2 * p, 2 * p + 1):
            sl = slice(h * dh, (h + 1) * dh)
            s = lax.dot_general(q[:, sl], k[:, sl],            # no k.T relayout
                                dimension_numbers=(((1,), (1,)), ((), ())),
                                preferred_element_type=jnp.float32)
            s = jnp.where(mask, s, neg)
            m = jnp.max(s, axis=-1, keepdims=True)
            e = jnp.exp(s - m)
            inv_l = pl.reciprocal(jnp.sum(e, axis=-1, keepdims=True), approx=True)
            o_h = jnp.dot(e.astype(jnp.bfloat16), v[:, sl],
                          preferred_element_type=jnp.float32) * inv_l
            pair.append(o_h)
        o_ref[0, :, 2 * p * dh:(2 * p + 2) * dh] = (
            jnp.concatenate(pair, axis=-1).astype(o_ref.dtype))


def causal_attention(qkv):
    """qkv: (B, T, 3*D) bf16 with heads packed along lanes -> (B, T, D) bf16."""
    B, T, threeD = qkv.shape
    D = threeD // 3
    scale = 1.0 / math.sqrt(D // NHEAD)
    tq = _row_tile(T, 256)   # q-row tile: >=2 grid steps for dual-TC even at small B
    # TODO(synk): for very long sequences (T >~ 8k) switch the full-T K/V block
    # to a manual double-buffered KV page loop (flash-style online softmax).
    return pl.pallas_call(
        functools.partial(_attn_kernel, nhead=NHEAD, scale=scale, tq=tq),
        out_shape=jax.ShapeDtypeStruct((B, T, D), ACT_DTYPE),
        grid=(B, T // tq),
        in_specs=[pl.BlockSpec((1, tq, D), lambda b, i: (b, i, 0)),   # q tile
                  pl.BlockSpec((1, T, D), lambda b, i: (b, 0, 1)),    # full K
                  pl.BlockSpec((1, T, D), lambda b, i: (b, 0, 2))],   # full V
        out_specs=pl.BlockSpec((1, tq, D), lambda b, i: (b, i, 0)),
        compiler_params=pltpu.CompilerParams(
            dimension_semantics=("parallel", "parallel"),
            vmem_limit_bytes=VMEM_LIMIT),
    )(qkv, qkv, qkv)


# ============================= plain-JAX glue =============================

def embedding_bag_mean(weight, codes, offsets):
    """nn.EmbeddingBag(mode='mean'): bag i spans codes[offsets[i]:offsets[i+1]]."""
    n_bags = offsets.shape[0]
    idx = jnp.arange(codes.shape[0])
    bag_ids = jnp.searchsorted(offsets, idx, side="right") - 1
    emb = weight[codes]
    sums = jax.ops.segment_sum(emb, bag_ids, num_segments=n_bags)
    counts = jax.ops.segment_sum(jnp.ones((codes.shape[0],), weight.dtype),
                                 bag_ids, num_segments=n_bags)
    return sums / jnp.maximum(counts, 1.0)[:, None]


def init_params(key):
    ks = jax.random.split(key, 6)

    def nrm(k, shape, std=0.02):
        return (std * jax.random.normal(k, shape)).astype(jnp.float32)

    def nrm_bf16(k, shape, std=0.02):
        return nrm(k, shape, std).astype(jnp.bfloat16)    # bf16 MXU weights

    return {
        "emb0": nrm(ks[0], (CONFIG["num_first"] + 1, CONFIG["size"] + 1)),
        "emb1": nrm(ks[1], (CONFIG["num_second"] + 1, CONFIG["size"] // 4 + 1)),
        "norm_w": jnp.ones((D_MODEL,), jnp.float32),
        "norm_b": jnp.zeros((D_MODEL,), jnp.float32),
        "enc_norm_w": jnp.ones((D_MODEL,), jnp.float32),
        "enc_norm_b": jnp.zeros((D_MODEL,), jnp.float32),
        "layers": {
            "w_qkv": nrm_bf16(ks[2], (NUM_LAYERS, D_MODEL, 3 * D_MODEL)),
            "b_qkv": jnp.zeros((NUM_LAYERS, 3 * D_MODEL), jnp.float32),
            "w_out": nrm_bf16(ks[3], (NUM_LAYERS, D_MODEL, D_MODEL)),
            "b_out": jnp.zeros((NUM_LAYERS, D_MODEL), jnp.float32),
            "ln1_w": jnp.ones((NUM_LAYERS, D_MODEL), jnp.float32),
            "ln1_b": jnp.zeros((NUM_LAYERS, D_MODEL), jnp.float32),
            "w_ff1": nrm_bf16(ks[4], (NUM_LAYERS, D_MODEL, DFF)),
            "b_ff1": jnp.zeros((NUM_LAYERS, DFF), jnp.float32),
            "w_ff2": nrm_bf16(ks[5], (NUM_LAYERS, DFF, D_MODEL)),
            "b_ff2": jnp.zeros((NUM_LAYERS, D_MODEL), jnp.float32),
            "ln2_w": jnp.ones((NUM_LAYERS, D_MODEL), jnp.float32),
            "ln2_b": jnp.zeros((NUM_LAYERS, D_MODEL), jnp.float32),
        },
    }


def patient_rnn_forward(params, codes, offsets, codes1, offsets1, day, pos,
                        all_lengths):
    size = CONFIG["size"]
    size_for_embedding = size - 5 - 200          # non-GRU (transformer) path

    e0 = embedding_bag_mean(params["emb0"], codes, offsets)[:, :size_for_embedding]
    e1 = embedding_bag_mean(params["emb1"], codes1, offsets1)
    e1 = jnp.pad(e1, ((0, 0), (size_for_embedding - (size // 4 + 1), 0)))
    combined = jnp.concatenate([e0 + e1, day[:, None], pos[:, None]], axis=1)

    T_max = max(l for _, l in all_lengths)
    T_pad = -(-T_max // 16) * 16                 # multiple of 16 (bf16 packing)
    B = len(all_lengths)

    # pack_sequence + pad_packed_sequence, kept batch-major (B, T_pad, feat)
    seqs = []
    for off, length in all_lengths:
        s = combined[off:off + length]
        seqs.append(jnp.pad(s, ((0, T_pad - length), (0, 0))))
    x = jnp.stack(seqs, axis=0)                                   # (B, T_pad, 309)
    x = jnp.pad(x, ((0, 0), (0, 0), (0, D_MODEL - x.shape[-1])))  # F.pad to 512

    M = B * T_pad
    x = x.reshape(M, D_MODEL)
    x = layernorm(x, params["norm_w"], params["norm_b"])          # self.norm -> bf16

    # TransformerEncoderLayer (post-norm, gelu), dropout = identity (eval)
    def layer(xc, p):
        qkv = linear(xc, p["w_qkv"], p["b_qkv"])                          # (M,3D) bf16
        a = causal_attention(qkv.reshape(B, T_pad, 3 * D_MODEL))          # (B,T,D)
        xc = linear_residual_layernorm(a.reshape(M, D_MODEL), p["w_out"],
                                       p["b_out"], xc,
                                       p["ln1_w"], p["ln1_b"])            # LN(x+attn)
        h = linear(xc, p["w_ff1"], p["b_ff1"], activation="gelu")         # fused GELU
        xc = linear_residual_layernorm(h, p["w_ff2"], p["b_ff2"], xc,
                                       p["ln2_w"], p["ln2_b"])            # LN(x+ff)
        return xc, None

    x, _ = lax.scan(layer, x, params["layers"])
    x = layernorm(x, params["enc_norm_w"], params["enc_norm_b"],
                  out_dtype=jnp.float32)                          # encoder_norm

    out = x.reshape(B, T_pad, D_MODEL)          # already batch-major (permute(1,0,2))
    return out[:, :T_max, :]                    # (B, T_max, 512)


# ================================= main ===================================

if __name__ == "__main__":
    key = jax.random.PRNGKey(0)
    k_param, k1, k2, k3, k4 = jax.random.split(key, 5)
    params = init_params(k_param)

    # two patients: (offset, length) into the flat timestep axis, sorted by
    # decreasing length (pack_sequence requirement)
    all_lengths = [(0, 5), (5, 3)]
    n_rows = sum(l for _, l in all_lengths)           # 8 timestep rows total

    # EmbeddingBag inputs (one bag per timestep row)
    codes = jax.random.randint(k1, (16,), 0, CONFIG["num_first"] + 1)
    offsets = jnp.array([0, 2, 4, 6, 8, 10, 12, 14], dtype=jnp.int32)
    codes1 = jax.random.randint(k2, (8,), 0, CONFIG["num_second"] + 1)
    offsets1 = jnp.array([0, 1, 2, 3, 4, 5, 6, 7], dtype=jnp.int32)
    day = jax.random.normal(k3, (n_rows,), jnp.float32)
    pos = jax.random.normal(k4, (n_rows,), jnp.float32)

    fwd = jax.jit(functools.partial(patient_rnn_forward, all_lengths=all_lengths))
    out = fwd(params, codes, offsets, codes1, offsets1, day, pos)
    jax.block_until_ready(out)
    assert out.shape == (len(all_lengths), 5, 512), out.shape
    assert bool(jnp.all(jnp.isfinite(out)))
    print("KERNEL_OK")
</pallas_src>

<mosaic_0001>
module attributes {stable_mosaic.version = 11 : i64} {
  func.func private @main(%arg0: i32) attributes {dimension_semantics = [#tpu.dimension_semantics<core_parallel>], iteration_bounds = array<i64: 2>, tpu.core_type = #tpu.core_type<sc_scalar_subcore>, window_params = []} {
    return
  }
}

module attributes {stable_mosaic.version = 11 : i64} {
  func.func private @main(%arg0: i32) attributes {dimension_semantics = [#tpu.dimension_semantics<core_parallel>], iteration_bounds = array<i64: 2>, tpu.core_type = #tpu.core_type<sc_scalar_subcore>, window_params = []} {
    return
  }
}

module attributes {stable_mosaic.version = 11 : i64} {
  func.func @_layernorm_kernel(%arg0: i32, %arg1: memref<32x512xf32, #tpu.memory_space<vmem>>, %arg2: memref<1x512xf32, #tpu.memory_space<vmem>>, %arg3: memref<1x512xf32, #tpu.memory_space<vmem>>, %arg4: memref<32x512xbf16, #tpu.memory_space<vmem>>) attributes {dimension_semantics = [#tpu.dimension_semantics<parallel>], iteration_bounds = array<i64: 1>, scalar_prefetch = 0 : i64, scratch_operands = 0 : i64, tpu.core_type = #tpu.core_type<tc>, window_params = [{transform_indices = @transform_0, window_bounds = array<i64: 32, 512>}, {pipeline_mode = #tpu.pipeline_mode<synchronous>, transform_indices = @transform_1, window_bounds = array<i64: 1, 512>}, {pipeline_mode = #tpu.pipeline_mode<synchronous>, transform_indices = @transform_2, window_bounds = array<i64: 1, 512>}, {transform_indices = @transform_3, window_bounds = array<i64: 32, 512>}]} {
    %c0 = arith.constant 0 : index
    %c0_0 = arith.constant 0 : index
    %0 = vector.load %arg1[%c0, %c0_0] : memref<32x512xf32, #tpu.memory_space<vmem>>, vector<32x512xf32>
    %cst = arith.constant dense<0.000000e+00> : vector<32xf32>
    %1 = vector.multi_reduction <add>, %0, %cst [1] : vector<32x512xf32> to vector<32xf32>
    %2 = vector.shape_cast %1 : vector<32xf32> to vector<32x1xf32>
    %cst_1 = arith.constant 5.120000e+02 : f32
    %3 = vector.broadcast %cst_1 : f32 to vector<32x1xf32>
    %4 = arith.divf %2, %3 : vector<32x1xf32>
    %5 = vector.broadcast %4 : vector<32x1xf32> to vector<32x512xf32>
    %6 = arith.subf %0, %5 : vector<32x512xf32>
    %7 = arith.mulf %6, %6 : vector<32x512xf32>
    %cst_2 = arith.constant dense<0.000000e+00> : vector<32xf32>
    %8 = vector.multi_reduction <add>, %7, %cst_2 [1] : vector<32x512xf32> to vector<32xf32>
    %9 = vector.shape_cast %8 : vector<32xf32> to vector<32x1xf32>
    %cst_3 = arith.constant 5.120000e+02 : f32
    %10 = vector.broadcast %cst_3 : f32 to vector<32x1xf32>
    %11 = arith.divf %9, %10 : vector<32x1xf32>
    %cst_4 = arith.constant 9.99999974E-6 : f32
    %12 = vector.broadcast %cst_4 : f32 to vector<32x1xf32>
    %13 = arith.addf %11, %12 : vector<32x1xf32>
    %14 = math.rsqrt %13 : vector<32x1xf32>
    %15 = vector.broadcast %4 : vector<32x1xf32> to vector<32x512xf32>
    %16 = arith.subf %0, %15 : vector<32x512xf32>
    %17 = vector.broadcast %14 : vector<32x1xf32> to vector<32x512xf32>
    %18 = arith.mulf %16, %17 : vector<32x512xf32>
    %c0_5 = arith.constant 0 : index
    %c0_6 = arith.constant 0 : index
    %19 = vector.load %arg2[%c0_5, %c0_6] : memref<1x512xf32, #tpu.memory_space<vmem>>, vector<1x512xf32>
    %20 = vector.broadcast %19 : vector<1x512xf32> to vector<32x512xf32>
    %21 = arith.mulf %18, %20 : vector<32x512xf32>
    %c0_7 = arith.constant 0 : index
    %c0_8 = arith.constant 0 : index
    %22 = vector.load %arg3[%c0_7, %c0_8] : memref<1x512xf32, #tpu.memory_space<vmem>>, vector<1x512xf32>
    %23 = vector.broadcast %22 : vector<1x512xf32> to vector<32x512xf32>
    %24 = arith.addf %21, %23 : vector<32x512xf32>
    %25 = arith.truncf %24 : vector<32x512xf32> to vector<32x512xbf16>
    %c0_9 = arith.constant 0 : index
    %c0_10 = arith.constant 0 : index
    %26 = vector.load %arg4[%c0_9, %c0_10] : memref<32x512xbf16, #tpu.memory_space<vmem>>, vector<32x512xbf16>
    tpu.vector_store %arg4[%c0_9, %c0_10], %25 {strides = array<i32>} : memref<32x512xbf16, #tpu.memory_space<vmem>>, vector<32x512xbf16>,
    return
  }
  func.func @transform_0(%arg0: i32) -> (i32, i32) {
    %c0_i32 = arith.constant 0 : i32
    %c0_i32_0 = arith.constant 0 : i32
    return %arg0, %c0_i32 : i32, i32
  }
  func.func @transform_1(%arg0: i32) -> (i32, i32) {
    %c0_i32 = arith.constant 0 : i32
    %c0_i32_0 = arith.constant 0 : i32
    %c0_i32_1 = arith.constant 0 : i32
    return %c0_i32, %c0_i32_0 : i32, i32
  }
  func.func @transform_2(%arg0: i32) -> (i32, i32) {
    %c0_i32 = arith.constant 0 : i32
    %c0_i32_0 = arith.constant 0 : i32
    %c0_i32_1 = arith.constant 0 : i32
    return %c0_i32, %c0_i32_0 : i32, i32
  }
  func.func @transform_3(%arg0: i32) -> (i32, i32) {
    %c0_i32 = arith.constant 0 : i32
    %c0_i32_0 = arith.constant 0 : i32
    return %arg0, %c0_i32 : i32, i32
  }
}

module attributes {stable_mosaic.version = 11 : i64} {
  func.func @_linear_kernel(%arg0: i32, %arg1: i32, %arg2: memref<32x512xbf16, #tpu.memory_space<vmem>>, %arg3: memref<512x512xbf16, #tpu.memory_space<vmem>>, %arg4: memref<1x512xf32, #tpu.memory_space<vmem>>, %arg5: memref<32x512xbf16, #tpu.memory_space<vmem>>) attributes {dimension_semantics = [#tpu.dimension_semantics<parallel>, #tpu.dimension_semantics<parallel>], iteration_bounds = array<i64: 1, 3>, scalar_prefetch = 0 : i64, scratch_operands = 0 : i64, tpu.core_type = #tpu.core_type<tc>, window_params = [{transform_indices = @transform_0, window_bounds = array<i64: 32, 512>}, {transform_indices = @transform_1, window_bounds = array<i64: 512, 512>}, {transform_indices = @transform_2, window_bounds = array<i64: 1, 512>}, {transform_indices = @transform_3, window_bounds = array<i64: 32, 512>}]} {
    %c0 = arith.constant 0 : index
    %c0_0 = arith.constant 0 : index
    %0 = vector.load %arg2[%c0, %c0_0] : memref<32x512xbf16, #tpu.memory_space<vmem>>, vector<32x512xbf16>
    %c0_1 = arith.constant 0 : index
    %c0_2 = arith.constant 0 : index
    %1 = vector.load %arg3[%c0_1, %c0_2] : memref<512x512xbf16, #tpu.memory_space<vmem>>, vector<512x512xbf16>
    %cst = arith.constant dense<0.000000e+00> : vector<32x512xf32>
    %2 = tpu.matmul %0, %1, %cst {dimension_numbers = #tpu.dot_dimension_numbers<[1], [0], [0], [1], [0, 0, 1, 1], [], []>} : vector<32x512xbf16>, vector<512x512xbf16>, vector<32x512xf32> -> vector<32x512xf32>
    %c0_3 = arith.constant 0 : index
    %c0_4 = arith.constant 0 : index
    %3 = vector.load %arg4[%c0_3, %c0_4] : memref<1x512xf32, #tpu.memory_space<vmem>>, vector<1x512xf32>
    %4 = vector.broadcast %3 : vector<1x512xf32> to vector<32x512xf32>
    %5 = arith.addf %2, %4 : vector<32x512xf32>
    %6 = arith.truncf %5 : vector<32x512xf32> to vector<32x512xbf16>
    %c0_5 = arith.constant 0 : index
    %c0_6 = arith.constant 0 : index
    %7 = vector.load %arg5[%c0_5, %c0_6] : memref<32x512xbf16, #tpu.memory_space<vmem>>, vector<32x512xbf16>
    tpu.vector_store %arg5[%c0_5, %c0_6], %6 {strides = array<i32>} : memref<32x512xbf16, #tpu.memory_space<vmem>>, vector<32x512xbf16>,
    return
  }
  func.func @transform_0(%arg0: i32, %arg1: i32) -> (i32, i32) {
    %c0_i32 = arith.constant 0 : i32
    %c0_i32_0 = arith.constant 0 : i32
    return %arg0, %c0_i32 : i32, i32
  }
  func.func @transform_1(%arg0: i32, %arg1: i32) -> (i32, i32) {
    %c0_i32 = arith.constant 0 : i32
    %c0_i32_0 = arith.constant 0 : i32
    return %c0_i32, %arg1 : i32, i32
  }
  func.func @transform_2(%arg0: i32, %arg1: i32) -> (i32, i32) {
    %c0_i32 = arith.constant 0 : i32
    %c0_i32_0 = arith.constant 0 : i32
    return %c0_i32, %arg1 : i32, i32
  }
  func.func @transform_3(%arg0: i32, %arg1: i32) -> (i32, i32) {
    %c0_i32 = arith.constant 0 : i32
    return %arg0, %arg1 : i32, i32
  }
}

module attributes {stable_mosaic.version = 11 : i64} {
  func.func @_attn_kernel(%arg0: i32, %arg1: i32, %arg2: memref<1x16x512xbf16, #tpu.memory_space<vmem>>, %arg3: memref<1x16x512xbf16, #tpu.memory_space<vmem>>, %arg4: memref<1x16x512xbf16, #tpu.memory_space<vmem>>, %arg5: memref<1x16x512xbf16, #tpu.memory_space<vmem>>) attributes {dimension_semantics = [#tpu.dimension_semantics<parallel>, #tpu.dimension_semantics<parallel>], iteration_bounds = array<i64: 2, 1>, scalar_prefetch = 0 : i64, scratch_operands = 0 : i64, tpu.core_type = #tpu.core_type<tc>, window_params = [{transform_indices = @transform_0, window_bounds = array<i64: 1, 16, 512>}, {transform_indices = @transform_1, window_bounds = array<i64: 1, 16, 512>}, {transform_indices = @transform_2, window_bounds = array<i64: 1, 16, 512>}, {transform_indices = @transform_3, window_bounds = array<i64: 1, 16, 512>}]} {
    %c0 = arith.constant 0 : index
    %c0_0 = arith.constant 0 : index
    %c0_1 = arith.constant 0 : index
    %0 = vector.load %arg2[%c0, %c0_0, %c0_1] : memref<1x16x512xbf16, #tpu.memory_space<vmem>>, vector<1x16x512xbf16>
    %1 = vector.shape_cast %0 : vector<1x16x512xbf16> to vector<16x512xbf16>
    %2 = arith.extf %1 : vector<16x512xbf16> to vector<16x512xf32>
    %cst = arith.constant 1.250000e-01 : f32
    %3 = vector.broadcast %cst : f32 to vector<16x512xf32>
    %4 = arith.mulf %2, %3 : vector<16x512xf32>
    %5 = arith.truncf %4 : vector<16x512xf32> to vector<16x512xbf16>
    %c0_2 = arith.constant 0 : index
    %c0_3 = arith.constant 0 : index
    %c0_4 = arith.constant 0 : index
    %6 = vector.load %arg3[%c0_2, %c0_3, %c0_4] : memref<1x16x512xbf16, #tpu.memory_space<vmem>>, vector<1x16x512xbf16>
    %7 = vector.shape_cast %6 : vector<1x16x512xbf16> to vector<16x512xbf16>
    %c0_5 = arith.constant 0 : index
    %c0_6 = arith.constant 0 : index
    %c0_7 = arith.constant 0 : index
    %8 = vector.load %arg4[%c0_5, %c0_6, %c0_7] : memref<1x16x512xbf16, #tpu.memory_space<vmem>>, vector<1x16x512xbf16>
    %9 = vector.shape_cast %8 : vector<1x16x512xbf16> to vector<16x512xbf16>
    %c16_i32 = arith.constant 16 : i32
    %10 = arith.muli %arg1, %c16_i32 : i32
    %11 = tpu.iota {dimensions = array<i32: 0>} : vector<16x16xi32>
    %12 = vector.broadcast %10 : i32 to vector<16x16xi32>
    %13 = arith.addi %12, %11 : vector<16x16xi32>
    %14 = tpu.iota {dimensions = array<i32: 1>} : vector<16x16xi32>
    %15 = arith.cmpi sle, %14, %13 : vector<16x16xi32>
    %16 = vector.extract_strided_slice %5 {offsets = [0, 0], sizes = [16, 64], strides = [1, 1]} : vector<16x512xbf16> to vector<16x64xbf16>
    %17 = vector.extract_strided_slice %7 {offsets = [0, 0], sizes = [16, 64], strides = [1, 1]} : vector<16x512xbf16> to vector<16x64xbf16>
    %cst_8 = arith.constant dense<0.000000e+00> : vector<16x16xf32>
    %18 = tpu.matmul %16, %17, %cst_8 {dimension_numbers = #tpu.dot_dimension_numbers<[1], [1], [0], [0], [0, 0, 1, 0], [], []>} : vector<16x64xbf16>, vector<16x64xbf16>, vector<16x16xf32> -> vector<16x16xf32>
    %cst_9 = arith.constant -1.000000e+30 : f32
    %19 = vector.broadcast %cst_9 : f32 to vector<16x16xf32>
    %20 = arith.select %15, %18, %19 : vector<16x16xi1>, vector<16x16xf32>
    %cst_10 = arith.constant dense<0xFF800000> : vector<16xf32>
    %21 = vector.multi_reduction <maximumf>, %20, %cst_10 [1] : vector<16x16xf32> to vector<16xf32>
    %22 = vector.shape_cast %21 : vector<16xf32> to vector<16x1xf32>
    %23 = vector.broadcast %22 : vector<16x1xf32> to vector<16x16xf32>
    %24 = arith.subf %20, %23 : vector<16x16xf32>
    %25 = math.exp %24 : vector<16x16xf32>
    %cst_11 = arith.constant dense<0.000000e+00> : vector<16xf32>
    %26 = vector.multi_reduction <add>, %25, %cst_11 [1] : vector<16x16xf32> to vector<16xf32>
    %27 = vector.shape_cast %26 : vector<16xf32> to vector<16x1xf32>
    %28 = tpu.reciprocal %27 {approx = true} : vector<16x1xf32> -> vector<16x1xf32>
    %29 = arith.truncf %25 : vector<16x16xf32> to vector<16x16xbf16>
    %30 = vector.extract_strided_slice %9 {offsets = [0, 0], sizes = [16, 64], strides = [1, 1]} : vector<16x512xbf16> to vector<16x64xbf16>
    %cst_12 = arith.constant dense<0.000000e+00> : vector<16x64xf32>
    %31 = tpu.matmul %29, %30, %cst_12 {dimension_numbers = #tpu.dot_dimension_numbers<[1], [0], [0], [1], [0, 0, 1, 1], [], []>} : vector<16x16xbf16>, vector<16x64xbf16>, vector<16x64xf32> -> vector<16x64xf32>
    %32 = vector.broadcast %28 : vector<16x1xf32> to vector<16x64xf32>
    %33 = arith.mulf %31, %32 : vector<16x64xf32>
    %34 = vector.extract_strided_slice %5 {offsets = [0, 64], sizes = [16, 64], strides = [1, 1]} : vector<16x512xbf16> to vector<16x64xbf16>
    %35 = vector.extract_strided_slice %7 {offsets = [0, 64], sizes = [16, 64], strides = [1, 1]} : vector<16x512xbf16> to vector<16x64xbf16>
    %cst_13 = arith.constant dense<0.000000e+00> : vector<16x16xf32>
    %36 = tpu.matmul %34, %35, %cst_13 {dimension_numbers = #tpu.dot_dimension_numbers<[1], [1], [0], [0], [0, 0, 1, 0], [], []>} : vector<16x64xbf16>, vector<16x64xbf16>, vector<16x16xf32> -> vector<16x16xf32>
    %cst_14 = arith.constant -1.000000e+30 : f32
    %37 = vector.broadcast %cst_14 : f32 to vector<16x16xf32>
    %38 = arith.select %15, %36, %37 : vector<16x16xi1>, vector<16x16xf32>
    %cst_15 = arith.constant dense<0xFF800000> : vector<16xf32>
    %39 = vector.multi_reduction <maximumf>, %38, %cst_15 [1] : vector<16x16xf32> to vector<16xf32>
    %40 = vector.shape_cast %39 : vector<16xf32> to vector<16x1xf32>
    %41 = vector.broadcast %40 : vector<16x1xf32> to vector<16x16xf32>
    %42 = arith.subf %38, %41 : vector<16x16xf32>
    %43 = math.exp %42 : vector<16x16xf32>
    %cst_16 = arith.constant dense<0.000000e+00> : vector<16xf32>
    %44 = vector.multi_reduction <add>, %43, %cst_16 [1] : vector<16x16xf32> to vector<16xf32>
    %45 = vector.shape_cast %44 : vector<16xf32> to vector<16x1xf32>
    %46 = tpu.reciprocal %45 {approx = true} : vector<16x1xf32> -> vector<16x1xf32>
    %47 = arith.truncf %43 : vector<16x16xf32> to vector<16x16xbf16>
    %48 = vector.extract_strided_slice %9 {offsets = [0, 64], sizes = [16, 64], strides = [1, 1]} : vector<16x512xbf16> to vector<16x64xbf16>
    %cst_17 = arith.constant dense<0.000000e+00> : vector<16x64xf32>
    %49 = tpu.matmul %47, %48, %cst_17 {dimension_numbers = #tpu.dot_dimension_numbers<[1], [0], [0], [1], [0, 0, 1, 1], [], []>} : vector<16x16xbf16>, vector<16x64xbf16>, vector<16x64xf32> -> vector<16x64xf32>
    %50 = vector.broadcast %46 : vector<16x1xf32> to vector<16x64xf32>
    %51 = arith.mulf %49, %50 : vector<16x64xf32>
    %52 = tpu.concatenate %33, %51 in 1 : vector<16x64xf32>, vector<16x64xf32> -> vector<16x128xf32>
    %53 = arith.truncf %52 : vector<16x128xf32> to vector<16x128xbf16>
    %c0_18 = arith.constant 0 : index
    %c0_19 = arith.constant 0 : index
    %c0_20 = arith.constant 0 : index
    %54 = vector.load %arg5[%c0_18, %c0_19, %c0_20] : memref<1x16x512xbf16, #tpu.memory_space<vmem>>, vector<1x16x128xbf16>
    %55 = vector.shape_cast %54 : vector<1x16x128xbf16> to vector<16x128xbf16>
    %56 = vector.shape_cast %53 : vector<16x128xbf16> to vector<1x16x128xbf16>
    tpu.vector_store %arg5[%c0_18, %c0_19, %c0_20], %56 {strides = array<i32>} : memref<1x16x512xbf16, #tpu.memory_space<vmem>>, vector<1x16x128xbf16>,
    %57 = vector.extract_strided_slice %5 {offsets = [0, 128], sizes = [16, 64], strides = [1, 1]} : vector<16x512xbf16> to vector<16x64xbf16>
    %58 = vector.extract_strided_slice %7 {offsets = [0, 128], sizes = [16, 64], strides = [1, 1]} : vector<16x512xbf16> to vector<16x64xbf16>
    %cst_21 = arith.constant dense<0.000000e+00> : vector<16x16xf32>
    %59 = tpu.matmul %57, %58, %cst_21 {dimension_numbers = #tpu.dot_dimension_numbers<[1], [1], [0], [0], [0, 0, 1, 0], [], []>} : vector<16x64xbf16>, vector<16x64xbf16>, vector<16x16xf32> -> vector<16x16xf32>
    %cst_22 = arith.constant -1.000000e+30 : f32
    %60 = vector.broadcast %cst_22 : f32 to vector<16x16xf32>
    %61 = arith.select %15, %59, %60 : vector<16x16xi1>, vector<16x16xf32>
    %cst_23 = arith.constant dense<0xFF800000> : vector<16xf32>
    %62 = vector.multi_reduction <maximumf>, %61, %cst_23 [1] : vector<16x16xf32> to vector<16xf32>
    %63 = vector.shape_cast %62 : vector<16xf32> to vector<16x1xf32>
    %64 = vector.broadcast %63 : vector<16x1xf32> to vector<16x16xf32>
    %65 = arith.subf %61, %64 : vector<16x16xf32>
    %66 = math.exp %65 : vector<16x16xf32>
    %cst_24 = arith.constant dense<0.000000e+00> : vector<16xf32>
    %67 = vector.multi_reduction <add>, %66, %cst_24 [1] : vector<16x16xf32> to vector<16xf32>
    %68 = vector.shape_cast %67 : vector<16xf32> to vector<16x1xf32>
    %69 = tpu.reciprocal %68 {approx = true} : vector<16x1xf32> -> vector<16x1xf32>
    %70 = arith.truncf %66 : vector<16x16xf32> to vector<16x16xbf16>
    %71 = vector.extract_strided_slice %9 {offsets = [0, 128], sizes = [16, 64], strides = [1, 1]} : vector<16x512xbf16> to vector<16x64xbf16>
    %cst_25 = arith.constant dense<0.000000e+00> : vector<16x64xf32>
    %72 = tpu.matmul %70, %71, %cst_25 {dimension_numbers = #tpu.dot_dimension_numbers<[1], [0], [0], [1], [0, 0, 1, 1], [], []>} : vector<16x16xbf16>, vector<16x64xbf16>, vector<16x64xf32> -> vector<16x64xf32>
    %73 = vector.broadcast %69 : vector<16x1xf32> to vector<16x64xf32>
    %74 = arith.mulf %72, %73 : vector<16x64xf32>
    %75 = vector.extract_strided_slice %5 {offsets = [0, 192], sizes = [16, 64], strides = [1, 1]} : vector<16x512xbf16> to vector<16x64xbf16>
    %76 = vector.extract_strided_slice %7 {offsets = [0, 192], sizes = [16, 64], strides = [1, 1]} : vector<16x512xbf16> to vector<16x64xbf16>
    %cst_26 = arith.constant dense<0.000000e+00> : vector<16x16xf32>
    %77 = tpu.matmul %75, %76, %cst_26 {dimension_numbers = #tpu.dot_dimension_numbers<[1], [1], [0], [0], [0, 0, 1, 0], [], []>} : vector<16x64xbf16>, vector<16x64xbf16>, vector<16x16xf32> -> vector<16x16xf32>
    %cst_27 = arith.constant -1.000000e+30 : f32
    %78 = vector.broadcast %cst_27 : f32 to vector<16x16xf32>
    %79 = arith.select %15, %77, %78 : vector<16x16xi1>, vector<16x16xf32>
    %cst_28 = arith.constant dense<0xFF800000> : vector<16xf32>
    %80 = vector.multi_reduction <maximumf>, %79, %cst_28 [1] : vector<16x16xf32> to vector<16xf32>
    %81 = vector.shape_cast %80 : vector<16xf32> to vector<16x1xf32>
    %82 = vector.broadcast %81 : vector<16x1xf32> to vector<16x16xf32>
    %83 = arith.subf %79, %82 : vector<16x16xf32>
    %84 = math.exp %83 : vector<16x16xf32>
    %cst_29 = arith.constant dense<0.000000e+00> : vector<16xf32>
    %85 = vector.multi_reduction <add>, %84, %cst_29 [1] : vector<16x16xf32> to vector<16xf32>
    %86 = vector.shape_cast %85 : vector<16xf32> to vector<16x1xf32>
    %87 = tpu.reciprocal %86 {approx = true} : vector<16x1xf32> -> vector<16x1xf32>
    %88 = arith.truncf %84 : vector<16x16xf32> to vector<16x16xbf16>
    %89 = vector.extract_strided_slice %9 {offsets = [0, 192], sizes = [16, 64], strides = [1, 1]} : vector<16x512xbf16> to vector<16x64xbf16>
    %cst_30 = arith.constant dense<0.000000e+00> : vector<16x64xf32>
    %90 = tpu.matmul %88, %89, %cst_30 {dimension_numbers = #tpu.dot_dimension_numbers<[1], [0], [0], [1], [0, 0, 1, 1], [], []>} : vector<16x16xbf16>, vector<16x64xbf16>, vector<16x64xf32> -> vector<16x64xf32>
    %91 = vector.broadcast %87 : vector<16x1xf32> to vector<16x64xf32>
    %92 = arith.mulf %90, %91 : vector<16x64xf32>
    %93 = tpu.concatenate %74, %92 in 1 : vector<16x64xf32>, vector<16x64xf32> -> vector<16x128xf32>
    %94 = arith.truncf %93 : vector<16x128xf32> to vector<16x128xbf16>
    %c0_31 = arith.constant 0 : index
    %c0_32 = arith.constant 0 : index
    %c128 = arith.constant 128 : index
    %95 = vector.load %arg5[%c0_31, %c0_32, %c128] : memref<1x16x512xbf16, #tpu.memory_space<vmem>>, vector<1x16x128xbf16>
    %96 = vector.shape_cast %95 : vector<1x16x128xbf16> to vector<16x128xbf16>
    %97 = vector.shape_cast %94 : vector<16x128xbf16> to vector<1x16x128xbf16>
    tpu.vector_store %arg5[%c0_31, %c0_32, %c128], %97 {strides = array<i32>} : memref<1x16x512xbf16, #tpu.memory_space<vmem>>, vector<1x16x128xbf16>,
    %98 = vector.extract_strided_slice %5 {offsets = [0, 256], sizes = [16, 64], strides = [1, 1]} : vector<16x512xbf16> to vector<16x64xbf16>
    %99 = vector.extract_strided_slice %7 {offsets = [0, 256], sizes = [16, 64], strides = [1, 1]} : vector<16x512xbf16> to vector<16x64xbf16>
    %cst_33 = arith.constant dense<0.000000e+00> : vector<16x16xf32>
    %100 = tpu.matmul %98, %99, %cst_33 {dimension_numbers = #tpu.dot_dimension_numbers<[1], [1], [0], [0], [0, 0, 1, 0], [], []>} : vector<16x64xbf16>, vector<16x64xbf16>, vector<16x16xf32> -> vector<16x16xf32>
    %cst_34 = arith.constant -1.000000e+30 : f32
    %101 = vector.broadcast %cst_34 : f32 to vector<16x16xf32>
    %102 = arith.select %15, %100, %101 : vector<16x16xi1>, vector<16x16xf32>
    %cst_35 = arith.constant dense<0xFF800000> : vector<16xf32>
    %103 = vector.multi_reduction <maximumf>, %102, %cst_35 [1] : vector<16x16xf32> to vector<16xf32>
    %104 = vector.shape_cast %103 : vector<16xf32> to vector<16x1xf32>
    %105 = vector.broadcast %104 : vector<16x1xf32> to vector<16x16xf32>
    %106 = arith.subf %102, %105 : vector<16x16xf32>
    %107 = math.exp %106 : vector<16x16xf32>
    %cst_36 = arith.constant dense<0.000000e+00> : vector<16xf32>
    %108 = vector.multi_reduction <add>, %107, %cst_36 [1] : vector<16x16xf32> to vector<16xf32>
    %109 = vector.shape_cast %108 : vector<16xf32> to vector<16x1xf32>
    %110 = tpu.reciprocal %109 {approx = true} : vector<16x1xf32> -> vector<16x1xf32>
    %111 = arith.truncf %107 : vector<16x16xf32> to vector<16x16xbf16>
    %112 = vector.extract_strided_slice %9 {offsets = [0, 256], sizes = [16, 64], strides = [1, 1]} : vector<16x512xbf16> to vector<16x64xbf16>
    %cst_37 = arith.constant dense<0.000000e+00> : vector<16x64xf32>
    %113 = tpu.matmul %111, %112, %cst_37 {dimension_numbers = #tpu.dot_dimension_numbers<[1], [0], [0], [1], [0, 0, 1, 1], [], []>} : vector<16x16xbf16>, vector<16x64xbf16>, vector<16x64xf32> -> vector<16x64xf32>
    %114 = vector.broadcast %110 : vector<16x1xf32> to vector<16x64xf32>
    %115 = arith.mulf %113, %114 : vector<16x64xf32>
    %116 = vector.extract_strided_slice %5 {offsets = [0, 320], sizes = [16, 64], strides = [1, 1]} : vector<16x512xbf16> to vector<16x64xbf16>
    %117 = vector.extract_strided_slice %7 {offsets = [0, 320], sizes = [16, 64], strides = [1, 1]} : vector<16x512xbf16> to vector<16x64xbf16>
    %cst_38 = arith.constant dense<0.000000e+00> : vector<16x16xf32>
    %118 = tpu.matmul %116, %117, %cst_38 {dimension_numbers = #tpu.dot_dimension_numbers<[1], [1], [0], [0], [0, 0, 1, 0], [], []>} : vector<16x64xbf16>, vector<16x64xbf16>, vector<16x16xf32> -> vector<16x16xf32>
    %cst_39 = arith.constant -1.000000e+30 : f32
    %119 = vector.broadcast %cst_39 : f32 to vector<16x16xf32>
    %120 = arith.select %15, %118, %119 : vector<16x16xi1>, vector<16x16xf32>
    %cst_40 = arith.constant dense<0xFF800000> : vector<16xf32>
    %121 = vector.multi_reduction <maximumf>, %120, %cst_40 [1] : vector<16x16xf32> to vector<16xf32>
    %122 = vector.shape_cast %121 : vector<16xf32> to vector<16x1xf32>
    %123 = vector.broadcast %122 : vector<16x1xf32> to vector<16x16xf32>
    %124 = arith.subf %120, %123 : vector<16x16xf32>
    %125 = math.exp %124 : vector<16x16xf32>
    %cst_41 = arith.constant dense<0.000000e+00> : vector<16xf32>
    %126 = vector.multi_reduction <add>, %125, %cst_41 [1] : vector<16x16xf32> to vector<16xf32>
    %127 = vector.shape_cast %126 : vector<16xf32> to vector<16x1xf32>
    %128 = tpu.reciprocal %127 {approx = true} : vector<16x1xf32> -> vector<16x1xf32>
    %129 = arith.truncf %125 : vector<16x16xf32> to vector<16x16xbf16>
    %130 = vector.extract_strided_slice %9 {offsets = [0, 320], sizes = [16, 64], strides = [1, 1]} : vector<16x512xbf16> to vector<16x64xbf16>
    %cst_42 = arith.constant dense<0.000000e+00> : vector<16x64xf32>
    %131 = tpu.matmul %129, %130, %cst_42 {dimension_numbers = #tpu.dot_dimension_numbers<[1], [0], [0], [1], [0, 0, 1, 1], [], []>} : vector<16x16xbf16>, vector<16x64xbf16>, vector<16x64xf32> -> vector<16x64xf32>
    %132 = vector.broadcast %128 : vector<16x1xf32> to vector<16x64xf32>
    %133 = arith.mulf %131, %132 : vector<16x64xf32>
    %134 = tpu.concatenate %115, %133 in 1 : vector<16x64xf32>, vector<16x64xf32> -> vector<16x128xf32>
    %135 = arith.truncf %134 : vector<16x128xf32> to vector<16x128xbf16>
    %c0_43 = arith.constant 0 : index
    %c0_44 = arith.constant 0 : index
    %c256 = arith.constant 256 : index
    %136 = vector.load %arg5[%c0_43, %c0_44, %c256] : memref<1x16x512xbf16, #tpu.memory_space<vmem>>, vector<1x16x128xbf16>
    %137 = vector.shape_cast %136 : vector<1x16x128xbf16> to vector<16x128xbf16>
    %138 = vector.shape_cast %135 : vector<16x128xbf16> to vector<1x16x128xbf16>
    tpu.vector_store %arg5[%c0_43, %c0_44, %c256], %138 {strides = array<i32>} : memref<1x16x512xbf16, #tpu.memory_space<vmem>>, vector<1x16x128xbf16>,
    %139 = vector.extract_strided_slice %5 {offsets = [0, 384], sizes = [16, 64], strides = [1, 1]} : vector<16x512xbf16> to vector<16x64xbf16>
    %140 = vector.extract_strided_slice %7 {offsets = [0, 384], sizes = [16, 64], strides = [1, 1]} : vector<16x512xbf16> to vector<16x64xbf16>
    %cst_45 = arith.constant dense<0.000000e+00> : vector<16x16xf32>
    %141 = tpu.matmul %139, %140, %cst_45 {dimension_numbers = #tpu.dot_dimension_numbers<[1], [1], [0], [0], [0, 0, 1, 0], [], []>} : vector<16x64xbf16>, vector<16x64xbf16>, vector<16x16xf32> -> vector<16x16xf32>
    %cst_46 = arith.constant -1.000000e+30 : f32
    %142 = vector.broadcast %cst_46 : f32 to vector<16x16xf32>
    %143 = arith.select %15, %141, %142 : vector<16x16xi1>, vector<16x16xf32>
    %cst_47 = arith.constant dense<0xFF800000> : vector<16xf32>
    %144 = vector.multi_reduction <maximumf>, %143, %cst_47 [1] : vector<16x16xf32> to vector<16xf32>
    %145 = vector.shape_cast %144 : vector<16xf32> to vector<16x1xf32>
    %146 = vector.broadcast %145 : vector<16x1xf32> to vector<16x16xf32>
    %147 = arith.subf %143, %146 : vector<16x16xf32>
    %148 = math.exp %147 : vector<16x16xf32>
    %cst_48 = arith.constant dense<0.000000e+00> : vector<16xf32>
    %149 = vector.multi_reduction <add>, %148, %cst_48 [1] : vector<16x16xf32> to vector<16xf32>
    %150 = vector.shape_cast %149 : vector<16xf32> to vector<16x1xf32>
    %151 = tpu.reciprocal %150 {approx = true} : vector<16x1xf32> -> vector<16x1xf32>
    %152 = arith.truncf %148 : vector<16x16xf32> to vector<16x16xbf16>
    %153 = vector.extract_strided_slice %9 {offsets = [0, 384], sizes = [16, 64], strides = [1, 1]} : vector<16x512xbf16> to vector<16x64xbf16>
    %cst_49 = arith.constant dense<0.000000e+00> : vector<16x64xf32>
    %154 = tpu.matmul %152, %153, %cst_49 {dimension_numbers = #tpu.dot_dimension_numbers<[1], [0], [0], [1], [0, 0, 1, 1], [], []>} : vector<16x16xbf16>, vector<16x64xbf16>, vector<16x64xf32> -> vector<16x64xf32>
    %155 = vector.broadcast %151 : vector<16x1xf32> to vector<16x64xf32>
    %156 = arith.mulf %154, %155 : vector<16x64xf32>
    %157 = vector.extract_strided_slice %5 {offsets = [0, 448], sizes = [16, 64], strides = [1, 1]} : vector<16x512xbf16> to vector<16x64xbf16>
    %158 = vector.extract_strided_slice %7 {offsets = [0, 448], sizes = [16, 64], strides = [1, 1]} : vector<16x512xbf16> to vector<16x64xbf16>
    %cst_50 = arith.constant dense<0.000000e+00> : vector<16x16xf32>
    %159 = tpu.matmul %157, %158, %cst_50 {dimension_numbers = #tpu.dot_dimension_numbers<[1], [1], [0], [0], [0, 0, 1, 0], [], []>} : vector<16x64xbf16>, vector<16x64xbf16>, vector<16x16xf32> -> vector<16x16xf32>
    %cst_51 = arith.constant -1.000000e+30 : f32
    %160 = vector.broadcast %cst_51 : f32 to vector<16x16xf32>
    %161 = arith.select %15, %159, %160 : vector<16x16xi1>, vector<16x16xf32>
    %cst_52 = arith.constant dense<0xFF800000> : vector<16xf32>
    %162 = vector.multi_reduction <maximumf>, %161, %cst_52 [1] : vector<16x16xf32> to vector<16xf32>
    %163 = vector.shape_cast %162 : vector<16xf32> to vector<16x1xf32>
    %164 = vector.broadcast %163 : vector<16x1xf32> to vector<16x16xf32>
    %165 = arith.subf %161, %164 : vector<16x16xf32>
    %166 = math.exp %165 : vector<16x16xf32>
    %cst_53 = arith.constant dense<0.000000e+00> : vector<16xf32>
    %167 = vector.multi_reduction <add>, %166, %cst_53 [1] : vector<16x16xf32> to vector<16xf32>
    %168 = vector.shape_cast %167 : vector<16xf32> to vector<16x1xf32>
    %169 = tpu.reciprocal %168 {approx = true} : vector<16x1xf32> -> vector<16x1xf32>
    %170 = arith.truncf %166 : vector<16x16xf32> to vector<16x16xbf16>
    %171 = vector.extract_strided_slice %9 {offsets = [0, 448], sizes = [16, 64], strides = [1, 1]} : vector<16x512xbf16> to vector<16x64xbf16>
    %cst_54 = arith.constant dense<0.000000e+00> : vector<16x64xf32>
    %172 = tpu.matmul %170, %171, %cst_54 {dimension_numbers = #tpu.dot_dimension_numbers<[1], [0], [0], [1], [0, 0, 1, 1], [], []>} : vector<16x16xbf16>, vector<16x64xbf16>, vector<16x64xf32> -> vector<16x64xf32>
    %173 = vector.broadcast %169 : vector<16x1xf32> to vector<16x64xf32>
    %174 = arith.mulf %172, %173 : vector<16x64xf32>
    %175 = tpu.concatenate %156, %174 in 1 : vector<16x64xf32>, vector<16x64xf32> -> vector<16x128xf32>
    %176 = arith.truncf %175 : vector<16x128xf32> to vector<16x128xbf16>
    %c0_55 = arith.constant 0 : index
    %c0_56 = arith.constant 0 : index
    %c384 = arith.constant 384 : index
    %177 = vector.load %arg5[%c0_55, %c0_56, %c384] : memref<1x16x512xbf16, #tpu.memory_space<vmem>>, vector<1x16x128xbf16>
    %178 = vector.shape_cast %177 : vector<1x16x128xbf16> to vector<16x128xbf16>
    %179 = vector.shape_cast %176 : vector<16x128xbf16> to vector<1x16x128xbf16>
    tpu.vector_store %arg5[%c0_55, %c0_56, %c384], %179 {strides = array<i32>} : memref<1x16x512xbf16, #tpu.memory_space<vmem>>, vector<1x16x128xbf16>,
    return
  }
  func.func @transform_0(%arg0: i32, %arg1: i32) -> (i32, i32, i32) {
    %c0_i32 = arith.constant 0 : i32
    %c0_i32_0 = arith.constant 0 : i32
    return %arg0, %arg1, %c0_i32 : i32, i32, i32
  }
  func.func @transform_1(%arg0: i32, %arg1: i32) -> (i32, i32, i32) {
    %c0_i32 = arith.constant 0 : i32
    %c1_i32 = arith.constant 1 : i32
    %c0_i32_0 = arith.constant 0 : i32
    return %arg0, %c0_i32, %c1_i32 : i32, i32, i32
  }
  func.func @transform_2(%arg0: i32, %arg1: i32) -> (i32, i32, i32) {
    %c0_i32 = arith.constant 0 : i32
    %c2_i32 = arith.constant 2 : i32
    %c0_i32_0 = arith.constant 0 : i32
    return %arg0, %c0_i32, %c2_i32 : i32, i32, i32
  }
  func.func @transform_3(%arg0: i32, %arg1: i32) -> (i32, i32, i32) {
    %c0_i32 = arith.constant 0 : i32
    %c0_i32_0 = arith.constant 0 : i32
    return %arg0, %arg1, %c0_i32 : i32, i32, i32
  }
}

module attributes {stable_mosaic.version = 11 : i64} {
  func.func @_linear_res_ln_kernel(%arg0: i32, %arg1: memref<32x512xbf16, #tpu.memory_space<vmem>>, %arg2: memref<512x512xbf16, #tpu.memory_space<vmem>>, %arg3: memref<1x512xf32, #tpu.memory_space<vmem>>, %arg4: memref<32x512xbf16, #tpu.memory_space<vmem>>, %arg5: memref<1x512xf32, #tpu.memory_space<vmem>>, %arg6: memref<1x512xf32, #tpu.memory_space<vmem>>, %arg7: memref<32x512xbf16, #tpu.memory_space<vmem>>) attributes {dimension_semantics = [#tpu.dimension_semantics<parallel>], iteration_bounds = array<i64: 1>, scalar_prefetch = 0 : i64, scratch_operands = 0 : i64, tpu.core_type = #tpu.core_type<tc>, window_params = [{transform_indices = @transform_0, window_bounds = array<i64: 32, 512>}, {pipeline_mode = #tpu.pipeline_mode<synchronous>, transform_indices = @transform_1, window_bounds = array<i64: 512, 512>}, {pipeline_mode = #tpu.pipeline_mode<synchronous>, transform_indices = @transform_2, window_bounds = array<i64: 1, 512>}, {transform_indices = @transform_3, window_bounds = array<i64: 32, 512>}, {pipeline_mode = #tpu.pipeline_mode<synchronous>, transform_indices = @transform_4, window_bounds = array<i64: 1, 512>}, {pipeline_mode = #tpu.pipeline_mode<synchronous>, transform_indices = @transform_5, window_bounds = array<i64: 1, 512>}, {transform_indices = @transform_6, window_bounds = array<i64: 32, 512>}]} {
    %c0 = arith.constant 0 : index
    %c0_0 = arith.constant 0 : index
    %0 = vector.load %arg1[%c0, %c0_0] : memref<32x512xbf16, #tpu.memory_space<vmem>>, vector<32x512xbf16>
    %c0_1 = arith.constant 0 : index
    %c0_2 = arith.constant 0 : index
    %1 = vector.load %arg2[%c0_1, %c0_2] : memref<512x512xbf16, #tpu.memory_space<vmem>>, vector<512x512xbf16>
    %cst = arith.constant dense<0.000000e+00> : vector<32x512xf32>
    %2 = tpu.matmul %0, %1, %cst {dimension_numbers = #tpu.dot_dimension_numbers<[1], [0], [0], [1], [0, 0, 1, 1], [], []>} : vector<32x512xbf16>, vector<512x512xbf16>, vector<32x512xf32> -> vector<32x512xf32>
    %c0_3 = arith.constant 0 : index
    %c0_4 = arith.constant 0 : index
    %3 = vector.load %arg3[%c0_3, %c0_4] : memref<1x512xf32, #tpu.memory_space<vmem>>, vector<1x512xf32>
    %4 = vector.broadcast %3 : vector<1x512xf32> to vector<32x512xf32>
    %5 = arith.addf %2, %4 : vector<32x512xf32>
    %c0_5 = arith.constant 0 : index
    %c0_6 = arith.constant 0 : index
    %6 = vector.load %arg4[%c0_5, %c0_6] : memref<32x512xbf16, #tpu.memory_space<vmem>>, vector<32x512xbf16>
    %7 = arith.extf %6 : vector<32x512xbf16> to vector<32x512xf32>
    %8 = arith.addf %5, %7 : vector<32x512xf32>
    %cst_7 = arith.constant dense<0.000000e+00> : vector<32xf32>
    %9 = vector.multi_reduction <add>, %8, %cst_7 [1] : vector<32x512xf32> to vector<32xf32>
    %10 = vector.shape_cast %9 : vector<32xf32> to vector<32x1xf32>
    %cst_8 = arith.constant 5.120000e+02 : f32
    %11 = vector.broadcast %cst_8 : f32 to vector<32x1xf32>
    %12 = arith.divf %10, %11 : vector<32x1xf32>
    %13 = vector.broadcast %12 : vector<32x1xf32> to vector<32x512xf32>
    %14 = arith.subf %8, %13 : vector<32x512xf32>
    %15 = arith.mulf %14, %14 : vector<32x512xf32>
    %cst_9 = arith.constant dense<0.000000e+00> : vector<32xf32>
    %16 = vector.multi_reduction <add>, %15, %cst_9 [1] : vector<32x512xf32> to vector<32xf32>
    %17 = vector.shape_cast %16 : vector<32xf32> to vector<32x1xf32>
    %cst_10 = arith.constant 5.120000e+02 : f32
    %18 = vector.broadcast %cst_10 : f32 to vector<32x1xf32>
    %19 = arith.divf %17, %18 : vector<32x1xf32>
    %cst_11 = arith.constant 9.99999974E-6 : f32
    %20 = vector.broadcast %cst_11 : f32 to vector<32x1xf32>
    %21 = arith.addf %19, %20 : vector<32x1xf32>
    %22 = math.rsqrt %21 : vector<32x1xf32>
    %23 = vector.broadcast %12 : vector<32x1xf32> to vector<32x512xf32>
    %24 = arith.subf %8, %23 : vector<32x512xf32>
    %25 = vector.broadcast %22 : vector<32x1xf32> to vector<32x512xf32>
    %26 = arith.mulf %24, %25 : vector<32x512xf32>
    %c0_12 = arith.constant 0 : index
    %c0_13 = arith.constant 0 : index
    %27 = vector.load %arg5[%c0_12, %c0_13] : memref<1x512xf32, #tpu.memory_space<vmem>>, vector<1x512xf32>
    %28 = vector.broadcast %27 : vector<1x512xf32> to vector<32x512xf32>
    %29 = arith.mulf %26, %28 : vector<32x512xf32>
    %c0_14 = arith.constant 0 : index
    %c0_15 = arith.constant 0 : index
    %30 = vector.load %arg6[%c0_14, %c0_15] : memref<1x512xf32, #tpu.memory_space<vmem>>, vector<1x512xf32>
    %31 = vector.broadcast %30 : vector<1x512xf32> to vector<32x512xf32>
    %32 = arith.addf %29, %31 : vector<32x512xf32>
    %33 = arith.truncf %32 : vector<32x512xf32> to vector<32x512xbf16>
    %c0_16 = arith.constant 0 : index
    %c0_17 = arith.constant 0 : index
    %34 = vector.load %arg7[%c0_16, %c0_17] : memref<32x512xbf16, #tpu.memory_space<vmem>>, vector<32x512xbf16>
    tpu.vector_store %arg7[%c0_16, %c0_17], %33 {strides = array<i32>} : memref<32x512xbf16, #tpu.memory_space<vmem>>, vector<32x512xbf16>,
    return
  }
  func.func @transform_0(%arg0: i32) -> (i32, i32) {
    %c0_i32 = arith.constant 0 : i32
    %c0_i32_0 = arith.constant 0 : i32
    return %arg0, %c0_i32 : i32, i32
  }
  func.func @transform_1(%arg0: i32) -> (i32, i32) {
    %c0_i32 = arith.constant 0 : i32
    %c0_i32_0 = arith.constant 0 : i32
    %c0_i32_1 = arith.constant 0 : i32
    return %c0_i32, %c0_i32_0 : i32, i32
  }
  func.func @transform_2(%arg0: i32) -> (i32, i32) {
    %c0_i32 = arith.constant 0 : i32
    %c0_i32_0 = arith.constant 0 : i32
    %c0_i32_1 = arith.constant 0 : i32
    return %c0_i32, %c0_i32_0 : i32, i32
  }
  func.func @transform_3(%arg0: i32) -> (i32, i32) {
    %c0_i32 = arith.constant 0 : i32
    %c0_i32_0 = arith.constant 0 : i32
    return %arg0, %c0_i32 : i32, i32
  }
  func.func @transform_4(%arg0: i32) -> (i32, i32) {
    %c0_i32 = arith.constant 0 : i32
    %c0_i32_0 = arith.constant 0 : i32
    %c0_i32_1 = arith.constant 0 : i32
    return %c0_i32, %c0_i32_0 : i32, i32
  }
  func.func @transform_5(%arg0: i32) -> (i32, i32) {
    %c0_i32 = arith.constant 0 : i32
    %c0_i32_0 = arith.constant 0 : i32
    %c0_i32_1 = arith.constant 0 : i32
    return %c0_i32, %c0_i32_0 : i32, i32
  }
  func.func @transform_6(%arg0: i32) -> (i32, i32) {
    %c0_i32 = arith.constant 0 : i32
    %c0_i32_0 = arith.constant 0 : i32
    return %arg0, %c0_i32 : i32, i32
  }
}

module attributes {stable_mosaic.version = 11 : i64} {
  func.func @_linear_kernel(%arg0: i32, %arg1: i32, %arg2: memref<32x512xbf16, #tpu.memory_space<vmem>>, %arg3: memref<512x512xbf16, #tpu.memory_space<vmem>>, %arg4: memref<1x512xf32, #tpu.memory_space<vmem>>, %arg5: memref<32x512xbf16, #tpu.memory_space<vmem>>) attributes {dimension_semantics = [#tpu.dimension_semantics<parallel>, #tpu.dimension_semantics<parallel>], iteration_bounds = array<i64: 1, 4>, scalar_prefetch = 0 : i64, scratch_operands = 0 : i64, tpu.core_type = #tpu.core_type<tc>, window_params = [{transform_indices = @transform_0, window_bounds = array<i64: 32, 512>}, {transform_indices = @transform_1, window_bounds = array<i64: 512, 512>}, {transform_indices = @transform_2, window_bounds = array<i64: 1, 512>}, {transform_indices = @transform_3, window_bounds = array<i64: 32, 512>}]} {
    %c0 = arith.constant 0 : index
    %c0_0 = arith.constant 0 : index
    %0 = vector.load %arg2[%c0, %c0_0] : memref<32x512xbf16, #tpu.memory_space<vmem>>, vector<32x512xbf16>
    %c0_1 = arith.constant 0 : index
    %c0_2 = arith.constant 0 : index
    %1 = vector.load %arg3[%c0_1, %c0_2] : memref<512x512xbf16, #tpu.memory_space<vmem>>, vector<512x512xbf16>
    %cst = arith.constant dense<0.000000e+00> : vector<32x512xf32>
    %2 = tpu.matmul %0, %1, %cst {dimension_numbers = #tpu.dot_dimension_numbers<[1], [0], [0], [1], [0, 0, 1, 1], [], []>} : vector<32x512xbf16>, vector<512x512xbf16>, vector<32x512xf32> -> vector<32x512xf32>
    %c0_3 = arith.constant 0 : index
    %c0_4 = arith.constant 0 : index
    %3 = vector.load %arg4[%c0_3, %c0_4] : memref<1x512xf32, #tpu.memory_space<vmem>>, vector<1x512xf32>
    %4 = vector.broadcast %3 : vector<1x512xf32> to vector<32x512xf32>
    %5 = arith.addf %2, %4 : vector<32x512xf32>
    %cst_5 = arith.constant 5.000000e-01 : f32
    %6 = vector.broadcast %cst_5 : f32 to vector<32x512xf32>
    %7 = arith.mulf %6, %5 : vector<32x512xf32>
    %cst_6 = arith.constant 4.471500e-02 : f32
    %8 = vector.broadcast %cst_6 : f32 to vector<32x512xf32>
    %9 = arith.mulf %8, %5 : vector<32x512xf32>
    %10 = arith.mulf %9, %5 : vector<32x512xf32>
    %11 = arith.mulf %10, %5 : vector<32x512xf32>
    %12 = arith.addf %5, %11 : vector<32x512xf32>
    %cst_7 = arith.constant 0.797884583 : f32
    %13 = vector.broadcast %cst_7 : f32 to vector<32x512xf32>
    %14 = arith.mulf %13, %12 : vector<32x512xf32>
    %15 = math.tanh %14 : vector<32x512xf32>
    %cst_8 = arith.constant 1.000000e+00 : f32
    %16 = vector.broadcast %cst_8 : f32 to vector<32x512xf32>
    %17 = arith.addf %16, %15 : vector<32x512xf32>
    %18 = arith.mulf %7, %17 : vector<32x512xf32>
    %19 = arith.truncf %18 : vector<32x512xf32> to vector<32x512xbf16>
    %c0_9 = arith.constant 0 : index
    %c0_10 = arith.constant 0 : index
    %20 = vector.load %arg5[%c0_9, %c0_10] : memref<32x512xbf16, #tpu.memory_space<vmem>>, vector<32x512xbf16>
    tpu.vector_store %arg5[%c0_9, %c0_10], %19 {strides = array<i32>} : memref<32x512xbf16, #tpu.memory_space<vmem>>, vector<32x512xbf16>,
    return
  }
  func.func @transform_0(%arg0: i32, %arg1: i32) -> (i32, i32) {
    %c0_i32 = arith.constant 0 : i32
    %c0_i32_0 = arith.constant 0 : i32
    return %arg0, %c0_i32 : i32, i32
  }
  func.func @transform_1(%arg0: i32, %arg1: i32) -> (i32, i32) {
    %c0_i32 = arith.constant 0 : i32
    %c0_i32_0 = arith.constant 0 : i32
    return %c0_i32, %arg1 : i32, i32
  }
  func.func @transform_2(%arg0: i32, %arg1: i32) -> (i32, i32) {
    %c0_i32 = arith.constant 0 : i32
    %c0_i32_0 = arith.constant 0 : i32
    return %c0_i32, %arg1 : i32, i32
  }
  func.func @transform_3(%arg0: i32, %arg1: i32) -> (i32, i32) {
    %c0_i32 = arith.constant 0 : i32
    return %arg0, %arg1 : i32, i32
  }
}

module attributes {stable_mosaic.version = 11 : i64} {
  func.func @_linear_res_ln_kernel(%arg0: i32, %arg1: memref<32x2048xbf16, #tpu.memory_space<vmem>>, %arg2: memref<2048x512xbf16, #tpu.memory_space<vmem>>, %arg3: memref<1x512xf32, #tpu.memory_space<vmem>>, %arg4: memref<32x512xbf16, #tpu.memory_space<vmem>>, %arg5: memref<1x512xf32, #tpu.memory_space<vmem>>, %arg6: memref<1x512xf32, #tpu.memory_space<vmem>>, %arg7: memref<32x512xbf16, #tpu.memory_space<vmem>>) attributes {dimension_semantics = [#tpu.dimension_semantics<parallel>], iteration_bounds = array<i64: 1>, scalar_prefetch = 0 : i64, scratch_operands = 0 : i64, tpu.core_type = #tpu.core_type<tc>, window_params = [{transform_indices = @transform_0, window_bounds = array<i64: 32, 2048>}, {pipeline_mode = #tpu.pipeline_mode<synchronous>, transform_indices = @transform_1, window_bounds = array<i64: 2048, 512>}, {pipeline_mode = #tpu.pipeline_mode<synchronous>, transform_indices = @transform_2, window_bounds = array<i64: 1, 512>}, {transform_indices = @transform_3, window_bounds = array<i64: 32, 512>}, {pipeline_mode = #tpu.pipeline_mode<synchronous>, transform_indices = @transform_4, window_bounds = array<i64: 1, 512>}, {pipeline_mode = #tpu.pipeline_mode<synchronous>, transform_indices = @transform_5, window_bounds = array<i64: 1, 512>}, {transform_indices = @transform_6, window_bounds = array<i64: 32, 512>}]} {
    %c0 = arith.constant 0 : index
    %c0_0 = arith.constant 0 : index
    %0 = vector.load %arg1[%c0, %c0_0] : memref<32x2048xbf16, #tpu.memory_space<vmem>>, vector<32x2048xbf16>
    %c0_1 = arith.constant 0 : index
    %c0_2 = arith.constant 0 : index
    %1 = vector.load %arg2[%c0_1, %c0_2] : memref<2048x512xbf16, #tpu.memory_space<vmem>>, vector<2048x512xbf16>
    %cst = arith.constant dense<0.000000e+00> : vector<32x512xf32>
    %2 = tpu.matmul %0, %1, %cst {dimension_numbers = #tpu.dot_dimension_numbers<[1], [0], [0], [1], [0, 0, 1, 1], [], []>} : vector<32x2048xbf16>, vector<2048x512xbf16>, vector<32x512xf32> -> vector<32x512xf32>
    %c0_3 = arith.constant 0 : index
    %c0_4 = arith.constant 0 : index
    %3 = vector.load %arg3[%c0_3, %c0_4] : memref<1x512xf32, #tpu.memory_space<vmem>>, vector<1x512xf32>
    %4 = vector.broadcast %3 : vector<1x512xf32> to vector<32x512xf32>
    %5 = arith.addf %2, %4 : vector<32x512xf32>
    %c0_5 = arith.constant 0 : index
    %c0_6 = arith.constant 0 : index
    %6 = vector.load %arg4[%c0_5, %c0_6] : memref<32x512xbf16, #tpu.memory_space<vmem>>, vector<32x512xbf16>
    %7 = arith.extf %6 : vector<32x512xbf16> to vector<32x512xf32>
    %8 = arith.addf %5, %7 : vector<32x512xf32>
    %cst_7 = arith.constant dense<0.000000e+00> : vector<32xf32>
    %9 = vector.multi_reduction <add>, %8, %cst_7 [1] : vector<32x512xf32> to vector<32xf32>
    %10 = vector.shape_cast %9 : vector<32xf32> to vector<32x1xf32>
    %cst_8 = arith.constant 5.120000e+02 : f32
    %11 = vector.broadcast %cst_8 : f32 to vector<32x1xf32>
    %12 = arith.divf %10, %11 : vector<32x1xf32>
    %13 = vector.broadcast %12 : vector<32x1xf32> to vector<32x512xf32>
    %14 = arith.subf %8, %13 : vector<32x512xf32>
    %15 = arith.mulf %14, %14 : vector<32x512xf32>
    %cst_9 = arith.constant dense<0.000000e+00> : vector<32xf32>
    %16 = vector.multi_reduction <add>, %15, %cst_9 [1] : vector<32x512xf32> to vector<32xf32>
    %17 = vector.shape_cast %16 : vector<32xf32> to vector<32x1xf32>
    %cst_10 = arith.constant 5.120000e+02 : f32
    %18 = vector.broadcast %cst_10 : f32 to vector<32x1xf32>
    %19 = arith.divf %17, %18 : vector<32x1xf32>
    %cst_11 = arith.constant 9.99999974E-6 : f32
    %20 = vector.broadcast %cst_11 : f32 to vector<32x1xf32>
    %21 = arith.addf %19, %20 : vector<32x1xf32>
    %22 = math.rsqrt %21 : vector<32x1xf32>
    %23 = vector.broadcast %12 : vector<32x1xf32> to vector<32x512xf32>
    %24 = arith.subf %8, %23 : vector<32x512xf32>
    %25 = vector.broadcast %22 : vector<32x1xf32> to vector<32x512xf32>
    %26 = arith.mulf %24, %25 : vector<32x512xf32>
    %c0_12 = arith.constant 0 : index
    %c0_13 = arith.constant 0 : index
    %27 = vector.load %arg5[%c0_12, %c0_13] : memref<1x512xf32, #tpu.memory_space<vmem>>, vector<1x512xf32>
    %28 = vector.broadcast %27 : vector<1x512xf32> to vector<32x512xf32>
    %29 = arith.mulf %26, %28 : vector<32x512xf32>
    %c0_14 = arith.constant 0 : index
    %c0_15 = arith.constant 0 : index
    %30 = vector.load %arg6[%c0_14, %c0_15] : memref<1x512xf32, #tpu.memory_space<vmem>>, vector<1x512xf32>
    %31 = vector.broadcast %30 : vector<1x512xf32> to vector<32x512xf32>
    %32 = arith.addf %29, %31 : vector<32x512xf32>
    %33 = arith.truncf %32 : vector<32x512xf32> to vector<32x512xbf16>
    %c0_16 = arith.constant 0 : index
    %c0_17 = arith.constant 0 : index
    %34 = vector.load %arg7[%c0_16, %c0_17] : memref<32x512xbf16, #tpu.memory_space<vmem>>, vector<32x512xbf16>
    tpu.vector_store %arg7[%c0_16, %c0_17], %33 {strides = array<i32>} : memref<32x512xbf16, #tpu.memory_space<vmem>>, vector<32x512xbf16>,
    return
  }
  func.func @transform_0(%arg0: i32) -> (i32, i32) {
    %c0_i32 = arith.constant 0 : i32
    %c0_i32_0 = arith.constant 0 : i32
    return %arg0, %c0_i32 : i32, i32
  }
  func.func @transform_1(%arg0: i32) -> (i32, i32) {
    %c0_i32 = arith.constant 0 : i32
    %c0_i32_0 = arith.constant 0 : i32
    %c0_i32_1 = arith.constant 0 : i32
    return %c0_i32, %c0_i32_0 : i32, i32
  }
  func.func @transform_2(%arg0: i32) -> (i32, i32) {
    %c0_i32 = arith.constant 0 : i32
    %c0_i32_0 = arith.constant 0 : i32
    %c0_i32_1 = arith.constant 0 : i32
    return %c0_i32, %c0_i32_0 : i32, i32
  }
  func.func @transform_3(%arg0: i32) -> (i32, i32) {
    %c0_i32 = arith.constant 0 : i32
    %c0_i32_0 = arith.constant 0 : i32
    return %arg0, %c0_i32 : i32, i32
  }
  func.func @transform_4(%arg0: i32) -> (i32, i32) {
    %c0_i32 = arith.constant 0 : i32
    %c0_i32_0 = arith.constant 0 : i32
    %c0_i32_1 = arith.constant 0 : i32
    return %c0_i32, %c0_i32_0 : i32, i32
  }
  func.func @transform_5(%arg0: i32) -> (i32, i32) {
    %c0_i32 = arith.constant 0 : i32
    %c0_i32_0 = arith.constant 0 : i32
    %c0_i32_1 = arith.constant 0 : i32
    return %c0_i32, %c0_i32_0 : i32, i32
  }
  func.func @transform_6(%arg0: i32) -> (i32, i32) {
    %c0_i32 = arith.constant 0 : i32
    %c0_i32_0 = arith.constant 0 : i32
    return %arg0, %c0_i32 : i32, i32
  }
}

module attributes {stable_mosaic.version = 11 : i64} {
  func.func @_layernorm_kernel(%arg0: i32, %arg1: memref<32x512xbf16, #tpu.memory_space<vmem>>, %arg2: memref<1x512xf32, #tpu.memory_space<vmem>>, %arg3: memref<1x512xf32, #tpu.memory_space<vmem>>, %arg4: memref<32x512xf32, #tpu.memory_space<vmem>>) attributes {dimension_semantics = [#tpu.dimension_semantics<parallel>], iteration_bounds = array<i64: 1>, scalar_prefetch = 0 : i64, scratch_operands = 0 : i64, tpu.core_type = #tpu.core_type<tc>, window_params = [{transform_indices = @transform_0, window_bounds = array<i64: 32, 512>}, {pipeline_mode = #tpu.pipeline_mode<synchronous>, transform_indices = @transform_1, window_bounds = array<i64: 1, 512>}, {pipeline_mode = #tpu.pipeline_mode<synchronous>, transform_indices = @transform_2, window_bounds = array<i64: 1, 512>}, {transform_indices = @transform_3, window_bounds = array<i64: 32, 512>}]} {
    %c0 = arith.constant 0 : index
    %c0_0 = arith.constant 0 : index
    %0 = vector.load %arg1[%c0, %c0_0] : memref<32x512xbf16, #tpu.memory_space<vmem>>, vector<32x512xbf16>
    %1 = arith.extf %0 : vector<32x512xbf16> to vector<32x512xf32>
    %cst = arith.constant dense<0.000000e+00> : vector<32xf32>
    %2 = vector.multi_reduction <add>, %1, %cst [1] : vector<32x512xf32> to vector<32xf32>
    %3 = vector.shape_cast %2 : vector<32xf32> to vector<32x1xf32>
    %cst_1 = arith.constant 5.120000e+02 : f32
    %4 = vector.broadcast %cst_1 : f32 to vector<32x1xf32>
    %5 = arith.divf %3, %4 : vector<32x1xf32>
    %6 = vector.broadcast %5 : vector<32x1xf32> to vector<32x512xf32>
    %7 = arith.subf %1, %6 : vector<32x512xf32>
    %8 = arith.mulf %7, %7 : vector<32x512xf32>
    %cst_2 = arith.constant dense<0.000000e+00> : vector<32xf32>
    %9 = vector.multi_reduction <add>, %8, %cst_2 [1] : vector<32x512xf32> to vector<32xf32>
    %10 = vector.shape_cast %9 : vector<32xf32> to vector<32x1xf32>
    %cst_3 = arith.constant 5.120000e+02 : f32
    %11 = vector.broadcast %cst_3 : f32 to vector<32x1xf32>
    %12 = arith.divf %10, %11 : vector<32x1xf32>
    %cst_4 = arith.constant 9.99999974E-6 : f32
    %13 = vector.broadcast %cst_4 : f32 to vector<32x1xf32>
    %14 = arith.addf %12, %13 : vector<32x1xf32>
    %15 = math.rsqrt %14 : vector<32x1xf32>
    %16 = vector.broadcast %5 : vector<32x1xf32> to vector<32x512xf32>
    %17 = arith.subf %1, %16 : vector<32x512xf32>
    %18 = vector.broadcast %15 : vector<32x1xf32> to vector<32x512xf32>
    %19 = arith.mulf %17, %18 : vector<32x512xf32>
    %c0_5 = arith.constant 0 : index
    %c0_6 = arith.constant 0 : index
    %20 = vector.load %arg2[%c0_5, %c0_6] : memref<1x512xf32, #tpu.memory_space<vmem>>, vector<1x512xf32>
    %21 = vector.broadcast %20 : vector<1x512xf32> to vector<32x512xf32>
    %22 = arith.mulf %19, %21 : vector<32x512xf32>
    %c0_7 = arith.constant 0 : index
    %c0_8 = arith.constant 0 : index
    %23 = vector.load %arg3[%c0_7, %c0_8] : memref<1x512xf32, #tpu.memory_space<vmem>>, vector<1x512xf32>
    %24 = vector.broadcast %23 : vector<1x512xf32> to vector<32x512xf32>
    %25 = arith.addf %22, %24 : vector<32x512xf32>
    %c0_9 = arith.constant 0 : index
    %c0_10 = arith.constant 0 : index
    %26 = vector.load %arg4[%c0_9, %c0_10] : memref<32x512xf32, #tpu.memory_space<vmem>>, vector<32x512xf32>
    tpu.vector_store %arg4[%c0_9, %c0_10], %25 {strides = array<i32>} : memref<32x512xf32, #tpu.memory_space<vmem>>, vector<32x512xf32>,
    return
  }
  func.func @transform_0(%arg0: i32) -> (i32, i32) {
    %c0_i32 = arith.constant 0 : i32
    %c0_i32_0 = arith.constant 0 : i32
    return %arg0, %c0_i32 : i32, i32
  }
  func.func @transform_1(%arg0: i32) -> (i32, i32) {
    %c0_i32 = arith.constant 0 : i32
    %c0_i32_0 = arith.constant 0 : i32
    %c0_i32_1 = arith.constant 0 : i32
    return %c0_i32, %c0_i32_0 : i32, i32
  }
  func.func @transform_2(%arg0: i32) -> (i32, i32) {
    %c0_i32 = arith.constant 0 : i32
    %c0_i32_0 = arith.constant 0 : i32
    %c0_i32_1 = arith.constant 0 : i32
    return %c0_i32, %c0_i32_0 : i32, i32
  }
  func.func @transform_3(%arg0: i32) -> (i32, i32) {
    %c0_i32 = arith.constant 0 : i32
    %c0_i32_0 = arith.constant 0 : i32
    return %arg0, %c0_i32 : i32, i32
  }
}

</mosaic_0001>

<llo_original>
// kernel: custom-call
$region0: #{custom-call}
  %s0 = inlined_call_operand.vmem [shape: u32[16], index: 0, kind: output, shape index: {}]

// kernel: custom-call.2
$region0: #{custom-call.2}
  %s0 = inlined_call_operand.vmem [shape: u32[8], index: 0, kind: output, shape index: {}]

// kernel: patient_rnn_forward.2
$region0: #{patient_rnn_forward.2}
  #allocation0 [shape = 'u32[]', space=smem, size = 0x4, offset = 0x4, fixed_abs, tag = 'smem constant byte address 0x4 - core index']
  #allocation1 [shape = 'u32[144,128]{1,0:T(1,128)}', space=vmem, size = 0x12000, scoped, tag = 'internal scratch']
  %s0 = inlined_call_operand.vmem [shape: f32[32,512], index: 0, kind: input, shape index: {}]
  %s1 = inlined_call_operand.vmem [shape: f32[1,512], index: 1, kind: input, shape index: {}]
  %s2 = inlined_call_operand.vmem [shape: f32[1,512], index: 2, kind: input, shape index: {}]
  %s3 = inlined_call_operand.vmem [shape: bf16[32,512], index: 3, kind: output, shape index: {}]
  %s4 = sld [smem:[#allocation0]]
  $region22: #{patient_rnn_forward.2} parent=0
    _
  %s6 = ssub.s32 1, %s4
  %s7 = scalar_select 0, %s6, %s4
  // Predicated region
  $region2: #{patient_rnn_forward.2} parent=0 // pred_check
    _
  $region3: #{patient_rnn_forward.2} parent=0 // pred_check_branch
    %9 = sbr.rel (0) target = $region5
  $region4: #{patient_rnn_forward.2} parent=0 // pred_region
    _
  $region5: #{patient_rnn_forward.2} parent=0 // pred_fallthru
    _
  // Predicated region
  $region6: #{patient_rnn_forward.2} parent=0 // pred_check
    _
  $region7: #{patient_rnn_forward.2} parent=0 // pred_check_branch
    %11 = sbr.rel (0) target = $region9
  $region8: #{patient_rnn_forward.2} parent=0 // pred_region
    _
  $region9: #{patient_rnn_forward.2} parent=0 // pred_fallthru
    _
  // Predicated region
  $region10: #{patient_rnn_forward.2} parent=0 // pred_check
    _
  $region11: #{patient_rnn_forward.2} parent=0 // pred_check_branch
    %13 = sbr.rel (0) target = $region13
  $region12: #{patient_rnn_forward.2} parent=0 // pred_region
    _
  $region13: #{patient_rnn_forward.2} parent=0 // pred_fallthru
    _
  %v14 = vld [vmem:[%s0] sm:$0xff]
  %v15 = vld [vmem:[%s0 + $0x8] sm:$0xff]
  %v16 = vld [vmem:[%s0 + $0x10] sm:$0xff]
  %v17 = vld [vmem:[%s0 + $0x18] sm:$0xff]
  %v18 = vld [vmem:[%s0 + $0x20] sm:$0xff]
  %v19 = vld [vmem:[%s0 + $0x28] sm:$0xff]
  %v20 = vld [vmem:[%s0 + $0x30] sm:$0xff]
  %v21 = vld [vmem:[%s0 + $0x38] sm:$0xff]
  %v22 = vld [vmem:[%s0 + $0x40] sm:$0xff]
  %v23 = vld [vmem:[%s0 + $0x48] sm:$0xff]
  %v24 = vld [vmem:[%s0 + $0x50] sm:$0xff]
  %v25 = vld [vmem:[%s0 + $0x58] sm:$0xff]
  %v26 = vld [vmem:[%s0 + $0x60] sm:$0xff]
  %v27 = vld [vmem:[%s0 + $0x68] sm:$0xff]
  %v28 = vld [vmem:[%s0 + $0x70] sm:$0xff]
  %v29 = vld [vmem:[%s0 + $0x78] sm:$0xff]
  %v30 = vadd.f32 %v14, %v15
  %v31 = vadd.f32 %v30, %v16
  %v32 = vadd.f32 %v31, %v17
  %33 = vadd.xlane.f32.xlu0 %v32
  %v34 = vpop.xlane.xlu0 %33
  %v35 = vadd.f32 %v18, %v19
  %v36 = vadd.f32 %v35, %v20
  %v37 = vadd.f32 %v36, %v21
  %38 = vadd.xlane.f32.xlu0 %v37
  %v39 = vpop.xlane.xlu0 %38
  %v40 = vadd.f32 %v22, %v23
  %v41 = vadd.f32 %v40, %v24
  %v42 = vadd.f32 %v41, %v25
  %43 = vadd.xlane.f32.xlu0 %v42
  %v44 = vpop.xlane.xlu0 %43
  %v45 = vadd.f32 %v26, %v27
  %v46 = vadd.f32 %v45, %v28
  %v47 = vadd.f32 %v46, %v29
  %48 = vadd.xlane.f32.xlu0 %v47
  %v49 = vpop.xlane.xlu0 %48
  %v50 = vrcp.pop 512.0
  %v51 = vmul.f32 %v34, %v50
  %v52 = vmul.f32 %v39, %v50
  %v53 = vmul.f32 %v44, %v50
  %v54 = vmul.f32 %v49, %v50
  %v55 = vsub.f32 %v14, %v51
  %v56 = vsub.f32 %v15, %v51
  %v57 = vsub.f32 %v16, %v51
  %v58 = vsub.f32 %v17, %v51
  %v59 = vsub.f32 %v18, %v52
  %v60 = vsub.f32 %v19, %v52
  %v61 = vsub.f32 %v20, %v52
  %v62 = vsub.f32 %v21, %v52
  %v63 = vsub.f32 %v22, %v53
  %v64 = vsub.f32 %v23, %v53
  %v65 = vsub.f32 %v24, %v53
  %v66 = vsub.f32 %v25, %v53
  %v67 = vsub.f32 %v26, %v54
  %v68 = vsub.f32 %v27, %v54
  %v69 = vsub.f32 %v28, %v54
  %v70 = vsub.f32 %v29, %v54
  %v71 = vmul.f32 %v55, %v55
  %v72 = vmul.f32 %v56, %v56
  %v73 = vmul.f32 %v57, %v57
  %v74 = vmul.f32 %v58, %v58
  %v75 = vmul.f32 %v59, %v59
  %v76 = vmul.f32 %v60, %v60
  %v77 = vmul.f32 %v61, %v61
  %v78 = vmul.f32 %v62, %v62
  %v79 = vmul.f32 %v63, %v63
  %v80 = vmul.f32 %v64, %v64
  %v81 = vmul.f32 %v65, %v65
  %v82 = vmul.f32 %v66, %v66
  %v83 = vmul.f32 %v67, %v67
  %v84 = vmul.f32 %v68, %v68
  %v85 = vmul.f32 %v69, %v69
  %v86 = vmul.f32 %v70, %v70
  %v87 = vadd.f32 %v71, %v72
  %v88 = vadd.f32 %v87, %v73
  %v89 = vadd.f32 %v88, %v74
  %90 = vadd.xlane.f32.xlu0 %v89
  %v91 = vpop.xlane.xlu0 %90
  %v92 = vadd.f32 %v75, %v76
  %v93 = vadd.f32 %v92, %v77
  %v94 = vadd.f32 %v93, %v78
  %95 = vadd.xlane.f32.xlu0 %v94
  %v96 = vpop.xlane.xlu0 %95
  %v97 = vadd.f32 %v79, %v80
  %v98 = vadd.f32 %v97, %v81
  %v99 = vadd.f32 %v98, %v82
  %100 = vadd.xlane.f32.xlu0 %v99
  %v101 = vpop.xlane.xlu0 %100
  %v102 = vadd.f32 %v83, %v84
  %v103 = vadd.f32 %v102, %v85
  %v104 = vadd.f32 %v103, %v86
  %105 = vadd.xlane.f32.xlu0 %v104
  %v106 = vpop.xlane.xlu0 %105
  %v107 = vmul.f32 %v91, %v50
  %v108 = vmul.f32 %v96, %v50
  %v109 = vmul.f32 %v101, %v50
  %v110 = vmul.f32 %v106, %v50
  %v111 = vadd.f32 %v107, 1e-05
  %v112 = vadd.f32 %v108, 1e-05
  %v113 = vadd.f32 %v109, 1e-05
  %v114 = vadd.f32 %v110, 1e-05
  %v115 = vrsqrt.pop %v111
  %v116 = vrsqrt.pop %v112
  %v117 = vrsqrt.pop %v113
  %v118 = vrsqrt.pop %v114
  %v119 = vmul.f32 %v55, %v115
  %v120 = vmul.f32 %v56, %v115
  %v121 = vmul.f32 %v57, %v115
  %v122 = vmul.f32 %v58, %v115
  %v123 = vmul.f32 %v59, %v116
  %v124 = vmul.f32 %v60, %v116
  %v125 = vmul.f32 %v61, %v116
  %v126 = vmul.f32 %v62, %v116
  %v127 = vmul.f32 %v63, %v117
  %v128 = vmul.f32 %v64, %v117
  %v129 = vmul.f32 %v65, %v117
  %v130 = vmul.f32 %v66, %v117
  %v131 = vmul.f32 %v67, %v118
  %v132 = vmul.f32 %v68, %v118
  %v133 = vmul.f32 %v69, %v118
  %v134 = vmul.f32 %v70, %v118
  %v135 = vld [vmem:[%s1] sm:$0xf]
  %v137 = vlaneseq
  %v138 = vshrl.u32 %v137, 7
  %v139 = vsub.s32 0, %v138
  %v140 = vrot.slane %v135, %v139
  %v141 = vlaneseq
  %v142 = vshrl.u32 %v141, 7
  %v143 = vsub.s32 1, %v142
  %v144 = vrot.slane %v135, %v143
  %v145 = vlaneseq
  %v146 = vshrl.u32 %v145, 7
  %v147 = vsub.s32 2, %v146
  %v148 = vrot.slane %v135, %v147
  %v149 = vlaneseq
  %v150 = vshrl.u32 %v149, 7
  %v151 = vsub.s32 3, %v150
  %v152 = vrot.slane %v135, %v151
  %v157 = vmul.f32 %v119, %v140
  %v158 = vmul.f32 %v120, %v144
  %v159 = vmul.f32 %v121, %v148
  %v160 = vmul.f32 %v122, %v152
  %v161 = vmul.f32 %v123, %v140
  %v162 = vmul.f32 %v124, %v144
  %v163 = vmul.f32 %v125, %v148
  %v164 = vmul.f32 %v126, %v152
  %v165 = vmul.f32 %v127, %v140
  %v166 = vmul.f32 %v128, %v144
  %v167 = vmul.f32 %v129, %v148
  %v168 = vmul.f32 %v130, %v152
  %v169 = vmul.f32 %v131, %v140
  %v170 = vmul.f32 %v132, %v144
  %v171 = vmul.f32 %v133, %v148
  %v172 = vmul.f32 %v134, %v152
  %v173 = vld [vmem:[%s2] sm:$0xf]
  %v175 = vlaneseq
  %v176 = vshrl.u32 %v175, 7
  %v177 = vsub.s32 0, %v176
  %v178 = vrot.slane %v173, %v177
  %v179 = vlaneseq
  %v180 = vshrl.u32 %v179, 7
  %v181 = vsub.s32 1, %v180
  %v182 = vrot.slane %v173, %v181
  %v183 = vlaneseq
  %v184 = vshrl.u32 %v183, 7
  %v185 = vsub.s32 2, %v184
  %v186 = vrot.slane %v173, %v185
  %v187 = vlaneseq
  %v188 = vshrl.u32 %v187, 7
  %v189 = vsub.s32 3, %v188
  %v190 = vrot.slane %v173, %v189
  %v195 = vadd.f32 %v157, %v178
  %v196 = vadd.f32 %v158, %v182
  %v197 = vadd.f32 %v159, %v186
  %v198 = vadd.f32 %v160, %v190
  %v199 = vadd.f32 %v161, %v178
  %v200 = vadd.f32 %v162, %v182
  %v201 = vadd.f32 %v163, %v186
  %v202 = vadd.f32 %v164, %v190
  %v203 = vadd.f32 %v165, %v178
  %v204 = vadd.f32 %v166, %v182
  %v205 = vadd.f32 %v167, %v186
  %v206 = vadd.f32 %v168, %v190
  %v207 = vadd.f32 %v169, %v178
  %v208 = vadd.f32 %v170, %v182
  %v209 = vadd.f32 %v171, %v186
  %v210 = vadd.f32 %v172, %v190
  %v211 = vpack.c.bf16 %v199, %v195
  %v212 = vpack.c.bf16 %v200, %v196
  %v213 = vpack.c.bf16 %v201, %v197
  %v214 = vpack.c.bf16 %v202, %v198
  %v215 = vpack.c.bf16 %v207, %v203
  %v216 = vpack.c.bf16 %v208, %v204
  %v217 = vpack.c.bf16 %v209, %v205
  %v218 = vpack.c.bf16 %v210, %v206
  %v227 = vunpack.c.l.b16 %v211
  %v228 = vunpack.c.l.b16 %v212
  %v229 = vunpack.c.l.b16 %v213
  %v230 = vunpack.c.l.b16 %v214
  %v231 = vunpack.c.h.b16 %v211
  %v232 = vunpack.c.h.b16 %v212
  %v233 = vunpack.c.h.b16 %v213
  %v234 = vunpack.c.h.b16 %v214
  %v235 = vunpack.c.l.b16 %v215
  %v236 = vunpack.c.l.b16 %v216
  %v237 = vunpack.c.l.b16 %v217
  %v238 = vunpack.c.l.b16 %v218
  %v239 = vunpack.c.h.b16 %v215
  %v240 = vunpack.c.h.b16 %v216
  %v241 = vunpack.c.h.b16 %v217
  %v242 = vunpack.c.h.b16 %v218
  %v243 = vpack.c.b16 %v228, %v227
  %v244 = vpack.c.b16 %v230, %v229
  %v245 = vpack.c.b16 %v232, %v231
  %v246 = vpack.c.b16 %v234, %v233
  %v247 = vpack.c.b16 %v236, %v235
  %v248 = vpack.c.b16 %v238, %v237
  %v249 = vpack.c.b16 %v240, %v239
  %v250 = vpack.c.b16 %v242, %v241
  %259 = vst [vmem:[%s3] sm:$0xff] %v243
  %260 = vst [vmem:[%s3 + $0x8] sm:$0xff] %v244
  %261 = vst [vmem:[%s3 + $0x10] sm:$0xff] %v245
  %262 = vst [vmem:[%s3 + $0x18] sm:$0xff] %v246
  %263 = vst [vmem:[%s3 + $0x20] sm:$0xff] %v247
  %264 = vst [vmem:[%s3 + $0x28] sm:$0xff] %v248
  %265 = vst [vmem:[%s3 + $0x30] sm:$0xff] %v249
  %266 = vst [vmem:[%s3 + $0x38] sm:$0xff] %v250
  // Predicated region
  $region14: #{patient_rnn_forward.2} parent=0 // pred_check
    _
  $region15: #{patient_rnn_forward.2} parent=0 // pred_check_branch
    %268 = sbr.rel (0) target = $region17
  $region16: #{patient_rnn_forward.2} parent=0 // pred_region
    _
  $region17: #{patient_rnn_forward.2} parent=0 // pred_fallthru
    _
  // Predicated region
  $region18: #{patient_rnn_forward.2} parent=0 // pred_check
    _
  $region19: #{patient_rnn_forward.2} parent=0 // pred_check_branch
    %270 = sbr.rel (0) target = $region21
  $region20: #{patient_rnn_forward.2} parent=0 // pred_region
    _
  $region21: #{patient_rnn_forward.2} parent=0 // pred_fallthru
    _

// kernel: closed_call.22
$region0: #{closed_call.22}
  #allocation0 [shape = 'u32[]', space=smem, size = 0x4, offset = 0x4, fixed_abs, tag = 'smem constant byte address 0x4 - core index']
  #allocation1 [shape = 'u32[144,128]{1,0:T(1,128)}', space=vmem, size = 0x12000, scoped, tag = 'internal scratch']
  %s0 = inlined_call_operand.vmem [shape: bf16[32,512], index: 0, kind: input, shape index: {}]
  %s1 = inlined_call_operand.vmem [shape: bf16[512,1536], index: 1, kind: input, shape index: {}]
  %s2 = inlined_call_operand.vmem [shape: f32[1,1536], index: 2, kind: input, shape index: {}]
  %s3 = inlined_call_operand.vmem [shape: bf16[32,1536], index: 3, kind: output, shape index: {}]
  %s4 = sld [smem:[#allocation0]]
  $region87: #{closed_call.22} parent=0
    _
  %s6 = ssub.s32 1, %s4
  %s7 = scalar_select 0, %s6, %s4
  $region1: #{closed_call.22} parent=0
    #allocation2 [shape = 'u8[1048576]{0}', space=vmem, size = 0x100000, scoped, tag = 'input window, operand 1']
    #allocation3 [shape = 'u8[65536]{0}', space=vmem, size = 0x10000, scoped, tag = 'output window, operand 0']
    loop: start=0, step=1, limit=5
    $region2: #{closed_call.22} parent=1 // loop_pre_header
      _
    $region3: #{closed_call.22} parent=1 // loop_header
      %s9 = sphi 0, %s13
      %p10 = scmp.ge.s32.totalorder %s9, 5
      %s16 = sphi 0, %s28
      %s17 = sphi 0, %s24
      %s18 = sphi 0, %s16
      %s19 = sphi 0, %s17
      %s20 = sphi 0, %s18
      %s21 = sphi 0, %s19
      %s31 = sphi 0, %s33
      %s34 = sphi 0, %s31
      %s35 = sphi 0, %s34
      %s51 = sphi 0, %s35
      %s57 = sphi 0, %s59
      %s60 = sphi 0, %s57
      %s61 = sphi 0, %s60
      %s77 = sphi 0, %s61
      %s83 = sphi 0, %s85
      %s86 = sphi 0, %s83
      %s87 = sphi 0, %s86
      %s103 = sphi 0, %s87
      %s111 = sphi 0, %s113
      %s114 = sphi 0, %s111
      %s115 = sphi 0, %s114
      %s131 = sphi 0, %s115
    $region4: #{closed_call.22} parent=1 // loop_header_branch
      %12 = sbr.rel (%p10) target = $region8
    $region5: #{closed_call.22} parent=1 // loop_body
      %s14 = ssub.s32 %s9, 1
      %s15 = ssub.s32 %s9, 2
      %s22 = sadd.s32 1, %s17
      %p23 = scmp.ge.s32.totalorder %s22, 3
      %s24 = scalar_select %p23, 0, %s22
      %s25 = sadd.s32 1, %s16
      %s26 = scalar_select %p23, %s25, %s16
      %p27 = scmp.ge.s32.totalorder %s26, 1
      %s28 = scalar_select %p27, 0, %s26
      %s29 = ssub.s32 %s16, %s28
      %p30 = scmp.eq.s32.totalorder %s29, 0
      %s32 = sadd.s32 %s31, 1
      %s33 = scalar_select %p30, %s31, %s32
      %p36 = pneg %p30
      %p37 = scmp.eq.s32.totalorder %s9, 2
      %p38 = por %p36, %p37
      %p39 = scmp.ne.s32.totalorder %s31, %s34
      %p40 = scmp.eq.s32.totalorder %s9, 0
      %p41 = por %p39, %p40
      %p42 = scmp.ne.s32.totalorder %s31, %s34
      %p43 = scmp.eq.s32.totalorder %s14, 2
      %p44 = por %p42, %p43
      %p45 = scmp.ne.s32.totalorder %s34, %s35
      %p46 = scmp.eq.s32.totalorder %s14, 0
      %p47 = por %p45, %p46
      %p48 = scmp.ne.s32.totalorder %s34, %s35
      %p49 = scmp.eq.s32.totalorder %s15, 2
      %p50 = por %p48, %p49
      %p52 = scmp.ne.s32.totalorder %s35, %s51
      %p53 = scmp.eq.s32.totalorder %s15, 0
      %p54 = por %p52, %p53
      %s55 = ssub.s32 %s17, %s24
      %p56 = scmp.eq.s32.totalorder %s55, 0
      %s58 = sadd.s32 %s57, 1
      %s59 = scalar_select %p56, %s57, %s58
      %p62 = pneg %p56
      %p63 = scmp.eq.s32.totalorder %s9, 2
      %p64 = por %p62, %p63
      %p65 = scmp.ne.s32.totalorder %s57, %s60
      %p66 = scmp.eq.s32.totalorder %s9, 0
      %p67 = por %p65, %p66
      %p68 = scmp.ne.s32.totalorder %s57, %s60
      %p69 = scmp.eq.s32.totalorder %s14, 2
      %p70 = por %p68, %p69
      %p71 = scmp.ne.s32.totalorder %s60, %s61
      %p72 = scmp.eq.s32.totalorder %s14, 0
      %p73 = por %p71, %p72
      %p74 = scmp.ne.s32.totalorder %s60, %s61
      %p75 = scmp.eq.s32.totalorder %s15, 2
      %p76 = por %p74, %p75
      %p78 = scmp.ne.s32.totalorder %s61, %s77
      %p79 = scmp.eq.s32.totalorder %s15, 0
      %p80 = por %p78, %p79
      %s81 = ssub.s32 %s17, %s24
      %p82 = scmp.eq.s32.totalorder %s81, 0
      %s84 = sadd.s32 %s83, 1
      %s85 = scalar_select %p82, %s83, %s84
      %p88 = pneg %p82
      %p89 = scmp.eq.s32.totalorder %s9, 2
      %p90 = por %p88, %p89
      %p91 = scmp.ne.s32.totalorder %s83, %s86
      %p92 = scmp.eq.s32.totalorder %s9, 0
      %p93 = por %p91, %p92
      %p94 = scmp.ne.s32.totalorder %s83, %s86
      %p95 = scmp.eq.s32.totalorder %s14, 2
      %p96 = por %p94, %p95
      %p97 = scmp.ne.s32.totalorder %s86, %s87
      %p98 = scmp.eq.s32.totalorder %s14, 0
      %p99 = por %p97, %p98
      %p100 = scmp.ne.s32.totalorder %s86, %s87
      %p101 = scmp.eq.s32.totalorder %s15, 2
      %p102 = por %p100, %p101
      %p104 = scmp.ne.s32.totalorder %s87, %s103
      %p105 = scmp.eq.s32.totalorder %s15, 0
      %p106 = por %p104, %p105
      %s107 = ssub.s32 %s16, %s28
      %s108 = ssub.s32 %s17, %s24
      %s109 = sor.u32 %s107, %s108
      %p110 = scmp.eq.s32.totalorder %s109, 0
      %s112 = sadd.s32 %s111, 1
      %s113 = scalar_select %p110, %s111, %s112
      %p116 = pneg %p110
      %p117 = scmp.eq.s32.totalorder %s9, 2
      %p118 = por %p116, %p117
      %p119 = scmp.ne.s32.totalorder %s111, %s114
      %p120 = scmp.eq.s32.totalorder %s9, 0
      %p121 = por %p119, %p120
      %p122 = scmp.ne.s32.totalorder %s111, %s114
      %p123 = scmp.eq.s32.totalorder %s14, 2
      %p124 = por %p122, %p123
      %p125 = scmp.ne.s32.totalorder %s114, %s115
      %p126 = scmp.eq.s32.totalorder %s14, 0
      %p127 = por %p125, %p126
      %p128 = scmp.ne.s32.totalorder %s114, %s115
      %p129 = scmp.eq.s32.totalorder %s15, 2
      %p130 = por %p128, %p129
      %p132 = scmp.ne.s32.totalorder %s115, %s131
      %p133 = scmp.eq.s32.totalorder %s15, 0
      %p134 = por %p132, %p133
      %p135 = scmp.le.s32.totalorder 1, %s9
      %p136 = scmp.lt.s32.totalorder %s9, 4
      %p137 = pnand %p135, %p136
      %p138 = pneg %p137
      // Predicated region
      $region9: #{closed_call.22} parent=5 // pred_check
        _
      $region10: #{closed_call.22} parent=5 // pred_check_branch
        %140 = sbr.rel (%p137) target = $region12
      $region11: #{closed_call.22} parent=5 // pred_region
        %s141 = ssub.s32 %s9, 1
        // Predicated region
        $region13: #{closed_call.22} parent=11 // pred_check
          %p142 = pneg %p47
        $region14: #{closed_call.22} parent=11 // pred_check_branch
          %144 = sbr.rel (%p142) target = $region16
        $region15: #{closed_call.22} parent=11 // pred_region
          %s145 = smul.u32 4, %s18
          %p146 = scmp.lt.s32.totalorder %s145, 3
          %s147 = scalar_select %p146, %s145, 3
          %s148 = smul.addr %s147, 4
          %s149 = smul.addr %s148, 4
          %s150 = scalar_lea.vmem %s0, %s149
          %s151 = smul.u32 4, %s18
        $region16: #{closed_call.22} parent=11 // pred_fallthru
          _
      $region12: #{closed_call.22} parent=5 // pred_fallthru
        _
      %p152 = scmp.lt.s32.totalorder %s9, 3
      // Predicated region
      $region17: #{closed_call.22} parent=5 // pred_check
        %p153 = pneg %p152
      $region18: #{closed_call.22} parent=5 // pred_check_branch
        %155 = sbr.rel (%p153) target = $region20
      $region19: #{closed_call.22} parent=5 // pred_region
        // Predicated region
        $region21: #{closed_call.22} parent=19 // pred_check
          %p156 = pneg %p67
        $region22: #{closed_call.22} parent=19 // pred_check_branch
          %158 = sbr.rel (%p156) target = $region24
        $region23: #{closed_call.22} parent=19 // pred_region
          %s159 = sand.u32 %s57, 1
          %s160 = sand.u32 %s57, 1
          %s161 = smul.addr %s160, 1024
          %s162 = scalar_lea.vmem [#allocation2], %s161
          %s163 = smul.u32 4, %s17
          %s164 = smul.addr %s163, 4
          %s165 = scalar_lea.vmem %s1, %s164
          // Predicated region
          $region25: #{closed_call.22} parent=23 // pred_check
            _
          $region26: #{closed_call.22} parent=23 // pred_check_branch
            %167 = sbr.rel (0) target = $region28
          $region27: #{closed_call.22} parent=23 // pred_region
            // Predicated region
            $region29: #{closed_call.22} parent=27 // pred_check
              _
            $region30: #{closed_call.22} parent=27 // pred_check_branch
              %169 = sbr.rel (0) target = $region32
            $region31: #{closed_call.22} parent=27 // pred_region
              loop: start=0, step=1, limit=1
              $region33: #{closed_call.22} parent=31 // loop_pre_header
                _
              $region34: #{closed_call.22} parent=31 // loop_header
                %s171 = sphi 0, %s175
                %p172 = scmp.ge.s32.totalorder %s171, 1
                %s176 = sphi %s165, %s165
                %s177 = sphi %s162, %s162
              $region35: #{closed_call.22} parent=31 // loop_header_branch
                %174 = sbr.rel (%p172) target = $region39
              $region36: #{closed_call.22} parent=31 // loop_body
                %v178 = vld [vmem:[%s176] sm:$0xff]
                %179 = vst [vmem:[%s177] sm:$0xff] %v178
                %v180 = vld [vmem:[%s176 + $0x8] sm:$0xff]
                %181 = vst [vmem:[%s177 + $0x8] sm:$0xff] %v180
                %v182 = vld [vmem:[%s176 + $0x30] sm:$0xff]
                %183 = vst [vmem:[%s177 + $0x10] sm:$0xff] %v182
                %v184 = vld [vmem:[%s176 + $0x38] sm:$0xff]
                %185 = vst [vmem:[%s177 + $0x18] sm:$0xff] %v184
                %v186 = vld [vmem:[%s176 + $0x60] sm:$0xff]
                %187 = vst [vmem:[%s177 + $0x20] sm:$0xff] %v186
                %v188 = vld [vmem:[%s176 + $0x68] sm:$0xff]
                %189 = vst [vmem:[%s177 + $0x28] sm:$0xff] %v188
                %v190 = vld [vmem:[%s176 + $0x90] sm:$0xff]
                %191 = vst [vmem:[%s177 + $0x30] sm:$0xff] %v190
                %v192 = vld [vmem:[%s176 + $0x98] sm:$0xff]
                %193 = vst [vmem:[%s177 + $0x38] sm:$0xff] %v192
                %v194 = vld [vmem:[%s176 + $0xc0] sm:$0xff]
                %195 = vst [vmem:[%s177 + $0x40] sm:$0xff] %v194
                %v196 = vld [vmem:[%s176 + $0xc8] sm:$0xff]
                %197 = vst [vmem:[%s177 + $0x48] sm:$0xff] %v196
                %v198 = vld [vmem:[%s176 + $0xf0] sm:$0xff]
                %199 = vst [vmem:[%s177 + $0x50] sm:$0xff] %v198
                %v200 = vld [vmem:[%s176 + $0xf8] sm:$0xff]
                %201 = vst [vmem:[%s177 + $0x58] sm:$0xff] %v200
                %v202 = vld [vmem:[%s176 + $0x120] sm:$0xff]
                %203 = vst [vmem:[%s177 + $0x60] sm:$0xff] %v202
                %v204 = vld [vmem:[%s176 + $0x128] sm:$0xff]
                %205 = vst [vmem:[%s177 + $0x68] sm:$0xff] %v204
                %v206 = vld [vmem:[%s176 + $0x150] sm:$0xff]
                %207 = vst [vmem:[%s177 + $0x70] sm:$0xff] %v206
                %v208 = vld [vmem:[%s176 + $0x158] sm:$0xff]
                %209 = vst [vmem:[%s177 + $0x78] sm:$0xff] %v208
                %v210 = vld [vmem:[%s176 + $0x180] sm:$0xff]
                %211 = vst [vmem:[%s177 + $0x80] sm:$0xff] %v210
                %v212 = vld [vmem:[%s176 + $0x188] sm:$0xff]
                %213 = vst [vmem:[%s177 + $0x88] sm:$0xff] %v212
                %v214 = vld [vmem:[%s176 + $0x1b0] sm:$0xff]
                %215 = vst [vmem:[%s177 + $0x90] sm:$0xff] %v214
                %v216 = vld [vmem:[%s176 + $0x1b8] sm:$0xff]
                %217 = vst [vmem:[%s177 + $0x98] sm:$0xff] %v216
                %v218 = vld [vmem:[%s176 + $0x1e0] sm:$0xff]
                %219 = vst [vmem:[%s177 + $0xa0] sm:$0xff] %v218
                %v220 = vld [vmem:[%s176 + $0x1e8] sm:$0xff]
                %221 = vst [vmem:[%s177 + $0xa8] sm:$0xff] %v220
                %v222 = vld [vmem:[%s176 + $0x210] sm:$0xff]
                %223 = vst [vmem:[%s177 + $0xb0] sm:$0xff] %v222
                %v224 = vld [vmem:[%s176 + $0x218] sm:$0xff]
                %225 = vst [vmem:[%s177 + $0xb8] sm:$0xff] %v224
                %v226 = vld [vmem:[%s176 + $0x240] sm:$0xff]
                %227 = vst [vmem:[%s177 + $0xc0] sm:$0xff] %v226
                %v228 = vld [vmem:[%s176 + $0x248] sm:$0xff]
                %229 = vst [vmem:[%s177 + $0xc8] sm:$0xff] %v228
                %v230 = vld [vmem:[%s176 + $0x270] sm:$0xff]
                %231 = vst [vmem:[%s177 + $0xd0] sm:$0xff] %v230
                %v232 = vld [vmem:[%s176 + $0x278] sm:$0xff]
                %233 = vst [vmem:[%s177 + $0xd8] sm:$0xff] %v232
                %v234 = vld [vmem:[%s176 + $0x2a0] sm:$0xff]
                %235 = vst [vmem:[%s177 + $0xe0] sm:$0xff] %v234
                %v236 = vld [vmem:[%s176 + $0x2a8] sm:$0xff]
                %237 = vst [vmem:[%s177 + $0xe8] sm:$0xff] %v236
                %v238 = vld [vmem:[%s176 + $0x2d0] sm:$0xff]
                %239 = vst [vmem:[%s177 + $0xf0] sm:$0xff] %v238
                %v240 = vld [vmem:[%s176 + $0x2d8] sm:$0xff]
                %241 = vst [vmem:[%s177 + $0xf8] sm:$0xff] %v240
                %v242 = vld [vmem:[%s176 + $0x300] sm:$0xff]
                %243 = vst [vmem:[%s177 + $0x100] sm:$0xff] %v242
                %v244 = vld [vmem:[%s176 + $0x308] sm:$0xff]
                %245 = vst [vmem:[%s177 + $0x108] sm:$0xff] %v244
                %v246 = vld [vmem:[%s176 + $0x330] sm:$0xff]
                %247 = vst [vmem:[%s177 + $0x110] sm:$0xff] %v246
                %v248 = vld [vmem:[%s176 + $0x338] sm:$0xff]
                %249 = vst [vmem:[%s177 + $0x118] sm:$0xff] %v248
                %v250 = vld [vmem:[%s176 + $0x360] sm:$0xff]
                %251 = vst [vmem:[%s177 + $0x120] sm:$0xff] %v250
                %v252 = vld [vmem:[%s176 + $0x368] sm:$0xff]
                %253 = vst [vmem:[%s177 + $0x128] sm:$0xff] %v252
                %v254 = vld [vmem:[%s176 + $0x390] sm:$0xff]
                %255 = vst [vmem:[%s177 + $0x130] sm:$0xff] %v254
                %v256 = vld [vmem:[%s176 + $0x398] sm:$0xff]
                %257 = vst [vmem:[%s177 + $0x138] sm:$0xff] %v256
                %v258 = vld [vmem:[%s176 + $0x3c0] sm:$0xff]
                %259 = vst [vmem:[%s177 + $0x140] sm:$0xff] %v258
                %v260 = vld [vmem:[%s176 + $0x3c8] sm:$0xff]
                %261 = vst [vmem:[%s177 + $0x148] sm:$0xff] %v260
                %v262 = vld [vmem:[%s176 + $0x3f0] sm:$0xff]
                %263 = vst [vmem:[%s177 + $0x150] sm:$0xff] %v262
                %v264 = vld [vmem:[%s176 + $0x3f8] sm:$0xff]
                %265 = vst [vmem:[%s177 + $0x158] sm:$0xff] %v264
                %v266 = vld [vmem:[%s176 + $0x420] sm:$0xff]
                %267 = vst [vmem:[%s177 + $0x160] sm:$0xff] %v266
                %v268 = vld [vmem:[%s176 + $0x428] sm:$0xff]
                %269 = vst [vmem:[%s177 + $0x168] sm:$0xff] %v268
                %v270 = vld [vmem:[%s176 + $0x450] sm:$0xff]
                %271 = vst [vmem:[%s177 + $0x170] sm:$0xff] %v270
                %v272 = vld [vmem:[%s176 + $0x458] sm:$0xff]
                %273 = vst [vmem:[%s177 + $0x178] sm:$0xff] %v272
                %v274 = vld [vmem:[%s176 + $0x480] sm:$0xff]
                %275 = vst [vmem:[%s177 + $0x180] sm:$0xff] %v274
                %v276 = vld [vmem:[%s176 + $0x488] sm:$0xff]
                %277 = vst [vmem:[%s177 + $0x188] sm:$0xff] %v276
                %v278 = vld [vmem:[%s176 + $0x4b0] sm:$0xff]
                %279 = vst [vmem:[%s177 + $0x190] sm:$0xff] %v278
                %v280 = vld [vmem:[%s176 + $0x4b8] sm:$0xff]
                %281 = vst [vmem:[%s177 + $0x198] sm:$0xff] %v280
                %v282 = vld [vmem:[%s176 + $0x4e0] sm:$0xff]
                %283 = vst [vmem:[%s177 + $0x1a0] sm:$0xff] %v282
                %v284 = vld [vmem:[%s176 + $0x4e8] sm:$0xff]
                %285 = vst [vmem:[%s177 + $0x1a8] sm:$0xff] %v284
                %v286 = vld [vmem:[%s176 + $0x510] sm:$0xff]
                %287 = vst [vmem:[%s177 + $0x1b0] sm:$0xff] %v286
                %v288 = vld [vmem:[%s176 + $0x518] sm:$0xff]
                %289 = vst [vmem:[%s177 + $0x1b8] sm:$0xff] %v288
                %v290 = vld [vmem:[%s176 + $0x540] sm:$0xff]
                %291 = vst [vmem:[%s177 + $0x1c0] sm:$0xff] %v290
                %v292 = vld [vmem:[%s176 + $0x548] sm:$0xff]
                %293 = vst [vmem:[%s177 + $0x1c8] sm:$0xff] %v292
                %v294 = vld [vmem:[%s176 + $0x570] sm:$0xff]
                %295 = vst [vmem:[%s177 + $0x1d0] sm:$0xff] %v294
                %v296 = vld [vmem:[%s176 + $0x578] sm:$0xff]
                %297 = vst [vmem:[%s177 + $0x1d8] sm:$0xff] %v296
                %v298 = vld [vmem:[%s176 + $0x5a0] sm:$0xff]
                %299 = vst [vmem:[%s177 + $0x1e0] sm:$0xff] %v298
                %v300 = vld [vmem:[%s176 + $0x5a8] sm:$0xff]
                %301 = vst [vmem:[%s177 + $0x1e8] sm:$0xff] %v300
                %v302 = vld [vmem:[%s176 + $0x5d0] sm:$0xff]
                %303 = vst [vmem:[%s177 + $0x1f0] sm:$0xff] %v302
                %v304 = vld [vmem:[%s176 + $0x5d8] sm:$0xff]
                %305 = vst [vmem:[%s177 + $0x1f8] sm:$0xff] %v304
                %v306 = vld [vmem:[%s176 + $0x600] sm:$0xff]
                %307 = vst [vmem:[%s177 + $0x200] sm:$0xff] %v306
                %v308 = vld [vmem:[%s176 + $0x608] sm:$0xff]
                %309 = vst [vmem:[%s177 + $0x208] sm:$0xff] %v308
                %v310 = vld [vmem:[%s176 + $0x630] sm:$0xff]
                %311 = vst [vmem:[%s177 + $0x210] sm:$0xff] %v310
                %v312 = vld [vmem:[%s176 + $0x638] sm:$0xff]
                %313 = vst [vmem:[%s177 + $0x218] sm:$0xff] %v312
                %v314 = vld [vmem:[%s176 + $0x660] sm:$0xff]
                %315 = vst [vmem:[%s177 + $0x220] sm:$0xff] %v314
                %v316 = vld [vmem:[%s176 + $0x668] sm:$0xff]
                %317 = vst [vmem:[%s177 + $0x228] sm:$0xff] %v316
                %v318 = vld [vmem:[%s176 + $0x690] sm:$0xff]
                %319 = vst [vmem:[%s177 + $0x230] sm:$0xff] %v318
                %v320 = vld [vmem:[%s176 + $0x698] sm:$0xff]
                %321 = vst [vmem:[%s177 + $0x238] sm:$0xff] %v320
                %v322 = vld [vmem:[%s176 + $0x6c0] sm:$0xff]
                %323 = vst [vmem:[%s177 + $0x240] sm:$0xff] %v322
                %v324 = vld [vmem:[%s176 + $0x6c8] sm:$0xff]
                %325 = vst [vmem:[%s177 + $0x248] sm:$0xff] %v324
                %v326 = vld [vmem:[%s176 + $0x6f0] sm:$0xff]
                %327 = vst [vmem:[%s177 + $0x250] sm:$0xff] %v326
                %v328 = vld [vmem:[%s176 + $0x6f8] sm:$0xff]
                %329 = vst [vmem:[%s177 + $0x258] sm:$0xff] %v328
                %v330 = vld [vmem:[%s176 + $0x720] sm:$0xff]
                %331 = vst [vmem:[%s177 + $0x260] sm:$0xff] %v330
                %v332 = vld [vmem:[%s176 + $0x728] sm:$0xff]
                %333 = vst [vmem:[%s177 + $0x268] sm:$0xff] %v332
                %v334 = vld [vmem:[%s176 + $0x750] sm:$0xff]
                %335 = vst [vmem:[%s177 + $0x270] sm:$0xff] %v334
                %v336 = vld [vmem:[%s176 + $0x758] sm:$0xff]
                %337 = vst [vmem:[%s177 + $0x278] sm:$0xff] %v336
                %v338 = vld [vmem:[%s176 + $0x780] sm:$0xff]
                %339 = vst [vmem:[%s177 + $0x280] sm:$0xff] %v338
                %v340 = vld [vmem:[%s176 + $0x788] sm:$0xff]
                %341 = vst [vmem:[%s177 + $0x288] sm:$0xff] %v340
                %v342 = vld [vmem:[%s176 + $0x7b0] sm:$0xff]
                %343 = vst [vmem:[%s177 + $0x290] sm:$0xff] %v342
                %v344 = vld [vmem:[%s176 + $0x7b8] sm:$0xff]
                %345 = vst [vmem:[%s177 + $0x298] sm:$0xff] %v344
                %v346 = vld [vmem:[%s176 + $0x7e0] sm:$0xff]
                %347 = vst [vmem:[%s177 + $0x2a0] sm:$0xff] %v346
                %v348 = vld [vmem:[%s176 + $0x7e8] sm:$0xff]
                %349 = vst [vmem:[%s177 + $0x2a8] sm:$0xff] %v348
                %v350 = vld [vmem:[%s176 + $0x810] sm:$0xff]
                %351 = vst [vmem:[%s177 + $0x2b0] sm:$0xff] %v350
                %v352 = vld [vmem:[%s176 + $0x818] sm:$0xff]
                %353 = vst [vmem:[%s177 + $0x2b8] sm:$0xff] %v352
                %v354 = vld [vmem:[%s176 + $0x840] sm:$0xff]
                %355 = vst [vmem:[%s177 + $0x2c0] sm:$0xff] %v354
                %v356 = vld [vmem:[%s176 + $0x848] sm:$0xff]
                %357 = vst [vmem:[%s177 + $0x2c8] sm:$0xff] %v356
                %v358 = vld [vmem:[%s176 + $0x870] sm:$0xff]
                %359 = vst [vmem:[%s177 + $0x2d0] sm:$0xff] %v358
                %v360 = vld [vmem:[%s176 + $0x878] sm:$0xff]
                %361 = vst [vmem:[%s177 + $0x2d8] sm:$0xff] %v360
                %v362 = vld [vmem:[%s176 + $0x8a0] sm:$0xff]
                %363 = vst [vmem:[%s177 + $0x2e0] sm:$0xff] %v362
                %v364 = vld [vmem:[%s176 + $0x8a8] sm:$0xff]
                %365 = vst [vmem:[%s177 + $0x2e8] sm:$0xff] %v364
                %v366 = vld [vmem:[%s176 + $0x8d0] sm:$0xff]
                %367 = vst [vmem:[%s177 + $0x2f0] sm:$0xff] %v366
                %v368 = vld [vmem:[%s176 + $0x8d8] sm:$0xff]
                %369 = vst [vmem:[%s177 + $0x2f8] sm:$0xff] %v368
                %v370 = vld [vmem:[%s176 + $0x900] sm:$0xff]
                %371 = vst [vmem:[%s177 + $0x300] sm:$0xff] %v370
                %v372 = vld [vmem:[%s176 + $0x908] sm:$0xff]
                %373 = vst [vmem:[%s177 + $0x308] sm:$0xff] %v372
                %v374 = vld [vmem:[%s176 + $0x930] sm:$0xff]
                %375 = vst [vmem:[%s177 + $0x310] sm:$0xff] %v374
                %v376 = vld [vmem:[%s176 + $0x938] sm:$0xff]
                %377 = vst [vmem:[%s177 + $0x318] sm:$0xff] %v376
                %v378 = vld [vmem:[%s176 + $0x960] sm:$0xff]
                %379 = vst [vmem:[%s177 + $0x320] sm:$0xff] %v378
                %v380 = vld [vmem:[%s176 + $0x968] sm:$0xff]
                %381 = vst [vmem:[%s177 + $0x328] sm:$0xff] %v380
                %v382 = vld [vmem:[%s176 + $0x990] sm:$0xff]
                %383 = vst [vmem:[%s177 + $0x330] sm:$0xff] %v382
                %v384 = vld [vmem:[%s176 + $0x998] sm:$0xff]
                %385 = vst [vmem:[%s177 + $0x338] sm:$0xff] %v384
                %v386 = vld [vmem:[%s176 + $0x9c0] sm:$0xff]
                %387 = vst [vmem:[%s177 + $0x340] sm:$0xff] %v386
                %v388 = vld [vmem:[%s176 + $0x9c8] sm:$0xff]
                %389 = vst [vmem:[%s177 + $0x348] sm:$0xff] %v388
                %v390 = vld [vmem:[%s176 + $0x9f0] sm:$0xff]
                %391 = vst [vmem:[%s177 + $0x350] sm:$0xff] %v390
                %v392 = vld [vmem:[%s176 + $0x9f8] sm:$0xff]
                %393 = vst [vmem:[%s177 + $0x358] sm:$0xff] %v392
                %v394 = vld [vmem:[%s176 + $0xa20] sm:$0xff]
                %395 = vst [vmem:[%s177 + $0x360] sm:$0xff] %v394
                %v396 = vld [vmem:[%s176 + $0xa28] sm:$0xff]
                %397 = vst [vmem:[%s177 + $0x368] sm:$0xff] %v396
                %v398 = vld [vmem:[%s176 + $0xa50] sm:$0xff]
                %399 = vst [vmem:[%s177 + $0x370] sm:$0xff] %v398
                %v400 = vld [vmem:[%s176 + $0xa58] sm:$0xff]
                %401 = vst [vmem:[%s177 + $0x378] sm:$0xff] %v400
                %v402 = vld [vmem:[%s176 + $0xa80] sm:$0xff]
                %403 = vst [vmem:[%s177 + $0x380] sm:$0xff] %v402
                %v404 = vld [vmem:[%s176 + $0xa88] sm:$0xff]
                %405 = vst [vmem:[%s177 + $0x388] sm:$0xff] %v404
                %v406 = vld [vmem:[%s176 + $0xab0] sm:$0xff]
                %407 = vst [vmem:[%s177 + $0x390] sm:$0xff] %v406
                %v408 = vld [vmem:[%s176 + $0xab8] sm:$0xff]
                %409 = vst [vmem:[%s177 + $0x398] sm:$0xff] %v408
                %v410 = vld [vmem:[%s176 + $0xae0] sm:$0xff]
                %411 = vst [vmem:[%s177 + $0x3a0] sm:$0xff] %v410
                %v412 = vld [vmem:[%s176 + $0xae8] sm:$0xff]
                %413 = vst [vmem:[%s177 + $0x3a8] sm:$0xff] %v412
                %v414 = vld [vmem:[%s176 + $0xb10] sm:$0xff]
                %415 = vst [vmem:[%s177 + $0x3b0] sm:$0xff] %v414
                %v416 = vld [vmem:[%s176 + $0xb18] sm:$0xff]
                %417 = vst [vmem:[%s177 + $0x3b8] sm:$0xff] %v416
                %v418 = vld [vmem:[%s176 + $0xb40] sm:$0xff]
                %419 = vst [vmem:[%s177 + $0x3c0] sm:$0xff] %v418
                %v420 = vld [vmem:[%s176 + $0xb48] sm:$0xff]
                %421 = vst [vmem:[%s177 + $0x3c8] sm:$0xff] %v420
                %v422 = vld [vmem:[%s176 + $0xb70] sm:$0xff]
                %423 = vst [vmem:[%s177 + $0x3d0] sm:$0xff] %v422
                %v424 = vld [vmem:[%s176 + $0xb78] sm:$0xff]
                %425 = vst [vmem:[%s177 + $0x3d8] sm:$0xff] %v424
                %v426 = vld [vmem:[%s176 + $0xba0] sm:$0xff]
                %427 = vst [vmem:[%s177 + $0x3e0] sm:$0xff] %v426
                %v428 = vld [vmem:[%s176 + $0xba8] sm:$0xff]
                %429 = vst [vmem:[%s177 + $0x3e8] sm:$0xff] %v428
                %v430 = vld [vmem:[%s176 + $0xbd0] sm:$0xff]
                %431 = vst [vmem:[%s177 + $0x3f0] sm:$0xff] %v430
                %v432 = vld [vmem:[%s176 + $0xbd8] sm:$0xff]
                %433 = vst [vmem:[%s177 + $0x3f8] sm:$0xff] %v432
              $region37: #{closed_call.22} parent=31 // loop_footer
                %s175 = sadd.s32 1, %s171
              $region38: #{closed_call.22} parent=31 // loop_footer_branch
                %170 = sbr.rel target = $region34
              $region39: #{closed_call.22} parent=31 // loop_exit
                _
            $region32: #{closed_call.22} parent=27 // pred_fallthru
              _
            // Predicated region
            $region40: #{closed_call.22} parent=27 // pred_check
              _
            $region41: #{closed_call.22} parent=27 // pred_check_branch
              %435 = sbr.rel target = $region43
            $region42: #{closed_call.22} parent=27 // pred_region
              _
            $region43: #{closed_call.22} parent=27 // pred_fallthru
              _
          $region28: #{closed_call.22} parent=23 // pred_fallthru
            _
          %436 = vnop
        $region24: #{closed_call.22} parent=19 // pred_fallthru
          _
        // Predicated region
        $region44: #{closed_call.22} parent=19 // pred_check
          %p437 = pneg %p93
        $region45: #{closed_call.22} parent=19 // pred_check_branch
          %439 = sbr.rel (%p437) target = $region47
        $region46: #{closed_call.22} parent=19 // pred_region
          %s440 = smul.u32 4, %s17
          %p441 = scmp.lt.s32.totalorder %s440, 11
          %s442 = scalar_select %p441, %s440, 11
          %s443 = scalar_lea.vmem %s2, %s442
          %s444 = smul.u32 4, %s17
        $region47: #{closed_call.22} parent=19 // pred_fallthru
          _
      $region20: #{closed_call.22} parent=5 // pred_fallthru
        _
      %p445 = scmp.le.s32.totalorder 1, %s9
      %p446 = scmp.lt.s32.totalorder %s9, 4
      %p447 = pnand %p445, %p446
      %p448 = pneg %p447
      // Predicated region
      $region48: #{closed_call.22} parent=5 // pred_check
        _
      $region49: #{closed_call.22} parent=5 // pred_check_branch
        %450 = sbr.rel (%p447) target = $region51
      $region50: #{closed_call.22} parent=5 // pred_region
        %s451 = ssub.s32 %s9, 1
        %s452 = sand.u32 %s60, 1
        %s453 = sand.u32 %s60, 1
        %s454 = smul.addr %s453, 1024
        %s455 = scalar_lea.vmem [#allocation2], %s454
        // Predicated region
        $region52: #{closed_call.22} parent=50 // pred_check
          %p456 = pneg %p73
        $region53: #{closed_call.22} parent=50 // pred_check_branch
          %458 = sbr.rel (%p456) target = $region55
        $region54: #{closed_call.22} parent=50 // pred_region
          _
        $region55: #{closed_call.22} parent=50 // pred_fallthru
          _
        %s459 = smul.u32 4, %s18
        %p460 = scmp.lt.s32.totalorder %s459, 3
        %s461 = scalar_select %p460, %s459, 3
        %s462 = smul.addr %s461, 4
        %s463 = smul.addr %s462, 4
        %s464 = scalar_lea.vmem %s0, %s463
        %p465 = pneg %p47
        %p466 = pneg %p44
        %s467 = sand.u32 %s60, 1
        %s468 = sand.u32 %s60, 1
        %s469 = smul.addr %s468, 1024
        %s470 = scalar_lea.vmem [#allocation2], %s469
        %p471 = pneg %p73
        %p472 = pneg %p70
        %s473 = smul.u32 4, %s19
        %p474 = scmp.lt.s32.totalorder %s473, 11
        %s475 = scalar_select %p474, %s473, 11
        %s476 = scalar_lea.vmem %s2, %s475
        %p477 = pneg %p99
        %p478 = pneg %p96
        %p479 = pneg %p127
        %p480 = pneg %p124
        %s481 = sand.u32 %s114, 1
        %s482 = sand.u32 %s114, 1
        %s483 = smul.addr %s482, 64
        %s484 = scalar_lea.vmem [#allocation3], %s483
        %s485 = smul.u32 4, %s18
        %p486 = scmp.lt.s32.totalorder %s485, 3
        %s487 = scalar_select %p486, %s485, 3
        %s488 = smul.addr %s487, 4
        %s489 = smul.addr %s488, 4
        %s490 = scalar_lea.vmem %s0, %s489
        %s491 = smul.u32 4, %s18
        %s492 = smul.u32 4, %s19
        %s493 = smul.u32 4, %s19
        %p494 = scmp.lt.s32.totalorder %s493, 11
        %s495 = scalar_select %p494, %s493, 11
        %s496 = scalar_lea.vmem %s2, %s495
        %s497 = smul.u32 4, %s19
        %s498 = smul.u32 4, %s18
        %s499 = smul.u32 4, %s19
        %v500 = vld [vmem:[%s490] sm:$0xff]
        %v501 = vld [vmem:[%s490 + $0x8] sm:$0xff]
        %v502 = vld [vmem:[%s490 + $0x10] sm:$0xff]
        %v503 = vld [vmem:[%s490 + $0x18] sm:$0xff]
        %v504 = vld [vmem:[%s490 + $0x20] sm:$0xff]
        %v505 = vld [vmem:[%s490 + $0x28] sm:$0xff]
        %v506 = vld [vmem:[%s490 + $0x30] sm:$0xff]
        %v507 = vld [vmem:[%s490 + $0x38] sm:$0xff]
        %v508 = vld [vmem:[%s455] sm:$0xff]
        %v509 = vld [vmem:[%s455 + $0x8] sm:$0xff]
        %v510 = vld [vmem:[%s455 + $0x10] sm:$0xff]
        %v511 = vld [vmem:[%s455 + $0x18] sm:$0xff]
        %v512 = vld [vmem:[%s455 + $0x20] sm:$0xff]
        %v513 = vld [vmem:[%s455 + $0x28] sm:$0xff]
        %v514 = vld [vmem:[%s455 + $0x30] sm:$0xff]
        %v515 = vld [vmem:[%s455 + $0x38] sm:$0xff]
        %v516 = vld [vmem:[%s455 + $0x40] sm:$0xff]
        %v517 = vld [vmem:[%s455 + $0x48] sm:$0xff]
        %v518 = vld [vmem:[%s455 + $0x50] sm:$0xff]
        %v519 = vld [vmem:[%s455 + $0x58] sm:$0xff]
        %v520 = vld [vmem:[%s455 + $0x60] sm:$0xff]
        %v521 = vld [vmem:[%s455 + $0x68] sm:$0xff]
        %v522 = vld [vmem:[%s455 + $0x70] sm:$0xff]
        %v523 = vld [vmem:[%s455 + $0x78] sm:$0xff]
        %v524 = vld [vmem:[%s455 + $0x80] sm:$0xff]
        %v525 = vld [vmem:[%s455 + $0x88] sm:$0xff]
        %v526 = vld [vmem:[%s455 + $0x90] sm:$0xff]
        %v527 = vld [vmem:[%s455 + $0x98] sm:$0xff]
        %v528 = vld [vmem:[%s455 + $0xa0] sm:$0xff]
        %v529 = vld [vmem:[%s455 + $0xa8] sm:$0xff]
        %v530 = vld [vmem:[%s455 + $0xb0] sm:$0xff]
        %v531 = vld [vmem:[%s455 + $0xb8] sm:$0xff]
        %v532 = vld [vmem:[%s455 + $0xc0] sm:$0xff]
        %v533 = vld [vmem:[%s455 + $0xc8] sm:$0xff]
        %v534 = vld [vmem:[%s455 + $0xd0] sm:$0xff]
        %v535 = vld [vmem:[%s455 + $0xd8] sm:$0xff]
        %v536 = vld [vmem:[%s455 + $0xe0] sm:$0xff]
        %v537 = vld [vmem:[%s455 + $0xe8] sm:$0xff]
        %v538 = vld [vmem:[%s455 + $0xf0] sm:$0xff]
        %v539 = vld [vmem:[%s455 + $0xf8] sm:$0xff]
        %v540 = vld [vmem:[%s455 + $0x100] sm:$0xff]
        %v541 = vld [vmem:[%s455 + $0x108] sm:$0xff]
        %v542 = vld [vmem:[%s455 + $0x110] sm:$0xff]
        %v543 = vld [vmem:[%s455 + $0x118] sm:$0xff]
        %v544 = vld [vmem:[%s455 + $0x120] sm:$0xff]
        %v545 = vld [vmem:[%s455 + $0x128] sm:$0xff]
        %v546 = vld [vmem:[%s455 + $0x130] sm:$0xff]
        %v547 = vld [vmem:[%s455 + $0x138] sm:$0xff]
        %v548 = vld [vmem:[%s455 + $0x140] sm:$0xff]
        %v549 = vld [vmem:[%s455 + $0x148] sm:$0xff]
        %v550 = vld [vmem:[%s455 + $0x150] sm:$0xff]
        %v551 = vld [vmem:[%s455 + $0x158] sm:$0xff]
        %v552 = vld [vmem:[%s455 + $0x160] sm:$0xff]
        %v553 = vld [vmem:[%s455 + $0x168] sm:$0xff]
        %v554 = vld [vmem:[%s455 + $0x170] sm:$0xff]
        %v555 = vld [vmem:[%s455 + $0x178] sm:$0xff]
        %v556 = vld [vmem:[%s455 + $0x180] sm:$0xff]
        %v557 = vld [vmem:[%s455 + $0x188] sm:$0xff]
        %v558 = vld [vmem:[%s455 + $0x190] sm:$0xff]
        %v559 = vld [vmem:[%s455 + $0x198] sm:$0xff]
        %v560 = vld [vmem:[%s455 + $0x1a0] sm:$0xff]
        %v561 = vld [vmem:[%s455 + $0x1a8] sm:$0xff]
        %v562 = vld [vmem:[%s455 + $0x1b0] sm:$0xff]
        %v563 = vld [vmem:[%s455 + $0x1b8] sm:$0xff]
        %v564 = vld [vmem:[%s455 + $0x1c0] sm:$0xff]
        %v565 = vld [vmem:[%s455 + $0x1c8] sm:$0xff]
        %v566 = vld [vmem:[%s455 + $0x1d0] sm:$0xff]
        %v567 = vld [vmem:[%s455 + $0x1d8] sm:$0xff]
        %v568 = vld [vmem:[%s455 + $0x1e0] sm:$0xff]
        %v569 = vld [vmem:[%s455 + $0x1e8] sm:$0xff]
        %v570 = vld [vmem:[%s455 + $0x1f0] sm:$0xff]
        %v571 = vld [vmem:[%s455 + $0x1f8] sm:$0xff]
        %v572 = vld [vmem:[%s455 + $0x200] sm:$0xff]
        %v573 = vld [vmem:[%s455 + $0x208] sm:$0xff]
        %v574 = vld [vmem:[%s455 + $0x210] sm:$0xff]
        %v575 = vld [vmem:[%s455 + $0x218] sm:$0xff]
        %v576 = vld [vmem:[%s455 + $0x220] sm:$0xff]
        %v577 = vld [vmem:[%s455 + $0x228] sm:$0xff]
        %v578 = vld [vmem:[%s455 + $0x230] sm:$0xff]
        %v579 = vld [vmem:[%s455 + $0x238] sm:$0xff]
        %v580 = vld [vmem:[%s455 + $0x240] sm:$0xff]
        %v581 = vld [vmem:[%s455 + $0x248] sm:$0xff]
        %v582 = vld [vmem:[%s455 + $0x250] sm:$0xff]
        %v583 = vld [vmem:[%s455 + $0x258] sm:$0xff]
        %v584 = vld [vmem:[%s455 + $0x260] sm:$0xff]
        %v585 = vld [vmem:[%s455 + $0x268] sm:$0xff]
        %v586 = vld [vmem:[%s455 + $0x270] sm:$0xff]
        %v587 = vld [vmem:[%s455 + $0x278] sm:$0xff]
        %v588 = vld [vmem:[%s455 + $0x280] sm:$0xff]
        %v589 = vld [vmem:[%s455 + $0x288] sm:$0xff]
        %v590 = vld [vmem:[%s455 + $0x290] sm:$0xff]
        %v591 = vld [vmem:[%s455 + $0x298] sm:$0xff]
        %v592 = vld [vmem:[%s455 + $0x2a0] sm:$0xff]
        %v593 = vld [vmem:[%s455 + $0x2a8] sm:$0xff]
        %v594 = vld [vmem:[%s455 + $0x2b0] sm:$0xff]
        %v595 = vld [vmem:[%s455 + $0x2b8] sm:$0xff]
        %v596 = vld [vmem:[%s455 + $0x2c0] sm:$0xff]
        %v597 = vld [vmem:[%s455 + $0x2c8] sm:$0xff]
        %v598 = vld [vmem:[%s455 + $0x2d0] sm:$0xff]
        %v599 = vld [vmem:[%s455 + $0x2d8] sm:$0xff]
        %v600 = vld [vmem:[%s455 + $0x2e0] sm:$0xff]
        %v601 = vld [vmem:[%s455 + $0x2e8] sm:$0xff]
        %v602 = vld [vmem:[%s455 + $0x2f0] sm:$0xff]
        %v603 = vld [vmem:[%s455 + $0x2f8] sm:$0xff]
        %v604 = vld [vmem:[%s455 + $0x300] sm:$0xff]
        %v605 = vld [vmem:[%s455 + $0x308] sm:$0xff]
        %v606 = vld [vmem:[%s455 + $0x310] sm:$0xff]
        %v607 = vld [vmem:[%s455 + $0x318] sm:$0xff]
        %v608 = vld [vmem:[%s455 + $0x320] sm:$0xff]
        %v609 = vld [vmem:[%s455 + $0x328] sm:$0xff]
        %v610 = vld [vmem:[%s455 + $0x330] sm:$0xff]
        %v611 = vld [vmem:[%s455 + $0x338] sm:$0xff]
        %v612 = vld [vmem:[%s455 + $0x340] sm:$0xff]
        %v613 = vld [vmem:[%s455 + $0x348] sm:$0xff]
        %v614 = vld [vmem:[%s455 + $0x350] sm:$0xff]
        %v615 = vld [vmem:[%s455 + $0x358] sm:$0xff]
        %v616 = vld [vmem:[%s455 + $0x360] sm:$0xff]
        %v617 = vld [vmem:[%s455 + $0x368] sm:$0xff]
        %v618 = vld [vmem:[%s455 + $0x370] sm:$0xff]
        %v619 = vld [vmem:[%s455 + $0x378] sm:$0xff]
        %v620 = vld [vmem:[%s455 + $0x380] sm:$0xff]
        %v621 = vld [vmem:[%s455 + $0x388] sm:$0xff]
        %v622 = vld [vmem:[%s455 + $0x390] sm:$0xff]
        %v623 = vld [vmem:[%s455 + $0x398] sm:$0xff]
        %v624 = vld [vmem:[%s455 + $0x3a0] sm:$0xff]
        %v625 = vld [vmem:[%s455 + $0x3a8] sm:$0xff]
        %v626 = vld [vmem:[%s455 + $0x3b0] sm:$0xff]
        %v627 = vld [vmem:[%s455 + $0x3b8] sm:$0xff]
        %v628 = vld [vmem:[%s455 + $0x3c0] sm:$0xff]
        %v629 = vld [vmem:[%s455 + $0x3c8] sm:$0xff]
        %v630 = vld [vmem:[%s455 + $0x3d0] sm:$0xff]
        %v631 = vld [vmem:[%s455 + $0x3d8] sm:$0xff]
        %v632 = vld [vmem:[%s455 + $0x3e0] sm:$0xff]
        %v633 = vld [vmem:[%s455 + $0x3e8] sm:$0xff]
        %v634 = vld [vmem:[%s455 + $0x3f0] sm:$0xff]
        %v635 = vld [vmem:[%s455 + $0x3f8] sm:$0xff]
        %v636 = vld [vmem:[%s496] sm:$0xf]
        %v638 = vlaneseq
        %v639 = vshrl.u32 %v638, 7
        %v640 = vsub.s32 0, %v639
        %v641 = vrot.slane %v636, %v640
        %v642 = vlaneseq
        %v643 = vshrl.u32 %v642, 7
        %v644 = vsub.s32 1, %v643
        %v645 = vrot.slane %v636, %v644
        %v646 = vlaneseq
        %v647 = vshrl.u32 %v646, 7
        %v648 = vsub.s32 2, %v647
        %v649 = vrot.slane %v636, %v648
        %v650 = vlaneseq
        %v651 = vshrl.u32 %v650, 7
        %v652 = vsub.s32 3, %v651
        %v653 = vrot.slane %v636, %v652
        %v666 = vunpack.c.l.b16 %v500
        %v667 = vunpack.c.h.b16 %v500
        %v668 = vunpack.c.l.b16 %v501
        %v669 = vunpack.c.h.b16 %v501
        %v670 = vunpack.c.l.b16 %v502
        %v671 = vunpack.c.h.b16 %v502
        %v672 = vunpack.c.l.b16 %v503
        %v673 = vunpack.c.h.b16 %v503
        %v674 = vunpack.c.l.b16 %v504
        %v675 = vunpack.c.h.b16 %v504
        %v676 = vunpack.c.l.b16 %v505
        %v677 = vunpack.c.h.b16 %v505
        %v678 = vunpack.c.l.b16 %v506
        %v679 = vunpack.c.h.b16 %v506
        %v680 = vunpack.c.l.b16 %v507
        %v681 = vunpack.c.h.b16 %v507
        %v682 = vpack.c.b16 %v670, %v666
        %v683 = vpack.c.b16 %v671, %v667
        %v684 = vpack.c.b16 %v672, %v668
        %v685 = vpack.c.b16 %v673, %v669
        %v686 = vpack.c.b16 %v678, %v674
        %v687 = vpack.c.b16 %v679, %v675
        %v688 = vpack.c.b16 %v680, %v676
        %v689 = vpack.c.b16 %v681, %v677
        %v826 = vunpack.c.l.b16 %v508
        %v827 = vunpack.c.h.b16 %v508
        %v828 = vunpack.c.l.b16 %v509
        %v829 = vunpack.c.h.b16 %v509
        %v830 = vunpack.c.l.b16 %v510
        %v831 = vunpack.c.h.b16 %v510
        %v832 = vunpack.c.l.b16 %v511
        %v833 = vunpack.c.h.b16 %v511
        %v834 = vunpack.c.l.b16 %v512
        %v835 = vunpack.c.h.b16 %v512
        %v836 = vunpack.c.l.b16 %v513
        %v837 = vunpack.c.h.b16 %v513
        %v838 = vunpack.c.l.b16 %v514
        %v839 = vunpack.c.h.b16 %v514
        %v840 = vunpack.c.l.b16 %v515
        %v841 = vunpack.c.h.b16 %v515
        %v842 = vunpack.c.l.b16 %v516
        %v843 = vunpack.c.h.b16 %v516
        %v844 = vunpack.c.l.b16 %v517
        %v845 = vunpack.c.h.b16 %v517
        %v846 = vunpack.c.l.b16 %v518
        %v847 = vunpack.c.h.b16 %v518
        %v848 = vunpack.c.l.b16 %v519
        %v849 = vunpack.c.h.b16 %v519
        %v850 = vunpack.c.l.b16 %v520
        %v851 = vunpack.c.h.b16 %v520
        %v852 = vunpack.c.l.b16 %v521
        %v853 = vunpack.c.h.b16 %v521
        %v854 = vunpack.c.l.b16 %v522
        %v855 = vunpack.c.h.b16 %v522
        %v856 = vunpack.c.l.b16 %v523
        %v857 = vunpack.c.h.b16 %v523
        %v858 = vunpack.c.l.b16 %v524
        %v859 = vunpack.c.h.b16 %v524
        %v860 = vunpack.c.l.b16 %v525
        %v861 = vunpack.c.h.b16 %v525
        %v862 = vunpack.c.l.b16 %v526
        %v863 = vunpack.c.h.b16 %v526
        %v864 = vunpack.c.l.b16 %v527
        %v865 = vunpack.c.h.b16 %v527
        %v866 = vunpack.c.l.b16 %v528
        %v867 = vunpack.c.h.b16 %v528
        %v868 = vunpack.c.l.b16 %v529
        %v869 = vunpack.c.h.b16 %v529
        %v870 = vunpack.c.l.b16 %v530
        %v871 = vunpack.c.h.b16 %v530
        %v872 = vunpack.c.l.b16 %v531
        %v873 = vunpack.c.h.b16 %v531
        %v874 = vunpack.c.l.b16 %v532
        %v875 = vunpack.c.h.b16 %v532
        %v876 = vunpack.c.l.b16 %v533
        %v877 = vunpack.c.h.b16 %v533
        %v878 = vunpack.c.l.b16 %v534
        %v879 = vunpack.c.h.b16 %v534
        %v880 = vunpack.c.l.b16 %v535
        %v881 = vunpack.c.h.b16 %v535
        %v882 = vunpack.c.l.b16 %v536
        %v883 = vunpack.c.h.b16 %v536
        %v884 = vunpack.c.l.b16 %v537
        %v885 = vunpack.c.h.b16 %v537
        %v886 = vunpack.c.l.b16 %v538
        %v887 = vunpack.c.h.b16 %v538
        %v888 = vunpack.c.l.b16 %v539
        %v889 = vunpack.c.h.b16 %v539
        %v890 = vunpack.c.l.b16 %v540
        %v891 = vunpack.c.h.b16 %v540
        %v892 = vunpack.c.l.b16 %v541
        %v893 = vunpack.c.h.b16 %v541
        %v894 = vunpack.c.l.b16 %v542
        %v895 = vunpack.c.h.b16 %v542
        %v896 = vunpack.c.l.b16 %v543
        %v897 = vunpack.c.h.b16 %v543
        %v898 = vunpack.c.l.b16 %v544
        %v899 = vunpack.c.h.b16 %v544
        %v900 = vunpack.c.l.b16 %v545
        %v901 = vunpack.c.h.b16 %v545
        %v902 = vunpack.c.l.b16 %v546
        %v903 = vunpack.c.h.b16 %v546
        %v904 = vunpack.c.l.b16 %v547
        %v905 = vunpack.c.h.b16 %v547
        %v906 = vunpack.c.l.b16 %v548
        %v907 = vunpack.c.h.b16 %v548
        %v908 = vunpack.c.l.b16 %v549
        %v909 = vunpack.c.h.b16 %v549
        %v910 = vunpack.c.l.b16 %v550
        %v911 = vunpack.c.h.b16 %v550
        %v912 = vunpack.c.l.b16 %v551
        %v913 = vunpack.c.h.b16 %v551
        %v914 = vunpack.c.l.b16 %v552
        %v915 = vunpack.c.h.b16 %v552
        %v916 = vunpack.c.l.b16 %v553
        %v917 = vunpack.c.h.b16 %v553
        %v918 = vunpack.c.l.b16 %v554
        %v919 = vunpack.c.h.b16 %v554
        %v920 = vunpack.c.l.b16 %v555
        %v921 = vunpack.c.h.b16 %v555
        %v922 = vunpack.c.l.b16 %v556
        %v923 = vunpack.c.h.b16 %v556
        %v924 = vunpack.c.l.b16 %v557
        %v925 = vunpack.c.h.b16 %v557
        %v926 = vunpack.c.l.b16 %v558
        %v927 = vunpack.c.h.b16 %v558
        %v928 = vunpack.c.l.b16 %v559
        %v929 = vunpack.c.h.b16 %v559
        %v930 = vunpack.c.l.b16 %v560
        %v931 = vunpack.c.h.b16 %v560
        %v932 = vunpack.c.l.b16 %v561
        %v933 = vunpack.c.h.b16 %v561
        %v934 = vunpack.c.l.b16 %v562
        %v935 = vunpack.c.h.b16 %v562
        %v936 = vunpack.c.l.b16 %v563
        %v937 = vunpack.c.h.b16 %v563
        %v938 = vunpack.c.l.b16 %v564
        %v939 = vunpack.c.h.b16 %v564
        %v940 = vunpack.c.l.b16 %v565
        %v941 = vunpack.c.h.b16 %v565
        %v942 = vunpack.c.l.b16 %v566
        %v943 = vunpack.c.h.b16 %v566
        %v944 = vunpack.c.l.b16 %v567
        %v945 = vunpack.c.h.b16 %v567
        %v946 = vunpack.c.l.b16 %v568
        %v947 = vunpack.c.h.b16 %v568
        %v948 = vunpack.c.l.b16 %v569
        %v949 = vunpack.c.h.b16 %v569
        %v950 = vunpack.c.l.b16 %v570
        %v951 = vunpack.c.h.b16 %v570
        %v952 = vunpack.c.l.b16 %v571
        %v953 = vunpack.c.h.b16 %v571
        %v954 = vunpack.c.l.b16 %v572
        %v955 = vunpack.c.h.b16 %v572
        %v956 = vunpack.c.l.b16 %v573
        %v957 = vunpack.c.h.b16 %v573
        %v958 = vunpack.c.l.b16 %v574
        %v959 = vunpack.c.h.b16 %v574
        %v960 = vunpack.c.l.b16 %v575
        %v961 = vunpack.c.h.b16 %v575
        %v962 = vunpack.c.l.b16 %v576
        %v963 = vunpack.c.h.b16 %v576
        %v964 = vunpack.c.l.b16 %v577
        %v965 = vunpack.c.h.b16 %v577
        %v966 = vunpack.c.l.b16 %v578
        %v967 = vunpack.c.h.b16 %v578
        %v968 = vunpack.c.l.b16 %v579
        %v969 = vunpack.c.h.b16 %v579
        %v970 = vunpack.c.l.b16 %v580
        %v971 = vunpack.c.h.b16 %v580
        %v972 = vunpack.c.l.b16 %v581
        %v973 = vunpack.c.h.b16 %v581
        %v974 = vunpack.c.l.b16 %v582
        %v975 = vunpack.c.h.b16 %v582
        %v976 = vunpack.c.l.b16 %v583
        %v977 = vunpack.c.h.b16 %v583
        %v978 = vunpack.c.l.b16 %v584
        %v979 = vunpack.c.h.b16 %v584
        %v980 = vunpack.c.l.b16 %v585
        %v981 = vunpack.c.h.b16 %v585
        %v982 = vunpack.c.l.b16 %v586
        %v983 = vunpack.c.h.b16 %v586
        %v984 = vunpack.c.l.b16 %v587
        %v985 = vunpack.c.h.b16 %v587
        %v986 = vunpack.c.l.b16 %v588
        %v987 = vunpack.c.h.b16 %v588
        %v988 = vunpack.c.l.b16 %v589
        %v989 = vunpack.c.h.b16 %v589
        %v990 = vunpack.c.l.b16 %v590
        %v991 = vunpack.c.h.b16 %v590
        %v992 = vunpack.c.l.b16 %v591
        %v993 = vunpack.c.h.b16 %v591
        %v994 = vunpack.c.l.b16 %v592
        %v995 = vunpack.c.h.b16 %v592
        %v996 = vunpack.c.l.b16 %v593
        %v997 = vunpack.c.h.b16 %v593
        %v998 = vunpack.c.l.b16 %v594
        %v999 = vunpack.c.h.b16 %v594
        %v1000 = vunpack.c.l.b16 %v595
        %v1001 = vunpack.c.h.b16 %v595
        %v1002 = vunpack.c.l.b16 %v596
        %v1003 = vunpack.c.h.b16 %v596
        %v1004 = vunpack.c.l.b16 %v597
        %v1005 = vunpack.c.h.b16 %v597
        %v1006 = vunpack.c.l.b16 %v598
        %v1007 = vunpack.c.h.b16 %v598
        %v1008 = vunpack.c.l.b16 %v599
        %v1009 = vunpack.c.h.b16 %v599
        %v1010 = vunpack.c.l.b16 %v600
        %v1011 = vunpack.c.h.b16 %v600
        %v1012 = vunpack.c.l.b16 %v601
        %v1013 = vunpack.c.h.b16 %v601
        %v1014 = vunpack.c.l.b16 %v602
        %v1015 = vunpack.c.h.b16 %v602
        %v1016 = vunpack.c.l.b16 %v603
        %v1017 = vunpack.c.h.b16 %v603
        %v1018 = vunpack.c.l.b16 %v604
        %v1019 = vunpack.c.h.b16 %v604
        %v1020 = vunpack.c.l.b16 %v605
        %v1021 = vunpack.c.h.b16 %v605
        %v1022 = vunpack.c.l.b16 %v606
        %v1023 = vunpack.c.h.b16 %v606
        %v1024 = vunpack.c.l.b16 %v607
        %v1025 = vunpack.c.h.b16 %v607
        %v1026 = vunpack.c.l.b16 %v608
        %v1027 = vunpack.c.h.b16 %v608
        %v1028 = vunpack.c.l.b16 %v609
        %v1029 = vunpack.c.h.b16 %v609
        %v1030 = vunpack.c.l.b16 %v610
        %v1031 = vunpack.c.h.b16 %v610
        %v1032 = vunpack.c.l.b16 %v611
        %v1033 = vunpack.c.h.b16 %v611
        %v1034 = vunpack.c.l.b16 %v612
        %v1035 = vunpack.c.h.b16 %v612
        %v1036 = vunpack.c.l.b16 %v613
        %v1037 = vunpack.c.h.b16 %v613
        %v1038 = vunpack.c.l.b16 %v614
        %v1039 = vunpack.c.h.b16 %v614
        %v1040 = vunpack.c.l.b16 %v615
        %v1041 = vunpack.c.h.b16 %v615
        %v1042 = vunpack.c.l.b16 %v616
        %v1043 = vunpack.c.h.b16 %v616
        %v1044 = vunpack.c.l.b16 %v617
        %v1045 = vunpack.c.h.b16 %v617
        %v1046 = vunpack.c.l.b16 %v618
        %v1047 = vunpack.c.h.b16 %v618
        %v1048 = vunpack.c.l.b16 %v619
        %v1049 = vunpack.c.h.b16 %v619
        %v1050 = vunpack.c.l.b16 %v620
        %v1051 = vunpack.c.h.b16 %v620
        %v1052 = vunpack.c.l.b16 %v621
        %v1053 = vunpack.c.h.b16 %v621
        %v1054 = vunpack.c.l.b16 %v622
        %v1055 = vunpack.c.h.b16 %v622
        %v1056 = vunpack.c.l.b16 %v623
        %v1057 = vunpack.c.h.b16 %v623
        %v1058 = vunpack.c.l.b16 %v624
        %v1059 = vunpack.c.h.b16 %v624
        %v1060 = vunpack.c.l.b16 %v625
        %v1061 = vunpack.c.h.b16 %v625
        %v1062 = vunpack.c.l.b16 %v626
        %v1063 = vunpack.c.h.b16 %v626
        %v1064 = vunpack.c.l.b16 %v627
        %v1065 = vunpack.c.h.b16 %v627
        %v1066 = vunpack.c.l.b16 %v628
        %v1067 = vunpack.c.h.b16 %v628
        %v1068 = vunpack.c.l.b16 %v629
        %v1069 = vunpack.c.h.b16 %v629
        %v1070 = vunpack.c.l.b16 %v630
        %v1071 = vunpack.c.h.b16 %v630
        %v1072 = vunpack.c.l.b16 %v631
        %v1073 = vunpack.c.h.b16 %v631
        %v1074 = vunpack.c.l.b16 %v632
        %v1075 = vunpack.c.h.b16 %v632
        %v1076 = vunpack.c.l.b16 %v633
        %v1077 = vunpack.c.h.b16 %v633
        %v1078 = vunpack.c.l.b16 %v634
        %v1079 = vunpack.c.h.b16 %v634
        %v1080 = vunpack.c.l.b16 %v635
        %v1081 = vunpack.c.h.b16 %v635
        %v1082 = vpack.c.b16 %v830, %v826
        %v1083 = vpack.c.b16 %v831, %v827
        %v1084 = vpack.c.b16 %v832, %v828
        %v1085 = vpack.c.b16 %v833, %v829
        %v1086 = vpack.c.b16 %v838, %v834
        %v1087 = vpack.c.b16 %v839, %v835
        %v1088 = vpack.c.b16 %v840, %v836
        %v1089 = vpack.c.b16 %v841, %v837
        %v1090 = vpack.c.b16 %v846, %v842
        %v1091 = vpack.c.b16 %v847, %v843
        %v1092 = vpack.c.b16 %v848, %v844
        %v1093 = vpack.c.b16 %v849, %v845
        %v1094 = vpack.c.b16 %v854, %v850
        %v1095 = vpack.c.b16 %v855, %v851
        %v1096 = vpack.c.b16 %v856, %v852
        %v1097 = vpack.c.b16 %v857, %v853
        %v1098 = vpack.c.b16 %v862, %v858
        %v1099 = vpack.c.b16 %v863, %v859
        %v1100 = vpack.c.b16 %v864, %v860
        %v1101 = vpack.c.b16 %v865, %v861
        %v1102 = vpack.c.b16 %v870, %v866
        %v1103 = vpack.c.b16 %v871, %v867
        %v1104 = vpack.c.b16 %v872, %v868
        %v1105 = vpack.c.b16 %v873, %v869
        %v1106 = vpack.c.b16 %v878, %v874
        %v1107 = vpack.c.b16 %v879, %v875
        %v1108 = vpack.c.b16 %v880, %v876
        %v1109 = vpack.c.b16 %v881, %v877
        %v1110 = vpack.c.b16 %v886, %v882
        %v1111 = vpack.c.b16 %v887, %v883
        %v1112 = vpack.c.b16 %v888, %v884
        %v1113 = vpack.c.b16 %v889, %v885
        %v1114 = vpack.c.b16 %v894, %v890
        %v1115 = vpack.c.b16 %v895, %v891
        %v1116 = vpack.c.b16 %v896, %v892
        %v1117 = vpack.c.b16 %v897, %v893
        %v1118 = vpack.c.b16 %v902, %v898
        %v1119 = vpack.c.b16 %v903, %v899
        %v1120 = vpack.c.b16 %v904, %v900
        %v1121 = vpack.c.b16 %v905, %v901
        %v1122 = vpack.c.b16 %v910, %v906
        %v1123 = vpack.c.b16 %v911, %v907
        %v1124 = vpack.c.b16 %v912, %v908
        %v1125 = vpack.c.b16 %v913, %v909
        %v1126 = vpack.c.b16 %v918, %v914
        %v1127 = vpack.c.b16 %v919, %v915
        %v1128 = vpack.c.b16 %v920, %v916
        %v1129 = vpack.c.b16 %v921, %v917
        %v1130 = vpack.c.b16 %v926, %v922
        %v1131 = vpack.c.b16 %v927, %v923
        %v1132 = vpack.c.b16 %v928, %v924
        %v1133 = vpack.c.b16 %v929, %v925
        %v1134 = vpack.c.b16 %v934, %v930
        %v1135 = vpack.c.b16 %v935, %v931
        %v1136 = vpack.c.b16 %v936, %v932
        %v1137 = vpack.c.b16 %v937, %v933
        %v1138 = vpack.c.b16 %v942, %v938
        %v1139 = vpack.c.b16 %v943, %v939
        %v1140 = vpack.c.b16 %v944, %v940
        %v1141 = vpack.c.b16 %v945, %v941
        %v1142 = vpack.c.b16 %v950, %v946
        %v1143 = vpack.c.b16 %v951, %v947
        %v1144 = vpack.c.b16 %v952, %v948
        %v1145 = vpack.c.b16 %v953, %v949
        %v1146 = vpack.c.b16 %v958, %v954
        %v1147 = vpack.c.b16 %v959, %v955
        %v1148 = vpack.c.b16 %v960, %v956
        %v1149 = vpack.c.b16 %v961, %v957
        %v1150 = vpack.c.b16 %v966, %v962
        %v1151 = vpack.c.b16 %v967, %v963
        %v1152 = vpack.c.b16 %v968, %v964
        %v1153 = vpack.c.b16 %v969, %v965
        %v1154 = vpack.c.b16 %v974, %v970
        %v1155 = vpack.c.b16 %v975, %v971
        %v1156 = vpack.c.b16 %v976, %v972
        %v1157 = vpack.c.b16 %v977, %v973
        %v1158 = vpack.c.b16 %v982, %v978
        %v1159 = vpack.c.b16 %v983, %v979
        %v1160 = vpack.c.b16 %v984, %v980
        %v1161 = vpack.c.b16 %v985, %v981
        %v1162 = vpack.c.b16 %v990, %v986
        %v1163 = vpack.c.b16 %v991, %v987
        %v1164 = vpack.c.b16 %v992, %v988
        %v1165 = vpack.c.b16 %v993, %v989
        %v1166 = vpack.c.b16 %v998, %v994
        %v1167 = vpack.c.b16 %v999, %v995
        %v1168 = vpack.c.b16 %v1000, %v996
        %v1169 = vpack.c.b16 %v1001, %v997
        %v1170 = vpack.c.b16 %v1006, %v1002
        %v1171 = vpack.c.b16 %v1007, %v1003
        %v1172 = vpack.c.b16 %v1008, %v1004
        %v1173 = vpack.c.b16 %v1009, %v1005
        %v1174 = vpack.c.b16 %v1014, %v1010
        %v1175 = vpack.c.b16 %v1015, %v1011
        %v1176 = vpack.c.b16 %v1016, %v1012
        %v1177 = vpack.c.b16 %v1017, %v1013
        %v1178 = vpack.c.b16 %v1022, %v1018
        %v1179 = vpack.c.b16 %v1023, %v1019
        %v1180 = vpack.c.b16 %v1024, %v1020
        %v1181 = vpack.c.b16 %v1025, %v1021
        %v1182 = vpack.c.b16 %v1030, %v1026
        %v1183 = vpack.c.b16 %v1031, %v1027
        %v1184 = vpack.c.b16 %v1032, %v1028
        %v1185 = vpack.c.b16 %v1033, %v1029
        %v1186 = vpack.c.b16 %v1038, %v1034
        %v1187 = vpack.c.b16 %v1039, %v1035
        %v1188 = vpack.c.b16 %v1040, %v1036
        %v1189 = vpack.c.b16 %v1041, %v1037
        %v1190 = vpack.c.b16 %v1046, %v1042
        %v1191 = vpack.c.b16 %v1047, %v1043
        %v1192 = vpack.c.b16 %v1048, %v1044
        %v1193 = vpack.c.b16 %v1049, %v1045
        %v1194 = vpack.c.b16 %v1054, %v1050
        %v1195 = vpack.c.b16 %v1055, %v1051
        %v1196 = vpack.c.b16 %v1056, %v1052
        %v1197 = vpack.c.b16 %v1057, %v1053
        %v1198 = vpack.c.b16 %v1062, %v1058
        %v1199 = vpack.c.b16 %v1063, %v1059
        %v1200 = vpack.c.b16 %v1064, %v1060
        %v1201 = vpack.c.b16 %v1065, %v1061
        %v1202 = vpack.c.b16 %v1070, %v1066
        %v1203 = vpack.c.b16 %v1071, %v1067
        %v1204 = vpack.c.b16 %v1072, %v1068
        %v1205 = vpack.c.b16 %v1073, %v1069
        %v1206 = vpack.c.b16 %v1078, %v1074
        %v1207 = vpack.c.b16 %v1079, %v1075
        %v1208 = vpack.c.b16 %v1080, %v1076
        %v1209 = vpack.c.b16 %v1081, %v1077
        %1338 = vmatprep.subr.bf16.mxu0 %v1083
        %1339 = vmatpush1.bf16.msra.mxu0 %v1082
        %1340 = vmatprep.subr.bf16.mxu0 %v1087
        %1341 = vmatpush1.bf16.msra.mxu0 %v1086
        %1342 = vmatprep.subr.bf16.mxu0 %v1091
        %1343 = vmatpush1.bf16.msra.mxu0 %v1090
        %1344 = vmatprep.subr.bf16.mxu0 %v1095
        %1345 = vmatpush1.bf16.msra.mxu0 %v1094
        %1346 = vmatprep.subr.bf16.mxu0 %v1099
        %1347 = vmatpush1.bf16.msra.mxu0 %v1098
        %1348 = vmatprep.subr.bf16.mxu0 %v1103
        %1349 = vmatpush1.bf16.msra.mxu0 %v1102
        %1350 = vmatprep.subr.bf16.mxu0 %v1107
        %1351 = vmatpush1.bf16.msra.mxu0 %v1106
        %1352 = vmatprep.subr.bf16.mxu0 %v1111
        %1353 = vmatpush1.bf16.msra.mxu0 %v1110
        %1354 = vmatprep.subr.bf16.mxu0 %v1115
        %1355 = vmatpush1.bf16.msra.mxu0 %v1114
        %1356 = vmatprep.subr.bf16.mxu0 %v1119
        %1357 = vmatpush1.bf16.msra.mxu0 %v1118
        %1358 = vmatprep.subr.bf16.mxu0 %v1123
        %1359 = vmatpush1.bf16.msra.mxu0 %v1122
        %1360 = vmatprep.subr.bf16.mxu0 %v1127
        %1361 = vmatpush1.bf16.msra.mxu0 %v1126
        %1362 = vmatprep.subr.bf16.mxu0 %v1131
        %1363 = vmatpush1.bf16.msra.mxu0 %v1130
        %1364 = vmatprep.subr.bf16.mxu0 %v1135
        %1365 = vmatpush1.bf16.msra.mxu0 %v1134
        %1366 = vmatprep.subr.bf16.mxu0 %v1139
        %1367 = vmatpush1.bf16.msra.mxu0 %v1138
        %1368 = vmatprep.subr.bf16.mxu0 %v1143
        %1369 = vmatpush1.bf16.msra.mxu0 %v1142
        %1370 = vmatprep.mubr.bf16.mxu0 %v683
        %1371 = vmatmul.mubr.bf16.gmra.mrb[0].mxu0 %v682
        %v1372 = vpop.f32.mrb[0].mxu0
        %v1373 = vadd.f32 %v641, %v1372
        %v1374 = vpop.f32.mrb[0].mxu0
        %v1375 = vadd.f32 %v645, %v1374
        %v1376 = vpop.f32.mrb[0].mxu0
        %v1377 = vadd.f32 %v641, %v1376
        %v1378 = vpop.f32.mrb[0].mxu0
        %v1379 = vadd.f32 %v645, %v1378
        %1380 = vmatprep.mubr.bf16.mxu0 %v687
        %1381 = vmatmul.mubr.bf16.gmra.mrb[0].mxu0 %v686
        %v1382 = vpop.f32.mrb[0].mxu0
        %v1383 = vadd.f32 %v641, %v1382
        %v1384 = vpop.f32.mrb[0].mxu0
        %v1385 = vadd.f32 %v645, %v1384
        %v1386 = vpop.f32.mrb[0].mxu0
        %v1387 = vadd.f32 %v641, %v1386
        %v1388 = vpop.f32.mrb[0].mxu0
        %v1389 = vadd.f32 %v645, %v1388
        %1390 = vdwg.mxu0
        %1391 = vmatprep.subr.bf16.mxu0 %v1147
        %1392 = vmatpush1.bf16.msra.mxu0 %v1146
        %1393 = vmatprep.subr.bf16.mxu0 %v1151
        %1394 = vmatpush1.bf16.msra.mxu0 %v1150
        %1395 = vmatprep.subr.bf16.mxu0 %v1155
        %1396 = vmatpush1.bf16.msra.mxu0 %v1154
        %1397 = vmatprep.subr.bf16.mxu0 %v1159
        %1398 = vmatpush1.bf16.msra.mxu0 %v1158
        %1399 = vmatprep.subr.bf16.mxu0 %v1163
        %1400 = vmatpush1.bf16.msra.mxu0 %v1162
        %1401 = vmatprep.subr.bf16.mxu0 %v1167
        %1402 = vmatpush1.bf16.msra.mxu0 %v1166
        %1403 = vmatprep.subr.bf16.mxu0 %v1171
        %1404 = vmatpush1.bf16.msra.mxu0 %v1170
        %1405 = vmatprep.subr.bf16.mxu0 %v1175
        %1406 = vmatpush1.bf16.msra.mxu0 %v1174
        %1407 = vmatprep.subr.bf16.mxu0 %v1179
        %1408 = vmatpush1.bf16.msra.mxu0 %v1178
        %1409 = vmatprep.subr.bf16.mxu0 %v1183
        %1410 = vmatpush1.bf16.msra.mxu0 %v1182
        %1411 = vmatprep.subr.bf16.mxu0 %v1187
        %1412 = vmatpush1.bf16.msra.mxu0 %v1186
        %1413 = vmatprep.subr.bf16.mxu0 %v1191
        %1414 = vmatpush1.bf16.msra.mxu0 %v1190
        %1415 = vmatprep.subr.bf16.mxu0 %v1195
        %1416 = vmatpush1.bf16.msra.mxu0 %v1194
        %1417 = vmatprep.subr.bf16.mxu0 %v1199
        %1418 = vmatpush1.bf16.msra.mxu0 %v1198
        %1419 = vmatprep.subr.bf16.mxu0 %v1203
        %1420 = vmatpush1.bf16.msra.mxu0 %v1202
        %1421 = vmatprep.subr.bf16.mxu0 %v1207
        %1422 = vmatpush1.bf16.msra.mxu0 %v1206
        %1423 = vmatprep.mubr.bf16.mxu0 %v685
        %1424 = vmatmul.mubr.bf16.gmra.mrb[0].mxu0 %v684
        %v1425 = vpop.f32.mrb[0].mxu0
        %v1426 = vadd.f32 %v1373, %v1425
        %v1427 = vpop.f32.mrb[0].mxu0
        %v1428 = vadd.f32 %v1375, %v1427
        %v1429 = vpop.f32.mrb[0].mxu0
        %v1430 = vadd.f32 %v1377, %v1429
        %v1431 = vpop.f32.mrb[0].mxu0
        %v1432 = vadd.f32 %v1379, %v1431
        %1433 = vmatprep.mubr.bf16.mxu0 %v689
        %1434 = vmatmul.mubr.bf16.gmra.mrb[0].mxu0 %v688
        %v1435 = vpop.f32.mrb[0].mxu0
        %v1436 = vadd.f32 %v1383, %v1435
        %v1437 = vpop.f32.mrb[0].mxu0
        %v1438 = vadd.f32 %v1385, %v1437
        %v1439 = vpop.f32.mrb[0].mxu0
        %v1440 = vadd.f32 %v1387, %v1439
        %v1441 = vpop.f32.mrb[0].mxu0
        %v1442 = vadd.f32 %v1389, %v1441
        %1443 = vdwg.mxu0
        %1444 = vmatprep.subr.bf16.mxu0 %v1085
        %1445 = vmatpush1.bf16.msra.mxu0 %v1084
        %1446 = vmatprep.subr.bf16.mxu0 %v1089
        %1447 = vmatpush1.bf16.msra.mxu0 %v1088
        %1448 = vmatprep.subr.bf16.mxu0 %v1093
        %1449 = vmatpush1.bf16.msra.mxu0 %v1092
        %1450 = vmatprep.subr.bf16.mxu0 %v1097
        %1451 = vmatpush1.bf16.msra.mxu0 %v1096
        %1452 = vmatprep.subr.bf16.mxu0 %v1101
        %1453 = vmatpush1.bf16.msra.mxu0 %v1100
        %1454 = vmatprep.subr.bf16.mxu0 %v1105
        %1455 = vmatpush1.bf16.msra.mxu0 %v1104
        %1456 = vmatprep.subr.bf16.mxu0 %v1109
        %1457 = vmatpush1.bf16.msra.mxu0 %v1108
        %1458 = vmatprep.subr.bf16.mxu0 %v1113
        %1459 = vmatpush1.bf16.msra.mxu0 %v1112
        %1460 = vmatprep.subr.bf16.mxu0 %v1117
        %1461 = vmatpush1.bf16.msra.mxu0 %v1116
        %1462 = vmatprep.subr.bf16.mxu0 %v1121
        %1463 = vmatpush1.bf16.msra.mxu0 %v1120
        %1464 = vmatprep.subr.bf16.mxu0 %v1125
        %1465 = vmatpush1.bf16.msra.mxu0 %v1124
        %1466 = vmatprep.subr.bf16.mxu0 %v1129
        %1467 = vmatpush1.bf16.msra.mxu0 %v1128
        %1468 = vmatprep.subr.bf16.mxu0 %v1133
        %1469 = vmatpush1.bf16.msra.mxu0 %v1132
        %1470 = vmatprep.subr.bf16.mxu0 %v1137
        %1471 = vmatpush1.bf16.msra.mxu0 %v1136
        %1472 = vmatprep.subr.bf16.mxu0 %v1141
        %1473 = vmatpush1.bf16.msra.mxu0 %v1140
        %1474 = vmatprep.subr.bf16.mxu0 %v1145
        %1475 = vmatpush1.bf16.msra.mxu0 %v1144
        %1476 = vmatprep.mubr.bf16.mxu0 %v683
        %1477 = vmatmul.mubr.bf16.gmra.mrb[0].mxu0 %v682
        %v1478 = vpop.f32.mrb[0].mxu0
        %v1479 = vadd.f32 %v649, %v1478
        %v1480 = vpop.f32.mrb[0].mxu0
        %v1481 = vadd.f32 %v653, %v1480
        %v1482 = vpop.f32.mrb[0].mxu0
        %v1483 = vadd.f32 %v649, %v1482
        %v1484 = vpop.f32.mrb[0].mxu0
        %v1485 = vadd.f32 %v653, %v1484
        %1486 = vmatprep.mubr.bf16.mxu0 %v687
        %1487 = vmatmul.mubr.bf16.gmra.mrb[0].mxu0 %v686
        %v1488 = vpop.f32.mrb[0].mxu0
        %v1489 = vadd.f32 %v649, %v1488
        %v1490 = vpop.f32.mrb[0].mxu0
        %v1491 = vadd.f32 %v653, %v1490
        %v1492 = vpop.f32.mrb[0].mxu0
        %v1493 = vadd.f32 %v649, %v1492
        %v1494 = vpop.f32.mrb[0].mxu0
        %v1495 = vadd.f32 %v653, %v1494
        %1496 = vdwg.mxu0
        %1497 = vmatprep.subr.bf16.mxu0 %v1149
        %1498 = vmatpush1.bf16.msra.mxu0 %v1148
        %1499 = vmatprep.subr.bf16.mxu0 %v1153
        %1500 = vmatpush1.bf16.msra.mxu0 %v1152
        %1501 = vmatprep.subr.bf16.mxu0 %v1157
        %1502 = vmatpush1.bf16.msra.mxu0 %v1156
        %1503 = vmatprep.subr.bf16.mxu0 %v1161
        %1504 = vmatpush1.bf16.msra.mxu0 %v1160
        %1505 = vmatprep.subr.bf16.mxu0 %v1165
        %1506 = vmatpush1.bf16.msra.mxu0 %v1164
        %1507 = vmatprep.subr.bf16.mxu0 %v1169
        %1508 = vmatpush1.bf16.msra.mxu0 %v1168
        %1509 = vmatprep.subr.bf16.mxu0 %v1173
        %1510 = vmatpush1.bf16.msra.mxu0 %v1172
        %1511 = vmatprep.subr.bf16.mxu0 %v1177
        %1512 = vmatpush1.bf16.msra.mxu0 %v1176
        %1513 = vmatprep.subr.bf16.mxu0 %v1181
        %1514 = vmatpush1.bf16.msra.mxu0 %v1180
        %1515 = vmatprep.subr.bf16.mxu0 %v1185
        %1516 = vmatpush1.bf16.msra.mxu0 %v1184
        %1517 = vmatprep.subr.bf16.mxu0 %v1189
        %1518 = vmatpush1.bf16.msra.mxu0 %v1188
        %1519 = vmatprep.subr.bf16.mxu0 %v1193
        %1520 = vmatpush1.bf16.msra.mxu0 %v1192
        %1521 = vmatprep.subr.bf16.mxu0 %v1197
        %1522 = vmatpush1.bf16.msra.mxu0 %v1196
        %1523 = vmatprep.subr.bf16.mxu0 %v1201
        %1524 = vmatpush1.bf16.msra.mxu0 %v1200
        %1525 = vmatprep.subr.bf16.mxu0 %v1205
        %1526 = vmatpush1.bf16.msra.mxu0 %v1204
        %1527 = vmatprep.subr.bf16.mxu0 %v1209
        %1528 = vmatpush1.bf16.msra.mxu0 %v1208
        %1529 = vmatprep.mubr.bf16.mxu0 %v685
        %1530 = vmatmul.mubr.bf16.gmra.mrb[0].mxu0 %v684
        %v1531 = vpop.f32.mrb[0].mxu0
        %v1532 = vadd.f32 %v1479, %v1531
        %v1533 = vpop.f32.mrb[0].mxu0
        %v1534 = vadd.f32 %v1481, %v1533
        %v1535 = vpop.f32.mrb[0].mxu0
        %v1536 = vadd.f32 %v1483, %v1535
        %v1537 = vpop.f32.mrb[0].mxu0
        %v1538 = vadd.f32 %v1485, %v1537
        %1539 = vmatprep.mubr.bf16.mxu0 %v689
        %1540 = vmatmul.mubr.bf16.gmra.mrb[0].mxu0 %v688
        %v1541 = vpop.f32.mrb[0].mxu0
        %v1542 = vadd.f32 %v1489, %v1541
        %v1543 = vpop.f32.mrb[0].mxu0
        %v1544 = vadd.f32 %v1491, %v1543
        %v1545 = vpop.f32.mrb[0].mxu0
        %v1546 = vadd.f32 %v1493, %v1545
        %v1547 = vpop.f32.mrb[0].mxu0
        %v1548 = vadd.f32 %v1495, %v1547
        %1549 = vdwg.mxu0
        %v1550 = vpack.c.bf16 %v1430, %v1426
        %v1551 = vpack.c.bf16 %v1432, %v1428
        %v1552 = vpack.c.bf16 %v1536, %v1532
        %v1553 = vpack.c.bf16 %v1538, %v1534
        %v1554 = vpack.c.bf16 %v1440, %v1436
        %v1555 = vpack.c.bf16 %v1442, %v1438
        %v1556 = vpack.c.bf16 %v1546, %v1542
        %v1557 = vpack.c.bf16 %v1548, %v1544
        %v1566 = vunpack.c.l.b16 %v1550
        %v1567 = vunpack.c.l.b16 %v1551
        %v1568 = vunpack.c.l.b16 %v1552
        %v1569 = vunpack.c.l.b16 %v1553
        %v1570 = vunpack.c.h.b16 %v1550
        %v1571 = vunpack.c.h.b16 %v1551
        %v1572 = vunpack.c.h.b16 %v1552
        %v1573 = vunpack.c.h.b16 %v1553
        %v1574 = vunpack.c.l.b16 %v1554
        %v1575 = vunpack.c.l.b16 %v1555
        %v1576 = vunpack.c.l.b16 %v1556
        %v1577 = vunpack.c.l.b16 %v1557
        %v1578 = vunpack.c.h.b16 %v1554
        %v1579 = vunpack.c.h.b16 %v1555
        %v1580 = vunpack.c.h.b16 %v1556
        %v1581 = vunpack.c.h.b16 %v1557
        %v1582 = vpack.c.b16 %v1567, %v1566
        %v1583 = vpack.c.b16 %v1569, %v1568
        %v1584 = vpack.c.b16 %v1571, %v1570
        %v1585 = vpack.c.b16 %v1573, %v1572
        %v1586 = vpack.c.b16 %v1575, %v1574
        %v1587 = vpack.c.b16 %v1577, %v1576
        %v1588 = vpack.c.b16 %v1579, %v1578
        %v1589 = vpack.c.b16 %v1581, %v1580
        %1598 = vst [vmem:[%s484] sm:$0xff] %v1582
        %1599 = vst [vmem:[%s484 + $0x8] sm:$0xff] %v1583
        %1600 = vst [vmem:[%s484 + $0x10] sm:$0xff] %v1584
        %1601 = vst [vmem:[%s484 + $0x18] sm:$0xff] %v1585
        %1602 = vst [vmem:[%s484 + $0x20] sm:$0xff] %v1586
        %1603 = vst [vmem:[%s484 + $0x28] sm:$0xff] %v1587
        %1604 = vst [vmem:[%s484 + $0x30] sm:$0xff] %v1588
        %1605 = vst [vmem:[%s484 + $0x38] sm:$0xff] %v1589
        %s1606 = sand.u32 %s114, 1
        %s1607 = sand.u32 %s114, 1
        %s1608 = smul.addr %s1607, 64
        %s1609 = scalar_lea.vmem [#allocation3], %s1608
        // Predicated region
        $region56: #{closed_call.22} parent=50 // pred_check
          %p1610 = pneg %p124
        $region57: #{closed_call.22} parent=50 // pred_check_branch
          %1612 = sbr.rel (%p1610) target = $region59
        $region58: #{closed_call.22} parent=50 // pred_region
          %s1613 = smul.u32 4, %s18
          %s1614 = smul.u32 4, %s19
          %s1615 = smul.addr %s1613, 12
          %s1616 = sadd.s32 %s1614, %s1615
          %s1617 = smul.addr %s1616, 4
          %s1618 = scalar_lea.vmem %s3, %s1617
          // Predicated region
          $region60: #{closed_call.22} parent=58 // pred_check
            _
          $region61: #{closed_call.22} parent=58 // pred_check_branch
            %1620 = sbr.rel (0) target = $region63
          $region62: #{closed_call.22} parent=58 // pred_region
            // Predicated region
            $region64: #{closed_call.22} parent=62 // pred_check
              _
            $region65: #{closed_call.22} parent=62 // pred_check_branch
              %1622 = sbr.rel (0) target = $region67
            $region66: #{closed_call.22} parent=62 // pred_region
              loop: start=0, step=1, limit=1
              $region68: #{closed_call.22} parent=66 // loop_pre_header
                _
              $region69: #{closed_call.22} parent=66 // loop_header
                %s1624 = sphi 0, %s1628
                %p1625 = scmp.ge.s32.totalorder %s1624, 1
                %s1629 = sphi %s1609, %s1609
                %s1630 = sphi %s1618, %s1618
              $region70: #{closed_call.22} parent=66 // loop_header_branch
                %1627 = sbr.rel (%p1625) target = $region74
              $region71: #{closed_call.22} parent=66 // loop_body
                %v1631 = vld [vmem:[%s1629] sm:$0xff]
                %1632 = vst [vmem:[%s1630] sm:$0xff] %v1631
                %v1633 = vld [vmem:[%s1629 + $0x8] sm:$0xff]
                %1634 = vst [vmem:[%s1630 + $0x8] sm:$0xff] %v1633
                %v1635 = vld [vmem:[%s1629 + $0x10] sm:$0xff]
                %1636 = vst [vmem:[%s1630 + $0x30] sm:$0xff] %v1635
                %v1637 = vld [vmem:[%s1629 + $0x18] sm:$0xff]
                %1638 = vst [vmem:[%s1630 + $0x38] sm:$0xff] %v1637
                %v1639 = vld [vmem:[%s1629 + $0x20] sm:$0xff]
                %1640 = vst [vmem:[%s1630 + $0x60] sm:$0xff] %v1639
                %v1641 = vld [vmem:[%s1629 + $0x28] sm:$0xff]
                %1642 = vst [vmem:[%s1630 + $0x68] sm:$0xff] %v1641
                %v1643 = vld [vmem:[%s1629 + $0x30] sm:$0xff]
                %1644 = vst [vmem:[%s1630 + $0x90] sm:$0xff] %v1643
                %v1645 = vld [vmem:[%s1629 + $0x38] sm:$0xff]
                %1646 = vst [vmem:[%s1630 + $0x98] sm:$0xff] %v1645
              $region72: #{closed_call.22} parent=66 // loop_footer
                %s1628 = sadd.s32 1, %s1624
              $region73: #{closed_call.22} parent=66 // loop_footer_branch
                %1623 = sbr.rel target = $region69
              $region74: #{closed_call.22} parent=66 // loop_exit
                _
            $region67: #{closed_call.22} parent=62 // pred_fallthru
              _
            // Predicated region
            $region75: #{closed_call.22} parent=62 // pred_check
              _
            $region76: #{closed_call.22} parent=62 // pred_check_branch
              %1648 = sbr.rel target = $region78
            $region77: #{closed_call.22} parent=62 // pred_region
              _
            $region78: #{closed_call.22} parent=62 // pred_fallthru
              _
          $region63: #{closed_call.22} parent=58 // pred_fallthru
            _
          %1649 = vnop
        $region59: #{closed_call.22} parent=50 // pred_fallthru
          _
      $region51: #{closed_call.22} parent=5 // pred_fallthru
        _
      %p1650 = scmp.le.s32.totalorder 2, %s9
      // Predicated region
      $region79: #{closed_call.22} parent=5 // pred_check
        %p1651 = pneg %p1650
      $region80: #{closed_call.22} parent=5 // pred_check_branch
        %1653 = sbr.rel (%p1651) target = $region82
      $region81: #{closed_call.22} parent=5 // pred_region
        %s1654 = ssub.s32 %s9, 2
        // Predicated region
        $region83: #{closed_call.22} parent=81 // pred_check
          %p1655 = pneg %p130
        $region84: #{closed_call.22} parent=81 // pred_check_branch
          %1657 = sbr.rel (%p1655) target = $region86
        $region85: #{closed_call.22} parent=81 // pred_region
          %s1658 = sand.u32 %s115, 1
          %s1659 = sand.u32 %s115, 1
          %s1660 = smul.addr %s1659, 64
          %s1661 = scalar_lea.vmem [#allocation3], %s1660
        $region86: #{closed_call.22} parent=81 // pred_fallthru
          _
      $region82: #{closed_call.22} parent=5 // pred_fallthru
        _
    $region6: #{closed_call.22} parent=1 // loop_footer
      %s13 = sadd.s32 1, %s9
    $region7: #{closed_call.22} parent=1 // loop_footer_branch
      %8 = sbr.rel target = $region3
    $region8: #{closed_call.22} parent=1 // loop_exit
      _

// kernel: closed_call.24
$region0: #{closed_call.24}
  #allocation0 [shape = 'u32[]', space=smem, size = 0x4, offset = 0x4, fixed_abs, tag = 'smem constant byte address 0x4 - core index']
  #allocation1 [shape = 'u32[144,128]{1,0:T(1,128)}', space=vmem, size = 0x12000, scoped, tag = 'internal scratch']
  %s0 = inlined_call_operand.vmem [shape: bf16[32,512], index: 0, kind: input, shape index: {}]
  %s1 = inlined_call_operand.vmem [shape: bf16[512,512], index: 1, kind: input, shape index: {}]
  %s2 = inlined_call_operand.vmem [shape: f32[1,512], index: 2, kind: input, shape index: {}]
  %s3 = inlined_call_operand.vmem [shape: bf16[32,512], index: 3, kind: input, shape index: {}]
  %s4 = inlined_call_operand.vmem [shape: f32[1,512], index: 4, kind: input, shape index: {}]
  %s5 = inlined_call_operand.vmem [shape: f32[1,512], index: 5, kind: input, shape index: {}]
  %s6 = inlined_call_operand.vmem [shape: bf16[32,512], index: 6, kind: output, shape index: {}]
  %s7 = sld [smem:[#allocation0]]
  $region34: #{closed_call.24} parent=0
    _
  %s9 = ssub.s32 1, %s7
  %s10 = scalar_select 0, %s9, %s7
  // Predicated region
  $region2: #{closed_call.24} parent=0 // pred_check
    _
  $region3: #{closed_call.24} parent=0 // pred_check_branch
    %12 = sbr.rel (0) target = $region5
  $region4: #{closed_call.24} parent=0 // pred_region
    _
  $region5: #{closed_call.24} parent=0 // pred_fallthru
    _
  // Predicated region
  $region6: #{closed_call.24} parent=0 // pred_check
    _
  $region7: #{closed_call.24} parent=0 // pred_check_branch
    %14 = sbr.rel (0) target = $region9
  $region8: #{closed_call.24} parent=0 // pred_region
    _
  $region9: #{closed_call.24} parent=0 // pred_fallthru
    _
  // Predicated region
  $region10: #{closed_call.24} parent=0 // pred_check
    _
  $region11: #{closed_call.24} parent=0 // pred_check_branch
    %16 = sbr.rel (0) target = $region13
  $region12: #{closed_call.24} parent=0 // pred_region
    _
  $region13: #{closed_call.24} parent=0 // pred_fallthru
    _
  // Predicated region
  $region14: #{closed_call.24} parent=0 // pred_check
    _
  $region15: #{closed_call.24} parent=0 // pred_check_branch
    %18 = sbr.rel (0) target = $region17
  $region16: #{closed_call.24} parent=0 // pred_region
    _
  $region17: #{closed_call.24} parent=0 // pred_fallthru
    _
  // Predicated region
  $region18: #{closed_call.24} parent=0 // pred_check
    _
  $region19: #{closed_call.24} parent=0 // pred_check_branch
    %20 = sbr.rel (0) target = $region21
  $region20: #{closed_call.24} parent=0 // pred_region
    _
  $region21: #{closed_call.24} parent=0 // pred_fallthru
    _
  // Predicated region
  $region22: #{closed_call.24} parent=0 // pred_check
    _
  $region23: #{closed_call.24} parent=0 // pred_check_branch
    %22 = sbr.rel (0) target = $region25
  $region24: #{closed_call.24} parent=0 // pred_region
    _
  $region25: #{closed_call.24} parent=0 // pred_fallthru
    _
  %v23 = vld [vmem:[%s0] sm:$0xff]
  %v24 = vld [vmem:[%s0 + $0x8] sm:$0xff]
  %v25 = vld [vmem:[%s0 + $0x10] sm:$0xff]
  %v26 = vld [vmem:[%s0 + $0x18] sm:$0xff]
  %v27 = vld [vmem:[%s0 + $0x20] sm:$0xff]
  %v28 = vld [vmem:[%s0 + $0x28] sm:$0xff]
  %v29 = vld [vmem:[%s0 + $0x30] sm:$0xff]
  %v30 = vld [vmem:[%s0 + $0x38] sm:$0xff]
  %v31 = vld [vmem:[%s1] sm:$0xff]
  %v32 = vld [vmem:[%s1 + $0x8] sm:$0xff]
  %v33 = vld [vmem:[%s1 + $0x10] sm:$0xff]
  %v34 = vld [vmem:[%s1 + $0x18] sm:$0xff]
  %v35 = vld [vmem:[%s1 + $0x20] sm:$0xff]
  %v36 = vld [vmem:[%s1 + $0x28] sm:$0xff]
  %v37 = vld [vmem:[%s1 + $0x30] sm:$0xff]
  %v38 = vld [vmem:[%s1 + $0x38] sm:$0xff]
  %v39 = vld [vmem:[%s1 + $0x40] sm:$0xff]
  %v40 = vld [vmem:[%s1 + $0x48] sm:$0xff]
  %v41 = vld [vmem:[%s1 + $0x50] sm:$0xff]
  %v42 = vld [vmem:[%s1 + $0x58] sm:$0xff]
  %v43 = vld [vmem:[%s1 + $0x60] sm:$0xff]
  %v44 = vld [vmem:[%s1 + $0x68] sm:$0xff]
  %v45 = vld [vmem:[%s1 + $0x70] sm:$0xff]
  %v46 = vld [vmem:[%s1 + $0x78] sm:$0xff]
  %v47 = vld [vmem:[%s1 + $0x80] sm:$0xff]
  %v48 = vld [vmem:[%s1 + $0x88] sm:$0xff]
  %v49 = vld [vmem:[%s1 + $0x90] sm:$0xff]
  %v50 = vld [vmem:[%s1 + $0x98] sm:$0xff]
  %v51 = vld [vmem:[%s1 + $0xa0] sm:$0xff]
  %v52 = vld [vmem:[%s1 + $0xa8] sm:$0xff]
  %v53 = vld [vmem:[%s1 + $0xb0] sm:$0xff]
  %v54 = vld [vmem:[%s1 + $0xb8] sm:$0xff]
  %v55 = vld [vmem:[%s1 + $0xc0] sm:$0xff]
  %v56 = vld [vmem:[%s1 + $0xc8] sm:$0xff]
  %v57 = vld [vmem:[%s1 + $0xd0] sm:$0xff]
  %v58 = vld [vmem:[%s1 + $0xd8] sm:$0xff]
  %v59 = vld [vmem:[%s1 + $0xe0] sm:$0xff]
  %v60 = vld [vmem:[%s1 + $0xe8] sm:$0xff]
  %v61 = vld [vmem:[%s1 + $0xf0] sm:$0xff]
  %v62 = vld [vmem:[%s1 + $0xf8] sm:$0xff]
  %v63 = vld [vmem:[%s1 + $0x100] sm:$0xff]
  %v64 = vld [vmem:[%s1 + $0x108] sm:$0xff]
  %v65 = vld [vmem:[%s1 + $0x110] sm:$0xff]
  %v66 = vld [vmem:[%s1 + $0x118] sm:$0xff]
  %v67 = vld [vmem:[%s1 + $0x120] sm:$0xff]
  %v68 = vld [vmem:[%s1 + $0x128] sm:$0xff]
  %v69 = vld [vmem:[%s1 + $0x130] sm:$0xff]
  %v70 = vld [vmem:[%s1 + $0x138] sm:$0xff]
  %v71 = vld [vmem:[%s1 + $0x140] sm:$0xff]
  %v72 = vld [vmem:[%s1 + $0x148] sm:$0xff]
  %v73 = vld [vmem:[%s1 + $0x150] sm:$0xff]
  %v74 = vld [vmem:[%s1 + $0x158] sm:$0xff]
  %v75 = vld [vmem:[%s1 + $0x160] sm:$0xff]
  %v76 = vld [vmem:[%s1 + $0x168] sm:$0xff]
  %v77 = vld [vmem:[%s1 + $0x170] sm:$0xff]
  %v78 = vld [vmem:[%s1 + $0x178] sm:$0xff]
  %v79 = vld [vmem:[%s1 + $0x180] sm:$0xff]
  %v80 = vld [vmem:[%s1 + $0x188] sm:$0xff]
  %v81 = vld [vmem:[%s1 + $0x190] sm:$0xff]
  %v82 = vld [vmem:[%s1 + $0x198] sm:$0xff]
  %v83 = vld [vmem:[%s1 + $0x1a0] sm:$0xff]
  %v84 = vld [vmem:[%s1 + $0x1a8] sm:$0xff]
  %v85 = vld [vmem:[%s1 + $0x1b0] sm:$0xff]
  %v86 = vld [vmem:[%s1 + $0x1b8] sm:$0xff]
  %v87 = vld [vmem:[%s1 + $0x1c0] sm:$0xff]
  %v88 = vld [vmem:[%s1 + $0x1c8] sm:$0xff]
  %v89 = vld [vmem:[%s1 + $0x1d0] sm:$0xff]
  %v90 = vld [vmem:[%s1 + $0x1d8] sm:$0xff]
  %v91 = vld [vmem:[%s1 + $0x1e0] sm:$0xff]
  %v92 = vld [vmem:[%s1 + $0x1e8] sm:$0xff]
  %v93 = vld [vmem:[%s1 + $0x1f0] sm:$0xff]
  %v94 = vld [vmem:[%s1 + $0x1f8] sm:$0xff]
  %v95 = vld [vmem:[%s1 + $0x200] sm:$0xff]
  %v96 = vld [vmem:[%s1 + $0x208] sm:$0xff]
  %v97 = vld [vmem:[%s1 + $0x210] sm:$0xff]
  %v98 = vld [vmem:[%s1 + $0x218] sm:$0xff]
  %v99 = vld [vmem:[%s1 + $0x220] sm:$0xff]
  %v100 = vld [vmem:[%s1 + $0x228] sm:$0xff]
  %v101 = vld [vmem:[%s1 + $0x230] sm:$0xff]
  %v102 = vld [vmem:[%s1 + $0x238] sm:$0xff]
  %v103 = vld [vmem:[%s1 + $0x240] sm:$0xff]
  %v104 = vld [vmem:[%s1 + $0x248] sm:$0xff]
  %v105 = vld [vmem:[%s1 + $0x250] sm:$0xff]
  %v106 = vld [vmem:[%s1 + $0x258] sm:$0xff]
  %v107 = vld [vmem:[%s1 + $0x260] sm:$0xff]
  %v108 = vld [vmem:[%s1 + $0x268] sm:$0xff]
  %v109 = vld [vmem:[%s1 + $0x270] sm:$0xff]
  %v110 = vld [vmem:[%s1 + $0x278] sm:$0xff]
  %v111 = vld [vmem:[%s1 + $0x280] sm:$0xff]
  %v112 = vld [vmem:[%s1 + $0x288] sm:$0xff]
  %v113 = vld [vmem:[%s1 + $0x290] sm:$0xff]
  %v114 = vld [vmem:[%s1 + $0x298] sm:$0xff]
  %v115 = vld [vmem:[%s1 + $0x2a0] sm:$0xff]
  %v116 = vld [vmem:[%s1 + $0x2a8] sm:$0xff]
  %v117 = vld [vmem:[%s1 + $0x2b0] sm:$0xff]
  %v118 = vld [vmem:[%s1 + $0x2b8] sm:$0xff]
  %v119 = vld [vmem:[%s1 + $0x2c0] sm:$0xff]
  %v120 = vld [vmem:[%s1 + $0x2c8] sm:$0xff]
  %v121 = vld [vmem:[%s1 + $0x2d0] sm:$0xff]
  %v122 = vld [vmem:[%s1 + $0x2d8] sm:$0xff]
  %v123 = vld [vmem:[%s1 + $0x2e0] sm:$0xff]
  %v124 = vld [vmem:[%s1 + $0x2e8] sm:$0xff]
  %v125 = vld [vmem:[%s1 + $0x2f0] sm:$0xff]
  %v126 = vld [vmem:[%s1 + $0x2f8] sm:$0xff]
  %v127 = vld [vmem:[%s1 + $0x300] sm:$0xff]
  %v128 = vld [vmem:[%s1 + $0x308] sm:$0xff]
  %v129 = vld [vmem:[%s1 + $0x310] sm:$0xff]
  %v130 = vld [vmem:[%s1 + $0x318] sm:$0xff]
  %v131 = vld [vmem:[%s1 + $0x320] sm:$0xff]
  %v132 = vld [vmem:[%s1 + $0x328] sm:$0xff]
  %v133 = vld [vmem:[%s1 + $0x330] sm:$0xff]
  %v134 = vld [vmem:[%s1 + $0x338] sm:$0xff]
  %v135 = vld [vmem:[%s1 + $0x340] sm:$0xff]
  %v136 = vld [vmem:[%s1 + $0x348] sm:$0xff]
  %v137 = vld [vmem:[%s1 + $0x350] sm:$0xff]
  %v138 = vld [vmem:[%s1 + $0x358] sm:$0xff]
  %v139 = vld [vmem:[%s1 + $0x360] sm:$0xff]
  %v140 = vld [vmem:[%s1 + $0x368] sm:$0xff]
  %v141 = vld [vmem:[%s1 + $0x370] sm:$0xff]
  %v142 = vld [vmem:[%s1 + $0x378] sm:$0xff]
  %v143 = vld [vmem:[%s1 + $0x380] sm:$0xff]
  %v144 = vld [vmem:[%s1 + $0x388] sm:$0xff]
  %v145 = vld [vmem:[%s1 + $0x390] sm:$0xff]
  %v146 = vld [vmem:[%s1 + $0x398] sm:$0xff]
  %v147 = vld [vmem:[%s1 + $0x3a0] sm:$0xff]
  %v148 = vld [vmem:[%s1 + $0x3a8] sm:$0xff]
  %v149 = vld [vmem:[%s1 + $0x3b0] sm:$0xff]
  %v150 = vld [vmem:[%s1 + $0x3b8] sm:$0xff]
  %v151 = vld [vmem:[%s1 + $0x3c0] sm:$0xff]
  %v152 = vld [vmem:[%s1 + $0x3c8] sm:$0xff]
  %v153 = vld [vmem:[%s1 + $0x3d0] sm:$0xff]
  %v154 = vld [vmem:[%s1 + $0x3d8] sm:$0xff]
  %v155 = vld [vmem:[%s1 + $0x3e0] sm:$0xff]
  %v156 = vld [vmem:[%s1 + $0x3e8] sm:$0xff]
  %v157 = vld [vmem:[%s1 + $0x3f0] sm:$0xff]
  %v158 = vld [vmem:[%s1 + $0x3f8] sm:$0xff]
  %v159 = vld [vmem:[%s2] sm:$0xf]
  %v161 = vlaneseq
  %v162 = vshrl.u32 %v161, 7
  %v163 = vsub.s32 0, %v162
  %v164 = vrot.slane %v159, %v163
  %v165 = vlaneseq
  %v166 = vshrl.u32 %v165, 7
  %v167 = vsub.s32 1, %v166
  %v168 = vrot.slane %v159, %v167
  %v169 = vlaneseq
  %v170 = vshrl.u32 %v169, 7
  %v171 = vsub.s32 2, %v170
  %v172 = vrot.slane %v159, %v171
  %v173 = vlaneseq
  %v174 = vshrl.u32 %v173, 7
  %v175 = vsub.s32 3, %v174
  %v176 = vrot.slane %v159, %v175
  %v189 = vunpack.c.l.b16 %v23
  %v190 = vunpack.c.h.b16 %v23
  %v191 = vunpack.c.l.b16 %v24
  %v192 = vunpack.c.h.b16 %v24
  %v193 = vunpack.c.l.b16 %v25
  %v194 = vunpack.c.h.b16 %v25
  %v195 = vunpack.c.l.b16 %v26
  %v196 = vunpack.c.h.b16 %v26
  %v197 = vunpack.c.l.b16 %v27
  %v198 = vunpack.c.h.b16 %v27
  %v199 = vunpack.c.l.b16 %v28
  %v200 = vunpack.c.h.b16 %v28
  %v201 = vunpack.c.l.b16 %v29
  %v202 = vunpack.c.h.b16 %v29
  %v203 = vunpack.c.l.b16 %v30
  %v204 = vunpack.c.h.b16 %v30
  %v205 = vpack.c.b16 %v193, %v189
  %v206 = vpack.c.b16 %v194, %v190
  %v207 = vpack.c.b16 %v195, %v191
  %v208 = vpack.c.b16 %v196, %v192
  %v209 = vpack.c.b16 %v201, %v197
  %v210 = vpack.c.b16 %v202, %v198
  %v211 = vpack.c.b16 %v203, %v199
  %v212 = vpack.c.b16 %v204, %v200
  %v349 = vunpack.c.l.b16 %v31
  %v350 = vunpack.c.h.b16 %v31
  %v351 = vunpack.c.l.b16 %v32
  %v352 = vunpack.c.h.b16 %v32
  %v353 = vunpack.c.l.b16 %v33
  %v354 = vunpack.c.h.b16 %v33
  %v355 = vunpack.c.l.b16 %v34
  %v356 = vunpack.c.h.b16 %v34
  %v357 = vunpack.c.l.b16 %v35
  %v358 = vunpack.c.h.b16 %v35
  %v359 = vunpack.c.l.b16 %v36
  %v360 = vunpack.c.h.b16 %v36
  %v361 = vunpack.c.l.b16 %v37
  %v362 = vunpack.c.h.b16 %v37
  %v363 = vunpack.c.l.b16 %v38
  %v364 = vunpack.c.h.b16 %v38
  %v365 = vunpack.c.l.b16 %v39
  %v366 = vunpack.c.h.b16 %v39
  %v367 = vunpack.c.l.b16 %v40
  %v368 = vunpack.c.h.b16 %v40
  %v369 = vunpack.c.l.b16 %v41
  %v370 = vunpack.c.h.b16 %v41
  %v371 = vunpack.c.l.b16 %v42
  %v372 = vunpack.c.h.b16 %v42
  %v373 = vunpack.c.l.b16 %v43
  %v374 = vunpack.c.h.b16 %v43
  %v375 = vunpack.c.l.b16 %v44
  %v376 = vunpack.c.h.b16 %v44
  %v377 = vunpack.c.l.b16 %v45
  %v378 = vunpack.c.h.b16 %v45
  %v379 = vunpack.c.l.b16 %v46
  %v380 = vunpack.c.h.b16 %v46
  %v381 = vunpack.c.l.b16 %v47
  %v382 = vunpack.c.h.b16 %v47
  %v383 = vunpack.c.l.b16 %v48
  %v384 = vunpack.c.h.b16 %v48
  %v385 = vunpack.c.l.b16 %v49
  %v386 = vunpack.c.h.b16 %v49
  %v387 = vunpack.c.l.b16 %v50
  %v388 = vunpack.c.h.b16 %v50
  %v389 = vunpack.c.l.b16 %v51
  %v390 = vunpack.c.h.b16 %v51
  %v391 = vunpack.c.l.b16 %v52
  %v392 = vunpack.c.h.b16 %v52
  %v393 = vunpack.c.l.b16 %v53
  %v394 = vunpack.c.h.b16 %v53
  %v395 = vunpack.c.l.b16 %v54
  %v396 = vunpack.c.h.b16 %v54
  %v397 = vunpack.c.l.b16 %v55
  %v398 = vunpack.c.h.b16 %v55
  %v399 = vunpack.c.l.b16 %v56
  %v400 = vunpack.c.h.b16 %v56
  %v401 = vunpack.c.l.b16 %v57
  %v402 = vunpack.c.h.b16 %v57
  %v403 = vunpack.c.l.b16 %v58
  %v404 = vunpack.c.h.b16 %v58
  %v405 = vunpack.c.l.b16 %v59
  %v406 = vunpack.c.h.b16 %v59
  %v407 = vunpack.c.l.b16 %v60
  %v408 = vunpack.c.h.b16 %v60
  %v409 = vunpack.c.l.b16 %v61
  %v410 = vunpack.c.h.b16 %v61
  %v411 = vunpack.c.l.b16 %v62
  %v412 = vunpack.c.h.b16 %v62
  %v413 = vunpack.c.l.b16 %v63
  %v414 = vunpack.c.h.b16 %v63
  %v415 = vunpack.c.l.b16 %v64
  %v416 = vunpack.c.h.b16 %v64
  %v417 = vunpack.c.l.b16 %v65
  %v418 = vunpack.c.h.b16 %v65
  %v419 = vunpack.c.l.b16 %v66
  %v420 = vunpack.c.h.b16 %v66
  %v421 = vunpack.c.l.b16 %v67
  %v422 = vunpack.c.h.b16 %v67
  %v423 = vunpack.c.l.b16 %v68
  %v424 = vunpack.c.h.b16 %v68
  %v425 = vunpack.c.l.b16 %v69
  %v426 = vunpack.c.h.b16 %v69
  %v427 = vunpack.c.l.b16 %v70
  %v428 = vunpack.c.h.b16 %v70
  %v429 = vunpack.c.l.b16 %v71
  %v430 = vunpack.c.h.b16 %v71
  %v431 = vunpack.c.l.b16 %v72
  %v432 = vunpack.c.h.b16 %v72
  %v433 = vunpack.c.l.b16 %v73
  %v434 = vunpack.c.h.b16 %v73
  %v435 = vunpack.c.l.b16 %v74
  %v436 = vunpack.c.h.b16 %v74
  %v437 = vunpack.c.l.b16 %v75
  %v438 = vunpack.c.h.b16 %v75
  %v439 = vunpack.c.l.b16 %v76
  %v440 = vunpack.c.h.b16 %v76
  %v441 = vunpack.c.l.b16 %v77
  %v442 = vunpack.c.h.b16 %v77
  %v443 = vunpack.c.l.b16 %v78
  %v444 = vunpack.c.h.b16 %v78
  %v445 = vunpack.c.l.b16 %v79
  %v446 = vunpack.c.h.b16 %v79
  %v447 = vunpack.c.l.b16 %v80
  %v448 = vunpack.c.h.b16 %v80
  %v449 = vunpack.c.l.b16 %v81
  %v450 = vunpack.c.h.b16 %v81
  %v451 = vunpack.c.l.b16 %v82
  %v452 = vunpack.c.h.b16 %v82
  %v453 = vunpack.c.l.b16 %v83
  %v454 = vunpack.c.h.b16 %v83
  %v455 = vunpack.c.l.b16 %v84
  %v456 = vunpack.c.h.b16 %v84
  %v457 = vunpack.c.l.b16 %v85
  %v458 = vunpack.c.h.b16 %v85
  %v459 = vunpack.c.l.b16 %v86
  %v460 = vunpack.c.h.b16 %v86
  %v461 = vunpack.c.l.b16 %v87
  %v462 = vunpack.c.h.b16 %v87
  %v463 = vunpack.c.l.b16 %v88
  %v464 = vunpack.c.h.b16 %v88
  %v465 = vunpack.c.l.b16 %v89
  %v466 = vunpack.c.h.b16 %v89
  %v467 = vunpack.c.l.b16 %v90
  %v468 = vunpack.c.h.b16 %v90
  %v469 = vunpack.c.l.b16 %v91
  %v470 = vunpack.c.h.b16 %v91
  %v471 = vunpack.c.l.b16 %v92
  %v472 = vunpack.c.h.b16 %v92
  %v473 = vunpack.c.l.b16 %v93
  %v474 = vunpack.c.h.b16 %v93
  %v475 = vunpack.c.l.b16 %v94
  %v476 = vunpack.c.h.b16 %v94
  %v477 = vunpack.c.l.b16 %v95
  %v478 = vunpack.c.h.b16 %v95
  %v479 = vunpack.c.l.b16 %v96
  %v480 = vunpack.c.h.b16 %v96
  %v481 = vunpack.c.l.b16 %v97
  %v482 = vunpack.c.h.b16 %v97
  %v483 = vunpack.c.l.b16 %v98
  %v484 = vunpack.c.h.b16 %v98
  %v485 = vunpack.c.l.b16 %v99
  %v486 = vunpack.c.h.b16 %v99
  %v487 = vunpack.c.l.b16 %v100
  %v488 = vunpack.c.h.b16 %v100
  %v489 = vunpack.c.l.b16 %v101
  %v490 = vunpack.c.h.b16 %v101
  %v491 = vunpack.c.l.b16 %v102
  %v492 = vunpack.c.h.b16 %v102
  %v493 = vunpack.c.l.b16 %v103
  %v494 = vunpack.c.h.b16 %v103
  %v495 = vunpack.c.l.b16 %v104
  %v496 = vunpack.c.h.b16 %v104
  %v497 = vunpack.c.l.b16 %v105
  %v498 = vunpack.c.h.b16 %v105
  %v499 = vunpack.c.l.b16 %v106
  %v500 = vunpack.c.h.b16 %v106
  %v501 = vunpack.c.l.b16 %v107
  %v502 = vunpack.c.h.b16 %v107
  %v503 = vunpack.c.l.b16 %v108
  %v504 = vunpack.c.h.b16 %v108
  %v505 = vunpack.c.l.b16 %v109
  %v506 = vunpack.c.h.b16 %v109
  %v507 = vunpack.c.l.b16 %v110
  %v508 = vunpack.c.h.b16 %v110
  %v509 = vunpack.c.l.b16 %v111
  %v510 = vunpack.c.h.b16 %v111
  %v511 = vunpack.c.l.b16 %v112
  %v512 = vunpack.c.h.b16 %v112
  %v513 = vunpack.c.l.b16 %v113
  %v514 = vunpack.c.h.b16 %v113
  %v515 = vunpack.c.l.b16 %v114
  %v516 = vunpack.c.h.b16 %v114
  %v517 = vunpack.c.l.b16 %v115
  %v518 = vunpack.c.h.b16 %v115
  %v519 = vunpack.c.l.b16 %v116
  %v520 = vunpack.c.h.b16 %v116
  %v521 = vunpack.c.l.b16 %v117
  %v522 = vunpack.c.h.b16 %v117
  %v523 = vunpack.c.l.b16 %v118
  %v524 = vunpack.c.h.b16 %v118
  %v525 = vunpack.c.l.b16 %v119
  %v526 = vunpack.c.h.b16 %v119
  %v527 = vunpack.c.l.b16 %v120
  %v528 = vunpack.c.h.b16 %v120
  %v529 = vunpack.c.l.b16 %v121
  %v530 = vunpack.c.h.b16 %v121
  %v531 = vunpack.c.l.b16 %v122
  %v532 = vunpack.c.h.b16 %v122
  %v533 = vunpack.c.l.b16 %v123
  %v534 = vunpack.c.h.b16 %v123
  %v535 = vunpack.c.l.b16 %v124
  %v536 = vunpack.c.h.b16 %v124
  %v537 = vunpack.c.l.b16 %v125
  %v538 = vunpack.c.h.b16 %v125
  %v539 = vunpack.c.l.b16 %v126
  %v540 = vunpack.c.h.b16 %v126
  %v541 = vunpack.c.l.b16 %v127
  %v542 = vunpack.c.h.b16 %v127
  %v543 = vunpack.c.l.b16 %v128
  %v544 = vunpack.c.h.b16 %v128
  %v545 = vunpack.c.l.b16 %v129
  %v546 = vunpack.c.h.b16 %v129
  %v547 = vunpack.c.l.b16 %v130
  %v548 = vunpack.c.h.b16 %v130
  %v549 = vunpack.c.l.b16 %v131
  %v550 = vunpack.c.h.b16 %v131
  %v551 = vunpack.c.l.b16 %v132
  %v552 = vunpack.c.h.b16 %v132
  %v553 = vunpack.c.l.b16 %v133
  %v554 = vunpack.c.h.b16 %v133
  %v555 = vunpack.c.l.b16 %v134
  %v556 = vunpack.c.h.b16 %v134
  %v557 = vunpack.c.l.b16 %v135
  %v558 = vunpack.c.h.b16 %v135
  %v559 = vunpack.c.l.b16 %v136
  %v560 = vunpack.c.h.b16 %v136
  %v561 = vunpack.c.l.b16 %v137
  %v562 = vunpack.c.h.b16 %v137
  %v563 = vunpack.c.l.b16 %v138
  %v564 = vunpack.c.h.b16 %v138
  %v565 = vunpack.c.l.b16 %v139
  %v566 = vunpack.c.h.b16 %v139
  %v567 = vunpack.c.l.b16 %v140
  %v568 = vunpack.c.h.b16 %v140
  %v569 = vunpack.c.l.b16 %v141
  %v570 = vunpack.c.h.b16 %v141
  %v571 = vunpack.c.l.b16 %v142
  %v572 = vunpack.c.h.b16 %v142
  %v573 = vunpack.c.l.b16 %v143
  %v574 = vunpack.c.h.b16 %v143
  %v575 = vunpack.c.l.b16 %v144
  %v576 = vunpack.c.h.b16 %v144
  %v577 = vunpack.c.l.b16 %v145
  %v578 = vunpack.c.h.b16 %v145
  %v579 = vunpack.c.l.b16 %v146
  %v580 = vunpack.c.h.b16 %v146
  %v581 = vunpack.c.l.b16 %v147
  %v582 = vunpack.c.h.b16 %v147
  %v583 = vunpack.c.l.b16 %v148
  %v584 = vunpack.c.h.b16 %v148
  %v585 = vunpack.c.l.b16 %v149
  %v586 = vunpack.c.h.b16 %v149
  %v587 = vunpack.c.l.b16 %v150
  %v588 = vunpack.c.h.b16 %v150
  %v589 = vunpack.c.l.b16 %v151
  %v590 = vunpack.c.h.b16 %v151
  %v591 = vunpack.c.l.b16 %v152
  %v592 = vunpack.c.h.b16 %v152
  %v593 = vunpack.c.l.b16 %v153
  %v594 = vunpack.c.h.b16 %v153
  %v595 = vunpack.c.l.b16 %v154
  %v596 = vunpack.c.h.b16 %v154
  %v597 = vunpack.c.l.b16 %v155
  %v598 = vunpack.c.h.b16 %v155
  %v599 = vunpack.c.l.b16 %v156
  %v600 = vunpack.c.h.b16 %v156
  %v601 = vunpack.c.l.b16 %v157
  %v602 = vunpack.c.h.b16 %v157
  %v603 = vunpack.c.l.b16 %v158
  %v604 = vunpack.c.h.b16 %v158
  %v605 = vpack.c.b16 %v353, %v349
  %v606 = vpack.c.b16 %v354, %v350
  %v607 = vpack.c.b16 %v355, %v351
  %v608 = vpack.c.b16 %v356, %v352
  %v609 = vpack.c.b16 %v361, %v357
  %v610 = vpack.c.b16 %v362, %v358
  %v611 = vpack.c.b16 %v363, %v359
  %v612 = vpack.c.b16 %v364, %v360
  %v613 = vpack.c.b16 %v369, %v365
  %v614 = vpack.c.b16 %v370, %v366
  %v615 = vpack.c.b16 %v371, %v367
  %v616 = vpack.c.b16 %v372, %v368
  %v617 = vpack.c.b16 %v377, %v373
  %v618 = vpack.c.b16 %v378, %v374
  %v619 = vpack.c.b16 %v379, %v375
  %v620 = vpack.c.b16 %v380, %v376
  %v621 = vpack.c.b16 %v385, %v381
  %v622 = vpack.c.b16 %v386, %v382
  %v623 = vpack.c.b16 %v387, %v383
  %v624 = vpack.c.b16 %v388, %v384
  %v625 = vpack.c.b16 %v393, %v389
  %v626 = vpack.c.b16 %v394, %v390
  %v627 = vpack.c.b16 %v395, %v391
  %v628 = vpack.c.b16 %v396, %v392
  %v629 = vpack.c.b16 %v401, %v397
  %v630 = vpack.c.b16 %v402, %v398
  %v631 = vpack.c.b16 %v403, %v399
  %v632 = vpack.c.b16 %v404, %v400
  %v633 = vpack.c.b16 %v409, %v405
  %v634 = vpack.c.b16 %v410, %v406
  %v635 = vpack.c.b16 %v411, %v407
  %v636 = vpack.c.b16 %v412, %v408
  %v637 = vpack.c.b16 %v417, %v413
  %v638 = vpack.c.b16 %v418, %v414
  %v639 = vpack.c.b16 %v419, %v415
  %v640 = vpack.c.b16 %v420, %v416
  %v641 = vpack.c.b16 %v425, %v421
  %v642 = vpack.c.b16 %v426, %v422
  %v643 = vpack.c.b16 %v427, %v423
  %v644 = vpack.c.b16 %v428, %v424
  %v645 = vpack.c.b16 %v433, %v429
  %v646 = vpack.c.b16 %v434, %v430
  %v647 = vpack.c.b16 %v435, %v431
  %v648 = vpack.c.b16 %v436, %v432
  %v649 = vpack.c.b16 %v441, %v437
  %v650 = vpack.c.b16 %v442, %v438
  %v651 = vpack.c.b16 %v443, %v439
  %v652 = vpack.c.b16 %v444, %v440
  %v653 = vpack.c.b16 %v449, %v445
  %v654 = vpack.c.b16 %v450, %v446
  %v655 = vpack.c.b16 %v451, %v447
  %v656 = vpack.c.b16 %v452, %v448
  %v657 = vpack.c.b16 %v457, %v453
  %v658 = vpack.c.b16 %v458, %v454
  %v659 = vpack.c.b16 %v459, %v455
  %v660 = vpack.c.b16 %v460, %v456
  %v661 = vpack.c.b16 %v465, %v461
  %v662 = vpack.c.b16 %v466, %v462
  %v663 = vpack.c.b16 %v467, %v463
  %v664 = vpack.c.b16 %v468, %v464
  %v665 = vpack.c.b16 %v473, %v469
  %v666 = vpack.c.b16 %v474, %v470
  %v667 = vpack.c.b16 %v475, %v471
  %v668 = vpack.c.b16 %v476, %v472
  %v669 = vpack.c.b16 %v481, %v477
  %v670 = vpack.c.b16 %v482, %v478
  %v671 = vpack.c.b16 %v483, %v479
  %v672 = vpack.c.b16 %v484, %v480
  %v673 = vpack.c.b16 %v489, %v485
  %v674 = vpack.c.b16 %v490, %v486
  %v675 = vpack.c.b16 %v491, %v487
  %v676 = vpack.c.b16 %v492, %v488
  %v677 = vpack.c.b16 %v497, %v493
  %v678 = vpack.c.b16 %v498, %v494
  %v679 = vpack.c.b16 %v499, %v495
  %v680 = vpack.c.b16 %v500, %v496
  %v681 = vpack.c.b16 %v505, %v501
  %v682 = vpack.c.b16 %v506, %v502
  %v683 = vpack.c.b16 %v507, %v503
  %v684 = vpack.c.b16 %v508, %v504
  %v685 = vpack.c.b16 %v513, %v509
  %v686 = vpack.c.b16 %v514, %v510
  %v687 = vpack.c.b16 %v515, %v511
  %v688 = vpack.c.b16 %v516, %v512
  %v689 = vpack.c.b16 %v521, %v517
  %v690 = vpack.c.b16 %v522, %v518
  %v691 = vpack.c.b16 %v523, %v519
  %v692 = vpack.c.b16 %v524, %v520
  %v693 = vpack.c.b16 %v529, %v525
  %v694 = vpack.c.b16 %v530, %v526
  %v695 = vpack.c.b16 %v531, %v527
  %v696 = vpack.c.b16 %v532, %v528
  %v697 = vpack.c.b16 %v537, %v533
  %v698 = vpack.c.b16 %v538, %v534
  %v699 = vpack.c.b16 %v539, %v535
  %v700 = vpack.c.b16 %v540, %v536
  %v701 = vpack.c.b16 %v545, %v541
  %v702 = vpack.c.b16 %v546, %v542
  %v703 = vpack.c.b16 %v547, %v543
  %v704 = vpack.c.b16 %v548, %v544
  %v705 = vpack.c.b16 %v553, %v549
  %v706 = vpack.c.b16 %v554, %v550
  %v707 = vpack.c.b16 %v555, %v551
  %v708 = vpack.c.b16 %v556, %v552
  %v709 = vpack.c.b16 %v561, %v557
  %v710 = vpack.c.b16 %v562, %v558
  %v711 = vpack.c.b16 %v563, %v559
  %v712 = vpack.c.b16 %v564, %v560
  %v713 = vpack.c.b16 %v569, %v565
  %v714 = vpack.c.b16 %v570, %v566
  %v715 = vpack.c.b16 %v571, %v567
  %v716 = vpack.c.b16 %v572, %v568
  %v717 = vpack.c.b16 %v577, %v573
  %v718 = vpack.c.b16 %v578, %v574
  %v719 = vpack.c.b16 %v579, %v575
  %v720 = vpack.c.b16 %v580, %v576
  %v721 = vpack.c.b16 %v585, %v581
  %v722 = vpack.c.b16 %v586, %v582
  %v723 = vpack.c.b16 %v587, %v583
  %v724 = vpack.c.b16 %v588, %v584
  %v725 = vpack.c.b16 %v593, %v589
  %v726 = vpack.c.b16 %v594, %v590
  %v727 = vpack.c.b16 %v595, %v591
  %v728 = vpack.c.b16 %v596, %v592
  %v729 = vpack.c.b16 %v601, %v597
  %v730 = vpack.c.b16 %v602, %v598
  %v731 = vpack.c.b16 %v603, %v599
  %v732 = vpack.c.b16 %v604, %v600
  %861 = vmatprep.subr.bf16.mxu0 %v606
  %862 = vmatpush1.bf16.msra.mxu0 %v605
  %863 = vmatprep.subr.bf16.mxu0 %v610
  %864 = vmatpush1.bf16.msra.mxu0 %v609
  %865 = vmatprep.subr.bf16.mxu0 %v614
  %866 = vmatpush1.bf16.msra.mxu0 %v613
  %867 = vmatprep.subr.bf16.mxu0 %v618
  %868 = vmatpush1.bf16.msra.mxu0 %v617
  %869 = vmatprep.subr.bf16.mxu0 %v622
  %870 = vmatpush1.bf16.msra.mxu0 %v621
  %871 = vmatprep.subr.bf16.mxu0 %v626
  %872 = vmatpush1.bf16.msra.mxu0 %v625
  %873 = vmatprep.subr.bf16.mxu0 %v630
  %874 = vmatpush1.bf16.msra.mxu0 %v629
  %875 = vmatprep.subr.bf16.mxu0 %v634
  %876 = vmatpush1.bf16.msra.mxu0 %v633
  %877 = vmatprep.subr.bf16.mxu0 %v638
  %878 = vmatpush1.bf16.msra.mxu0 %v637
  %879 = vmatprep.subr.bf16.mxu0 %v642
  %880 = vmatpush1.bf16.msra.mxu0 %v641
  %881 = vmatprep.subr.bf16.mxu0 %v646
  %882 = vmatpush1.bf16.msra.mxu0 %v645
  %883 = vmatprep.subr.bf16.mxu0 %v650
  %884 = vmatpush1.bf16.msra.mxu0 %v649
  %885 = vmatprep.subr.bf16.mxu0 %v654
  %886 = vmatpush1.bf16.msra.mxu0 %v653
  %887 = vmatprep.subr.bf16.mxu0 %v658
  %888 = vmatpush1.bf16.msra.mxu0 %v657
  %889 = vmatprep.subr.bf16.mxu0 %v662
  %890 = vmatpush1.bf16.msra.mxu0 %v661
  %891 = vmatprep.subr.bf16.mxu0 %v666
  %892 = vmatpush1.bf16.msra.mxu0 %v665
  %893 = vmatprep.mubr.bf16.mxu0 %v206
  %894 = vmatmul.mubr.bf16.gmra.mrb[0].mxu0 %v205
  %v895 = vpop.f32.mrb[0].mxu0
  %v896 = vadd.f32 %v164, %v895
  %v897 = vpop.f32.mrb[0].mxu0
  %v898 = vadd.f32 %v168, %v897
  %v899 = vpop.f32.mrb[0].mxu0
  %v900 = vadd.f32 %v164, %v899
  %v901 = vpop.f32.mrb[0].mxu0
  %v902 = vadd.f32 %v168, %v901
  %903 = vmatprep.mubr.bf16.mxu0 %v210
  %904 = vmatmul.mubr.bf16.gmra.mrb[0].mxu0 %v209
  %v905 = vpop.f32.mrb[0].mxu0
  %v906 = vadd.f32 %v164, %v905
  %v907 = vpop.f32.mrb[0].mxu0
  %v908 = vadd.f32 %v168, %v907
  %v909 = vpop.f32.mrb[0].mxu0
  %v910 = vadd.f32 %v164, %v909
  %v911 = vpop.f32.mrb[0].mxu0
  %v912 = vadd.f32 %v168, %v911
  %913 = vdwg.mxu0
  %914 = vmatprep.subr.bf16.mxu0 %v670
  %915 = vmatpush1.bf16.msra.mxu0 %v669
  %916 = vmatprep.subr.bf16.mxu0 %v674
  %917 = vmatpush1.bf16.msra.mxu0 %v673
  %918 = vmatprep.subr.bf16.mxu0 %v678
  %919 = vmatpush1.bf16.msra.mxu0 %v677
  %920 = vmatprep.subr.bf16.mxu0 %v682
  %921 = vmatpush1.bf16.msra.mxu0 %v681
  %922 = vmatprep.subr.bf16.mxu0 %v686
  %923 = vmatpush1.bf16.msra.mxu0 %v685
  %924 = vmatprep.subr.bf16.mxu0 %v690
  %925 = vmatpush1.bf16.msra.mxu0 %v689
  %926 = vmatprep.subr.bf16.mxu0 %v694
  %927 = vmatpush1.bf16.msra.mxu0 %v693
  %928 = vmatprep.subr.bf16.mxu0 %v698
  %929 = vmatpush1.bf16.msra.mxu0 %v697
  %930 = vmatprep.subr.bf16.mxu0 %v702
  %931 = vmatpush1.bf16.msra.mxu0 %v701
  %932 = vmatprep.subr.bf16.mxu0 %v706
  %933 = vmatpush1.bf16.msra.mxu0 %v705
  %934 = vmatprep.subr.bf16.mxu0 %v710
  %935 = vmatpush1.bf16.msra.mxu0 %v709
  %936 = vmatprep.subr.bf16.mxu0 %v714
  %937 = vmatpush1.bf16.msra.mxu0 %v713
  %938 = vmatprep.subr.bf16.mxu0 %v718
  %939 = vmatpush1.bf16.msra.mxu0 %v717
  %940 = vmatprep.subr.bf16.mxu0 %v722
  %941 = vmatpush1.bf16.msra.mxu0 %v721
  %942 = vmatprep.subr.bf16.mxu0 %v726
  %943 = vmatpush1.bf16.msra.mxu0 %v725
  %944 = vmatprep.subr.bf16.mxu0 %v730
  %945 = vmatpush1.bf16.msra.mxu0 %v729
  %946 = vmatprep.mubr.bf16.mxu0 %v208
  %947 = vmatmul.mubr.bf16.gmra.mrb[0].mxu0 %v207
  %v948 = vpop.f32.mrb[0].mxu0
  %v949 = vadd.f32 %v896, %v948
  %v950 = vpop.f32.mrb[0].mxu0
  %v951 = vadd.f32 %v898, %v950
  %v952 = vpop.f32.mrb[0].mxu0
  %v953 = vadd.f32 %v900, %v952
  %v954 = vpop.f32.mrb[0].mxu0
  %v955 = vadd.f32 %v902, %v954
  %956 = vmatprep.mubr.bf16.mxu0 %v212
  %957 = vmatmul.mubr.bf16.gmra.mrb[0].mxu0 %v211
  %v958 = vpop.f32.mrb[0].mxu0
  %v959 = vadd.f32 %v906, %v958
  %v960 = vpop.f32.mrb[0].mxu0
  %v961 = vadd.f32 %v908, %v960
  %v962 = vpop.f32.mrb[0].mxu0
  %v963 = vadd.f32 %v910, %v962
  %v964 = vpop.f32.mrb[0].mxu0
  %v965 = vadd.f32 %v912, %v964
  %966 = vdwg.mxu0
  %967 = vmatprep.subr.bf16.mxu0 %v608
  %968 = vmatpush1.bf16.msra.mxu0 %v607
  %969 = vmatprep.subr.bf16.mxu0 %v612
  %970 = vmatpush1.bf16.msra.mxu0 %v611
  %971 = vmatprep.subr.bf16.mxu0 %v616
  %972 = vmatpush1.bf16.msra.mxu0 %v615
  %973 = vmatprep.subr.bf16.mxu0 %v620
  %974 = vmatpush1.bf16.msra.mxu0 %v619
  %975 = vmatprep.subr.bf16.mxu0 %v624
  %976 = vmatpush1.bf16.msra.mxu0 %v623
  %977 = vmatprep.subr.bf16.mxu0 %v628
  %978 = vmatpush1.bf16.msra.mxu0 %v627
  %979 = vmatprep.subr.bf16.mxu0 %v632
  %980 = vmatpush1.bf16.msra.mxu0 %v631
  %981 = vmatprep.subr.bf16.mxu0 %v636
  %982 = vmatpush1.bf16.msra.mxu0 %v635
  %983 = vmatprep.subr.bf16.mxu0 %v640
  %984 = vmatpush1.bf16.msra.mxu0 %v639
  %985 = vmatprep.subr.bf16.mxu0 %v644
  %986 = vmatpush1.bf16.msra.mxu0 %v643
  %987 = vmatprep.subr.bf16.mxu0 %v648
  %988 = vmatpush1.bf16.msra.mxu0 %v647
  %989 = vmatprep.subr.bf16.mxu0 %v652
  %990 = vmatpush1.bf16.msra.mxu0 %v651
  %991 = vmatprep.subr.bf16.mxu0 %v656
  %992 = vmatpush1.bf16.msra.mxu0 %v655
  %993 = vmatprep.subr.bf16.mxu0 %v660
  %994 = vmatpush1.bf16.msra.mxu0 %v659
  %995 = vmatprep.subr.bf16.mxu0 %v664
  %996 = vmatpush1.bf16.msra.mxu0 %v663
  %997 = vmatprep.subr.bf16.mxu0 %v668
  %998 = vmatpush1.bf16.msra.mxu0 %v667
  %999 = vmatprep.mubr.bf16.mxu0 %v206
  %1000 = vmatmul.mubr.bf16.gmra.mrb[0].mxu0 %v205
  %v1001 = vpop.f32.mrb[0].mxu0
  %v1002 = vadd.f32 %v172, %v1001
  %v1003 = vpop.f32.mrb[0].mxu0
  %v1004 = vadd.f32 %v176, %v1003
  %v1005 = vpop.f32.mrb[0].mxu0
  %v1006 = vadd.f32 %v172, %v1005
  %v1007 = vpop.f32.mrb[0].mxu0
  %v1008 = vadd.f32 %v176, %v1007
  %1009 = vmatprep.mubr.bf16.mxu0 %v210
  %1010 = vmatmul.mubr.bf16.gmra.mrb[0].mxu0 %v209
  %v1011 = vpop.f32.mrb[0].mxu0
  %v1012 = vadd.f32 %v172, %v1011
  %v1013 = vpop.f32.mrb[0].mxu0
  %v1014 = vadd.f32 %v176, %v1013
  %v1015 = vpop.f32.mrb[0].mxu0
  %v1016 = vadd.f32 %v172, %v1015
  %v1017 = vpop.f32.mrb[0].mxu0
  %v1018 = vadd.f32 %v176, %v1017
  %1019 = vdwg.mxu0
  %1020 = vmatprep.subr.bf16.mxu0 %v672
  %1021 = vmatpush1.bf16.msra.mxu0 %v671
  %1022 = vmatprep.subr.bf16.mxu0 %v676
  %1023 = vmatpush1.bf16.msra.mxu0 %v675
  %1024 = vmatprep.subr.bf16.mxu0 %v680
  %1025 = vmatpush1.bf16.msra.mxu0 %v679
  %1026 = vmatprep.subr.bf16.mxu0 %v684
  %1027 = vmatpush1.bf16.msra.mxu0 %v683
  %1028 = vmatprep.subr.bf16.mxu0 %v688
  %1029 = vmatpush1.bf16.msra.mxu0 %v687
  %1030 = vmatprep.subr.bf16.mxu0 %v692
  %1031 = vmatpush1.bf16.msra.mxu0 %v691
  %1032 = vmatprep.subr.bf16.mxu0 %v696
  %1033 = vmatpush1.bf16.msra.mxu0 %v695
  %1034 = vmatprep.subr.bf16.mxu0 %v700
  %1035 = vmatpush1.bf16.msra.mxu0 %v699
  %1036 = vmatprep.subr.bf16.mxu0 %v704
  %1037 = vmatpush1.bf16.msra.mxu0 %v703
  %1038 = vmatprep.subr.bf16.mxu0 %v708
  %1039 = vmatpush1.bf16.msra.mxu0 %v707
  %1040 = vmatprep.subr.bf16.mxu0 %v712
  %1041 = vmatpush1.bf16.msra.mxu0 %v711
  %1042 = vmatprep.subr.bf16.mxu0 %v716
  %1043 = vmatpush1.bf16.msra.mxu0 %v715
  %1044 = vmatprep.subr.bf16.mxu0 %v720
  %1045 = vmatpush1.bf16.msra.mxu0 %v719
  %1046 = vmatprep.subr.bf16.mxu0 %v724
  %1047 = vmatpush1.bf16.msra.mxu0 %v723
  %1048 = vmatprep.subr.bf16.mxu0 %v728
  %1049 = vmatpush1.bf16.msra.mxu0 %v727
  %1050 = vmatprep.subr.bf16.mxu0 %v732
  %1051 = vmatpush1.bf16.msra.mxu0 %v731
  %1052 = vmatprep.mubr.bf16.mxu0 %v208
  %1053 = vmatmul.mubr.bf16.gmra.mrb[0].mxu0 %v207
  %v1054 = vpop.f32.mrb[0].mxu0
  %v1055 = vadd.f32 %v1002, %v1054
  %v1056 = vpop.f32.mrb[0].mxu0
  %v1057 = vadd.f32 %v1004, %v1056
  %v1058 = vpop.f32.mrb[0].mxu0
  %v1059 = vadd.f32 %v1006, %v1058
  %v1060 = vpop.f32.mrb[0].mxu0
  %v1061 = vadd.f32 %v1008, %v1060
  %1062 = vmatprep.mubr.bf16.mxu0 %v212
  %1063 = vmatmul.mubr.bf16.gmra.mrb[0].mxu0 %v211
  %v1064 = vpop.f32.mrb[0].mxu0
  %v1065 = vadd.f32 %v1012, %v1064
  %v1066 = vpop.f32.mrb[0].mxu0
  %v1067 = vadd.f32 %v1014, %v1066
  %v1068 = vpop.f32.mrb[0].mxu0
  %v1069 = vadd.f32 %v1016, %v1068
  %v1070 = vpop.f32.mrb[0].mxu0
  %v1071 = vadd.f32 %v1018, %v1070
  %1072 = vdwg.mxu0
  %v1073 = vld [vmem:[%s3] sm:$0xff]
  %v1074 = vld [vmem:[%s3 + $0x8] sm:$0xff]
  %v1075 = vld [vmem:[%s3 + $0x10] sm:$0xff]
  %v1076 = vld [vmem:[%s3 + $0x18] sm:$0xff]
  %v1077 = vld [vmem:[%s3 + $0x20] sm:$0xff]
  %v1078 = vld [vmem:[%s3 + $0x28] sm:$0xff]
  %v1079 = vld [vmem:[%s3 + $0x30] sm:$0xff]
  %v1080 = vld [vmem:[%s3 + $0x38] sm:$0xff]
  %v1081 = vunpack.c.l.bf16 %v1073
  %v1082 = vunpack.c.h.bf16 %v1073
  %v1083 = vunpack.c.l.bf16 %v1074
  %v1084 = vunpack.c.h.bf16 %v1074
  %v1085 = vunpack.c.l.bf16 %v1075
  %v1086 = vunpack.c.h.bf16 %v1075
  %v1087 = vunpack.c.l.bf16 %v1076
  %v1088 = vunpack.c.h.bf16 %v1076
  %v1089 = vunpack.c.l.bf16 %v1077
  %v1090 = vunpack.c.h.bf16 %v1077
  %v1091 = vunpack.c.l.bf16 %v1078
  %v1092 = vunpack.c.h.bf16 %v1078
  %v1093 = vunpack.c.l.bf16 %v1079
  %v1094 = vunpack.c.h.bf16 %v1079
  %v1095 = vunpack.c.l.bf16 %v1080
  %v1096 = vunpack.c.h.bf16 %v1080
  %v1097 = vadd.f32 %v949, %v1081
  %v1098 = vadd.f32 %v951, %v1082
  %v1099 = vadd.f32 %v1055, %v1083
  %v1100 = vadd.f32 %v1057, %v1084
  %v1101 = vadd.f32 %v953, %v1085
  %v1102 = vadd.f32 %v955, %v1086
  %v1103 = vadd.f32 %v1059, %v1087
  %v1104 = vadd.f32 %v1061, %v1088
  %v1105 = vadd.f32 %v959, %v1089
  %v1106 = vadd.f32 %v961, %v1090
  %v1107 = vadd.f32 %v1065, %v1091
  %v1108 = vadd.f32 %v1067, %v1092
  %v1109 = vadd.f32 %v963, %v1093
  %v1110 = vadd.f32 %v965, %v1094
  %v1111 = vadd.f32 %v1069, %v1095
  %v1112 = vadd.f32 %v1071, %v1096
  %v1113 = vadd.f32 %v1097, %v1098
  %v1114 = vadd.f32 %v1113, %v1099
  %v1115 = vadd.f32 %v1114, %v1100
  %1116 = vadd.xlane.f32.xlu0 %v1115
  %v1117 = vpop.xlane.xlu0 %1116
  %v1118 = vadd.f32 %v1101, %v1102
  %v1119 = vadd.f32 %v1118, %v1103
  %v1120 = vadd.f32 %v1119, %v1104
  %1121 = vadd.xlane.f32.xlu0 %v1120
  %v1122 = vpop.xlane.xlu0 %1121
  %v1123 = vadd.f32 %v1105, %v1106
  %v1124 = vadd.f32 %v1123, %v1107
  %v1125 = vadd.f32 %v1124, %v1108
  %1126 = vadd.xlane.f32.xlu0 %v1125
  %v1127 = vpop.xlane.xlu0 %1126
  %v1128 = vadd.f32 %v1109, %v1110
  %v1129 = vadd.f32 %v1128, %v1111
  %v1130 = vadd.f32 %v1129, %v1112
  %1131 = vadd.xlane.f32.xlu0 %v1130
  %v1132 = vpop.xlane.xlu0 %1131
  %v1133 = vrcp.pop 512.0
  %v1134 = vmul.f32 %v1117, %v1133
  %v1135 = vmul.f32 %v1122, %v1133
  %v1136 = vmul.f32 %v1127, %v1133
  %v1137 = vmul.f32 %v1132, %v1133
  %v1138 = vsub.f32 %v1097, %v1134
  %v1139 = vsub.f32 %v1098, %v1134
  %v1140 = vsub.f32 %v1099, %v1134
  %v1141 = vsub.f32 %v1100, %v1134
  %v1142 = vsub.f32 %v1101, %v1135
  %v1143 = vsub.f32 %v1102, %v1135
  %v1144 = vsub.f32 %v1103, %v1135
  %v1145 = vsub.f32 %v1104, %v1135
  %v1146 = vsub.f32 %v1105, %v1136
  %v1147 = vsub.f32 %v1106, %v1136
  %v1148 = vsub.f32 %v1107, %v1136
  %v1149 = vsub.f32 %v1108, %v1136
  %v1150 = vsub.f32 %v1109, %v1137
  %v1151 = vsub.f32 %v1110, %v1137
  %v1152 = vsub.f32 %v1111, %v1137
  %v1153 = vsub.f32 %v1112, %v1137
  %v1154 = vmul.f32 %v1138, %v1138
  %v1155 = vmul.f32 %v1139, %v1139
  %v1156 = vmul.f32 %v1140, %v1140
  %v1157 = vmul.f32 %v1141, %v1141
  %v1158 = vmul.f32 %v1142, %v1142
  %v1159 = vmul.f32 %v1143, %v1143
  %v1160 = vmul.f32 %v1144, %v1144
  %v1161 = vmul.f32 %v1145, %v1145
  %v1162 = vmul.f32 %v1146, %v1146
  %v1163 = vmul.f32 %v1147, %v1147
  %v1164 = vmul.f32 %v1148, %v1148
  %v1165 = vmul.f32 %v1149, %v1149
  %v1166 = vmul.f32 %v1150, %v1150
  %v1167 = vmul.f32 %v1151, %v1151
  %v1168 = vmul.f32 %v1152, %v1152
  %v1169 = vmul.f32 %v1153, %v1153
  %v1170 = vadd.f32 %v1154, %v1155
  %v1171 = vadd.f32 %v1170, %v1156
  %v1172 = vadd.f32 %v1171, %v1157
  %1173 = vadd.xlane.f32.xlu0 %v1172
  %v1174 = vpop.xlane.xlu0 %1173
  %v1175 = vadd.f32 %v1158, %v1159
  %v1176 = vadd.f32 %v1175, %v1160
  %v1177 = vadd.f32 %v1176, %v1161
  %1178 = vadd.xlane.f32.xlu0 %v1177
  %v1179 = vpop.xlane.xlu0 %1178
  %v1180 = vadd.f32 %v1162, %v1163
  %v1181 = vadd.f32 %v1180, %v1164
  %v1182 = vadd.f32 %v1181, %v1165
  %1183 = vadd.xlane.f32.xlu0 %v1182
  %v1184 = vpop.xlane.xlu0 %1183
  %v1185 = vadd.f32 %v1166, %v1167
  %v1186 = vadd.f32 %v1185, %v1168
  %v1187 = vadd.f32 %v1186, %v1169
  %1188 = vadd.xlane.f32.xlu0 %v1187
  %v1189 = vpop.xlane.xlu0 %1188
  %v1190 = vmul.f32 %v1174, %v1133
  %v1191 = vmul.f32 %v1179, %v1133
  %v1192 = vmul.f32 %v1184, %v1133
  %v1193 = vmul.f32 %v1189, %v1133
  %v1194 = vadd.f32 %v1190, 1e-05
  %v1195 = vadd.f32 %v1191, 1e-05
  %v1196 = vadd.f32 %v1192, 1e-05
  %v1197 = vadd.f32 %v1193, 1e-05
  %v1198 = vrsqrt.pop %v1194
  %v1199 = vrsqrt.pop %v1195
  %v1200 = vrsqrt.pop %v1196
  %v1201 = vrsqrt.pop %v1197
  %v1202 = vmul.f32 %v1138, %v1198
  %v1203 = vmul.f32 %v1139, %v1198
  %v1204 = vmul.f32 %v1140, %v1198
  %v1205 = vmul.f32 %v1141, %v1198
  %v1206 = vmul.f32 %v1142, %v1199
  %v1207 = vmul.f32 %v1143, %v1199
  %v1208 = vmul.f32 %v1144, %v1199
  %v1209 = vmul.f32 %v1145, %v1199
  %v1210 = vmul.f32 %v1146, %v1200
  %v1211 = vmul.f32 %v1147, %v1200
  %v1212 = vmul.f32 %v1148, %v1200
  %v1213 = vmul.f32 %v1149, %v1200
  %v1214 = vmul.f32 %v1150, %v1201
  %v1215 = vmul.f32 %v1151, %v1201
  %v1216 = vmul.f32 %v1152, %v1201
  %v1217 = vmul.f32 %v1153, %v1201
  %v1218 = vld [vmem:[%s4] sm:$0xf]
  %v1220 = vlaneseq
  %v1221 = vshrl.u32 %v1220, 7
  %v1222 = vsub.s32 0, %v1221
  %v1223 = vrot.slane %v1218, %v1222
  %v1224 = vlaneseq
  %v1225 = vshrl.u32 %v1224, 7
  %v1226 = vsub.s32 1, %v1225
  %v1227 = vrot.slane %v1218, %v1226
  %v1228 = vlaneseq
  %v1229 = vshrl.u32 %v1228, 7
  %v1230 = vsub.s32 2, %v1229
  %v1231 = vrot.slane %v1218, %v1230
  %v1232 = vlaneseq
  %v1233 = vshrl.u32 %v1232, 7
  %v1234 = vsub.s32 3, %v1233
  %v1235 = vrot.slane %v1218, %v1234
  %v1240 = vmul.f32 %v1202, %v1223
  %v1241 = vmul.f32 %v1203, %v1227
  %v1242 = vmul.f32 %v1204, %v1231
  %v1243 = vmul.f32 %v1205, %v1235
  %v1244 = vmul.f32 %v1206, %v1223
  %v1245 = vmul.f32 %v1207, %v1227
  %v1246 = vmul.f32 %v1208, %v1231
  %v1247 = vmul.f32 %v1209, %v1235
  %v1248 = vmul.f32 %v1210, %v1223
  %v1249 = vmul.f32 %v1211, %v1227
  %v1250 = vmul.f32 %v1212, %v1231
  %v1251 = vmul.f32 %v1213, %v1235
  %v1252 = vmul.f32 %v1214, %v1223
  %v1253 = vmul.f32 %v1215, %v1227
  %v1254 = vmul.f32 %v1216, %v1231
  %v1255 = vmul.f32 %v1217, %v1235
  %v1256 = vld [vmem:[%s5] sm:$0xf]
  %v1258 = vlaneseq
  %v1259 = vshrl.u32 %v1258, 7
  %v1260 = vsub.s32 0, %v1259
  %v1261 = vrot.slane %v1256, %v1260
  %v1262 = vlaneseq
  %v1263 = vshrl.u32 %v1262, 7
  %v1264 = vsub.s32 1, %v1263
  %v1265 = vrot.slane %v1256, %v1264
  %v1266 = vlaneseq
  %v1267 = vshrl.u32 %v1266, 7
  %v1268 = vsub.s32 2, %v1267
  %v1269 = vrot.slane %v1256, %v1268
  %v1270 = vlaneseq
  %v1271 = vshrl.u32 %v1270, 7
  %v1272 = vsub.s32 3, %v1271
  %v1273 = vrot.slane %v1256, %v1272
  %v1278 = vadd.f32 %v1240, %v1261
  %v1279 = vadd.f32 %v1241, %v1265
  %v1280 = vadd.f32 %v1242, %v1269
  %v1281 = vadd.f32 %v1243, %v1273
  %v1282 = vadd.f32 %v1244, %v1261
  %v1283 = vadd.f32 %v1245, %v1265
  %v1284 = vadd.f32 %v1246, %v1269
  %v1285 = vadd.f32 %v1247, %v1273
  %v1286 = vadd.f32 %v1248, %v1261
  %v1287 = vadd.f32 %v1249, %v1265
  %v1288 = vadd.f32 %v1250, %v1269
  %v1289 = vadd.f32 %v1251, %v1273
  %v1290 = vadd.f32 %v1252, %v1261
  %v1291 = vadd.f32 %v1253, %v1265
  %v1292 = vadd.f32 %v1254, %v1269
  %v1293 = vadd.f32 %v1255, %v1273
  %v1294 = vpack.c.bf16 %v1282, %v1278
  %v1295 = vpack.c.bf16 %v1283, %v1279
  %v1296 = vpack.c.bf16 %v1284, %v1280
  %v1297 = vpack.c.bf16 %v1285, %v1281
  %v1298 = vpack.c.bf16 %v1290, %v1286
  %v1299 = vpack.c.bf16 %v1291, %v1287
  %v1300 = vpack.c.bf16 %v1292, %v1288
  %v1301 = vpack.c.bf16 %v1293, %v1289
  %v1310 = vunpack.c.l.b16 %v1294
  %v1311 = vunpack.c.l.b16 %v1295
  %v1312 = vunpack.c.l.b16 %v1296
  %v1313 = vunpack.c.l.b16 %v1297
  %v1314 = vunpack.c.h.b16 %v1294
  %v1315 = vunpack.c.h.b16 %v1295
  %v1316 = vunpack.c.h.b16 %v1296
  %v1317 = vunpack.c.h.b16 %v1297
  %v1318 = vunpack.c.l.b16 %v1298
  %v1319 = vunpack.c.l.b16 %v1299
  %v1320 = vunpack.c.l.b16 %v1300
  %v1321 = vunpack.c.l.b16 %v1301
  %v1322 = vunpack.c.h.b16 %v1298
  %v1323 = vunpack.c.h.b16 %v1299
  %v1324 = vunpack.c.h.b16 %v1300
  %v1325 = vunpack.c.h.b16 %v1301
  %v1326 = vpack.c.b16 %v1311, %v1310
  %v1327 = vpack.c.b16 %v1313, %v1312
  %v1328 = vpack.c.b16 %v1315, %v1314
  %v1329 = vpack.c.b16 %v1317, %v1316
  %v1330 = vpack.c.b16 %v1319, %v1318
  %v1331 = vpack.c.b16 %v1321, %v1320
  %v1332 = vpack.c.b16 %v1323, %v1322
  %v1333 = vpack.c.b16 %v1325, %v1324
  %1342 = vst [vmem:[%s6] sm:$0xff] %v1326
  %1343 = vst [vmem:[%s6 + $0x8] sm:$0xff] %v1327
  %1344 = vst [vmem:[%s6 + $0x10] sm:$0xff] %v1328
  %1345 = vst [vmem:[%s6 + $0x18] sm:$0xff] %v1329
  %1346 = vst [vmem:[%s6 + $0x20] sm:$0xff] %v1330
  %1347 = vst [vmem:[%s6 + $0x28] sm:$0xff] %v1331
  %1348 = vst [vmem:[%s6 + $0x30] sm:$0xff] %v1332
  %1349 = vst [vmem:[%s6 + $0x38] sm:$0xff] %v1333
  // Predicated region
  $region26: #{closed_call.24} parent=0 // pred_check
    _
  $region27: #{closed_call.24} parent=0 // pred_check_branch
    %1351 = sbr.rel (0) target = $region29
  $region28: #{closed_call.24} parent=0 // pred_region
    _
  $region29: #{closed_call.24} parent=0 // pred_fallthru
    _
  // Predicated region
  $region30: #{closed_call.24} parent=0 // pred_check
    _
  $region31: #{closed_call.24} parent=0 // pred_check_branch
    %1353 = sbr.rel (0) target = $region33
  $region32: #{closed_call.24} parent=0 // pred_region
    _
  $region33: #{closed_call.24} parent=0 // pred_fallthru
    _

// kernel: closed_call.23
$region0: #{closed_call.23}
  #allocation0 [shape = 'u32[]', space=smem, size = 0x4, offset = 0x4, fixed_abs, tag = 'smem constant byte address 0x4 - core index']
  #allocation1 [shape = 'u32[144,128]{1,0:T(1,128)}', space=vmem, size = 0x12000, scoped, tag = 'internal scratch']
  %s0 = inlined_call_operand.vmem [shape: bf16[2,16,1536], index: 0, kind: input, shape index: {}, may-alias: {0,1,2}]
  %s1 = inlined_call_operand.vmem [shape: bf16[2,16,1536], index: 1, kind: input, shape index: {}, may-alias: {0,1,2}]
  %s2 = inlined_call_operand.vmem [shape: bf16[2,16,1536], index: 2, kind: input, shape index: {}, may-alias: {0,1,2}]
  %s3 = inlined_call_operand.vmem [shape: bf16[2,16,512], index: 3, kind: output, shape index: {}]
  %s4 = sld [smem:[#allocation0]]
  $region114: #{closed_call.23} parent=0
    _
  %s6 = ssub.s32 1, %s4
  %s7 = scalar_select 0, %s6, %s4
  $region1: #{closed_call.23} parent=0
    #allocation2 [shape = 'u8[32768]{0}', space=vmem, size = 0x8000, scoped, tag = 'input window, operand 0']
    #allocation3 [shape = 'u8[32768]{0}', space=vmem, size = 0x8000, scoped, tag = 'input window, operand 1']
    #allocation4 [shape = 'u8[32768]{0}', space=vmem, size = 0x8000, scoped, tag = 'input window, operand 2']
    loop: start=0, step=1, limit=4
    $region2: #{closed_call.23} parent=1 // loop_pre_header
      _
    $region3: #{closed_call.23} parent=1 // loop_header
      %s9 = sphi 0, %s13
      %p10 = scmp.ge.s32.totalorder %s9, 4
      %s16 = sphi 0, %s28
      %s17 = sphi 0, %s24
      %s18 = sphi 0, %s16
      %s19 = sphi 0, %s17
      %s20 = sphi 0, %s18
      %s21 = sphi 0, %s19
      %s33 = sphi 0, %s35
      %s36 = sphi 0, %s33
      %s37 = sphi 0, %s36
      %s53 = sphi 0, %s37
      %s59 = sphi 0, %s61
      %s62 = sphi 0, %s59
      %s63 = sphi 0, %s62
      %s79 = sphi 0, %s63
      %s85 = sphi 0, %s87
      %s88 = sphi 0, %s85
      %s89 = sphi 0, %s88
      %s105 = sphi 0, %s89
      %s113 = sphi 0, %s115
      %s116 = sphi 0, %s113
      %s117 = sphi 0, %s116
      %s133 = sphi 0, %s117
    $region4: #{closed_call.23} parent=1 // loop_header_branch
      %12 = sbr.rel (%p10) target = $region8
    $region5: #{closed_call.23} parent=1 // loop_body
      %s14 = ssub.s32 %s9, 1
      %s15 = ssub.s32 %s9, 2
      %s22 = sadd.s32 1, %s17
      %p23 = scmp.ge.s32.totalorder %s22, 1
      %s24 = scalar_select %p23, 0, %s22
      %s25 = sadd.s32 1, %s16
      %s26 = scalar_select %p23, %s25, %s16
      %p27 = scmp.ge.s32.totalorder %s26, 2
      %s28 = scalar_select %p27, 0, %s26
      %s29 = ssub.s32 %s16, %s28
      %s30 = ssub.s32 %s17, %s24
      %s31 = sor.u32 %s29, %s30
      %p32 = scmp.eq.s32.totalorder %s31, 0
      %s34 = sadd.s32 %s33, 1
      %s35 = scalar_select %p32, %s33, %s34
      %p38 = pneg %p32
      %p39 = scmp.eq.s32.totalorder %s9, 1
      %p40 = por %p38, %p39
      %p41 = scmp.ne.s32.totalorder %s33, %s36
      %p42 = scmp.eq.s32.totalorder %s9, 0
      %p43 = por %p41, %p42
      %p44 = scmp.ne.s32.totalorder %s33, %s36
      %p45 = scmp.eq.s32.totalorder %s14, 1
      %p46 = por %p44, %p45
      %p47 = scmp.ne.s32.totalorder %s36, %s37
      %p48 = scmp.eq.s32.totalorder %s14, 0
      %p49 = por %p47, %p48
      %p50 = scmp.ne.s32.totalorder %s36, %s37
      %p51 = scmp.eq.s32.totalorder %s15, 1
      %p52 = por %p50, %p51
      %p54 = scmp.ne.s32.totalorder %s37, %s53
      %p55 = scmp.eq.s32.totalorder %s15, 0
      %p56 = por %p54, %p55
      %s57 = ssub.s32 %s16, %s28
      %p58 = scmp.eq.s32.totalorder %s57, 0
      %s60 = sadd.s32 %s59, 1
      %s61 = scalar_select %p58, %s59, %s60
      %p64 = pneg %p58
      %p65 = scmp.eq.s32.totalorder %s9, 1
      %p66 = por %p64, %p65
      %p67 = scmp.ne.s32.totalorder %s59, %s62
      %p68 = scmp.eq.s32.totalorder %s9, 0
      %p69 = por %p67, %p68
      %p70 = scmp.ne.s32.totalorder %s59, %s62
      %p71 = scmp.eq.s32.totalorder %s14, 1
      %p72 = por %p70, %p71
      %p73 = scmp.ne.s32.totalorder %s62, %s63
      %p74 = scmp.eq.s32.totalorder %s14, 0
      %p75 = por %p73, %p74
      %p76 = scmp.ne.s32.totalorder %s62, %s63
      %p77 = scmp.eq.s32.totalorder %s15, 1
      %p78 = por %p76, %p77
      %p80 = scmp.ne.s32.totalorder %s63, %s79
      %p81 = scmp.eq.s32.totalorder %s15, 0
      %p82 = por %p80, %p81
      %s83 = ssub.s32 %s16, %s28
      %p84 = scmp.eq.s32.totalorder %s83, 0
      %s86 = sadd.s32 %s85, 1
      %s87 = scalar_select %p84, %s85, %s86
      %p90 = pneg %p84
      %p91 = scmp.eq.s32.totalorder %s9, 1
      %p92 = por %p90, %p91
      %p93 = scmp.ne.s32.totalorder %s85, %s88
      %p94 = scmp.eq.s32.totalorder %s9, 0
      %p95 = por %p93, %p94
      %p96 = scmp.ne.s32.totalorder %s85, %s88
      %p97 = scmp.eq.s32.totalorder %s14, 1
      %p98 = por %p96, %p97
      %p99 = scmp.ne.s32.totalorder %s88, %s89
      %p100 = scmp.eq.s32.totalorder %s14, 0
      %p101 = por %p99, %p100
      %p102 = scmp.ne.s32.totalorder %s88, %s89
      %p103 = scmp.eq.s32.totalorder %s15, 1
      %p104 = por %p102, %p103
      %p106 = scmp.ne.s32.totalorder %s89, %s105
      %p107 = scmp.eq.s32.totalorder %s15, 0
      %p108 = por %p106, %p107
      %s109 = ssub.s32 %s16, %s28
      %s110 = ssub.s32 %s17, %s24
      %s111 = sor.u32 %s109, %s110
      %p112 = scmp.eq.s32.totalorder %s111, 0
      %s114 = sadd.s32 %s113, 1
      %s115 = scalar_select %p112, %s113, %s114
      %p118 = pneg %p112
      %p119 = scmp.eq.s32.totalorder %s9, 1
      %p120 = por %p118, %p119
      %p121 = scmp.ne.s32.totalorder %s113, %s116
      %p122 = scmp.eq.s32.totalorder %s9, 0
      %p123 = por %p121, %p122
      %p124 = scmp.ne.s32.totalorder %s113, %s116
      %p125 = scmp.eq.s32.totalorder %s14, 1
      %p126 = por %p124, %p125
      %p127 = scmp.ne.s32.totalorder %s116, %s117
      %p128 = scmp.eq.s32.totalorder %s14, 0
      %p129 = por %p127, %p128
      %p130 = scmp.ne.s32.totalorder %s116, %s117
      %p131 = scmp.eq.s32.totalorder %s15, 1
      %p132 = por %p130, %p131
      %p134 = scmp.ne.s32.totalorder %s117, %s133
      %p135 = scmp.eq.s32.totalorder %s15, 0
      %p136 = por %p134, %p135
      %p137 = scmp.le.s32.totalorder 1, %s9
      %p138 = scmp.lt.s32.totalorder %s9, 3
      %p139 = pnand %p137, %p138
      %p140 = pneg %p139
      // Predicated region
      $region9: #{closed_call.23} parent=5 // pred_check
        _
      $region10: #{closed_call.23} parent=5 // pred_check_branch
        %142 = sbr.rel (%p139) target = $region12
      $region11: #{closed_call.23} parent=5 // pred_region
        %s143 = ssub.s32 %s9, 1
      $region12: #{closed_call.23} parent=5 // pred_fallthru
        _
      %p144 = scmp.lt.s32.totalorder %s9, 2
      // Predicated region
      $region13: #{closed_call.23} parent=5 // pred_check
        %p145 = pneg %p144
      $region14: #{closed_call.23} parent=5 // pred_check_branch
        %147 = sbr.rel (%p145) target = $region16
      $region15: #{closed_call.23} parent=5 // pred_region
        // Predicated region
        $region17: #{closed_call.23} parent=15 // pred_check
          %p148 = pneg %p43
        $region18: #{closed_call.23} parent=15 // pred_check_branch
          %150 = sbr.rel (%p148) target = $region20
        $region19: #{closed_call.23} parent=15 // pred_region
          %s151 = sand.u32 %s33, 1
          %s152 = sand.u32 %s33, 1
          %s153 = smul.addr %s152, 32
          %s154 = scalar_lea.vmem [#allocation2], %s153
          %s155 = smul.u32 2, %s17
          %s156 = smul.addr %s155, 12
          %s157 = smul.addr %s16, 24
          %s158 = sadd.s32 %s156, %s157
          %s159 = smul.addr %s158, 4
          %s160 = scalar_lea.vmem %s0, %s159
          // Predicated region
          $region21: #{closed_call.23} parent=19 // pred_check
            _
          $region22: #{closed_call.23} parent=19 // pred_check_branch
            %162 = sbr.rel (0) target = $region24
          $region23: #{closed_call.23} parent=19 // pred_region
            // Predicated region
            $region25: #{closed_call.23} parent=23 // pred_check
              _
            $region26: #{closed_call.23} parent=23 // pred_check_branch
              %164 = sbr.rel (0) target = $region28
            $region27: #{closed_call.23} parent=23 // pred_region
              loop: start=0, step=1, limit=1
              $region29: #{closed_call.23} parent=27 // loop_pre_header
                _
              $region30: #{closed_call.23} parent=27 // loop_header
                %s166 = sphi 0, %s170
                %p167 = scmp.ge.s32.totalorder %s166, 1
                %s171 = sphi %s160, %s160
                %s172 = sphi %s154, %s154
              $region31: #{closed_call.23} parent=27 // loop_header_branch
                %169 = sbr.rel (%p167) target = $region35
              $region32: #{closed_call.23} parent=27 // loop_body
                %v173 = vld [vmem:[%s171] sm:$0xff]
                %174 = vst [vmem:[%s172] sm:$0xff] %v173
                %v175 = vld [vmem:[%s171 + $0x8] sm:$0xff]
                %176 = vst [vmem:[%s172 + $0x8] sm:$0xff] %v175
                %v177 = vld [vmem:[%s171 + $0x30] sm:$0xff]
                %178 = vst [vmem:[%s172 + $0x10] sm:$0xff] %v177
                %v179 = vld [vmem:[%s171 + $0x38] sm:$0xff]
                %180 = vst [vmem:[%s172 + $0x18] sm:$0xff] %v179
              $region33: #{closed_call.23} parent=27 // loop_footer
                %s170 = sadd.s32 1, %s166
              $region34: #{closed_call.23} parent=27 // loop_footer_branch
                %165 = sbr.rel target = $region30
              $region35: #{closed_call.23} parent=27 // loop_exit
                _
            $region28: #{closed_call.23} parent=23 // pred_fallthru
              _
            // Predicated region
            $region36: #{closed_call.23} parent=23 // pred_check
              _
            $region37: #{closed_call.23} parent=23 // pred_check_branch
              %182 = sbr.rel target = $region39
            $region38: #{closed_call.23} parent=23 // pred_region
              _
            $region39: #{closed_call.23} parent=23 // pred_fallthru
              _
          $region24: #{closed_call.23} parent=19 // pred_fallthru
            _
          %183 = vnop
        $region20: #{closed_call.23} parent=15 // pred_fallthru
          _
        // Predicated region
        $region40: #{closed_call.23} parent=15 // pred_check
          %p184 = pneg %p69
        $region41: #{closed_call.23} parent=15 // pred_check_branch
          %186 = sbr.rel (%p184) target = $region43
        $region42: #{closed_call.23} parent=15 // pred_region
          %s187 = sand.u32 %s59, 1
          %s188 = sand.u32 %s59, 1
          %s189 = smul.addr %s188, 32
          %s190 = scalar_lea.vmem [#allocation3], %s189
          %s191 = smul.addr %s16, 24
          %s192 = sadd.s32 4, %s191
          %s193 = smul.addr %s192, 4
          %s194 = scalar_lea.vmem %s1, %s193
          // Predicated region
          $region44: #{closed_call.23} parent=42 // pred_check
            _
          $region45: #{closed_call.23} parent=42 // pred_check_branch
            %196 = sbr.rel (0) target = $region47
          $region46: #{closed_call.23} parent=42 // pred_region
            // Predicated region
            $region48: #{closed_call.23} parent=46 // pred_check
              _
            $region49: #{closed_call.23} parent=46 // pred_check_branch
              %198 = sbr.rel (0) target = $region51
            $region50: #{closed_call.23} parent=46 // pred_region
              loop: start=0, step=1, limit=1
              $region52: #{closed_call.23} parent=50 // loop_pre_header
                _
              $region53: #{closed_call.23} parent=50 // loop_header
                %s200 = sphi 0, %s204
                %p201 = scmp.ge.s32.totalorder %s200, 1
                %s205 = sphi %s194, %s194
                %s206 = sphi %s190, %s190
              $region54: #{closed_call.23} parent=50 // loop_header_branch
                %203 = sbr.rel (%p201) target = $region58
              $region55: #{closed_call.23} parent=50 // loop_body
                %v207 = vld [vmem:[%s205] sm:$0xff]
                %208 = vst [vmem:[%s206] sm:$0xff] %v207
                %v209 = vld [vmem:[%s205 + $0x8] sm:$0xff]
                %210 = vst [vmem:[%s206 + $0x8] sm:$0xff] %v209
                %v211 = vld [vmem:[%s205 + $0x30] sm:$0xff]
                %212 = vst [vmem:[%s206 + $0x10] sm:$0xff] %v211
                %v213 = vld [vmem:[%s205 + $0x38] sm:$0xff]
                %214 = vst [vmem:[%s206 + $0x18] sm:$0xff] %v213
              $region56: #{closed_call.23} parent=50 // loop_footer
                %s204 = sadd.s32 1, %s200
              $region57: #{closed_call.23} parent=50 // loop_footer_branch
                %199 = sbr.rel target = $region53
              $region58: #{closed_call.23} parent=50 // loop_exit
                _
            $region51: #{closed_call.23} parent=46 // pred_fallthru
              _
            // Predicated region
            $region59: #{closed_call.23} parent=46 // pred_check
              _
            $region60: #{closed_call.23} parent=46 // pred_check_branch
              %216 = sbr.rel target = $region62
            $region61: #{closed_call.23} parent=46 // pred_region
              _
            $region62: #{closed_call.23} parent=46 // pred_fallthru
              _
          $region47: #{closed_call.23} parent=42 // pred_fallthru
            _
          %217 = vnop
        $region43: #{closed_call.23} parent=15 // pred_fallthru
          _
        // Predicated region
        $region63: #{closed_call.23} parent=15 // pred_check
          %p218 = pneg %p95
        $region64: #{closed_call.23} parent=15 // pred_check_branch
          %220 = sbr.rel (%p218) target = $region66
        $region65: #{closed_call.23} parent=15 // pred_region
          %s221 = sand.u32 %s85, 1
          %s222 = sand.u32 %s85, 1
          %s223 = smul.addr %s222, 32
          %s224 = scalar_lea.vmem [#allocation4], %s223
          %s225 = smul.addr %s16, 24
          %s226 = sadd.s32 8, %s225
          %s227 = smul.addr %s226, 4
          %s228 = scalar_lea.vmem %s2, %s227
          // Predicated region
          $region67: #{closed_call.23} parent=65 // pred_check
            _
          $region68: #{closed_call.23} parent=65 // pred_check_branch
            %230 = sbr.rel (0) target = $region70
          $region69: #{closed_call.23} parent=65 // pred_region
            // Predicated region
            $region71: #{closed_call.23} parent=69 // pred_check
              _
            $region72: #{closed_call.23} parent=69 // pred_check_branch
              %232 = sbr.rel (0) target = $region74
            $region73: #{closed_call.23} parent=69 // pred_region
              loop: start=0, step=1, limit=1
              $region75: #{closed_call.23} parent=73 // loop_pre_header
                _
              $region76: #{closed_call.23} parent=73 // loop_header
                %s234 = sphi 0, %s238
                %p235 = scmp.ge.s32.totalorder %s234, 1
                %s239 = sphi %s228, %s228
                %s240 = sphi %s224, %s224
              $region77: #{closed_call.23} parent=73 // loop_header_branch
                %237 = sbr.rel (%p235) target = $region81
              $region78: #{closed_call.23} parent=73 // loop_body
                %v241 = vld [vmem:[%s239] sm:$0xff]
                %242 = vst [vmem:[%s240] sm:$0xff] %v241
                %v243 = vld [vmem:[%s239 + $0x8] sm:$0xff]
                %244 = vst [vmem:[%s240 + $0x8] sm:$0xff] %v243
                %v245 = vld [vmem:[%s239 + $0x30] sm:$0xff]
                %246 = vst [vmem:[%s240 + $0x10] sm:$0xff] %v245
                %v247 = vld [vmem:[%s239 + $0x38] sm:$0xff]
                %248 = vst [vmem:[%s240 + $0x18] sm:$0xff] %v247
              $region79: #{closed_call.23} parent=73 // loop_footer
                %s238 = sadd.s32 1, %s234
              $region80: #{closed_call.23} parent=73 // loop_footer_branch
                %233 = sbr.rel target = $region76
              $region81: #{closed_call.23} parent=73 // loop_exit
                _
            $region74: #{closed_call.23} parent=69 // pred_fallthru
              _
            // Predicated region
            $region82: #{closed_call.23} parent=69 // pred_check
              _
            $region83: #{closed_call.23} parent=69 // pred_check_branch
              %250 = sbr.rel target = $region85
            $region84: #{closed_call.23} parent=69 // pred_region
              _
            $region85: #{closed_call.23} parent=69 // pred_fallthru
              _
          $region70: #{closed_call.23} parent=65 // pred_fallthru
            _
          %251 = vnop
        $region66: #{closed_call.23} parent=15 // pred_fallthru
          _
      $region16: #{closed_call.23} parent=5 // pred_fallthru
        _
      %p252 = scmp.le.s32.totalorder 1, %s9
      %p253 = scmp.lt.s32.totalorder %s9, 3
      %p254 = pnand %p252, %p253
      %p255 = pneg %p254
      // Predicated region
      $region86: #{closed_call.23} parent=5 // pred_check
        _
      $region87: #{closed_call.23} parent=5 // pred_check_branch
        %257 = sbr.rel (%p254) target = $region89
      $region88: #{closed_call.23} parent=5 // pred_region
        %s258 = ssub.s32 %s9, 1
        %s259 = sand.u32 %s36, 1
        %s260 = sand.u32 %s36, 1
        %s261 = smul.addr %s260, 32
        %s262 = scalar_lea.vmem [#allocation2], %s261
        // Predicated region
        $region90: #{closed_call.23} parent=88 // pred_check
          %p263 = pneg %p49
        $region91: #{closed_call.23} parent=88 // pred_check_branch
          %265 = sbr.rel (%p263) target = $region93
        $region92: #{closed_call.23} parent=88 // pred_region
          _
        $region93: #{closed_call.23} parent=88 // pred_fallthru
          _
        %s266 = sand.u32 %s62, 1
        %s267 = sand.u32 %s62, 1
        %s268 = smul.addr %s267, 32
        %s269 = scalar_lea.vmem [#allocation3], %s268
        // Predicated region
        $region94: #{closed_call.23} parent=88 // pred_check
          %p270 = pneg %p75
        $region95: #{closed_call.23} parent=88 // pred_check_branch
          %272 = sbr.rel (%p270) target = $region97
        $region96: #{closed_call.23} parent=88 // pred_region
          _
        $region97: #{closed_call.23} parent=88 // pred_fallthru
          _
        %s273 = sand.u32 %s88, 1
        %s274 = sand.u32 %s88, 1
        %s275 = smul.addr %s274, 32
        %s276 = scalar_lea.vmem [#allocation4], %s275
        // Predicated region
        $region98: #{closed_call.23} parent=88 // pred_check
          %p277 = pneg %p101
        $region99: #{closed_call.23} parent=88 // pred_check_branch
          %279 = sbr.rel (%p277) target = $region101
        $region100: #{closed_call.23} parent=88 // pred_region
          _
        $region101: #{closed_call.23} parent=88 // pred_fallthru
          _
        %s280 = sand.u32 %s36, 1
        %s281 = sand.u32 %s36, 1
        %s282 = smul.addr %s281, 32
        %s283 = scalar_lea.vmem [#allocation2], %s282
        %p284 = pneg %p49
        %p285 = pneg %p46
        %s286 = sand.u32 %s62, 1
        %s287 = sand.u32 %s62, 1
        %s288 = smul.addr %s287, 32
        %s289 = scalar_lea.vmem [#allocation3], %s288
        %p290 = pneg %p75
        %p291 = pneg %p72
        %s292 = sand.u32 %s88, 1
        %s293 = sand.u32 %s88, 1
        %s294 = smul.addr %s293, 32
        %s295 = scalar_lea.vmem [#allocation4], %s294
        %p296 = pneg %p101
        %p297 = pneg %p98
        %p298 = pneg %p129
        %p299 = pneg %p126
        %s300 = smul.u32 2, %s19
        %p301 = scmp.lt.s32.totalorder %s18, 1
        %s302 = scalar_select %p301, %s18, 1
        %p303 = scmp.lt.s32.totalorder %s300, 1
        %s304 = scalar_select %p303, %s300, 1
        %s305 = smul.addr %s304, 4
        %s306 = smul.addr %s302, 8
        %s307 = sadd.s32 %s305, %s306
        %s308 = smul.addr %s307, 4
        %s309 = scalar_lea.vmem %s3, %s308
        %s310 = smul.u32 2, %s19
        %s311 = smul.u32 2, %s19
        %p312 = scmp.lt.s32.totalorder %s18, 1
        %s313 = scalar_select %p312, %s18, 1
        %p314 = scmp.lt.s32.totalorder %s311, 1
        %s315 = scalar_select %p314, %s311, 1
        %s316 = smul.addr %s315, 4
        %s317 = smul.addr %s313, 8
        %s318 = sadd.s32 %s316, %s317
        %s319 = smul.addr %s318, 4
        %s320 = scalar_lea.vmem %s3, %s319
        %s321 = smul.u32 2, %s19
        %v323 = vld [vmem:[%s262] sm:$0xff]
        %v324 = vld [vmem:[%s262 + $0x8] sm:$0xff]
        %v325 = vld [vmem:[%s262 + $0x10] sm:$0xff]
        %v326 = vld [vmem:[%s262 + $0x18] sm:$0xff]
        %v327 = vunpack.c.l.bf16 %v323
        %v328 = vunpack.c.h.bf16 %v323
        %v329 = vunpack.c.l.bf16 %v324
        %v330 = vunpack.c.h.bf16 %v324
        %v331 = vunpack.c.l.bf16 %v325
        %v332 = vunpack.c.h.bf16 %v325
        %v333 = vunpack.c.l.bf16 %v326
        %v334 = vunpack.c.h.bf16 %v326
        %v335 = vmul.f32 %v327, 0.125
        %v336 = vmul.f32 %v328, 0.125
        %v337 = vmul.f32 %v329, 0.125
        %v338 = vmul.f32 %v330, 0.125
        %v339 = vmul.f32 %v331, 0.125
        %v340 = vmul.f32 %v332, 0.125
        %v341 = vmul.f32 %v333, 0.125
        %v342 = vmul.f32 %v334, 0.125
        %v343 = vpack.c.bf16 %v339, %v335
        %v344 = vpack.c.bf16 %v340, %v336
        %v345 = vpack.c.bf16 %v341, %v337
        %v346 = vpack.c.bf16 %v342, %v338
        %v347 = vld [vmem:[%s269] sm:$0xff]
        %v348 = vld [vmem:[%s269 + $0x8] sm:$0xff]
        %v349 = vld [vmem:[%s269 + $0x10] sm:$0xff]
        %v350 = vld [vmem:[%s269 + $0x18] sm:$0xff]
        %v351 = vld [vmem:[%s276] sm:$0xff]
        %v352 = vld [vmem:[%s276 + $0x8] sm:$0xff]
        %v353 = vld [vmem:[%s276 + $0x10] sm:$0xff]
        %v354 = vld [vmem:[%s276 + $0x18] sm:$0xff]
        %s355 = smul.u32 %s19, 16
        %v356 = vlaneseq
        %v357 = vshrl.u32 %v356, 7
        %v358 = vadd.s32 %v357, 8
        %v359 = vstv %s355
        %v360 = vadd.s32 %v359, %v357
        %v361 = vadd.s32 %v359, %v358
        %v362 = vlaneseq
        %v363 = vand.u32 %v362, 127
        %vm364 = vcmp.le.s32.totalorder %v363, %v360
        %vm365 = vcmp.le.s32.totalorder %v363, %v361
        %v368 = vunpack.c.l.b16 %v347
        %v369 = vunpack.c.l.b16 %v349
        %v370 = vpack.c.b16 %v369, %v368
        %vm371 = vcmask 523264
        %v373 = vsel %vm371, %v343, 0
        %v376 = vsel %vm371, %v370, 0
        %378 = vmatprep.subr.bf16.mxu0 0
        %379 = vmatpush1.bf16.xpose.msra.mxu0 %v376
        %380 = vmatprep.subr.bf16.mxu0 0
        %381 = vmatpush1.bf16.xpose.msra.mxu0 0
        %382 = vmatprep.subr.bf16.mxu0 0
        %383 = vmatpush1.bf16.xpose.msra.mxu0 0
        %384 = vmatprep.subr.bf16.mxu0 0
        %385 = vmatpush1.bf16.xpose.msra.mxu0 0
        %386 = vmatprep.subr.bf16.mxu0 0
        %387 = vmatpush1.bf16.xpose.msra.mxu0 0
        %388 = vmatprep.subr.bf16.mxu0 0
        %389 = vmatpush1.bf16.xpose.msra.mxu0 0
        %390 = vmatprep.subr.bf16.mxu0 0
        %391 = vmatpush1.bf16.xpose.msra.mxu0 0
        %392 = vmatprep.subr.bf16.mxu0 0
        %393 = vmatpush1.bf16.xpose.msra.mxu0 0
        %394 = vmatprep.subr.bf16.mxu0 0
        %395 = vmatpush1.bf16.xpose.msra.mxu0 0
        %396 = vmatprep.subr.bf16.mxu0 0
        %397 = vmatpush1.bf16.xpose.msra.mxu0 0
        %398 = vmatprep.subr.bf16.mxu0 0
        %399 = vmatpush1.bf16.xpose.msra.mxu0 0
        %400 = vmatprep.subr.bf16.mxu0 0
        %401 = vmatpush1.bf16.xpose.msra.mxu0 0
        %402 = vmatprep.subr.bf16.mxu0 0
        %403 = vmatpush1.bf16.xpose.msra.mxu0 0
        %404 = vmatprep.subr.bf16.mxu0 0
        %405 = vmatpush1.bf16.xpose.msra.mxu0 0
        %406 = vmatprep.subr.bf16.mxu0 0
        %407 = vmatpush1.bf16.xpose.msra.mxu0 0
        %408 = vmatprep.subr.bf16.mxu0 0
        %409 = vmatpush1.bf16.xpose.msra.mxu0 0
        %410 = vmatprep.mubr.bf16.mxu0 0
        %411 = vmatmul.mubr.bf16.gmra.mrb[0].mxu0 %v373
        %v412 = vpop.f32.mrb[0].mxu0
        %v413 = vadd.f32 0.0, %v412
        %v414 = vpop.f32.mrb[0].mxu0
        %v415 = vpop.f32.mrb[0].mxu0
        %v416 = vadd.f32 0.0, %v415
        %v417 = vpop.f32.mrb[0].mxu0
        %418 = vdwg.mxu0
        %v419 = vsel %vm364, %v413, -1e+30
        %v420 = vsel %vm365, %v416, -1e+30
        %vm421 = vcmask 130048
        %v422 = vsel %vm421, %v419, -inf
        %423 = vmax.xlane.f32.xlu0 %v422
        %v424 = vpop.xlane.xlu0 %423
        %v425 = vsel %vm421, %v420, -inf
        %426 = vmax.xlane.f32.xlu0 %v425
        %v427 = vpop.xlane.xlu0 %426
        %v428 = vsub.f32 %v419, %v424
        %v429 = vsub.f32 %v420, %v427
        %v430 = vmul.f32 %v428, 1.442695
        %v431 = vpow.pop %v430
        %v432 = vmul.f32 %v429, 1.442695
        %v433 = vpow.pop %v432
        %v434 = vsel %vm421, %v431, 0.0
        %435 = vadd.xlane.f32.xlu0 %v434
        %v436 = vpop.xlane.xlu0 %435
        %v437 = vsel %vm421, %v433, 0.0
        %438 = vadd.xlane.f32.xlu0 %v437
        %v439 = vpop.xlane.xlu0 %438
        %v440 = vrcp.pop %v436
        %v441 = vrcp.pop %v439
        %v442 = vpack.c.bf16 %v433, %v431
        %v445 = vunpack.c.l.b16 %v351
        %v446 = vunpack.c.l.b16 %v353
        %v447 = vpack.c.b16 %v446, %v445
        %v450 = vsel %vm421, %v442, 0
        %452 = vmatprep.subr.bf16.mxu0 0
        %453 = vmatpush1.bf16.msra.mxu0 %v447
        %454 = vmatprep.subr.bf16.mxu0 0
        %455 = vmatpush1.bf16.msra.mxu0 0
        %456 = vmatprep.subr.bf16.mxu0 0
        %457 = vmatpush1.bf16.msra.mxu0 0
        %458 = vmatprep.subr.bf16.mxu0 0
        %459 = vmatpush1.bf16.msra.mxu0 0
        %460 = vmatprep.subr.bf16.mxu0 0
        %461 = vmatpush1.bf16.msra.mxu0 0
        %462 = vmatprep.subr.bf16.mxu0 0
        %463 = vmatpush1.bf16.msra.mxu0 0
        %464 = vmatprep.subr.bf16.mxu0 0
        %465 = vmatpush1.bf16.msra.mxu0 0
        %466 = vmatprep.subr.bf16.mxu0 0
        %467 = vmatpush1.bf16.msra.mxu0 0
        %468 = vmatprep.subr.bf16.mxu0 0
        %469 = vmatpush1.bf16.msra.mxu0 0
        %470 = vmatprep.subr.bf16.mxu0 0
        %471 = vmatpush1.bf16.msra.mxu0 0
        %472 = vmatprep.subr.bf16.mxu0 0
        %473 = vmatpush1.bf16.msra.mxu0 0
        %474 = vmatprep.subr.bf16.mxu0 0
        %475 = vmatpush1.bf16.msra.mxu0 0
        %476 = vmatprep.subr.bf16.mxu0 0
        %477 = vmatpush1.bf16.msra.mxu0 0
        %478 = vmatprep.subr.bf16.mxu0 0
        %479 = vmatpush1.bf16.msra.mxu0 0
        %480 = vmatprep.subr.bf16.mxu0 0
        %481 = vmatpush1.bf16.msra.mxu0 0
        %482 = vmatprep.subr.bf16.mxu0 0
        %483 = vmatpush1.bf16.msra.mxu0 0
        %484 = vmatprep.mubr.bf16.mxu0 0
        %485 = vmatmul.mubr.bf16.gmra.mrb[0].mxu0 %v450
        %v486 = vpop.f32.mrb[0].mxu0
        %v487 = vadd.f32 0.0, %v486
        %v488 = vpop.f32.mrb[0].mxu0
        %v489 = vpop.f32.mrb[0].mxu0
        %v490 = vadd.f32 0.0, %v489
        %v491 = vpop.f32.mrb[0].mxu0
        %492 = vdwg.mxu0
        %v493 = vmul.f32 %v487, %v440
        %v494 = vmul.f32 %v490, %v441
        %496 = vrot.lane.b32.xlu0 %v343, 64
        %v497 = vpop.permute.xlu0 %496
        %498 = vrot.lane.b32.xlu0 %v370, 64
        %v499 = vpop.permute.xlu0 %498
        %v501 = vsel %vm371, %v497, 0
        %v504 = vsel %vm371, %v499, 0
        %506 = vmatprep.subr.bf16.mxu0 0
        %507 = vmatpush1.bf16.xpose.msra.mxu0 %v504
        %508 = vmatprep.subr.bf16.mxu0 0
        %509 = vmatpush1.bf16.xpose.msra.mxu0 0
        %510 = vmatprep.subr.bf16.mxu0 0
        %511 = vmatpush1.bf16.xpose.msra.mxu0 0
        %512 = vmatprep.subr.bf16.mxu0 0
        %513 = vmatpush1.bf16.xpose.msra.mxu0 0
        %514 = vmatprep.subr.bf16.mxu0 0
        %515 = vmatpush1.bf16.xpose.msra.mxu0 0
        %516 = vmatprep.subr.bf16.mxu0 0
        %517 = vmatpush1.bf16.xpose.msra.mxu0 0
        %518 = vmatprep.subr.bf16.mxu0 0
        %519 = vmatpush1.bf16.xpose.msra.mxu0 0
        %520 = vmatprep.subr.bf16.mxu0 0
        %521 = vmatpush1.bf16.xpose.msra.mxu0 0
        %522 = vmatprep.subr.bf16.mxu0 0
        %523 = vmatpush1.bf16.xpose.msra.mxu0 0
        %524 = vmatprep.subr.bf16.mxu0 0
        %525 = vmatpush1.bf16.xpose.msra.mxu0 0
        %526 = vmatprep.subr.bf16.mxu0 0
        %527 = vmatpush1.bf16.xpose.msra.mxu0 0
        %528 = vmatprep.subr.bf16.mxu0 0
        %529 = vmatpush1.bf16.xpose.msra.mxu0 0
        %530 = vmatprep.subr.bf16.mxu0 0
        %531 = vmatpush1.bf16.xpose.msra.mxu0 0
        %532 = vmatprep.subr.bf16.mxu0 0
        %533 = vmatpush1.bf16.xpose.msra.mxu0 0
        %534 = vmatprep.subr.bf16.mxu0 0
        %535 = vmatpush1.bf16.xpose.msra.mxu0 0
        %536 = vmatprep.subr.bf16.mxu0 0
        %537 = vmatpush1.bf16.xpose.msra.mxu0 0
        %538 = vmatprep.mubr.bf16.mxu0 0
        %539 = vmatmul.mubr.bf16.gmra.mrb[0].mxu0 %v501
        %v540 = vpop.f32.mrb[0].mxu0
        %v541 = vadd.f32 0.0, %v540
        %v542 = vpop.f32.mrb[0].mxu0
        %v543 = vpop.f32.mrb[0].mxu0
        %v544 = vadd.f32 0.0, %v543
        %v545 = vpop.f32.mrb[0].mxu0
        %546 = vdwg.mxu0
        %v547 = vsel %vm364, %v541, -1e+30
        %v548 = vsel %vm365, %v544, -1e+30
        %v549 = vsel %vm421, %v547, -inf
        %550 = vmax.xlane.f32.xlu0 %v549
        %v551 = vpop.xlane.xlu0 %550
        %v552 = vsel %vm421, %v548, -inf
        %553 = vmax.xlane.f32.xlu0 %v552
        %v554 = vpop.xlane.xlu0 %553
        %v555 = vsub.f32 %v547, %v551
        %v556 = vsub.f32 %v548, %v554
        %v557 = vmul.f32 %v555, 1.442695
        %v558 = vpow.pop %v557
        %v559 = vmul.f32 %v556, 1.442695
        %v560 = vpow.pop %v559
        %v561 = vsel %vm421, %v558, 0.0
        %562 = vadd.xlane.f32.xlu0 %v561
        %v563 = vpop.xlane.xlu0 %562
        %v564 = vsel %vm421, %v560, 0.0
        %565 = vadd.xlane.f32.xlu0 %v564
        %v566 = vpop.xlane.xlu0 %565
        %v567 = vrcp.pop %v563
        %v568 = vrcp.pop %v566
        %v569 = vpack.c.bf16 %v560, %v558
        %570 = vrot.lane.b32.xlu0 %v447, 64
        %v571 = vpop.permute.xlu0 %570
        %v574 = vsel %vm421, %v569, 0
        %576 = vmatprep.subr.bf16.mxu0 0
        %577 = vmatpush1.bf16.msra.mxu0 %v571
        %578 = vmatprep.subr.bf16.mxu0 0
        %579 = vmatpush1.bf16.msra.mxu0 0
        %580 = vmatprep.subr.bf16.mxu0 0
        %581 = vmatpush1.bf16.msra.mxu0 0
        %582 = vmatprep.subr.bf16.mxu0 0
        %583 = vmatpush1.bf16.msra.mxu0 0
        %584 = vmatprep.subr.bf16.mxu0 0
        %585 = vmatpush1.bf16.msra.mxu0 0
        %586 = vmatprep.subr.bf16.mxu0 0
        %587 = vmatpush1.bf16.msra.mxu0 0
        %588 = vmatprep.subr.bf16.mxu0 0
        %589 = vmatpush1.bf16.msra.mxu0 0
        %590 = vmatprep.subr.bf16.mxu0 0
        %591 = vmatpush1.bf16.msra.mxu0 0
        %592 = vmatprep.subr.bf16.mxu0 0
        %593 = vmatpush1.bf16.msra.mxu0 0
        %594 = vmatprep.subr.bf16.mxu0 0
        %595 = vmatpush1.bf16.msra.mxu0 0
        %596 = vmatprep.subr.bf16.mxu0 0
        %597 = vmatpush1.bf16.msra.mxu0 0
        %598 = vmatprep.subr.bf16.mxu0 0
        %599 = vmatpush1.bf16.msra.mxu0 0
        %600 = vmatprep.subr.bf16.mxu0 0
        %601 = vmatpush1.bf16.msra.mxu0 0
        %602 = vmatprep.subr.bf16.mxu0 0
        %603 = vmatpush1.bf16.msra.mxu0 0
        %604 = vmatprep.subr.bf16.mxu0 0
        %605 = vmatpush1.bf16.msra.mxu0 0
        %606 = vmatprep.subr.bf16.mxu0 0
        %607 = vmatpush1.bf16.msra.mxu0 0
        %608 = vmatprep.mubr.bf16.mxu0 0
        %609 = vmatmul.mubr.bf16.gmra.mrb[0].mxu0 %v574
        %v610 = vpop.f32.mrb[0].mxu0
        %v611 = vadd.f32 0.0, %v610
        %v612 = vpop.f32.mrb[0].mxu0
        %v613 = vpop.f32.mrb[0].mxu0
        %v614 = vadd.f32 0.0, %v613
        %v615 = vpop.f32.mrb[0].mxu0
        %616 = vdwg.mxu0
        %v617 = vmul.f32 %v611, %v567
        %v618 = vmul.f32 %v614, %v568
        %621 = vrot.lane.b32.xlu0 %v617, 64
        %v622 = vpop.permute.xlu0 %621
        %623 = vrot.lane.b32.xlu0 %v618, 64
        %v624 = vpop.permute.xlu0 %623
        %v627 = vsel %vm371, %v493, %v622
        %v628 = vsel %vm371, %v494, %v624
        %v629 = vpack.c.bf16 %v628, %v627
        %v631 = vunpack.c.l.b16 %v629
        %v632 = vunpack.c.h.b16 %v629
        %v633 = vpack.c.b16 %v631, %v631
        %v634 = vpack.c.b16 %v632, %v632
        %637 = vst [vmem:[%s320] sm:$0xf] %v633
        %638 = vst [vmem:[%s320 + $0x10] sm:$0xf] %v634
        %v639 = vunpack.c.h.b16 %v347
        %v640 = vunpack.c.h.b16 %v349
        %v641 = vpack.c.b16 %v640, %v639
        %v643 = vsel %vm371, %v344, 0
        %v646 = vsel %vm371, %v641, 0
        %648 = vmatprep.subr.bf16.mxu0 0
        %649 = vmatpush1.bf16.xpose.msra.mxu0 %v646
        %650 = vmatprep.subr.bf16.mxu0 0
        %651 = vmatpush1.bf16.xpose.msra.mxu0 0
        %652 = vmatprep.subr.bf16.mxu0 0
        %653 = vmatpush1.bf16.xpose.msra.mxu0 0
        %654 = vmatprep.subr.bf16.mxu0 0
        %655 = vmatpush1.bf16.xpose.msra.mxu0 0
        %656 = vmatprep.subr.bf16.mxu0 0
        %657 = vmatpush1.bf16.xpose.msra.mxu0 0
        %658 = vmatprep.subr.bf16.mxu0 0
        %659 = vmatpush1.bf16.xpose.msra.mxu0 0
        %660 = vmatprep.subr.bf16.mxu0 0
        %661 = vmatpush1.bf16.xpose.msra.mxu0 0
        %662 = vmatprep.subr.bf16.mxu0 0
        %663 = vmatpush1.bf16.xpose.msra.mxu0 0
        %664 = vmatprep.subr.bf16.mxu0 0
        %665 = vmatpush1.bf16.xpose.msra.mxu0 0
        %666 = vmatprep.subr.bf16.mxu0 0
        %667 = vmatpush1.bf16.xpose.msra.mxu0 0
        %668 = vmatprep.subr.bf16.mxu0 0
        %669 = vmatpush1.bf16.xpose.msra.mxu0 0
        %670 = vmatprep.subr.bf16.mxu0 0
        %671 = vmatpush1.bf16.xpose.msra.mxu0 0
        %672 = vmatprep.subr.bf16.mxu0 0
        %673 = vmatpush1.bf16.xpose.msra.mxu0 0
        %674 = vmatprep.subr.bf16.mxu0 0
        %675 = vmatpush1.bf16.xpose.msra.mxu0 0
        %676 = vmatprep.subr.bf16.mxu0 0
        %677 = vmatpush1.bf16.xpose.msra.mxu0 0
        %678 = vmatprep.subr.bf16.mxu0 0
        %679 = vmatpush1.bf16.xpose.msra.mxu0 0
        %680 = vmatprep.mubr.bf16.mxu0 0
        %681 = vmatmul.mubr.bf16.gmra.mrb[0].mxu0 %v643
        %v682 = vpop.f32.mrb[0].mxu0
        %v683 = vadd.f32 0.0, %v682
        %v684 = vpop.f32.mrb[0].mxu0
        %v685 = vpop.f32.mrb[0].mxu0
        %v686 = vadd.f32 0.0, %v685
        %v687 = vpop.f32.mrb[0].mxu0
        %688 = vdwg.mxu0
        %v689 = vsel %vm364, %v683, -1e+30
        %v690 = vsel %vm365, %v686, -1e+30
        %v691 = vsel %vm421, %v689, -inf
        %692 = vmax.xlane.f32.xlu0 %v691
        %v693 = vpop.xlane.xlu0 %692
        %v694 = vsel %vm421, %v690, -inf
        %695 = vmax.xlane.f32.xlu0 %v694
        %v696 = vpop.xlane.xlu0 %695
        %v697 = vsub.f32 %v689, %v693
        %v698 = vsub.f32 %v690, %v696
        %v699 = vmul.f32 %v697, 1.442695
        %v700 = vpow.pop %v699
        %v701 = vmul.f32 %v698, 1.442695
        %v702 = vpow.pop %v701
        %v703 = vsel %vm421, %v700, 0.0
        %704 = vadd.xlane.f32.xlu0 %v703
        %v705 = vpop.xlane.xlu0 %704
        %v706 = vsel %vm421, %v702, 0.0
        %707 = vadd.xlane.f32.xlu0 %v706
        %v708 = vpop.xlane.xlu0 %707
        %v709 = vrcp.pop %v705
        %v710 = vrcp.pop %v708
        %v711 = vpack.c.bf16 %v702, %v700
        %v712 = vunpack.c.h.b16 %v351
        %v713 = vunpack.c.h.b16 %v353
        %v714 = vpack.c.b16 %v713, %v712
        %v717 = vsel %vm421, %v711, 0
        %719 = vmatprep.subr.bf16.mxu0 0
        %720 = vmatpush1.bf16.msra.mxu0 %v714
        %721 = vmatprep.subr.bf16.mxu0 0
        %722 = vmatpush1.bf16.msra.mxu0 0
        %723 = vmatprep.subr.bf16.mxu0 0
        %724 = vmatpush1.bf16.msra.mxu0 0
        %725 = vmatprep.subr.bf16.mxu0 0
        %726 = vmatpush1.bf16.msra.mxu0 0
        %727 = vmatprep.subr.bf16.mxu0 0
        %728 = vmatpush1.bf16.msra.mxu0 0
        %729 = vmatprep.subr.bf16.mxu0 0
        %730 = vmatpush1.bf16.msra.mxu0 0
        %731 = vmatprep.subr.bf16.mxu0 0
        %732 = vmatpush1.bf16.msra.mxu0 0
        %733 = vmatprep.subr.bf16.mxu0 0
        %734 = vmatpush1.bf16.msra.mxu0 0
        %735 = vmatprep.subr.bf16.mxu0 0
        %736 = vmatpush1.bf16.msra.mxu0 0
        %737 = vmatprep.subr.bf16.mxu0 0
        %738 = vmatpush1.bf16.msra.mxu0 0
        %739 = vmatprep.subr.bf16.mxu0 0
        %740 = vmatpush1.bf16.msra.mxu0 0
        %741 = vmatprep.subr.bf16.mxu0 0
        %742 = vmatpush1.bf16.msra.mxu0 0
        %743 = vmatprep.subr.bf16.mxu0 0
        %744 = vmatpush1.bf16.msra.mxu0 0
        %745 = vmatprep.subr.bf16.mxu0 0
        %746 = vmatpush1.bf16.msra.mxu0 0
        %747 = vmatprep.subr.bf16.mxu0 0
        %748 = vmatpush1.bf16.msra.mxu0 0
        %749 = vmatprep.subr.bf16.mxu0 0
        %750 = vmatpush1.bf16.msra.mxu0 0
        %751 = vmatprep.mubr.bf16.mxu0 0
        %752 = vmatmul.mubr.bf16.gmra.mrb[0].mxu0 %v717
        %v753 = vpop.f32.mrb[0].mxu0
        %v754 = vadd.f32 0.0, %v753
        %v755 = vpop.f32.mrb[0].mxu0
        %v756 = vpop.f32.mrb[0].mxu0
        %v757 = vadd.f32 0.0, %v756
        %v758 = vpop.f32.mrb[0].mxu0
        %759 = vdwg.mxu0
        %v760 = vmul.f32 %v754, %v709
        %v761 = vmul.f32 %v757, %v710
        %763 = vrot.lane.b32.xlu0 %v344, 64
        %v764 = vpop.permute.xlu0 %763
        %765 = vrot.lane.b32.xlu0 %v641, 64
        %v766 = vpop.permute.xlu0 %765
        %v768 = vsel %vm371, %v764, 0
        %v771 = vsel %vm371, %v766, 0
        %773 = vmatprep.subr.bf16.mxu0 0
        %774 = vmatpush1.bf16.xpose.msra.mxu0 %v771
        %775 = vmatprep.subr.bf16.mxu0 0
        %776 = vmatpush1.bf16.xpose.msra.mxu0 0
        %777 = vmatprep.subr.bf16.mxu0 0
        %778 = vmatpush1.bf16.xpose.msra.mxu0 0
        %779 = vmatprep.subr.bf16.mxu0 0
        %780 = vmatpush1.bf16.xpose.msra.mxu0 0
        %781 = vmatprep.subr.bf16.mxu0 0
        %782 = vmatpush1.bf16.xpose.msra.mxu0 0
        %783 = vmatprep.subr.bf16.mxu0 0
        %784 = vmatpush1.bf16.xpose.msra.mxu0 0
        %785 = vmatprep.subr.bf16.mxu0 0
        %786 = vmatpush1.bf16.xpose.msra.mxu0 0
        %787 = vmatprep.subr.bf16.mxu0 0
        %788 = vmatpush1.bf16.xpose.msra.mxu0 0
        %789 = vmatprep.subr.bf16.mxu0 0
        %790 = vmatpush1.bf16.xpose.msra.mxu0 0
        %791 = vmatprep.subr.bf16.mxu0 0
        %792 = vmatpush1.bf16.xpose.msra.mxu0 0
        %793 = vmatprep.subr.bf16.mxu0 0
        %794 = vmatpush1.bf16.xpose.msra.mxu0 0
        %795 = vmatprep.subr.bf16.mxu0 0
        %796 = vmatpush1.bf16.xpose.msra.mxu0 0
        %797 = vmatprep.subr.bf16.mxu0 0
        %798 = vmatpush1.bf16.xpose.msra.mxu0 0
        %799 = vmatprep.subr.bf16.mxu0 0
        %800 = vmatpush1.bf16.xpose.msra.mxu0 0
        %801 = vmatprep.subr.bf16.mxu0 0
        %802 = vmatpush1.bf16.xpose.msra.mxu0 0
        %803 = vmatprep.subr.bf16.mxu0 0
        %804 = vmatpush1.bf16.xpose.msra.mxu0 0
        %805 = vmatprep.mubr.bf16.mxu0 0
        %806 = vmatmul.mubr.bf16.gmra.mrb[0].mxu0 %v768
        %v807 = vpop.f32.mrb[0].mxu0
        %v808 = vadd.f32 0.0, %v807
        %v809 = vpop.f32.mrb[0].mxu0
        %v810 = vpop.f32.mrb[0].mxu0
        %v811 = vadd.f32 0.0, %v810
        %v812 = vpop.f32.mrb[0].mxu0
        %813 = vdwg.mxu0
        %v814 = vsel %vm364, %v808, -1e+30
        %v815 = vsel %vm365, %v811, -1e+30
        %v816 = vsel %vm421, %v814, -inf
        %817 = vmax.xlane.f32.xlu0 %v816
        %v818 = vpop.xlane.xlu0 %817
        %v819 = vsel %vm421, %v815, -inf
        %820 = vmax.xlane.f32.xlu0 %v819
        %v821 = vpop.xlane.xlu0 %820
        %v822 = vsub.f32 %v814, %v818
        %v823 = vsub.f32 %v815, %v821
        %v824 = vmul.f32 %v822, 1.442695
        %v825 = vpow.pop %v824
        %v826 = vmul.f32 %v823, 1.442695
        %v827 = vpow.pop %v826
        %v828 = vsel %vm421, %v825, 0.0
        %829 = vadd.xlane.f32.xlu0 %v828
        %v830 = vpop.xlane.xlu0 %829
        %v831 = vsel %vm421, %v827, 0.0
        %832 = vadd.xlane.f32.xlu0 %v831
        %v833 = vpop.xlane.xlu0 %832
        %v834 = vrcp.pop %v830
        %v835 = vrcp.pop %v833
        %v836 = vpack.c.bf16 %v827, %v825
        %837 = vrot.lane.b32.xlu0 %v714, 64
        %v838 = vpop.permute.xlu0 %837
        %v841 = vsel %vm421, %v836, 0
        %843 = vmatprep.subr.bf16.mxu0 0
        %844 = vmatpush1.bf16.msra.mxu0 %v838
        %845 = vmatprep.subr.bf16.mxu0 0
        %846 = vmatpush1.bf16.msra.mxu0 0
        %847 = vmatprep.subr.bf16.mxu0 0
        %848 = vmatpush1.bf16.msra.mxu0 0
        %849 = vmatprep.subr.bf16.mxu0 0
        %850 = vmatpush1.bf16.msra.mxu0 0
        %851 = vmatprep.subr.bf16.mxu0 0
        %852 = vmatpush1.bf16.msra.mxu0 0
        %853 = vmatprep.subr.bf16.mxu0 0
        %854 = vmatpush1.bf16.msra.mxu0 0
        %855 = vmatprep.subr.bf16.mxu0 0
        %856 = vmatpush1.bf16.msra.mxu0 0
        %857 = vmatprep.subr.bf16.mxu0 0
        %858 = vmatpush1.bf16.msra.mxu0 0
        %859 = vmatprep.subr.bf16.mxu0 0
        %860 = vmatpush1.bf16.msra.mxu0 0
        %861 = vmatprep.subr.bf16.mxu0 0
        %862 = vmatpush1.bf16.msra.mxu0 0
        %863 = vmatprep.subr.bf16.mxu0 0
        %864 = vmatpush1.bf16.msra.mxu0 0
        %865 = vmatprep.subr.bf16.mxu0 0
        %866 = vmatpush1.bf16.msra.mxu0 0
        %867 = vmatprep.subr.bf16.mxu0 0
        %868 = vmatpush1.bf16.msra.mxu0 0
        %869 = vmatprep.subr.bf16.mxu0 0
        %870 = vmatpush1.bf16.msra.mxu0 0
        %871 = vmatprep.subr.bf16.mxu0 0
        %872 = vmatpush1.bf16.msra.mxu0 0
        %873 = vmatprep.subr.bf16.mxu0 0
        %874 = vmatpush1.bf16.msra.mxu0 0
        %875 = vmatprep.mubr.bf16.mxu0 0
        %876 = vmatmul.mubr.bf16.gmra.mrb[0].mxu0 %v841
        %v877 = vpop.f32.mrb[0].mxu0
        %v878 = vadd.f32 0.0, %v877
        %v879 = vpop.f32.mrb[0].mxu0
        %v880 = vpop.f32.mrb[0].mxu0
        %v881 = vadd.f32 0.0, %v880
        %v882 = vpop.f32.mrb[0].mxu0
        %883 = vdwg.mxu0
        %v884 = vmul.f32 %v878, %v834
        %v885 = vmul.f32 %v881, %v835
        %888 = vrot.lane.b32.xlu0 %v884, 64
        %v889 = vpop.permute.xlu0 %888
        %890 = vrot.lane.b32.xlu0 %v885, 64
        %v891 = vpop.permute.xlu0 %890
        %v894 = vsel %vm371, %v760, %v889
        %v895 = vsel %vm371, %v761, %v891
        %v896 = vpack.c.bf16 %v895, %v894
        %v898 = vunpack.c.l.b16 %v896
        %v899 = vunpack.c.h.b16 %v896
        %v900 = vpack.c.b16 %v898, %v898
        %v901 = vpack.c.b16 %v899, %v899
        %904 = vst [vmem:[%s320 + $0x4] sm:$0xf] %v900
        %905 = vst [vmem:[%s320 + $0x14] sm:$0xf] %v901
        %v908 = vunpack.c.l.b16 %v348
        %v909 = vunpack.c.l.b16 %v350
        %v910 = vpack.c.b16 %v909, %v908
        %v912 = vsel %vm371, %v345, 0
        %v915 = vsel %vm371, %v910, 0
        %917 = vmatprep.subr.bf16.mxu0 0
        %918 = vmatpush1.bf16.xpose.msra.mxu0 %v915
        %919 = vmatprep.subr.bf16.mxu0 0
        %920 = vmatpush1.bf16.xpose.msra.mxu0 0
        %921 = vmatprep.subr.bf16.mxu0 0
        %922 = vmatpush1.bf16.xpose.msra.mxu0 0
        %923 = vmatprep.subr.bf16.mxu0 0
        %924 = vmatpush1.bf16.xpose.msra.mxu0 0
        %925 = vmatprep.subr.bf16.mxu0 0
        %926 = vmatpush1.bf16.xpose.msra.mxu0 0
        %927 = vmatprep.subr.bf16.mxu0 0
        %928 = vmatpush1.bf16.xpose.msra.mxu0 0
        %929 = vmatprep.subr.bf16.mxu0 0
        %930 = vmatpush1.bf16.xpose.msra.mxu0 0
        %931 = vmatprep.subr.bf16.mxu0 0
        %932 = vmatpush1.bf16.xpose.msra.mxu0 0
        %933 = vmatprep.subr.bf16.mxu0 0
        %934 = vmatpush1.bf16.xpose.msra.mxu0 0
        %935 = vmatprep.subr.bf16.mxu0 0
        %936 = vmatpush1.bf16.xpose.msra.mxu0 0
        %937 = vmatprep.subr.bf16.mxu0 0
        %938 = vmatpush1.bf16.xpose.msra.mxu0 0
        %939 = vmatprep.subr.bf16.mxu0 0
        %940 = vmatpush1.bf16.xpose.msra.mxu0 0
        %941 = vmatprep.subr.bf16.mxu0 0
        %942 = vmatpush1.bf16.xpose.msra.mxu0 0
        %943 = vmatprep.subr.bf16.mxu0 0
        %944 = vmatpush1.bf16.xpose.msra.mxu0 0
        %945 = vmatprep.subr.bf16.mxu0 0
        %946 = vmatpush1.bf16.xpose.msra.mxu0 0
        %947 = vmatprep.subr.bf16.mxu0 0
        %948 = vmatpush1.bf16.xpose.msra.mxu0 0
        %949 = vmatprep.mubr.bf16.mxu0 0
        %950 = vmatmul.mubr.bf16.gmra.mrb[0].mxu0 %v912
        %v951 = vpop.f32.mrb[0].mxu0
        %v952 = vadd.f32 0.0, %v951
        %v953 = vpop.f32.mrb[0].mxu0
        %v954 = vpop.f32.mrb[0].mxu0
        %v955 = vadd.f32 0.0, %v954
        %v956 = vpop.f32.mrb[0].mxu0
        %957 = vdwg.mxu0
        %v958 = vsel %vm364, %v952, -1e+30
        %v959 = vsel %vm365, %v955, -1e+30
        %v960 = vsel %vm421, %v958, -inf
        %961 = vmax.xlane.f32.xlu0 %v960
        %v962 = vpop.xlane.xlu0 %961
        %v963 = vsel %vm421, %v959, -inf
        %964 = vmax.xlane.f32.xlu0 %v963
        %v965 = vpop.xlane.xlu0 %964
        %v966 = vsub.f32 %v958, %v962
        %v967 = vsub.f32 %v959, %v965
        %v968 = vmul.f32 %v966, 1.442695
        %v969 = vpow.pop %v968
        %v970 = vmul.f32 %v967, 1.442695
        %v971 = vpow.pop %v970
        %v972 = vsel %vm421, %v969, 0.0
        %973 = vadd.xlane.f32.xlu0 %v972
        %v974 = vpop.xlane.xlu0 %973
        %v975 = vsel %vm421, %v971, 0.0
        %976 = vadd.xlane.f32.xlu0 %v975
        %v977 = vpop.xlane.xlu0 %976
        %v978 = vrcp.pop %v974
        %v979 = vrcp.pop %v977
        %v980 = vpack.c.bf16 %v971, %v969
        %v983 = vunpack.c.l.b16 %v352
        %v984 = vunpack.c.l.b16 %v354
        %v985 = vpack.c.b16 %v984, %v983
        %v988 = vsel %vm421, %v980, 0
        %990 = vmatprep.subr.bf16.mxu0 0
        %991 = vmatpush1.bf16.msra.mxu0 %v985
        %992 = vmatprep.subr.bf16.mxu0 0
        %993 = vmatpush1.bf16.msra.mxu0 0
        %994 = vmatprep.subr.bf16.mxu0 0
        %995 = vmatpush1.bf16.msra.mxu0 0
        %996 = vmatprep.subr.bf16.mxu0 0
        %997 = vmatpush1.bf16.msra.mxu0 0
        %998 = vmatprep.subr.bf16.mxu0 0
        %999 = vmatpush1.bf16.msra.mxu0 0
        %1000 = vmatprep.subr.bf16.mxu0 0
        %1001 = vmatpush1.bf16.msra.mxu0 0
        %1002 = vmatprep.subr.bf16.mxu0 0
        %1003 = vmatpush1.bf16.msra.mxu0 0
        %1004 = vmatprep.subr.bf16.mxu0 0
        %1005 = vmatpush1.bf16.msra.mxu0 0
        %1006 = vmatprep.subr.bf16.mxu0 0
        %1007 = vmatpush1.bf16.msra.mxu0 0
        %1008 = vmatprep.subr.bf16.mxu0 0
        %1009 = vmatpush1.bf16.msra.mxu0 0
        %1010 = vmatprep.subr.bf16.mxu0 0
        %1011 = vmatpush1.bf16.msra.mxu0 0
        %1012 = vmatprep.subr.bf16.mxu0 0
        %1013 = vmatpush1.bf16.msra.mxu0 0
        %1014 = vmatprep.subr.bf16.mxu0 0
        %1015 = vmatpush1.bf16.msra.mxu0 0
        %1016 = vmatprep.subr.bf16.mxu0 0
        %1017 = vmatpush1.bf16.msra.mxu0 0
        %1018 = vmatprep.subr.bf16.mxu0 0
        %1019 = vmatpush1.bf16.msra.mxu0 0
        %1020 = vmatprep.subr.bf16.mxu0 0
        %1021 = vmatpush1.bf16.msra.mxu0 0
        %1022 = vmatprep.mubr.bf16.mxu0 0
        %1023 = vmatmul.mubr.bf16.gmra.mrb[0].mxu0 %v988
        %v1024 = vpop.f32.mrb[0].mxu0
        %v1025 = vadd.f32 0.0, %v1024
        %v1026 = vpop.f32.mrb[0].mxu0
        %v1027 = vpop.f32.mrb[0].mxu0
        %v1028 = vadd.f32 0.0, %v1027
        %v1029 = vpop.f32.mrb[0].mxu0
        %1030 = vdwg.mxu0
        %v1031 = vmul.f32 %v1025, %v978
        %v1032 = vmul.f32 %v1028, %v979
        %1034 = vrot.lane.b32.xlu0 %v345, 64
        %v1035 = vpop.permute.xlu0 %1034
        %1036 = vrot.lane.b32.xlu0 %v910, 64
        %v1037 = vpop.permute.xlu0 %1036
        %v1039 = vsel %vm371, %v1035, 0
        %v1042 = vsel %vm371, %v1037, 0
        %1044 = vmatprep.subr.bf16.mxu0 0
        %1045 = vmatpush1.bf16.xpose.msra.mxu0 %v1042
        %1046 = vmatprep.subr.bf16.mxu0 0
        %1047 = vmatpush1.bf16.xpose.msra.mxu0 0
        %1048 = vmatprep.subr.bf16.mxu0 0
        %1049 = vmatpush1.bf16.xpose.msra.mxu0 0
        %1050 = vmatprep.subr.bf16.mxu0 0
        %1051 = vmatpush1.bf16.xpose.msra.mxu0 0
        %1052 = vmatprep.subr.bf16.mxu0 0
        %1053 = vmatpush1.bf16.xpose.msra.mxu0 0
        %1054 = vmatprep.subr.bf16.mxu0 0
        %1055 = vmatpush1.bf16.xpose.msra.mxu0 0
        %1056 = vmatprep.subr.bf16.mxu0 0
        %1057 = vmatpush1.bf16.xpose.msra.mxu0 0
        %1058 = vmatprep.subr.bf16.mxu0 0
        %1059 = vmatpush1.bf16.xpose.msra.mxu0 0
        %1060 = vmatprep.subr.bf16.mxu0 0
        %1061 = vmatpush1.bf16.xpose.msra.mxu0 0
        %1062 = vmatprep.subr.bf16.mxu0 0
        %1063 = vmatpush1.bf16.xpose.msra.mxu0 0
        %1064 = vmatprep.subr.bf16.mxu0 0
        %1065 = vmatpush1.bf16.xpose.msra.mxu0 0
        %1066 = vmatprep.subr.bf16.mxu0 0
        %1067 = vmatpush1.bf16.xpose.msra.mxu0 0
        %1068 = vmatprep.subr.bf16.mxu0 0
        %1069 = vmatpush1.bf16.xpose.msra.mxu0 0
        %1070 = vmatprep.subr.bf16.mxu0 0
        %1071 = vmatpush1.bf16.xpose.msra.mxu0 0
        %1072 = vmatprep.subr.bf16.mxu0 0
        %1073 = vmatpush1.bf16.xpose.msra.mxu0 0
        %1074 = vmatprep.subr.bf16.mxu0 0
        %1075 = vmatpush1.bf16.xpose.msra.mxu0 0
        %1076 = vmatprep.mubr.bf16.mxu0 0
        %1077 = vmatmul.mubr.bf16.gmra.mrb[0].mxu0 %v1039
        %v1078 = vpop.f32.mrb[0].mxu0
        %v1079 = vadd.f32 0.0, %v1078
        %v1080 = vpop.f32.mrb[0].mxu0
        %v1081 = vpop.f32.mrb[0].mxu0
        %v1082 = vadd.f32 0.0, %v1081
        %v1083 = vpop.f32.mrb[0].mxu0
        %1084 = vdwg.mxu0
        %v1085 = vsel %vm364, %v1079, -1e+30
        %v1086 = vsel %vm365, %v1082, -1e+30
        %v1087 = vsel %vm421, %v1085, -inf
        %1088 = vmax.xlane.f32.xlu0 %v1087
        %v1089 = vpop.xlane.xlu0 %1088
        %v1090 = vsel %vm421, %v1086, -inf
        %1091 = vmax.xlane.f32.xlu0 %v1090
        %v1092 = vpop.xlane.xlu0 %1091
        %v1093 = vsub.f32 %v1085, %v1089
        %v1094 = vsub.f32 %v1086, %v1092
        %v1095 = vmul.f32 %v1093, 1.442695
        %v1096 = vpow.pop %v1095
        %v1097 = vmul.f32 %v1094, 1.442695
        %v1098 = vpow.pop %v1097
        %v1099 = vsel %vm421, %v1096, 0.0
        %1100 = vadd.xlane.f32.xlu0 %v1099
        %v1101 = vpop.xlane.xlu0 %1100
        %v1102 = vsel %vm421, %v1098, 0.0
        %1103 = vadd.xlane.f32.xlu0 %v1102
        %v1104 = vpop.xlane.xlu0 %1103
        %v1105 = vrcp.pop %v1101
        %v1106 = vrcp.pop %v1104
        %v1107 = vpack.c.bf16 %v1098, %v1096
        %1108 = vrot.lane.b32.xlu0 %v985, 64
        %v1109 = vpop.permute.xlu0 %1108
        %v1112 = vsel %vm421, %v1107, 0
        %1114 = vmatprep.subr.bf16.mxu0 0
        %1115 = vmatpush1.bf16.msra.mxu0 %v1109
        %1116 = vmatprep.subr.bf16.mxu0 0
        %1117 = vmatpush1.bf16.msra.mxu0 0
        %1118 = vmatprep.subr.bf16.mxu0 0
        %1119 = vmatpush1.bf16.msra.mxu0 0
        %1120 = vmatprep.subr.bf16.mxu0 0
        %1121 = vmatpush1.bf16.msra.mxu0 0
        %1122 = vmatprep.subr.bf16.mxu0 0
        %1123 = vmatpush1.bf16.msra.mxu0 0
        %1124 = vmatprep.subr.bf16.mxu0 0
        %1125 = vmatpush1.bf16.msra.mxu0 0
        %1126 = vmatprep.subr.bf16.mxu0 0
        %1127 = vmatpush1.bf16.msra.mxu0 0
        %1128 = vmatprep.subr.bf16.mxu0 0
        %1129 = vmatpush1.bf16.msra.mxu0 0
        %1130 = vmatprep.subr.bf16.mxu0 0
        %1131 = vmatpush1.bf16.msra.mxu0 0
        %1132 = vmatprep.subr.bf16.mxu0 0
        %1133 = vmatpush1.bf16.msra.mxu0 0
        %1134 = vmatprep.subr.bf16.mxu0 0
        %1135 = vmatpush1.bf16.msra.mxu0 0
        %1136 = vmatprep.subr.bf16.mxu0 0
        %1137 = vmatpush1.bf16.msra.mxu0 0
        %1138 = vmatprep.subr.bf16.mxu0 0
        %1139 = vmatpush1.bf16.msra.mxu0 0
        %1140 = vmatprep.subr.bf16.mxu0 0
        %1141 = vmatpush1.bf16.msra.mxu0 0
        %1142 = vmatprep.subr.bf16.mxu0 0
        %1143 = vmatpush1.bf16.msra.mxu0 0
        %1144 = vmatprep.subr.bf16.mxu0 0
        %1145 = vmatpush1.bf16.msra.mxu0 0
        %1146 = vmatprep.mubr.bf16.mxu0 0
        %1147 = vmatmul.mubr.bf16.gmra.mrb[0].mxu0 %v1112
        %v1148 = vpop.f32.mrb[0].mxu0
        %v1149 = vadd.f32 0.0, %v1148
        %v1150 = vpop.f32.mrb[0].mxu0
        %v1151 = vpop.f32.mrb[0].mxu0
        %v1152 = vadd.f32 0.0, %v1151
        %v1153 = vpop.f32.mrb[0].mxu0
        %1154 = vdwg.mxu0
        %v1155 = vmul.f32 %v1149, %v1105
        %v1156 = vmul.f32 %v1152, %v1106
        %1159 = vrot.lane.b32.xlu0 %v1155, 64
        %v1160 = vpop.permute.xlu0 %1159
        %1161 = vrot.lane.b32.xlu0 %v1156, 64
        %v1162 = vpop.permute.xlu0 %1161
        %v1165 = vsel %vm371, %v1031, %v1160
        %v1166 = vsel %vm371, %v1032, %v1162
        %v1167 = vpack.c.bf16 %v1166, %v1165
        %v1169 = vunpack.c.l.b16 %v1167
        %v1170 = vunpack.c.h.b16 %v1167
        %v1171 = vpack.c.b16 %v1169, %v1169
        %v1172 = vpack.c.b16 %v1170, %v1170
        %1175 = vst [vmem:[%s320 + $0x8] sm:$0xf] %v1171
        %1176 = vst [vmem:[%s320 + $0x18] sm:$0xf] %v1172
        %v1177 = vunpack.c.h.b16 %v348
        %v1178 = vunpack.c.h.b16 %v350
        %v1179 = vpack.c.b16 %v1178, %v1177
        %v1181 = vsel %vm371, %v346, 0
        %v1184 = vsel %vm371, %v1179, 0
        %1186 = vmatprep.subr.bf16.mxu0 0
        %1187 = vmatpush1.bf16.xpose.msra.mxu0 %v1184
        %1188 = vmatprep.subr.bf16.mxu0 0
        %1189 = vmatpush1.bf16.xpose.msra.mxu0 0
        %1190 = vmatprep.subr.bf16.mxu0 0
        %1191 = vmatpush1.bf16.xpose.msra.mxu0 0
        %1192 = vmatprep.subr.bf16.mxu0 0
        %1193 = vmatpush1.bf16.xpose.msra.mxu0 0
        %1194 = vmatprep.subr.bf16.mxu0 0
        %1195 = vmatpush1.bf16.xpose.msra.mxu0 0
        %1196 = vmatprep.subr.bf16.mxu0 0
        %1197 = vmatpush1.bf16.xpose.msra.mxu0 0
        %1198 = vmatprep.subr.bf16.mxu0 0
        %1199 = vmatpush1.bf16.xpose.msra.mxu0 0
        %1200 = vmatprep.subr.bf16.mxu0 0
        %1201 = vmatpush1.bf16.xpose.msra.mxu0 0
        %1202 = vmatprep.subr.bf16.mxu0 0
        %1203 = vmatpush1.bf16.xpose.msra.mxu0 0
        %1204 = vmatprep.subr.bf16.mxu0 0
        %1205 = vmatpush1.bf16.xpose.msra.mxu0 0
        %1206 = vmatprep.subr.bf16.mxu0 0
        %1207 = vmatpush1.bf16.xpose.msra.mxu0 0
        %1208 = vmatprep.subr.bf16.mxu0 0
        %1209 = vmatpush1.bf16.xpose.msra.mxu0 0
        %1210 = vmatprep.subr.bf16.mxu0 0
        %1211 = vmatpush1.bf16.xpose.msra.mxu0 0
        %1212 = vmatprep.subr.bf16.mxu0 0
        %1213 = vmatpush1.bf16.xpose.msra.mxu0 0
        %1214 = vmatprep.subr.bf16.mxu0 0
        %1215 = vmatpush1.bf16.xpose.msra.mxu0 0
        %1216 = vmatprep.subr.bf16.mxu0 0
        %1217 = vmatpush1.bf16.xpose.msra.mxu0 0
        %1218 = vmatprep.mubr.bf16.mxu0 0
        %1219 = vmatmul.mubr.bf16.gmra.mrb[0].mxu0 %v1181
        %v1220 = vpop.f32.mrb[0].mxu0
        %v1221 = vadd.f32 0.0, %v1220
        %v1222 = vpop.f32.mrb[0].mxu0
        %v1223 = vpop.f32.mrb[0].mxu0
        %v1224 = vadd.f32 0.0, %v1223
        %v1225 = vpop.f32.mrb[0].mxu0
        %1226 = vdwg.mxu0
        %v1227 = vsel %vm364, %v1221, -1e+30
        %v1228 = vsel %vm365, %v1224, -1e+30
        %v1229 = vsel %vm421, %v1227, -inf
        %1230 = vmax.xlane.f32.xlu0 %v1229
        %v1231 = vpop.xlane.xlu0 %1230
        %v1232 = vsel %vm421, %v1228, -inf
        %1233 = vmax.xlane.f32.xlu0 %v1232
        %v1234 = vpop.xlane.xlu0 %1233
        %v1235 = vsub.f32 %v1227, %v1231
        %v1236 = vsub.f32 %v1228, %v1234
        %v1237 = vmul.f32 %v1235, 1.442695
        %v1238 = vpow.pop %v1237
        %v1239 = vmul.f32 %v1236, 1.442695
        %v1240 = vpow.pop %v1239
        %v1241 = vsel %vm421, %v1238, 0.0
        %1242 = vadd.xlane.f32.xlu0 %v1241
        %v1243 = vpop.xlane.xlu0 %1242
        %v1244 = vsel %vm421, %v1240, 0.0
        %1245 = vadd.xlane.f32.xlu0 %v1244
        %v1246 = vpop.xlane.xlu0 %1245
        %v1247 = vrcp.pop %v1243
        %v1248 = vrcp.pop %v1246
        %v1249 = vpack.c.bf16 %v1240, %v1238
        %v1250 = vunpack.c.h.b16 %v352
        %v1251 = vunpack.c.h.b16 %v354
        %v1252 = vpack.c.b16 %v1251, %v1250
        %v1255 = vsel %vm421, %v1249, 0
        %1257 = vmatprep.subr.bf16.mxu0 0
        %1258 = vmatpush1.bf16.msra.mxu0 %v1252
        %1259 = vmatprep.subr.bf16.mxu0 0
        %1260 = vmatpush1.bf16.msra.mxu0 0
        %1261 = vmatprep.subr.bf16.mxu0 0
        %1262 = vmatpush1.bf16.msra.mxu0 0
        %1263 = vmatprep.subr.bf16.mxu0 0
        %1264 = vmatpush1.bf16.msra.mxu0 0
        %1265 = vmatprep.subr.bf16.mxu0 0
        %1266 = vmatpush1.bf16.msra.mxu0 0
        %1267 = vmatprep.subr.bf16.mxu0 0
        %1268 = vmatpush1.bf16.msra.mxu0 0
        %1269 = vmatprep.subr.bf16.mxu0 0
        %1270 = vmatpush1.bf16.msra.mxu0 0
        %1271 = vmatprep.subr.bf16.mxu0 0
        %1272 = vmatpush1.bf16.msra.mxu0 0
        %1273 = vmatprep.subr.bf16.mxu0 0
        %1274 = vmatpush1.bf16.msra.mxu0 0
        %1275 = vmatprep.subr.bf16.mxu0 0
        %1276 = vmatpush1.bf16.msra.mxu0 0
        %1277 = vmatprep.subr.bf16.mxu0 0
        %1278 = vmatpush1.bf16.msra.mxu0 0
        %1279 = vmatprep.subr.bf16.mxu0 0
        %1280 = vmatpush1.bf16.msra.mxu0 0
        %1281 = vmatprep.subr.bf16.mxu0 0
        %1282 = vmatpush1.bf16.msra.mxu0 0
        %1283 = vmatprep.subr.bf16.mxu0 0
        %1284 = vmatpush1.bf16.msra.mxu0 0
        %1285 = vmatprep.subr.bf16.mxu0 0
        %1286 = vmatpush1.bf16.msra.mxu0 0
        %1287 = vmatprep.subr.bf16.mxu0 0
        %1288 = vmatpush1.bf16.msra.mxu0 0
        %1289 = vmatprep.mubr.bf16.mxu0 0
        %1290 = vmatmul.mubr.bf16.gmra.mrb[0].mxu0 %v1255
        %v1291 = vpop.f32.mrb[0].mxu0
        %v1292 = vadd.f32 0.0, %v1291
        %v1293 = vpop.f32.mrb[0].mxu0
        %v1294 = vpop.f32.mrb[0].mxu0
        %v1295 = vadd.f32 0.0, %v1294
        %v1296 = vpop.f32.mrb[0].mxu0
        %1297 = vdwg.mxu0
        %v1298 = vmul.f32 %v1292, %v1247
        %v1299 = vmul.f32 %v1295, %v1248
        %1301 = vrot.lane.b32.xlu0 %v346, 64
        %v1302 = vpop.permute.xlu0 %1301
        %1303 = vrot.lane.b32.xlu0 %v1179, 64
        %v1304 = vpop.permute.xlu0 %1303
        %v1306 = vsel %vm371, %v1302, 0
        %v1309 = vsel %vm371, %v1304, 0
        %1311 = vmatprep.subr.bf16.mxu0 0
        %1312 = vmatpush1.bf16.xpose.msra.mxu0 %v1309
        %1313 = vmatprep.subr.bf16.mxu0 0
        %1314 = vmatpush1.bf16.xpose.msra.mxu0 0
        %1315 = vmatprep.subr.bf16.mxu0 0
        %1316 = vmatpush1.bf16.xpose.msra.mxu0 0
        %1317 = vmatprep.subr.bf16.mxu0 0
        %1318 = vmatpush1.bf16.xpose.msra.mxu0 0
        %1319 = vmatprep.subr.bf16.mxu0 0
        %1320 = vmatpush1.bf16.xpose.msra.mxu0 0
        %1321 = vmatprep.subr.bf16.mxu0 0
        %1322 = vmatpush1.bf16.xpose.msra.mxu0 0
        %1323 = vmatprep.subr.bf16.mxu0 0
        %1324 = vmatpush1.bf16.xpose.msra.mxu0 0
        %1325 = vmatprep.subr.bf16.mxu0 0
        %1326 = vmatpush1.bf16.xpose.msra.mxu0 0
        %1327 = vmatprep.subr.bf16.mxu0 0
        %1328 = vmatpush1.bf16.xpose.msra.mxu0 0
        %1329 = vmatprep.subr.bf16.mxu0 0
        %1330 = vmatpush1.bf16.xpose.msra.mxu0 0
        %1331 = vmatprep.subr.bf16.mxu0 0
        %1332 = vmatpush1.bf16.xpose.msra.mxu0 0
        %1333 = vmatprep.subr.bf16.mxu0 0
        %1334 = vmatpush1.bf16.xpose.msra.mxu0 0
        %1335 = vmatprep.subr.bf16.mxu0 0
        %1336 = vmatpush1.bf16.xpose.msra.mxu0 0
        %1337 = vmatprep.subr.bf16.mxu0 0
        %1338 = vmatpush1.bf16.xpose.msra.mxu0 0
        %1339 = vmatprep.subr.bf16.mxu0 0
        %1340 = vmatpush1.bf16.xpose.msra.mxu0 0
        %1341 = vmatprep.subr.bf16.mxu0 0
        %1342 = vmatpush1.bf16.xpose.msra.mxu0 0
        %1343 = vmatprep.mubr.bf16.mxu0 0
        %1344 = vmatmul.mubr.bf16.gmra.mrb[0].mxu0 %v1306
        %v1345 = vpop.f32.mrb[0].mxu0
        %v1346 = vadd.f32 0.0, %v1345
        %v1347 = vpop.f32.mrb[0].mxu0
        %v1348 = vpop.f32.mrb[0].mxu0
        %v1349 = vadd.f32 0.0, %v1348
        %v1350 = vpop.f32.mrb[0].mxu0
        %1351 = vdwg.mxu0
        %v1352 = vsel %vm364, %v1346, -1e+30
        %v1353 = vsel %vm365, %v1349, -1e+30
        %v1354 = vsel %vm421, %v1352, -inf
        %1355 = vmax.xlane.f32.xlu0 %v1354
        %v1356 = vpop.xlane.xlu0 %1355
        %v1357 = vsel %vm421, %v1353, -inf
        %1358 = vmax.xlane.f32.xlu0 %v1357
        %v1359 = vpop.xlane.xlu0 %1358
        %v1360 = vsub.f32 %v1352, %v1356
        %v1361 = vsub.f32 %v1353, %v1359
        %v1362 = vmul.f32 %v1360, 1.442695
        %v1363 = vpow.pop %v1362
        %v1364 = vmul.f32 %v1361, 1.442695
        %v1365 = vpow.pop %v1364
        %v1366 = vsel %vm421, %v1363, 0.0
        %1367 = vadd.xlane.f32.xlu0 %v1366
        %v1368 = vpop.xlane.xlu0 %1367
        %v1369 = vsel %vm421, %v1365, 0.0
        %1370 = vadd.xlane.f32.xlu0 %v1369
        %v1371 = vpop.xlane.xlu0 %1370
        %v1372 = vrcp.pop %v1368
        %v1373 = vrcp.pop %v1371
        %v1374 = vpack.c.bf16 %v1365, %v1363
        %1375 = vrot.lane.b32.xlu0 %v1252, 64
        %v1376 = vpop.permute.xlu0 %1375
        %v1379 = vsel %vm421, %v1374, 0
        %1381 = vmatprep.subr.bf16.mxu0 0
        %1382 = vmatpush1.bf16.msra.mxu0 %v1376
        %1383 = vmatprep.subr.bf16.mxu0 0
        %1384 = vmatpush1.bf16.msra.mxu0 0
        %1385 = vmatprep.subr.bf16.mxu0 0
        %1386 = vmatpush1.bf16.msra.mxu0 0
        %1387 = vmatprep.subr.bf16.mxu0 0
        %1388 = vmatpush1.bf16.msra.mxu0 0
        %1389 = vmatprep.subr.bf16.mxu0 0
        %1390 = vmatpush1.bf16.msra.mxu0 0
        %1391 = vmatprep.subr.bf16.mxu0 0
        %1392 = vmatpush1.bf16.msra.mxu0 0
        %1393 = vmatprep.subr.bf16.mxu0 0
        %1394 = vmatpush1.bf16.msra.mxu0 0
        %1395 = vmatprep.subr.bf16.mxu0 0
        %1396 = vmatpush1.bf16.msra.mxu0 0
        %1397 = vmatprep.subr.bf16.mxu0 0
        %1398 = vmatpush1.bf16.msra.mxu0 0
        %1399 = vmatprep.subr.bf16.mxu0 0
        %1400 = vmatpush1.bf16.msra.mxu0 0
        %1401 = vmatprep.subr.bf16.mxu0 0
        %1402 = vmatpush1.bf16.msra.mxu0 0
        %1403 = vmatprep.subr.bf16.mxu0 0
        %1404 = vmatpush1.bf16.msra.mxu0 0
        %1405 = vmatprep.subr.bf16.mxu0 0
        %1406 = vmatpush1.bf16.msra.mxu0 0
        %1407 = vmatprep.subr.bf16.mxu0 0
        %1408 = vmatpush1.bf16.msra.mxu0 0
        %1409 = vmatprep.subr.bf16.mxu0 0
        %1410 = vmatpush1.bf16.msra.mxu0 0
        %1411 = vmatprep.subr.bf16.mxu0 0
        %1412 = vmatpush1.bf16.msra.mxu0 0
        %1413 = vmatprep.mubr.bf16.mxu0 0
        %1414 = vmatmul.mubr.bf16.gmra.mrb[0].mxu0 %v1379
        %v1415 = vpop.f32.mrb[0].mxu0
        %v1416 = vadd.f32 0.0, %v1415
        %v1417 = vpop.f32.mrb[0].mxu0
        %v1418 = vpop.f32.mrb[0].mxu0
        %v1419 = vadd.f32 0.0, %v1418
        %v1420 = vpop.f32.mrb[0].mxu0
        %1421 = vdwg.mxu0
        %v1422 = vmul.f32 %v1416, %v1372
        %v1423 = vmul.f32 %v1419, %v1373
        %1426 = vrot.lane.b32.xlu0 %v1422, 64
        %v1427 = vpop.permute.xlu0 %1426
        %1428 = vrot.lane.b32.xlu0 %v1423, 64
        %v1429 = vpop.permute.xlu0 %1428
        %v1432 = vsel %vm371, %v1298, %v1427
        %v1433 = vsel %vm371, %v1299, %v1429
        %v1434 = vpack.c.bf16 %v1433, %v1432
        %v1436 = vunpack.c.l.b16 %v1434
        %v1437 = vunpack.c.h.b16 %v1434
        %v1438 = vpack.c.b16 %v1436, %v1436
        %v1439 = vpack.c.b16 %v1437, %v1437
        %1442 = vst [vmem:[%s320 + $0xc] sm:$0xf] %v1438
        %1443 = vst [vmem:[%s320 + $0x1c] sm:$0xf] %v1439
        %s1444 = smul.u32 2, %s19
        %p1445 = scmp.lt.s32.totalorder %s18, 1
        %s1446 = scalar_select %p1445, %s18, 1
        %p1447 = scmp.lt.s32.totalorder %s1444, 1
        %s1448 = scalar_select %p1447, %s1444, 1
        %s1449 = smul.addr %s1448, 4
        %s1450 = smul.addr %s1446, 8
        %s1451 = sadd.s32 %s1449, %s1450
        %s1452 = smul.addr %s1451, 4
        %s1453 = scalar_lea.vmem %s3, %s1452
        // Predicated region
        $region102: #{closed_call.23} parent=88 // pred_check
          %p1454 = pneg %p126
        $region103: #{closed_call.23} parent=88 // pred_check_branch
          %1456 = sbr.rel (%p1454) target = $region105
        $region104: #{closed_call.23} parent=88 // pred_region
          %s1457 = smul.u32 2, %s19
        $region105: #{closed_call.23} parent=88 // pred_fallthru
          _
      $region89: #{closed_call.23} parent=5 // pred_fallthru
        _
      %p1458 = scmp.le.s32.totalorder 2, %s9
      // Predicated region
      $region106: #{closed_call.23} parent=5 // pred_check
        %p1459 = pneg %p1458
      $region107: #{closed_call.23} parent=5 // pred_check_branch
        %1461 = sbr.rel (%p1459) target = $region109
      $region108: #{closed_call.23} parent=5 // pred_region
        %s1462 = ssub.s32 %s9, 2
        // Predicated region
        $region110: #{closed_call.23} parent=108 // pred_check
          %p1463 = pneg %p132
        $region111: #{closed_call.23} parent=108 // pred_check_branch
          %1465 = sbr.rel (%p1463) target = $region113
        $region112: #{closed_call.23} parent=108 // pred_region
          %s1466 = smul.u32 2, %s21
          %p1467 = scmp.lt.s32.totalorder %s20, 1
          %s1468 = scalar_select %p1467, %s20, 1
          %p1469 = scmp.lt.s32.totalorder %s1466, 1
          %s1470 = scalar_select %p1469, %s1466, 1
          %s1471 = smul.addr %s1470, 4
          %s1472 = smul.addr %s1468, 8
          %s1473 = sadd.s32 %s1471, %s1472
          %s1474 = smul.addr %s1473, 4
          %s1475 = scalar_lea.vmem %s3, %s1474
        $region113: #{closed_call.23} parent=108 // pred_fallthru
          _
      $region109: #{closed_call.23} parent=5 // pred_fallthru
        _
    $region6: #{closed_call.23} parent=1 // loop_footer
      %s13 = sadd.s32 1, %s9
    $region7: #{closed_call.23} parent=1 // loop_footer_branch
      %8 = sbr.rel target = $region3
    $region8: #{closed_call.23} parent=1 // loop_exit
      _

// kernel: closed_call.25
$region0: #{closed_call.25}
  #allocation0 [shape = 'u32[]', space=smem, size = 0x4, offset = 0x4, fixed_abs, tag = 'smem constant byte address 0x4 - core index']
  #allocation1 [shape = 'u32[144,128]{1,0:T(1,128)}', space=vmem, size = 0x12000, scoped, tag = 'internal scratch']
  %s0 = inlined_call_operand.vmem [shape: bf16[32,512], index: 0, kind: input, shape index: {}]
  %s1 = inlined_call_operand.vmem [shape: bf16[512,2048], index: 1, kind: input, shape index: {}]
  %s2 = inlined_call_operand.vmem [shape: f32[1,2048], index: 2, kind: input, shape index: {}]
  %s3 = inlined_call_operand.vmem [shape: bf16[32,2048], index: 3, kind: output, shape index: {}]
  %s4 = sld [smem:[#allocation0]]
  $region87: #{closed_call.25} parent=0
    _
  %s6 = ssub.s32 1, %s4
  %s7 = scalar_select 0, %s6, %s4
  $region1: #{closed_call.25} parent=0
    #allocation2 [shape = 'u8[1048576]{0}', space=vmem, size = 0x100000, scoped, tag = 'input window, operand 1']
    #allocation3 [shape = 'u8[65536]{0}', space=vmem, size = 0x10000, scoped, tag = 'output window, operand 0']
    loop: start=0, step=1, limit=6
    $region2: #{closed_call.25} parent=1 // loop_pre_header
      _
    $region3: #{closed_call.25} parent=1 // loop_header
      %s9 = sphi 0, %s13
      %p10 = scmp.ge.s32.totalorder %s9, 6
      %s16 = sphi 0, %s28
      %s17 = sphi 0, %s24
      %s18 = sphi 0, %s16
      %s19 = sphi 0, %s17
      %s20 = sphi 0, %s18
      %s21 = sphi 0, %s19
      %s31 = sphi 0, %s33
      %s34 = sphi 0, %s31
      %s35 = sphi 0, %s34
      %s51 = sphi 0, %s35
      %s57 = sphi 0, %s59
      %s60 = sphi 0, %s57
      %s61 = sphi 0, %s60
      %s77 = sphi 0, %s61
      %s83 = sphi 0, %s85
      %s86 = sphi 0, %s83
      %s87 = sphi 0, %s86
      %s103 = sphi 0, %s87
      %s111 = sphi 0, %s113
      %s114 = sphi 0, %s111
      %s115 = sphi 0, %s114
      %s131 = sphi 0, %s115
    $region4: #{closed_call.25} parent=1 // loop_header_branch
      %12 = sbr.rel (%p10) target = $region8
    $region5: #{closed_call.25} parent=1 // loop_body
      %s14 = ssub.s32 %s9, 1
      %s15 = ssub.s32 %s9, 2
      %s22 = sadd.s32 1, %s17
      %p23 = scmp.ge.s32.totalorder %s22, 4
      %s24 = scalar_select %p23, 0, %s22
      %s25 = sadd.s32 1, %s16
      %s26 = scalar_select %p23, %s25, %s16
      %p27 = scmp.ge.s32.totalorder %s26, 1
      %s28 = scalar_select %p27, 0, %s26
      %s29 = ssub.s32 %s16, %s28
      %p30 = scmp.eq.s32.totalorder %s29, 0
      %s32 = sadd.s32 %s31, 1
      %s33 = scalar_select %p30, %s31, %s32
      %p36 = pneg %p30
      %p37 = scmp.eq.s32.totalorder %s9, 3
      %p38 = por %p36, %p37
      %p39 = scmp.ne.s32.totalorder %s31, %s34
      %p40 = scmp.eq.s32.totalorder %s9, 0
      %p41 = por %p39, %p40
      %p42 = scmp.ne.s32.totalorder %s31, %s34
      %p43 = scmp.eq.s32.totalorder %s14, 3
      %p44 = por %p42, %p43
      %p45 = scmp.ne.s32.totalorder %s34, %s35
      %p46 = scmp.eq.s32.totalorder %s14, 0
      %p47 = por %p45, %p46
      %p48 = scmp.ne.s32.totalorder %s34, %s35
      %p49 = scmp.eq.s32.totalorder %s15, 3
      %p50 = por %p48, %p49
      %p52 = scmp.ne.s32.totalorder %s35, %s51
      %p53 = scmp.eq.s32.totalorder %s15, 0
      %p54 = por %p52, %p53
      %s55 = ssub.s32 %s17, %s24
      %p56 = scmp.eq.s32.totalorder %s55, 0
      %s58 = sadd.s32 %s57, 1
      %s59 = scalar_select %p56, %s57, %s58
      %p62 = pneg %p56
      %p63 = scmp.eq.s32.totalorder %s9, 3
      %p64 = por %p62, %p63
      %p65 = scmp.ne.s32.totalorder %s57, %s60
      %p66 = scmp.eq.s32.totalorder %s9, 0
      %p67 = por %p65, %p66
      %p68 = scmp.ne.s32.totalorder %s57, %s60
      %p69 = scmp.eq.s32.totalorder %s14, 3
      %p70 = por %p68, %p69
      %p71 = scmp.ne.s32.totalorder %s60, %s61
      %p72 = scmp.eq.s32.totalorder %s14, 0
      %p73 = por %p71, %p72
      %p74 = scmp.ne.s32.totalorder %s60, %s61
      %p75 = scmp.eq.s32.totalorder %s15, 3
      %p76 = por %p74, %p75
      %p78 = scmp.ne.s32.totalorder %s61, %s77
      %p79 = scmp.eq.s32.totalorder %s15, 0
      %p80 = por %p78, %p79
      %s81 = ssub.s32 %s17, %s24
      %p82 = scmp.eq.s32.totalorder %s81, 0
      %s84 = sadd.s32 %s83, 1
      %s85 = scalar_select %p82, %s83, %s84
      %p88 = pneg %p82
      %p89 = scmp.eq.s32.totalorder %s9, 3
      %p90 = por %p88, %p89
      %p91 = scmp.ne.s32.totalorder %s83, %s86
      %p92 = scmp.eq.s32.totalorder %s9, 0
      %p93 = por %p91, %p92
      %p94 = scmp.ne.s32.totalorder %s83, %s86
      %p95 = scmp.eq.s32.totalorder %s14, 3
      %p96 = por %p94, %p95
      %p97 = scmp.ne.s32.totalorder %s86, %s87
      %p98 = scmp.eq.s32.totalorder %s14, 0
      %p99 = por %p97, %p98
      %p100 = scmp.ne.s32.totalorder %s86, %s87
      %p101 = scmp.eq.s32.totalorder %s15, 3
      %p102 = por %p100, %p101
      %p104 = scmp.ne.s32.totalorder %s87, %s103
      %p105 = scmp.eq.s32.totalorder %s15, 0
      %p106 = por %p104, %p105
      %s107 = ssub.s32 %s16, %s28
      %s108 = ssub.s32 %s17, %s24
      %s109 = sor.u32 %s107, %s108
      %p110 = scmp.eq.s32.totalorder %s109, 0
      %s112 = sadd.s32 %s111, 1
      %s113 = scalar_select %p110, %s111, %s112
      %p116 = pneg %p110
      %p117 = scmp.eq.s32.totalorder %s9, 3
      %p118 = por %p116, %p117
      %p119 = scmp.ne.s32.totalorder %s111, %s114
      %p120 = scmp.eq.s32.totalorder %s9, 0
      %p121 = por %p119, %p120
      %p122 = scmp.ne.s32.totalorder %s111, %s114
      %p123 = scmp.eq.s32.totalorder %s14, 3
      %p124 = por %p122, %p123
      %p125 = scmp.ne.s32.totalorder %s114, %s115
      %p126 = scmp.eq.s32.totalorder %s14, 0
      %p127 = por %p125, %p126
      %p128 = scmp.ne.s32.totalorder %s114, %s115
      %p129 = scmp.eq.s32.totalorder %s15, 3
      %p130 = por %p128, %p129
      %p132 = scmp.ne.s32.totalorder %s115, %s131
      %p133 = scmp.eq.s32.totalorder %s15, 0
      %p134 = por %p132, %p133
      %p135 = scmp.le.s32.totalorder 1, %s9
      %p136 = scmp.lt.s32.totalorder %s9, 5
      %p137 = pnand %p135, %p136
      %p138 = pneg %p137
      // Predicated region
      $region9: #{closed_call.25} parent=5 // pred_check
        _
      $region10: #{closed_call.25} parent=5 // pred_check_branch
        %140 = sbr.rel (%p137) target = $region12
      $region11: #{closed_call.25} parent=5 // pred_region
        %s141 = ssub.s32 %s9, 1
        // Predicated region
        $region13: #{closed_call.25} parent=11 // pred_check
          %p142 = pneg %p47
        $region14: #{closed_call.25} parent=11 // pred_check_branch
          %144 = sbr.rel (%p142) target = $region16
        $region15: #{closed_call.25} parent=11 // pred_region
          %s145 = smul.u32 4, %s18
          %p146 = scmp.lt.s32.totalorder %s145, 3
          %s147 = scalar_select %p146, %s145, 3
          %s148 = smul.addr %s147, 4
          %s149 = smul.addr %s148, 4
          %s150 = scalar_lea.vmem %s0, %s149
          %s151 = smul.u32 4, %s18
        $region16: #{closed_call.25} parent=11 // pred_fallthru
          _
      $region12: #{closed_call.25} parent=5 // pred_fallthru
        _
      %p152 = scmp.lt.s32.totalorder %s9, 4
      // Predicated region
      $region17: #{closed_call.25} parent=5 // pred_check
        %p153 = pneg %p152
      $region18: #{closed_call.25} parent=5 // pred_check_branch
        %155 = sbr.rel (%p153) target = $region20
      $region19: #{closed_call.25} parent=5 // pred_region
        // Predicated region
        $region21: #{closed_call.25} parent=19 // pred_check
          %p156 = pneg %p67
        $region22: #{closed_call.25} parent=19 // pred_check_branch
          %158 = sbr.rel (%p156) target = $region24
        $region23: #{closed_call.25} parent=19 // pred_region
          %s159 = sand.u32 %s57, 1
          %s160 = sand.u32 %s57, 1
          %s161 = smul.addr %s160, 1024
          %s162 = scalar_lea.vmem [#allocation2], %s161
          %s163 = smul.u32 4, %s17
          %s164 = smul.addr %s163, 4
          %s165 = scalar_lea.vmem %s1, %s164
          // Predicated region
          $region25: #{closed_call.25} parent=23 // pred_check
            _
          $region26: #{closed_call.25} parent=23 // pred_check_branch
            %167 = sbr.rel (0) target = $region28
          $region27: #{closed_call.25} parent=23 // pred_region
            // Predicated region
            $region29: #{closed_call.25} parent=27 // pred_check
              _
            $region30: #{closed_call.25} parent=27 // pred_check_branch
              %169 = sbr.rel (0) target = $region32
            $region31: #{closed_call.25} parent=27 // pred_region
              loop: start=0, step=1, limit=1
              $region33: #{closed_call.25} parent=31 // loop_pre_header
                _
              $region34: #{closed_call.25} parent=31 // loop_header
                %s171 = sphi 0, %s175
                %p172 = scmp.ge.s32.totalorder %s171, 1
                %s176 = sphi %s165, %s165
                %s177 = sphi %s162, %s162
              $region35: #{closed_call.25} parent=31 // loop_header_branch
                %174 = sbr.rel (%p172) target = $region39
              $region36: #{closed_call.25} parent=31 // loop_body
                %v178 = vld [vmem:[%s176] sm:$0xff]
                %179 = vst [vmem:[%s177] sm:$0xff] %v178
                %v180 = vld [vmem:[%s176 + $0x8] sm:$0xff]
                %181 = vst [vmem:[%s177 + $0x8] sm:$0xff] %v180
                %v182 = vld [vmem:[%s176 + $0x40] sm:$0xff]
                %183 = vst [vmem:[%s177 + $0x10] sm:$0xff] %v182
                %v184 = vld [vmem:[%s176 + $0x48] sm:$0xff]
                %185 = vst [vmem:[%s177 + $0x18] sm:$0xff] %v184
                %v186 = vld [vmem:[%s176 + $0x80] sm:$0xff]
                %187 = vst [vmem:[%s177 + $0x20] sm:$0xff] %v186
                %v188 = vld [vmem:[%s176 + $0x88] sm:$0xff]
                %189 = vst [vmem:[%s177 + $0x28] sm:$0xff] %v188
                %v190 = vld [vmem:[%s176 + $0xc0] sm:$0xff]
                %191 = vst [vmem:[%s177 + $0x30] sm:$0xff] %v190
                %v192 = vld [vmem:[%s176 + $0xc8] sm:$0xff]
                %193 = vst [vmem:[%s177 + $0x38] sm:$0xff] %v192
                %v194 = vld [vmem:[%s176 + $0x100] sm:$0xff]
                %195 = vst [vmem:[%s177 + $0x40] sm:$0xff] %v194
                %v196 = vld [vmem:[%s176 + $0x108] sm:$0xff]
                %197 = vst [vmem:[%s177 + $0x48] sm:$0xff] %v196
                %v198 = vld [vmem:[%s176 + $0x140] sm:$0xff]
                %199 = vst [vmem:[%s177 + $0x50] sm:$0xff] %v198
                %v200 = vld [vmem:[%s176 + $0x148] sm:$0xff]
                %201 = vst [vmem:[%s177 + $0x58] sm:$0xff] %v200
                %v202 = vld [vmem:[%s176 + $0x180] sm:$0xff]
                %203 = vst [vmem:[%s177 + $0x60] sm:$0xff] %v202
                %v204 = vld [vmem:[%s176 + $0x188] sm:$0xff]
                %205 = vst [vmem:[%s177 + $0x68] sm:$0xff] %v204
                %v206 = vld [vmem:[%s176 + $0x1c0] sm:$0xff]
                %207 = vst [vmem:[%s177 + $0x70] sm:$0xff] %v206
                %v208 = vld [vmem:[%s176 + $0x1c8] sm:$0xff]
                %209 = vst [vmem:[%s177 + $0x78] sm:$0xff] %v208
                %v210 = vld [vmem:[%s176 + $0x200] sm:$0xff]
                %211 = vst [vmem:[%s177 + $0x80] sm:$0xff] %v210
                %v212 = vld [vmem:[%s176 + $0x208] sm:$0xff]
                %213 = vst [vmem:[%s177 + $0x88] sm:$0xff] %v212
                %v214 = vld [vmem:[%s176 + $0x240] sm:$0xff]
                %215 = vst [vmem:[%s177 + $0x90] sm:$0xff] %v214
                %v216 = vld [vmem:[%s176 + $0x248] sm:$0xff]
                %217 = vst [vmem:[%s177 + $0x98] sm:$0xff] %v216
                %v218 = vld [vmem:[%s176 + $0x280] sm:$0xff]
                %219 = vst [vmem:[%s177 + $0xa0] sm:$0xff] %v218
                %v220 = vld [vmem:[%s176 + $0x288] sm:$0xff]
                %221 = vst [vmem:[%s177 + $0xa8] sm:$0xff] %v220
                %v222 = vld [vmem:[%s176 + $0x2c0] sm:$0xff]
                %223 = vst [vmem:[%s177 + $0xb0] sm:$0xff] %v222
                %v224 = vld [vmem:[%s176 + $0x2c8] sm:$0xff]
                %225 = vst [vmem:[%s177 + $0xb8] sm:$0xff] %v224
                %v226 = vld [vmem:[%s176 + $0x300] sm:$0xff]
                %227 = vst [vmem:[%s177 + $0xc0] sm:$0xff] %v226
                %v228 = vld [vmem:[%s176 + $0x308] sm:$0xff]
                %229 = vst [vmem:[%s177 + $0xc8] sm:$0xff] %v228
                %v230 = vld [vmem:[%s176 + $0x340] sm:$0xff]
                %231 = vst [vmem:[%s177 + $0xd0] sm:$0xff] %v230
                %v232 = vld [vmem:[%s176 + $0x348] sm:$0xff]
                %233 = vst [vmem:[%s177 + $0xd8] sm:$0xff] %v232
                %v234 = vld [vmem:[%s176 + $0x380] sm:$0xff]
                %235 = vst [vmem:[%s177 + $0xe0] sm:$0xff] %v234
                %v236 = vld [vmem:[%s176 + $0x388] sm:$0xff]
                %237 = vst [vmem:[%s177 + $0xe8] sm:$0xff] %v236
                %v238 = vld [vmem:[%s176 + $0x3c0] sm:$0xff]
                %239 = vst [vmem:[%s177 + $0xf0] sm:$0xff] %v238
                %v240 = vld [vmem:[%s176 + $0x3c8] sm:$0xff]
                %241 = vst [vmem:[%s177 + $0xf8] sm:$0xff] %v240
                %v242 = vld [vmem:[%s176 + $0x400] sm:$0xff]
                %243 = vst [vmem:[%s177 + $0x100] sm:$0xff] %v242
                %v244 = vld [vmem:[%s176 + $0x408] sm:$0xff]
                %245 = vst [vmem:[%s177 + $0x108] sm:$0xff] %v244
                %v246 = vld [vmem:[%s176 + $0x440] sm:$0xff]
                %247 = vst [vmem:[%s177 + $0x110] sm:$0xff] %v246
                %v248 = vld [vmem:[%s176 + $0x448] sm:$0xff]
                %249 = vst [vmem:[%s177 + $0x118] sm:$0xff] %v248
                %v250 = vld [vmem:[%s176 + $0x480] sm:$0xff]
                %251 = vst [vmem:[%s177 + $0x120] sm:$0xff] %v250
                %v252 = vld [vmem:[%s176 + $0x488] sm:$0xff]
                %253 = vst [vmem:[%s177 + $0x128] sm:$0xff] %v252
                %v254 = vld [vmem:[%s176 + $0x4c0] sm:$0xff]
                %255 = vst [vmem:[%s177 + $0x130] sm:$0xff] %v254
                %v256 = vld [vmem:[%s176 + $0x4c8] sm:$0xff]
                %257 = vst [vmem:[%s177 + $0x138] sm:$0xff] %v256
                %v258 = vld [vmem:[%s176 + $0x500] sm:$0xff]
                %259 = vst [vmem:[%s177 + $0x140] sm:$0xff] %v258
                %v260 = vld [vmem:[%s176 + $0x508] sm:$0xff]
                %261 = vst [vmem:[%s177 + $0x148] sm:$0xff] %v260
                %v262 = vld [vmem:[%s176 + $0x540] sm:$0xff]
                %263 = vst [vmem:[%s177 + $0x150] sm:$0xff] %v262
                %v264 = vld [vmem:[%s176 + $0x548] sm:$0xff]
                %265 = vst [vmem:[%s177 + $0x158] sm:$0xff] %v264
                %v266 = vld [vmem:[%s176 + $0x580] sm:$0xff]
                %267 = vst [vmem:[%s177 + $0x160] sm:$0xff] %v266
                %v268 = vld [vmem:[%s176 + $0x588] sm:$0xff]
                %269 = vst [vmem:[%s177 + $0x168] sm:$0xff] %v268
                %v270 = vld [vmem:[%s176 + $0x5c0] sm:$0xff]
                %271 = vst [vmem:[%s177 + $0x170] sm:$0xff] %v270
                %v272 = vld [vmem:[%s176 + $0x5c8] sm:$0xff]
                %273 = vst [vmem:[%s177 + $0x178] sm:$0xff] %v272
                %v274 = vld [vmem:[%s176 + $0x600] sm:$0xff]
                %275 = vst [vmem:[%s177 + $0x180] sm:$0xff] %v274
                %v276 = vld [vmem:[%s176 + $0x608] sm:$0xff]
                %277 = vst [vmem:[%s177 + $0x188] sm:$0xff] %v276
                %v278 = vld [vmem:[%s176 + $0x640] sm:$0xff]
                %279 = vst [vmem:[%s177 + $0x190] sm:$0xff] %v278
                %v280 = vld [vmem:[%s176 + $0x648] sm:$0xff]
                %281 = vst [vmem:[%s177 + $0x198] sm:$0xff] %v280
                %v282 = vld [vmem:[%s176 + $0x680] sm:$0xff]
                %283 = vst [vmem:[%s177 + $0x1a0] sm:$0xff] %v282
                %v284 = vld [vmem:[%s176 + $0x688] sm:$0xff]
                %285 = vst [vmem:[%s177 + $0x1a8] sm:$0xff] %v284
                %v286 = vld [vmem:[%s176 + $0x6c0] sm:$0xff]
                %287 = vst [vmem:[%s177 + $0x1b0] sm:$0xff] %v286
                %v288 = vld [vmem:[%s176 + $0x6c8] sm:$0xff]
                %289 = vst [vmem:[%s177 + $0x1b8] sm:$0xff] %v288
                %v290 = vld [vmem:[%s176 + $0x700] sm:$0xff]
                %291 = vst [vmem:[%s177 + $0x1c0] sm:$0xff] %v290
                %v292 = vld [vmem:[%s176 + $0x708] sm:$0xff]
                %293 = vst [vmem:[%s177 + $0x1c8] sm:$0xff] %v292
                %v294 = vld [vmem:[%s176 + $0x740] sm:$0xff]
                %295 = vst [vmem:[%s177 + $0x1d0] sm:$0xff] %v294
                %v296 = vld [vmem:[%s176 + $0x748] sm:$0xff]
                %297 = vst [vmem:[%s177 + $0x1d8] sm:$0xff] %v296
                %v298 = vld [vmem:[%s176 + $0x780] sm:$0xff]
                %299 = vst [vmem:[%s177 + $0x1e0] sm:$0xff] %v298
                %v300 = vld [vmem:[%s176 + $0x788] sm:$0xff]
                %301 = vst [vmem:[%s177 + $0x1e8] sm:$0xff] %v300
                %v302 = vld [vmem:[%s176 + $0x7c0] sm:$0xff]
                %303 = vst [vmem:[%s177 + $0x1f0] sm:$0xff] %v302
                %v304 = vld [vmem:[%s176 + $0x7c8] sm:$0xff]
                %305 = vst [vmem:[%s177 + $0x1f8] sm:$0xff] %v304
                %v306 = vld [vmem:[%s176 + $0x800] sm:$0xff]
                %307 = vst [vmem:[%s177 + $0x200] sm:$0xff] %v306
                %v308 = vld [vmem:[%s176 + $0x808] sm:$0xff]
                %309 = vst [vmem:[%s177 + $0x208] sm:$0xff] %v308
                %v310 = vld [vmem:[%s176 + $0x840] sm:$0xff]
                %311 = vst [vmem:[%s177 + $0x210] sm:$0xff] %v310
                %v312 = vld [vmem:[%s176 + $0x848] sm:$0xff]
                %313 = vst [vmem:[%s177 + $0x218] sm:$0xff] %v312
                %v314 = vld [vmem:[%s176 + $0x880] sm:$0xff]
                %315 = vst [vmem:[%s177 + $0x220] sm:$0xff] %v314
                %v316 = vld [vmem:[%s176 + $0x888] sm:$0xff]
                %317 = vst [vmem:[%s177 + $0x228] sm:$0xff] %v316
                %v318 = vld [vmem:[%s176 + $0x8c0] sm:$0xff]
                %319 = vst [vmem:[%s177 + $0x230] sm:$0xff] %v318
                %v320 = vld [vmem:[%s176 + $0x8c8] sm:$0xff]
                %321 = vst [vmem:[%s177 + $0x238] sm:$0xff] %v320
                %v322 = vld [vmem:[%s176 + $0x900] sm:$0xff]
                %323 = vst [vmem:[%s177 + $0x240] sm:$0xff] %v322
                %v324 = vld [vmem:[%s176 + $0x908] sm:$0xff]
                %325 = vst [vmem:[%s177 + $0x248] sm:$0xff] %v324
                %v326 = vld [vmem:[%s176 + $0x940] sm:$0xff]
                %327 = vst [vmem:[%s177 + $0x250] sm:$0xff] %v326
                %v328 = vld [vmem:[%s176 + $0x948] sm:$0xff]
                %329 = vst [vmem:[%s177 + $0x258] sm:$0xff] %v328
                %v330 = vld [vmem:[%s176 + $0x980] sm:$0xff]
                %331 = vst [vmem:[%s177 + $0x260] sm:$0xff] %v330
                %v332 = vld [vmem:[%s176 + $0x988] sm:$0xff]
                %333 = vst [vmem:[%s177 + $0x268] sm:$0xff] %v332
                %v334 = vld [vmem:[%s176 + $0x9c0] sm:$0xff]
                %335 = vst [vmem:[%s177 + $0x270] sm:$0xff] %v334
                %v336 = vld [vmem:[%s176 + $0x9c8] sm:$0xff]
                %337 = vst [vmem:[%s177 + $0x278] sm:$0xff] %v336
                %v338 = vld [vmem:[%s176 + $0xa00] sm:$0xff]
                %339 = vst [vmem:[%s177 + $0x280] sm:$0xff] %v338
                %v340 = vld [vmem:[%s176 + $0xa08] sm:$0xff]
                %341 = vst [vmem:[%s177 + $0x288] sm:$0xff] %v340
                %v342 = vld [vmem:[%s176 + $0xa40] sm:$0xff]
                %343 = vst [vmem:[%s177 + $0x290] sm:$0xff] %v342
                %v344 = vld [vmem:[%s176 + $0xa48] sm:$0xff]
                %345 = vst [vmem:[%s177 + $0x298] sm:$0xff] %v344
                %v346 = vld [vmem:[%s176 + $0xa80] sm:$0xff]
                %347 = vst [vmem:[%s177 + $0x2a0] sm:$0xff] %v346
                %v348 = vld [vmem:[%s176 + $0xa88] sm:$0xff]
                %349 = vst [vmem:[%s177 + $0x2a8] sm:$0xff] %v348
                %v350 = vld [vmem:[%s176 + $0xac0] sm:$0xff]
                %351 = vst [vmem:[%s177 + $0x2b0] sm:$0xff] %v350
                %v352 = vld [vmem:[%s176 + $0xac8] sm:$0xff]
                %353 = vst [vmem:[%s177 + $0x2b8] sm:$0xff] %v352
                %v354 = vld [vmem:[%s176 + $0xb00] sm:$0xff]
                %355 = vst [vmem:[%s177 + $0x2c0] sm:$0xff] %v354
                %v356 = vld [vmem:[%s176 + $0xb08] sm:$0xff]
                %357 = vst [vmem:[%s177 + $0x2c8] sm:$0xff] %v356
                %v358 = vld [vmem:[%s176 + $0xb40] sm:$0xff]
                %359 = vst [vmem:[%s177 + $0x2d0] sm:$0xff] %v358
                %v360 = vld [vmem:[%s176 + $0xb48] sm:$0xff]
                %361 = vst [vmem:[%s177 + $0x2d8] sm:$0xff] %v360
                %v362 = vld [vmem:[%s176 + $0xb80] sm:$0xff]
                %363 = vst [vmem:[%s177 + $0x2e0] sm:$0xff] %v362
                %v364 = vld [vmem:[%s176 + $0xb88] sm:$0xff]
                %365 = vst [vmem:[%s177 + $0x2e8] sm:$0xff] %v364
                %v366 = vld [vmem:[%s176 + $0xbc0] sm:$0xff]
                %367 = vst [vmem:[%s177 + $0x2f0] sm:$0xff] %v366
                %v368 = vld [vmem:[%s176 + $0xbc8] sm:$0xff]
                %369 = vst [vmem:[%s177 + $0x2f8] sm:$0xff] %v368
                %v370 = vld [vmem:[%s176 + $0xc00] sm:$0xff]
                %371 = vst [vmem:[%s177 + $0x300] sm:$0xff] %v370
                %v372 = vld [vmem:[%s176 + $0xc08] sm:$0xff]
                %373 = vst [vmem:[%s177 + $0x308] sm:$0xff] %v372
                %v374 = vld [vmem:[%s176 + $0xc40] sm:$0xff]
                %375 = vst [vmem:[%s177 + $0x310] sm:$0xff] %v374
                %v376 = vld [vmem:[%s176 + $0xc48] sm:$0xff]
                %377 = vst [vmem:[%s177 + $0x318] sm:$0xff] %v376
                %v378 = vld [vmem:[%s176 + $0xc80] sm:$0xff]
                %379 = vst [vmem:[%s177 + $0x320] sm:$0xff] %v378
                %v380 = vld [vmem:[%s176 + $0xc88] sm:$0xff]
                %381 = vst [vmem:[%s177 + $0x328] sm:$0xff] %v380
                %v382 = vld [vmem:[%s176 + $0xcc0] sm:$0xff]
                %383 = vst [vmem:[%s177 + $0x330] sm:$0xff] %v382
                %v384 = vld [vmem:[%s176 + $0xcc8] sm:$0xff]
                %385 = vst [vmem:[%s177 + $0x338] sm:$0xff] %v384
                %v386 = vld [vmem:[%s176 + $0xd00] sm:$0xff]
                %387 = vst [vmem:[%s177 + $0x340] sm:$0xff] %v386
                %v388 = vld [vmem:[%s176 + $0xd08] sm:$0xff]
                %389 = vst [vmem:[%s177 + $0x348] sm:$0xff] %v388
                %v390 = vld [vmem:[%s176 + $0xd40] sm:$0xff]
                %391 = vst [vmem:[%s177 + $0x350] sm:$0xff] %v390
                %v392 = vld [vmem:[%s176 + $0xd48] sm:$0xff]
                %393 = vst [vmem:[%s177 + $0x358] sm:$0xff] %v392
                %v394 = vld [vmem:[%s176 + $0xd80] sm:$0xff]
                %395 = vst [vmem:[%s177 + $0x360] sm:$0xff] %v394
                %v396 = vld [vmem:[%s176 + $0xd88] sm:$0xff]
                %397 = vst [vmem:[%s177 + $0x368] sm:$0xff] %v396
                %v398 = vld [vmem:[%s176 + $0xdc0] sm:$0xff]
                %399 = vst [vmem:[%s177 + $0x370] sm:$0xff] %v398
                %v400 = vld [vmem:[%s176 + $0xdc8] sm:$0xff]
                %401 = vst [vmem:[%s177 + $0x378] sm:$0xff] %v400
                %v402 = vld [vmem:[%s176 + $0xe00] sm:$0xff]
                %403 = vst [vmem:[%s177 + $0x380] sm:$0xff] %v402
                %v404 = vld [vmem:[%s176 + $0xe08] sm:$0xff]
                %405 = vst [vmem:[%s177 + $0x388] sm:$0xff] %v404
                %v406 = vld [vmem:[%s176 + $0xe40] sm:$0xff]
                %407 = vst [vmem:[%s177 + $0x390] sm:$0xff] %v406
                %v408 = vld [vmem:[%s176 + $0xe48] sm:$0xff]
                %409 = vst [vmem:[%s177 + $0x398] sm:$0xff] %v408
                %v410 = vld [vmem:[%s176 + $0xe80] sm:$0xff]
                %411 = vst [vmem:[%s177 + $0x3a0] sm:$0xff] %v410
                %v412 = vld [vmem:[%s176 + $0xe88] sm:$0xff]
                %413 = vst [vmem:[%s177 + $0x3a8] sm:$0xff] %v412
                %v414 = vld [vmem:[%s176 + $0xec0] sm:$0xff]
                %415 = vst [vmem:[%s177 + $0x3b0] sm:$0xff] %v414
                %v416 = vld [vmem:[%s176 + $0xec8] sm:$0xff]
                %417 = vst [vmem:[%s177 + $0x3b8] sm:$0xff] %v416
                %v418 = vld [vmem:[%s176 + $0xf00] sm:$0xff]
                %419 = vst [vmem:[%s177 + $0x3c0] sm:$0xff] %v418
                %v420 = vld [vmem:[%s176 + $0xf08] sm:$0xff]
                %421 = vst [vmem:[%s177 + $0x3c8] sm:$0xff] %v420
                %v422 = vld [vmem:[%s176 + $0xf40] sm:$0xff]
                %423 = vst [vmem:[%s177 + $0x3d0] sm:$0xff] %v422
                %v424 = vld [vmem:[%s176 + $0xf48] sm:$0xff]
                %425 = vst [vmem:[%s177 + $0x3d8] sm:$0xff] %v424
                %v426 = vld [vmem:[%s176 + $0xf80] sm:$0xff]
                %427 = vst [vmem:[%s177 + $0x3e0] sm:$0xff] %v426
                %v428 = vld [vmem:[%s176 + $0xf88] sm:$0xff]
                %429 = vst [vmem:[%s177 + $0x3e8] sm:$0xff] %v428
                %v430 = vld [vmem:[%s176 + $0xfc0] sm:$0xff]
                %431 = vst [vmem:[%s177 + $0x3f0] sm:$0xff] %v430
                %v432 = vld [vmem:[%s176 + $0xfc8] sm:$0xff]
                %433 = vst [vmem:[%s177 + $0x3f8] sm:$0xff] %v432
              $region37: #{closed_call.25} parent=31 // loop_footer
                %s175 = sadd.s32 1, %s171
              $region38: #{closed_call.25} parent=31 // loop_footer_branch
                %170 = sbr.rel target = $region34
              $region39: #{closed_call.25} parent=31 // loop_exit
                _
            $region32: #{closed_call.25} parent=27 // pred_fallthru
              _
            // Predicated region
            $region40: #{closed_call.25} parent=27 // pred_check
              _
            $region41: #{closed_call.25} parent=27 // pred_check_branch
              %435 = sbr.rel target = $region43
            $region42: #{closed_call.25} parent=27 // pred_region
              _
            $region43: #{closed_call.25} parent=27 // pred_fallthru
              _
          $region28: #{closed_call.25} parent=23 // pred_fallthru
            _
          %436 = vnop
        $region24: #{closed_call.25} parent=19 // pred_fallthru
          _
        // Predicated region
        $region44: #{closed_call.25} parent=19 // pred_check
          %p437 = pneg %p93
        $region45: #{closed_call.25} parent=19 // pred_check_branch
          %439 = sbr.rel (%p437) target = $region47
        $region46: #{closed_call.25} parent=19 // pred_region
          %s440 = smul.u32 4, %s17
          %p441 = scmp.lt.s32.totalorder %s440, 15
          %s442 = scalar_select %p441, %s440, 15
          %s443 = scalar_lea.vmem %s2, %s442
          %s444 = smul.u32 4, %s17
        $region47: #{closed_call.25} parent=19 // pred_fallthru
          _
      $region20: #{closed_call.25} parent=5 // pred_fallthru
        _
      %p445 = scmp.le.s32.totalorder 1, %s9
      %p446 = scmp.lt.s32.totalorder %s9, 5
      %p447 = pnand %p445, %p446
      %p448 = pneg %p447
      // Predicated region
      $region48: #{closed_call.25} parent=5 // pred_check
        _
      $region49: #{closed_call.25} parent=5 // pred_check_branch
        %450 = sbr.rel (%p447) target = $region51
      $region50: #{closed_call.25} parent=5 // pred_region
        %s451 = ssub.s32 %s9, 1
        %s452 = sand.u32 %s60, 1
        %s453 = sand.u32 %s60, 1
        %s454 = smul.addr %s453, 1024
        %s455 = scalar_lea.vmem [#allocation2], %s454
        // Predicated region
        $region52: #{closed_call.25} parent=50 // pred_check
          %p456 = pneg %p73
        $region53: #{closed_call.25} parent=50 // pred_check_branch
          %458 = sbr.rel (%p456) target = $region55
        $region54: #{closed_call.25} parent=50 // pred_region
          _
        $region55: #{closed_call.25} parent=50 // pred_fallthru
          _
        %s459 = smul.u32 4, %s18
        %p460 = scmp.lt.s32.totalorder %s459, 3
        %s461 = scalar_select %p460, %s459, 3
        %s462 = smul.addr %s461, 4
        %s463 = smul.addr %s462, 4
        %s464 = scalar_lea.vmem %s0, %s463
        %p465 = pneg %p47
        %p466 = pneg %p44
        %s467 = sand.u32 %s60, 1
        %s468 = sand.u32 %s60, 1
        %s469 = smul.addr %s468, 1024
        %s470 = scalar_lea.vmem [#allocation2], %s469
        %p471 = pneg %p73
        %p472 = pneg %p70
        %s473 = smul.u32 4, %s19
        %p474 = scmp.lt.s32.totalorder %s473, 15
        %s475 = scalar_select %p474, %s473, 15
        %s476 = scalar_lea.vmem %s2, %s475
        %p477 = pneg %p99
        %p478 = pneg %p96
        %p479 = pneg %p127
        %p480 = pneg %p124
        %s481 = sand.u32 %s114, 1
        %s482 = sand.u32 %s114, 1
        %s483 = smul.addr %s482, 64
        %s484 = scalar_lea.vmem [#allocation3], %s483
        %s485 = smul.u32 4, %s18
        %p486 = scmp.lt.s32.totalorder %s485, 3
        %s487 = scalar_select %p486, %s485, 3
        %s488 = smul.addr %s487, 4
        %s489 = smul.addr %s488, 4
        %s490 = scalar_lea.vmem %s0, %s489
        %s491 = smul.u32 4, %s18
        %s492 = smul.u32 4, %s19
        %s493 = smul.u32 4, %s19
        %p494 = scmp.lt.s32.totalorder %s493, 15
        %s495 = scalar_select %p494, %s493, 15
        %s496 = scalar_lea.vmem %s2, %s495
        %s497 = smul.u32 4, %s19
        %s498 = smul.u32 4, %s18
        %s499 = smul.u32 4, %s19
        %v500 = vld [vmem:[%s490] sm:$0xff]
        %v501 = vld [vmem:[%s490 + $0x8] sm:$0xff]
        %v502 = vld [vmem:[%s490 + $0x10] sm:$0xff]
        %v503 = vld [vmem:[%s490 + $0x18] sm:$0xff]
        %v504 = vld [vmem:[%s490 + $0x20] sm:$0xff]
        %v505 = vld [vmem:[%s490 + $0x28] sm:$0xff]
        %v506 = vld [vmem:[%s490 + $0x30] sm:$0xff]
        %v507 = vld [vmem:[%s490 + $0x38] sm:$0xff]
        %v508 = vld [vmem:[%s455] sm:$0xff]
        %v509 = vld [vmem:[%s455 + $0x8] sm:$0xff]
        %v510 = vld [vmem:[%s455 + $0x10] sm:$0xff]
        %v511 = vld [vmem:[%s455 + $0x18] sm:$0xff]
        %v512 = vld [vmem:[%s455 + $0x20] sm:$0xff]
        %v513 = vld [vmem:[%s455 + $0x28] sm:$0xff]
        %v514 = vld [vmem:[%s455 + $0x30] sm:$0xff]
        %v515 = vld [vmem:[%s455 + $0x38] sm:$0xff]
        %v516 = vld [vmem:[%s455 + $0x40] sm:$0xff]
        %v517 = vld [vmem:[%s455 + $0x48] sm:$0xff]
        %v518 = vld [vmem:[%s455 + $0x50] sm:$0xff]
        %v519 = vld [vmem:[%s455 + $0x58] sm:$0xff]
        %v520 = vld [vmem:[%s455 + $0x60] sm:$0xff]
        %v521 = vld [vmem:[%s455 + $0x68] sm:$0xff]
        %v522 = vld [vmem:[%s455 + $0x70] sm:$0xff]
        %v523 = vld [vmem:[%s455 + $0x78] sm:$0xff]
        %v524 = vld [vmem:[%s455 + $0x80] sm:$0xff]
        %v525 = vld [vmem:[%s455 + $0x88] sm:$0xff]
        %v526 = vld [vmem:[%s455 + $0x90] sm:$0xff]
        %v527 = vld [vmem:[%s455 + $0x98] sm:$0xff]
        %v528 = vld [vmem:[%s455 + $0xa0] sm:$0xff]
        %v529 = vld [vmem:[%s455 + $0xa8] sm:$0xff]
        %v530 = vld [vmem:[%s455 + $0xb0] sm:$0xff]
        %v531 = vld [vmem:[%s455 + $0xb8] sm:$0xff]
        %v532 = vld [vmem:[%s455 + $0xc0] sm:$0xff]
        %v533 = vld [vmem:[%s455 + $0xc8] sm:$0xff]
        %v534 = vld [vmem:[%s455 + $0xd0] sm:$0xff]
        %v535 = vld [vmem:[%s455 + $0xd8] sm:$0xff]
        %v536 = vld [vmem:[%s455 + $0xe0] sm:$0xff]
        %v537 = vld [vmem:[%s455 + $0xe8] sm:$0xff]
        %v538 = vld [vmem:[%s455 + $0xf0] sm:$0xff]
        %v539 = vld [vmem:[%s455 + $0xf8] sm:$0xff]
        %v540 = vld [vmem:[%s455 + $0x100] sm:$0xff]
        %v541 = vld [vmem:[%s455 + $0x108] sm:$0xff]
        %v542 = vld [vmem:[%s455 + $0x110] sm:$0xff]
        %v543 = vld [vmem:[%s455 + $0x118] sm:$0xff]
        %v544 = vld [vmem:[%s455 + $0x120] sm:$0xff]
        %v545 = vld [vmem:[%s455 + $0x128] sm:$0xff]
        %v546 = vld [vmem:[%s455 + $0x130] sm:$0xff]
        %v547 = vld [vmem:[%s455 + $0x138] sm:$0xff]
        %v548 = vld [vmem:[%s455 + $0x140] sm:$0xff]
        %v549 = vld [vmem:[%s455 + $0x148] sm:$0xff]
        %v550 = vld [vmem:[%s455 + $0x150] sm:$0xff]
        %v551 = vld [vmem:[%s455 + $0x158] sm:$0xff]
        %v552 = vld [vmem:[%s455 + $0x160] sm:$0xff]
        %v553 = vld [vmem:[%s455 + $0x168] sm:$0xff]
        %v554 = vld [vmem:[%s455 + $0x170] sm:$0xff]
        %v555 = vld [vmem:[%s455 + $0x178] sm:$0xff]
        %v556 = vld [vmem:[%s455 + $0x180] sm:$0xff]
        %v557 = vld [vmem:[%s455 + $0x188] sm:$0xff]
        %v558 = vld [vmem:[%s455 + $0x190] sm:$0xff]
        %v559 = vld [vmem:[%s455 + $0x198] sm:$0xff]
        %v560 = vld [vmem:[%s455 + $0x1a0] sm:$0xff]
        %v561 = vld [vmem:[%s455 + $0x1a8] sm:$0xff]
        %v562 = vld [vmem:[%s455 + $0x1b0] sm:$0xff]
        %v563 = vld [vmem:[%s455 + $0x1b8] sm:$0xff]
        %v564 = vld [vmem:[%s455 + $0x1c0] sm:$0xff]
        %v565 = vld [vmem:[%s455 + $0x1c8] sm:$0xff]
        %v566 = vld [vmem:[%s455 + $0x1d0] sm:$0xff]
        %v567 = vld [vmem:[%s455 + $0x1d8] sm:$0xff]
        %v568 = vld [vmem:[%s455 + $0x1e0] sm:$0xff]
        %v569 = vld [vmem:[%s455 + $0x1e8] sm:$0xff]
        %v570 = vld [vmem:[%s455 + $0x1f0] sm:$0xff]
        %v571 = vld [vmem:[%s455 + $0x1f8] sm:$0xff]
        %v572 = vld [vmem:[%s455 + $0x200] sm:$0xff]
        %v573 = vld [vmem:[%s455 + $0x208] sm:$0xff]
        %v574 = vld [vmem:[%s455 + $0x210] sm:$0xff]
        %v575 = vld [vmem:[%s455 + $0x218] sm:$0xff]
        %v576 = vld [vmem:[%s455 + $0x220] sm:$0xff]
        %v577 = vld [vmem:[%s455 + $0x228] sm:$0xff]
        %v578 = vld [vmem:[%s455 + $0x230] sm:$0xff]
        %v579 = vld [vmem:[%s455 + $0x238] sm:$0xff]
        %v580 = vld [vmem:[%s455 + $0x240] sm:$0xff]
        %v581 = vld [vmem:[%s455 + $0x248] sm:$0xff]
        %v582 = vld [vmem:[%s455 + $0x250] sm:$0xff]
        %v583 = vld [vmem:[%s455 + $0x258] sm:$0xff]
        %v584 = vld [vmem:[%s455 + $0x260] sm:$0xff]
        %v585 = vld [vmem:[%s455 + $0x268] sm:$0xff]
        %v586 = vld [vmem:[%s455 + $0x270] sm:$0xff]
        %v587 = vld [vmem:[%s455 + $0x278] sm:$0xff]
        %v588 = vld [vmem:[%s455 + $0x280] sm:$0xff]
        %v589 = vld [vmem:[%s455 + $0x288] sm:$0xff]
        %v590 = vld [vmem:[%s455 + $0x290] sm:$0xff]
        %v591 = vld [vmem:[%s455 + $0x298] sm:$0xff]
        %v592 = vld [vmem:[%s455 + $0x2a0] sm:$0xff]
        %v593 = vld [vmem:[%s455 + $0x2a8] sm:$0xff]
        %v594 = vld [vmem:[%s455 + $0x2b0] sm:$0xff]
        %v595 = vld [vmem:[%s455 + $0x2b8] sm:$0xff]
        %v596 = vld [vmem:[%s455 + $0x2c0] sm:$0xff]
        %v597 = vld [vmem:[%s455 + $0x2c8] sm:$0xff]
        %v598 = vld [vmem:[%s455 + $0x2d0] sm:$0xff]
        %v599 = vld [vmem:[%s455 + $0x2d8] sm:$0xff]
        %v600 = vld [vmem:[%s455 + $0x2e0] sm:$0xff]
        %v601 = vld [vmem:[%s455 + $0x2e8] sm:$0xff]
        %v602 = vld [vmem:[%s455 + $0x2f0] sm:$0xff]
        %v603 = vld [vmem:[%s455 + $0x2f8] sm:$0xff]
        %v604 = vld [vmem:[%s455 + $0x300] sm:$0xff]
        %v605 = vld [vmem:[%s455 + $0x308] sm:$0xff]
        %v606 = vld [vmem:[%s455 + $0x310] sm:$0xff]
        %v607 = vld [vmem:[%s455 + $0x318] sm:$0xff]
        %v608 = vld [vmem:[%s455 + $0x320] sm:$0xff]
        %v609 = vld [vmem:[%s455 + $0x328] sm:$0xff]
        %v610 = vld [vmem:[%s455 + $0x330] sm:$0xff]
        %v611 = vld [vmem:[%s455 + $0x338] sm:$0xff]
        %v612 = vld [vmem:[%s455 + $0x340] sm:$0xff]
        %v613 = vld [vmem:[%s455 + $0x348] sm:$0xff]
        %v614 = vld [vmem:[%s455 + $0x350] sm:$0xff]
        %v615 = vld [vmem:[%s455 + $0x358] sm:$0xff]
        %v616 = vld [vmem:[%s455 + $0x360] sm:$0xff]
        %v617 = vld [vmem:[%s455 + $0x368] sm:$0xff]
        %v618 = vld [vmem:[%s455 + $0x370] sm:$0xff]
        %v619 = vld [vmem:[%s455 + $0x378] sm:$0xff]
        %v620 = vld [vmem:[%s455 + $0x380] sm:$0xff]
        %v621 = vld [vmem:[%s455 + $0x388] sm:$0xff]
        %v622 = vld [vmem:[%s455 + $0x390] sm:$0xff]
        %v623 = vld [vmem:[%s455 + $0x398] sm:$0xff]
        %v624 = vld [vmem:[%s455 + $0x3a0] sm:$0xff]
        %v625 = vld [vmem:[%s455 + $0x3a8] sm:$0xff]
        %v626 = vld [vmem:[%s455 + $0x3b0] sm:$0xff]
        %v627 = vld [vmem:[%s455 + $0x3b8] sm:$0xff]
        %v628 = vld [vmem:[%s455 + $0x3c0] sm:$0xff]
        %v629 = vld [vmem:[%s455 + $0x3c8] sm:$0xff]
        %v630 = vld [vmem:[%s455 + $0x3d0] sm:$0xff]
        %v631 = vld [vmem:[%s455 + $0x3d8] sm:$0xff]
        %v632 = vld [vmem:[%s455 + $0x3e0] sm:$0xff]
        %v633 = vld [vmem:[%s455 + $0x3e8] sm:$0xff]
        %v634 = vld [vmem:[%s455 + $0x3f0] sm:$0xff]
        %v635 = vld [vmem:[%s455 + $0x3f8] sm:$0xff]
        %v636 = vld [vmem:[%s496] sm:$0xf]
        %v638 = vlaneseq
        %v639 = vshrl.u32 %v638, 7
        %v640 = vsub.s32 0, %v639
        %v641 = vrot.slane %v636, %v640
        %v642 = vlaneseq
        %v643 = vshrl.u32 %v642, 7
        %v644 = vsub.s32 1, %v643
        %v645 = vrot.slane %v636, %v644
        %v646 = vlaneseq
        %v647 = vshrl.u32 %v646, 7
        %v648 = vsub.s32 2, %v647
        %v649 = vrot.slane %v636, %v648
        %v650 = vlaneseq
        %v651 = vshrl.u32 %v650, 7
        %v652 = vsub.s32 3, %v651
        %v653 = vrot.slane %v636, %v652
        %v666 = vunpack.c.l.b16 %v500
        %v667 = vunpack.c.h.b16 %v500
        %v668 = vunpack.c.l.b16 %v501
        %v669 = vunpack.c.h.b16 %v501
        %v670 = vunpack.c.l.b16 %v502
        %v671 = vunpack.c.h.b16 %v502
        %v672 = vunpack.c.l.b16 %v503
        %v673 = vunpack.c.h.b16 %v503
        %v674 = vunpack.c.l.b16 %v504
        %v675 = vunpack.c.h.b16 %v504
        %v676 = vunpack.c.l.b16 %v505
        %v677 = vunpack.c.h.b16 %v505
        %v678 = vunpack.c.l.b16 %v506
        %v679 = vunpack.c.h.b16 %v506
        %v680 = vunpack.c.l.b16 %v507
        %v681 = vunpack.c.h.b16 %v507
        %v682 = vpack.c.b16 %v670, %v666
        %v683 = vpack.c.b16 %v671, %v667
        %v684 = vpack.c.b16 %v672, %v668
        %v685 = vpack.c.b16 %v673, %v669
        %v686 = vpack.c.b16 %v678, %v674
        %v687 = vpack.c.b16 %v679, %v675
        %v688 = vpack.c.b16 %v680, %v676
        %v689 = vpack.c.b16 %v681, %v677
        %v826 = vunpack.c.l.b16 %v508
        %v827 = vunpack.c.h.b16 %v508
        %v828 = vunpack.c.l.b16 %v509
        %v829 = vunpack.c.h.b16 %v509
        %v830 = vunpack.c.l.b16 %v510
        %v831 = vunpack.c.h.b16 %v510
        %v832 = vunpack.c.l.b16 %v511
        %v833 = vunpack.c.h.b16 %v511
        %v834 = vunpack.c.l.b16 %v512
        %v835 = vunpack.c.h.b16 %v512
        %v836 = vunpack.c.l.b16 %v513
        %v837 = vunpack.c.h.b16 %v513
        %v838 = vunpack.c.l.b16 %v514
        %v839 = vunpack.c.h.b16 %v514
        %v840 = vunpack.c.l.b16 %v515
        %v841 = vunpack.c.h.b16 %v515
        %v842 = vunpack.c.l.b16 %v516
        %v843 = vunpack.c.h.b16 %v516
        %v844 = vunpack.c.l.b16 %v517
        %v845 = vunpack.c.h.b16 %v517
        %v846 = vunpack.c.l.b16 %v518
        %v847 = vunpack.c.h.b16 %v518
        %v848 = vunpack.c.l.b16 %v519
        %v849 = vunpack.c.h.b16 %v519
        %v850 = vunpack.c.l.b16 %v520
        %v851 = vunpack.c.h.b16 %v520
        %v852 = vunpack.c.l.b16 %v521
        %v853 = vunpack.c.h.b16 %v521
        %v854 = vunpack.c.l.b16 %v522
        %v855 = vunpack.c.h.b16 %v522
        %v856 = vunpack.c.l.b16 %v523
        %v857 = vunpack.c.h.b16 %v523
        %v858 = vunpack.c.l.b16 %v524
        %v859 = vunpack.c.h.b16 %v524
        %v860 = vunpack.c.l.b16 %v525
        %v861 = vunpack.c.h.b16 %v525
        %v862 = vunpack.c.l.b16 %v526
        %v863 = vunpack.c.h.b16 %v526
        %v864 = vunpack.c.l.b16 %v527
        %v865 = vunpack.c.h.b16 %v527
        %v866 = vunpack.c.l.b16 %v528
        %v867 = vunpack.c.h.b16 %v528
        %v868 = vunpack.c.l.b16 %v529
        %v869 = vunpack.c.h.b16 %v529
        %v870 = vunpack.c.l.b16 %v530
        %v871 = vunpack.c.h.b16 %v530
        %v872 = vunpack.c.l.b16 %v531
        %v873 = vunpack.c.h.b16 %v531
        %v874 = vunpack.c.l.b16 %v532
        %v875 = vunpack.c.h.b16 %v532
        %v876 = vunpack.c.l.b16 %v533
        %v877 = vunpack.c.h.b16 %v533
        %v878 = vunpack.c.l.b16 %v534
        %v879 = vunpack.c.h.b16 %v534
        %v880 = vunpack.c.l.b16 %v535
        %v881 = vunpack.c.h.b16 %v535
        %v882 = vunpack.c.l.b16 %v536
        %v883 = vunpack.c.h.b16 %v536
        %v884 = vunpack.c.l.b16 %v537
        %v885 = vunpack.c.h.b16 %v537
        %v886 = vunpack.c.l.b16 %v538
        %v887 = vunpack.c.h.b16 %v538
        %v888 = vunpack.c.l.b16 %v539
        %v889 = vunpack.c.h.b16 %v539
        %v890 = vunpack.c.l.b16 %v540
        %v891 = vunpack.c.h.b16 %v540
        %v892 = vunpack.c.l.b16 %v541
        %v893 = vunpack.c.h.b16 %v541
        %v894 = vunpack.c.l.b16 %v542
        %v895 = vunpack.c.h.b16 %v542
        %v896 = vunpack.c.l.b16 %v543
        %v897 = vunpack.c.h.b16 %v543
        %v898 = vunpack.c.l.b16 %v544
        %v899 = vunpack.c.h.b16 %v544
        %v900 = vunpack.c.l.b16 %v545
        %v901 = vunpack.c.h.b16 %v545
        %v902 = vunpack.c.l.b16 %v546
        %v903 = vunpack.c.h.b16 %v546
        %v904 = vunpack.c.l.b16 %v547
        %v905 = vunpack.c.h.b16 %v547
        %v906 = vunpack.c.l.b16 %v548
        %v907 = vunpack.c.h.b16 %v548
        %v908 = vunpack.c.l.b16 %v549
        %v909 = vunpack.c.h.b16 %v549
        %v910 = vunpack.c.l.b16 %v550
        %v911 = vunpack.c.h.b16 %v550
        %v912 = vunpack.c.l.b16 %v551
        %v913 = vunpack.c.h.b16 %v551
        %v914 = vunpack.c.l.b16 %v552
        %v915 = vunpack.c.h.b16 %v552
        %v916 = vunpack.c.l.b16 %v553
        %v917 = vunpack.c.h.b16 %v553
        %v918 = vunpack.c.l.b16 %v554
        %v919 = vunpack.c.h.b16 %v554
        %v920 = vunpack.c.l.b16 %v555
        %v921 = vunpack.c.h.b16 %v555
        %v922 = vunpack.c.l.b16 %v556
        %v923 = vunpack.c.h.b16 %v556
        %v924 = vunpack.c.l.b16 %v557
        %v925 = vunpack.c.h.b16 %v557
        %v926 = vunpack.c.l.b16 %v558
        %v927 = vunpack.c.h.b16 %v558
        %v928 = vunpack.c.l.b16 %v559
        %v929 = vunpack.c.h.b16 %v559
        %v930 = vunpack.c.l.b16 %v560
        %v931 = vunpack.c.h.b16 %v560
        %v932 = vunpack.c.l.b16 %v561
        %v933 = vunpack.c.h.b16 %v561
        %v934 = vunpack.c.l.b16 %v562
        %v935 = vunpack.c.h.b16 %v562
        %v936 = vunpack.c.l.b16 %v563
        %v937 = vunpack.c.h.b16 %v563
        %v938 = vunpack.c.l.b16 %v564
        %v939 = vunpack.c.h.b16 %v564
        %v940 = vunpack.c.l.b16 %v565
        %v941 = vunpack.c.h.b16 %v565
        %v942 = vunpack.c.l.b16 %v566
        %v943 = vunpack.c.h.b16 %v566
        %v944 = vunpack.c.l.b16 %v567
        %v945 = vunpack.c.h.b16 %v567
        %v946 = vunpack.c.l.b16 %v568
        %v947 = vunpack.c.h.b16 %v568
        %v948 = vunpack.c.l.b16 %v569
        %v949 = vunpack.c.h.b16 %v569
        %v950 = vunpack.c.l.b16 %v570
        %v951 = vunpack.c.h.b16 %v570
        %v952 = vunpack.c.l.b16 %v571
        %v953 = vunpack.c.h.b16 %v571
        %v954 = vunpack.c.l.b16 %v572
        %v955 = vunpack.c.h.b16 %v572
        %v956 = vunpack.c.l.b16 %v573
        %v957 = vunpack.c.h.b16 %v573
        %v958 = vunpack.c.l.b16 %v574
        %v959 = vunpack.c.h.b16 %v574
        %v960 = vunpack.c.l.b16 %v575
        %v961 = vunpack.c.h.b16 %v575
        %v962 = vunpack.c.l.b16 %v576
        %v963 = vunpack.c.h.b16 %v576
        %v964 = vunpack.c.l.b16 %v577
        %v965 = vunpack.c.h.b16 %v577
        %v966 = vunpack.c.l.b16 %v578
        %v967 = vunpack.c.h.b16 %v578
        %v968 = vunpack.c.l.b16 %v579
        %v969 = vunpack.c.h.b16 %v579
        %v970 = vunpack.c.l.b16 %v580
        %v971 = vunpack.c.h.b16 %v580
        %v972 = vunpack.c.l.b16 %v581
        %v973 = vunpack.c.h.b16 %v581
        %v974 = vunpack.c.l.b16 %v582
        %v975 = vunpack.c.h.b16 %v582
        %v976 = vunpack.c.l.b16 %v583
        %v977 = vunpack.c.h.b16 %v583
        %v978 = vunpack.c.l.b16 %v584
        %v979 = vunpack.c.h.b16 %v584
        %v980 = vunpack.c.l.b16 %v585
        %v981 = vunpack.c.h.b16 %v585
        %v982 = vunpack.c.l.b16 %v586
        %v983 = vunpack.c.h.b16 %v586
        %v984 = vunpack.c.l.b16 %v587
        %v985 = vunpack.c.h.b16 %v587
        %v986 = vunpack.c.l.b16 %v588
        %v987 = vunpack.c.h.b16 %v588
        %v988 = vunpack.c.l.b16 %v589
        %v989 = vunpack.c.h.b16 %v589
        %v990 = vunpack.c.l.b16 %v590
        %v991 = vunpack.c.h.b16 %v590
        %v992 = vunpack.c.l.b16 %v591
        %v993 = vunpack.c.h.b16 %v591
        %v994 = vunpack.c.l.b16 %v592
        %v995 = vunpack.c.h.b16 %v592
        %v996 = vunpack.c.l.b16 %v593
        %v997 = vunpack.c.h.b16 %v593
        %v998 = vunpack.c.l.b16 %v594
        %v999 = vunpack.c.h.b16 %v594
        %v1000 = vunpack.c.l.b16 %v595
        %v1001 = vunpack.c.h.b16 %v595
        %v1002 = vunpack.c.l.b16 %v596
        %v1003 = vunpack.c.h.b16 %v596
        %v1004 = vunpack.c.l.b16 %v597
        %v1005 = vunpack.c.h.b16 %v597
        %v1006 = vunpack.c.l.b16 %v598
        %v1007 = vunpack.c.h.b16 %v598
        %v1008 = vunpack.c.l.b16 %v599
        %v1009 = vunpack.c.h.b16 %v599
        %v1010 = vunpack.c.l.b16 %v600
        %v1011 = vunpack.c.h.b16 %v600
        %v1012 = vunpack.c.l.b16 %v601
        %v1013 = vunpack.c.h.b16 %v601
        %v1014 = vunpack.c.l.b16 %v602
        %v1015 = vunpack.c.h.b16 %v602
        %v1016 = vunpack.c.l.b16 %v603
        %v1017 = vunpack.c.h.b16 %v603
        %v1018 = vunpack.c.l.b16 %v604
        %v1019 = vunpack.c.h.b16 %v604
        %v1020 = vunpack.c.l.b16 %v605
        %v1021 = vunpack.c.h.b16 %v605
        %v1022 = vunpack.c.l.b16 %v606
        %v1023 = vunpack.c.h.b16 %v606
        %v1024 = vunpack.c.l.b16 %v607
        %v1025 = vunpack.c.h.b16 %v607
        %v1026 = vunpack.c.l.b16 %v608
        %v1027 = vunpack.c.h.b16 %v608
        %v1028 = vunpack.c.l.b16 %v609
        %v1029 = vunpack.c.h.b16 %v609
        %v1030 = vunpack.c.l.b16 %v610
        %v1031 = vunpack.c.h.b16 %v610
        %v1032 = vunpack.c.l.b16 %v611
        %v1033 = vunpack.c.h.b16 %v611
        %v1034 = vunpack.c.l.b16 %v612
        %v1035 = vunpack.c.h.b16 %v612
        %v1036 = vunpack.c.l.b16 %v613
        %v1037 = vunpack.c.h.b16 %v613
        %v1038 = vunpack.c.l.b16 %v614
        %v1039 = vunpack.c.h.b16 %v614
        %v1040 = vunpack.c.l.b16 %v615
        %v1041 = vunpack.c.h.b16 %v615
        %v1042 = vunpack.c.l.b16 %v616
        %v1043 = vunpack.c.h.b16 %v616
        %v1044 = vunpack.c.l.b16 %v617
        %v1045 = vunpack.c.h.b16 %v617
        %v1046 = vunpack.c.l.b16 %v618
        %v1047 = vunpack.c.h.b16 %v618
        %v1048 = vunpack.c.l.b16 %v619
        %v1049 = vunpack.c.h.b16 %v619
        %v1050 = vunpack.c.l.b16 %v620
        %v1051 = vunpack.c.h.b16 %v620
        %v1052 = vunpack.c.l.b16 %v621
        %v1053 = vunpack.c.h.b16 %v621
        %v1054 = vunpack.c.l.b16 %v622
        %v1055 = vunpack.c.h.b16 %v622
        %v1056 = vunpack.c.l.b16 %v623
        %v1057 = vunpack.c.h.b16 %v623
        %v1058 = vunpack.c.l.b16 %v624
        %v1059 = vunpack.c.h.b16 %v624
        %v1060 = vunpack.c.l.b16 %v625
        %v1061 = vunpack.c.h.b16 %v625
        %v1062 = vunpack.c.l.b16 %v626
        %v1063 = vunpack.c.h.b16 %v626
        %v1064 = vunpack.c.l.b16 %v627
        %v1065 = vunpack.c.h.b16 %v627
        %v1066 = vunpack.c.l.b16 %v628
        %v1067 = vunpack.c.h.b16 %v628
        %v1068 = vunpack.c.l.b16 %v629
        %v1069 = vunpack.c.h.b16 %v629
        %v1070 = vunpack.c.l.b16 %v630
        %v1071 = vunpack.c.h.b16 %v630
        %v1072 = vunpack.c.l.b16 %v631
        %v1073 = vunpack.c.h.b16 %v631
        %v1074 = vunpack.c.l.b16 %v632
        %v1075 = vunpack.c.h.b16 %v632
        %v1076 = vunpack.c.l.b16 %v633
        %v1077 = vunpack.c.h.b16 %v633
        %v1078 = vunpack.c.l.b16 %v634
        %v1079 = vunpack.c.h.b16 %v634
        %v1080 = vunpack.c.l.b16 %v635
        %v1081 = vunpack.c.h.b16 %v635
        %v1082 = vpack.c.b16 %v830, %v826
        %v1083 = vpack.c.b16 %v831, %v827
        %v1084 = vpack.c.b16 %v832, %v828
        %v1085 = vpack.c.b16 %v833, %v829
        %v1086 = vpack.c.b16 %v838, %v834
        %v1087 = vpack.c.b16 %v839, %v835
        %v1088 = vpack.c.b16 %v840, %v836
        %v1089 = vpack.c.b16 %v841, %v837
        %v1090 = vpack.c.b16 %v846, %v842
        %v1091 = vpack.c.b16 %v847, %v843
        %v1092 = vpack.c.b16 %v848, %v844
        %v1093 = vpack.c.b16 %v849, %v845
        %v1094 = vpack.c.b16 %v854, %v850
        %v1095 = vpack.c.b16 %v855, %v851
        %v1096 = vpack.c.b16 %v856, %v852
        %v1097 = vpack.c.b16 %v857, %v853
        %v1098 = vpack.c.b16 %v862, %v858
        %v1099 = vpack.c.b16 %v863, %v859
        %v1100 = vpack.c.b16 %v864, %v860
        %v1101 = vpack.c.b16 %v865, %v861
        %v1102 = vpack.c.b16 %v870, %v866
        %v1103 = vpack.c.b16 %v871, %v867
        %v1104 = vpack.c.b16 %v872, %v868
        %v1105 = vpack.c.b16 %v873, %v869
        %v1106 = vpack.c.b16 %v878, %v874
        %v1107 = vpack.c.b16 %v879, %v875
        %v1108 = vpack.c.b16 %v880, %v876
        %v1109 = vpack.c.b16 %v881, %v877
        %v1110 = vpack.c.b16 %v886, %v882
        %v1111 = vpack.c.b16 %v887, %v883
        %v1112 = vpack.c.b16 %v888, %v884
        %v1113 = vpack.c.b16 %v889, %v885
        %v1114 = vpack.c.b16 %v894, %v890
        %v1115 = vpack.c.b16 %v895, %v891
        %v1116 = vpack.c.b16 %v896, %v892
        %v1117 = vpack.c.b16 %v897, %v893
        %v1118 = vpack.c.b16 %v902, %v898
        %v1119 = vpack.c.b16 %v903, %v899
        %v1120 = vpack.c.b16 %v904, %v900
        %v1121 = vpack.c.b16 %v905, %v901
        %v1122 = vpack.c.b16 %v910, %v906
        %v1123 = vpack.c.b16 %v911, %v907
        %v1124 = vpack.c.b16 %v912, %v908
        %v1125 = vpack.c.b16 %v913, %v909
        %v1126 = vpack.c.b16 %v918, %v914
        %v1127 = vpack.c.b16 %v919, %v915
        %v1128 = vpack.c.b16 %v920, %v916
        %v1129 = vpack.c.b16 %v921, %v917
        %v1130 = vpack.c.b16 %v926, %v922
        %v1131 = vpack.c.b16 %v927, %v923
        %v1132 = vpack.c.b16 %v928, %v924
        %v1133 = vpack.c.b16 %v929, %v925
        %v1134 = vpack.c.b16 %v934, %v930
        %v1135 = vpack.c.b16 %v935, %v931
        %v1136 = vpack.c.b16 %v936, %v932
        %v1137 = vpack.c.b16 %v937, %v933
        %v1138 = vpack.c.b16 %v942, %v938
        %v1139 = vpack.c.b16 %v943, %v939
        %v1140 = vpack.c.b16 %v944, %v940
        %v1141 = vpack.c.b16 %v945, %v941
        %v1142 = vpack.c.b16 %v950, %v946
        %v1143 = vpack.c.b16 %v951, %v947
        %v1144 = vpack.c.b16 %v952, %v948
        %v1145 = vpack.c.b16 %v953, %v949
        %v1146 = vpack.c.b16 %v958, %v954
        %v1147 = vpack.c.b16 %v959, %v955
        %v1148 = vpack.c.b16 %v960, %v956
        %v1149 = vpack.c.b16 %v961, %v957
        %v1150 = vpack.c.b16 %v966, %v962
        %v1151 = vpack.c.b16 %v967, %v963
        %v1152 = vpack.c.b16 %v968, %v964
        %v1153 = vpack.c.b16 %v969, %v965
        %v1154 = vpack.c.b16 %v974, %v970
        %v1155 = vpack.c.b16 %v975, %v971
        %v1156 = vpack.c.b16 %v976, %v972
        %v1157 = vpack.c.b16 %v977, %v973
        %v1158 = vpack.c.b16 %v982, %v978
        %v1159 = vpack.c.b16 %v983, %v979
        %v1160 = vpack.c.b16 %v984, %v980
        %v1161 = vpack.c.b16 %v985, %v981
        %v1162 = vpack.c.b16 %v990, %v986
        %v1163 = vpack.c.b16 %v991, %v987
        %v1164 = vpack.c.b16 %v992, %v988
        %v1165 = vpack.c.b16 %v993, %v989
        %v1166 = vpack.c.b16 %v998, %v994
        %v1167 = vpack.c.b16 %v999, %v995
        %v1168 = vpack.c.b16 %v1000, %v996
        %v1169 = vpack.c.b16 %v1001, %v997
        %v1170 = vpack.c.b16 %v1006, %v1002
        %v1171 = vpack.c.b16 %v1007, %v1003
        %v1172 = vpack.c.b16 %v1008, %v1004
        %v1173 = vpack.c.b16 %v1009, %v1005
        %v1174 = vpack.c.b16 %v1014, %v1010
        %v1175 = vpack.c.b16 %v1015, %v1011
        %v1176 = vpack.c.b16 %v1016, %v1012
        %v1177 = vpack.c.b16 %v1017, %v1013
        %v1178 = vpack.c.b16 %v1022, %v1018
        %v1179 = vpack.c.b16 %v1023, %v1019
        %v1180 = vpack.c.b16 %v1024, %v1020
        %v1181 = vpack.c.b16 %v1025, %v1021
        %v1182 = vpack.c.b16 %v1030, %v1026
        %v1183 = vpack.c.b16 %v1031, %v1027
        %v1184 = vpack.c.b16 %v1032, %v1028
        %v1185 = vpack.c.b16 %v1033, %v1029
        %v1186 = vpack.c.b16 %v1038, %v1034
        %v1187 = vpack.c.b16 %v1039, %v1035
        %v1188 = vpack.c.b16 %v1040, %v1036
        %v1189 = vpack.c.b16 %v1041, %v1037
        %v1190 = vpack.c.b16 %v1046, %v1042
        %v1191 = vpack.c.b16 %v1047, %v1043
        %v1192 = vpack.c.b16 %v1048, %v1044
        %v1193 = vpack.c.b16 %v1049, %v1045
        %v1194 = vpack.c.b16 %v1054, %v1050
        %v1195 = vpack.c.b16 %v1055, %v1051
        %v1196 = vpack.c.b16 %v1056, %v1052
        %v1197 = vpack.c.b16 %v1057, %v1053
        %v1198 = vpack.c.b16 %v1062, %v1058
        %v1199 = vpack.c.b16 %v1063, %v1059
        %v1200 = vpack.c.b16 %v1064, %v1060
        %v1201 = vpack.c.b16 %v1065, %v1061
        %v1202 = vpack.c.b16 %v1070, %v1066
        %v1203 = vpack.c.b16 %v1071, %v1067
        %v1204 = vpack.c.b16 %v1072, %v1068
        %v1205 = vpack.c.b16 %v1073, %v1069
        %v1206 = vpack.c.b16 %v1078, %v1074
        %v1207 = vpack.c.b16 %v1079, %v1075
        %v1208 = vpack.c.b16 %v1080, %v1076
        %v1209 = vpack.c.b16 %v1081, %v1077
        %1338 = vmatprep.subr.bf16.mxu0 %v1083
        %1339 = vmatpush1.bf16.msra.mxu0 %v1082
        %1340 = vmatprep.subr.bf16.mxu0 %v1087
        %1341 = vmatpush1.bf16.msra.mxu0 %v1086
        %1342 = vmatprep.subr.bf16.mxu0 %v1091
        %1343 = vmatpush1.bf16.msra.mxu0 %v1090
        %1344 = vmatprep.subr.bf16.mxu0 %v1095
        %1345 = vmatpush1.bf16.msra.mxu0 %v1094
        %1346 = vmatprep.subr.bf16.mxu0 %v1099
        %1347 = vmatpush1.bf16.msra.mxu0 %v1098
        %1348 = vmatprep.subr.bf16.mxu0 %v1103
        %1349 = vmatpush1.bf16.msra.mxu0 %v1102
        %1350 = vmatprep.subr.bf16.mxu0 %v1107
        %1351 = vmatpush1.bf16.msra.mxu0 %v1106
        %1352 = vmatprep.subr.bf16.mxu0 %v1111
        %1353 = vmatpush1.bf16.msra.mxu0 %v1110
        %1354 = vmatprep.subr.bf16.mxu0 %v1115
        %1355 = vmatpush1.bf16.msra.mxu0 %v1114
        %1356 = vmatprep.subr.bf16.mxu0 %v1119
        %1357 = vmatpush1.bf16.msra.mxu0 %v1118
        %1358 = vmatprep.subr.bf16.mxu0 %v1123
        %1359 = vmatpush1.bf16.msra.mxu0 %v1122
        %1360 = vmatprep.subr.bf16.mxu0 %v1127
        %1361 = vmatpush1.bf16.msra.mxu0 %v1126
        %1362 = vmatprep.subr.bf16.mxu0 %v1131
        %1363 = vmatpush1.bf16.msra.mxu0 %v1130
        %1364 = vmatprep.subr.bf16.mxu0 %v1135
        %1365 = vmatpush1.bf16.msra.mxu0 %v1134
        %1366 = vmatprep.subr.bf16.mxu0 %v1139
        %1367 = vmatpush1.bf16.msra.mxu0 %v1138
        %1368 = vmatprep.subr.bf16.mxu0 %v1143
        %1369 = vmatpush1.bf16.msra.mxu0 %v1142
        %1370 = vmatprep.mubr.bf16.mxu0 %v683
        %1371 = vmatmul.mubr.bf16.gmra.mrb[0].mxu0 %v682
        %v1372 = vpop.f32.mrb[0].mxu0
        %v1373 = vadd.f32 %v641, %v1372
        %v1374 = vpop.f32.mrb[0].mxu0
        %v1375 = vadd.f32 %v645, %v1374
        %v1376 = vpop.f32.mrb[0].mxu0
        %v1377 = vadd.f32 %v641, %v1376
        %v1378 = vpop.f32.mrb[0].mxu0
        %v1379 = vadd.f32 %v645, %v1378
        %1380 = vmatprep.mubr.bf16.mxu0 %v687
        %1381 = vmatmul.mubr.bf16.gmra.mrb[0].mxu0 %v686
        %v1382 = vpop.f32.mrb[0].mxu0
        %v1383 = vadd.f32 %v641, %v1382
        %v1384 = vpop.f32.mrb[0].mxu0
        %v1385 = vadd.f32 %v645, %v1384
        %v1386 = vpop.f32.mrb[0].mxu0
        %v1387 = vadd.f32 %v641, %v1386
        %v1388 = vpop.f32.mrb[0].mxu0
        %v1389 = vadd.f32 %v645, %v1388
        %1390 = vdwg.mxu0
        %1391 = vmatprep.subr.bf16.mxu0 %v1147
        %1392 = vmatpush1.bf16.msra.mxu0 %v1146
        %1393 = vmatprep.subr.bf16.mxu0 %v1151
        %1394 = vmatpush1.bf16.msra.mxu0 %v1150
        %1395 = vmatprep.subr.bf16.mxu0 %v1155
        %1396 = vmatpush1.bf16.msra.mxu0 %v1154
        %1397 = vmatprep.subr.bf16.mxu0 %v1159
        %1398 = vmatpush1.bf16.msra.mxu0 %v1158
        %1399 = vmatprep.subr.bf16.mxu0 %v1163
        %1400 = vmatpush1.bf16.msra.mxu0 %v1162
        %1401 = vmatprep.subr.bf16.mxu0 %v1167
        %1402 = vmatpush1.bf16.msra.mxu0 %v1166
        %1403 = vmatprep.subr.bf16.mxu0 %v1171
        %1404 = vmatpush1.bf16.msra.mxu0 %v1170
        %1405 = vmatprep.subr.bf16.mxu0 %v1175
        %1406 = vmatpush1.bf16.msra.mxu0 %v1174
        %1407 = vmatprep.subr.bf16.mxu0 %v1179
        %1408 = vmatpush1.bf16.msra.mxu0 %v1178
        %1409 = vmatprep.subr.bf16.mxu0 %v1183
        %1410 = vmatpush1.bf16.msra.mxu0 %v1182
        %1411 = vmatprep.subr.bf16.mxu0 %v1187
        %1412 = vmatpush1.bf16.msra.mxu0 %v1186
        %1413 = vmatprep.subr.bf16.mxu0 %v1191
        %1414 = vmatpush1.bf16.msra.mxu0 %v1190
        %1415 = vmatprep.subr.bf16.mxu0 %v1195
        %1416 = vmatpush1.bf16.msra.mxu0 %v1194
        %1417 = vmatprep.subr.bf16.mxu0 %v1199
        %1418 = vmatpush1.bf16.msra.mxu0 %v1198
        %1419 = vmatprep.subr.bf16.mxu0 %v1203
        %1420 = vmatpush1.bf16.msra.mxu0 %v1202
        %1421 = vmatprep.subr.bf16.mxu0 %v1207
        %1422 = vmatpush1.bf16.msra.mxu0 %v1206
        %1423 = vmatprep.mubr.bf16.mxu0 %v685
        %1424 = vmatmul.mubr.bf16.gmra.mrb[0].mxu0 %v684
        %v1425 = vpop.f32.mrb[0].mxu0
        %v1426 = vadd.f32 %v1373, %v1425
        %v1427 = vpop.f32.mrb[0].mxu0
        %v1428 = vadd.f32 %v1375, %v1427
        %v1429 = vpop.f32.mrb[0].mxu0
        %v1430 = vadd.f32 %v1377, %v1429
        %v1431 = vpop.f32.mrb[0].mxu0
        %v1432 = vadd.f32 %v1379, %v1431
        %1433 = vmatprep.mubr.bf16.mxu0 %v689
        %1434 = vmatmul.mubr.bf16.gmra.mrb[0].mxu0 %v688
        %v1435 = vpop.f32.mrb[0].mxu0
        %v1436 = vadd.f32 %v1383, %v1435
        %v1437 = vpop.f32.mrb[0].mxu0
        %v1438 = vadd.f32 %v1385, %v1437
        %v1439 = vpop.f32.mrb[0].mxu0
        %v1440 = vadd.f32 %v1387, %v1439
        %v1441 = vpop.f32.mrb[0].mxu0
        %v1442 = vadd.f32 %v1389, %v1441
        %1443 = vdwg.mxu0
        %1444 = vmatprep.subr.bf16.mxu0 %v1085
        %1445 = vmatpush1.bf16.msra.mxu0 %v1084
        %1446 = vmatprep.subr.bf16.mxu0 %v1089
        %1447 = vmatpush1.bf16.msra.mxu0 %v1088
        %1448 = vmatprep.subr.bf16.mxu0 %v1093
        %1449 = vmatpush1.bf16.msra.mxu0 %v1092
        %1450 = vmatprep.subr.bf16.mxu0 %v1097
        %1451 = vmatpush1.bf16.msra.mxu0 %v1096
        %1452 = vmatprep.subr.bf16.mxu0 %v1101
        %1453 = vmatpush1.bf16.msra.mxu0 %v1100
        %1454 = vmatprep.subr.bf16.mxu0 %v1105
        %1455 = vmatpush1.bf16.msra.mxu0 %v1104
        %1456 = vmatprep.subr.bf16.mxu0 %v1109
        %1457 = vmatpush1.bf16.msra.mxu0 %v1108
        %1458 = vmatprep.subr.bf16.mxu0 %v1113
        %1459 = vmatpush1.bf16.msra.mxu0 %v1112
        %1460 = vmatprep.subr.bf16.mxu0 %v1117
        %1461 = vmatpush1.bf16.msra.mxu0 %v1116
        %1462 = vmatprep.subr.bf16.mxu0 %v1121
        %1463 = vmatpush1.bf16.msra.mxu0 %v1120
        %1464 = vmatprep.subr.bf16.mxu0 %v1125
        %1465 = vmatpush1.bf16.msra.mxu0 %v1124
        %1466 = vmatprep.subr.bf16.mxu0 %v1129
        %1467 = vmatpush1.bf16.msra.mxu0 %v1128
        %1468 = vmatprep.subr.bf16.mxu0 %v1133
        %1469 = vmatpush1.bf16.msra.mxu0 %v1132
        %1470 = vmatprep.subr.bf16.mxu0 %v1137
        %1471 = vmatpush1.bf16.msra.mxu0 %v1136
        %1472 = vmatprep.subr.bf16.mxu0 %v1141
        %1473 = vmatpush1.bf16.msra.mxu0 %v1140
        %1474 = vmatprep.subr.bf16.mxu0 %v1145
        %1475 = vmatpush1.bf16.msra.mxu0 %v1144
        %1476 = vmatprep.mubr.bf16.mxu0 %v683
        %1477 = vmatmul.mubr.bf16.gmra.mrb[0].mxu0 %v682
        %v1478 = vpop.f32.mrb[0].mxu0
        %v1479 = vadd.f32 %v649, %v1478
        %v1480 = vpop.f32.mrb[0].mxu0
        %v1481 = vadd.f32 %v653, %v1480
        %v1482 = vpop.f32.mrb[0].mxu0
        %v1483 = vadd.f32 %v649, %v1482
        %v1484 = vpop.f32.mrb[0].mxu0
        %v1485 = vadd.f32 %v653, %v1484
        %1486 = vmatprep.mubr.bf16.mxu0 %v687
        %1487 = vmatmul.mubr.bf16.gmra.mrb[0].mxu0 %v686
        %v1488 = vpop.f32.mrb[0].mxu0
        %v1489 = vadd.f32 %v649, %v1488
        %v1490 = vpop.f32.mrb[0].mxu0
        %v1491 = vadd.f32 %v653, %v1490
        %v1492 = vpop.f32.mrb[0].mxu0
        %v1493 = vadd.f32 %v649, %v1492
        %v1494 = vpop.f32.mrb[0].mxu0
        %v1495 = vadd.f32 %v653, %v1494
        %1496 = vdwg.mxu0
        %1497 = vmatprep.subr.bf16.mxu0 %v1149
        %1498 = vmatpush1.bf16.msra.mxu0 %v1148
        %1499 = vmatprep.subr.bf16.mxu0 %v1153
        %1500 = vmatpush1.bf16.msra.mxu0 %v1152
        %1501 = vmatprep.subr.bf16.mxu0 %v1157
        %1502 = vmatpush1.bf16.msra.mxu0 %v1156
        %1503 = vmatprep.subr.bf16.mxu0 %v1161
        %1504 = vmatpush1.bf16.msra.mxu0 %v1160
        %1505 = vmatprep.subr.bf16.mxu0 %v1165
        %1506 = vmatpush1.bf16.msra.mxu0 %v1164
        %1507 = vmatprep.subr.bf16.mxu0 %v1169
        %1508 = vmatpush1.bf16.msra.mxu0 %v1168
        %1509 = vmatprep.subr.bf16.mxu0 %v1173
        %1510 = vmatpush1.bf16.msra.mxu0 %v1172
        %1511 = vmatprep.subr.bf16.mxu0 %v1177
        %1512 = vmatpush1.bf16.msra.mxu0 %v1176
        %1513 = vmatprep.subr.bf16.mxu0 %v1181
        %1514 = vmatpush1.bf16.msra.mxu0 %v1180
        %1515 = vmatprep.subr.bf16.mxu0 %v1185
        %1516 = vmatpush1.bf16.msra.mxu0 %v1184
        %1517 = vmatprep.subr.bf16.mxu0 %v1189
        %1518 = vmatpush1.bf16.msra.mxu0 %v1188
        %1519 = vmatprep.subr.bf16.mxu0 %v1193
        %1520 = vmatpush1.bf16.msra.mxu0 %v1192
        %1521 = vmatprep.subr.bf16.mxu0 %v1197
        %1522 = vmatpush1.bf16.msra.mxu0 %v1196
        %1523 = vmatprep.subr.bf16.mxu0 %v1201
        %1524 = vmatpush1.bf16.msra.mxu0 %v1200
        %1525 = vmatprep.subr.bf16.mxu0 %v1205
        %1526 = vmatpush1.bf16.msra.mxu0 %v1204
        %1527 = vmatprep.subr.bf16.mxu0 %v1209
        %1528 = vmatpush1.bf16.msra.mxu0 %v1208
        %1529 = vmatprep.mubr.bf16.mxu0 %v685
        %1530 = vmatmul.mubr.bf16.gmra.mrb[0].mxu0 %v684
        %v1531 = vpop.f32.mrb[0].mxu0
        %v1532 = vadd.f32 %v1479, %v1531
        %v1533 = vpop.f32.mrb[0].mxu0
        %v1534 = vadd.f32 %v1481, %v1533
        %v1535 = vpop.f32.mrb[0].mxu0
        %v1536 = vadd.f32 %v1483, %v1535
        %v1537 = vpop.f32.mrb[0].mxu0
        %v1538 = vadd.f32 %v1485, %v1537
        %1539 = vmatprep.mubr.bf16.mxu0 %v689
        %1540 = vmatmul.mubr.bf16.gmra.mrb[0].mxu0 %v688
        %v1541 = vpop.f32.mrb[0].mxu0
        %v1542 = vadd.f32 %v1489, %v1541
        %v1543 = vpop.f32.mrb[0].mxu0
        %v1544 = vadd.f32 %v1491, %v1543
        %v1545 = vpop.f32.mrb[0].mxu0
        %v1546 = vadd.f32 %v1493, %v1545
        %v1547 = vpop.f32.mrb[0].mxu0
        %v1548 = vadd.f32 %v1495, %v1547
        %1549 = vdwg.mxu0
        %v1550 = vmul.f32 %v1426, 0.5
        %v1551 = vmul.f32 %v1428, 0.5
        %v1552 = vmul.f32 %v1532, 0.5
        %v1553 = vmul.f32 %v1534, 0.5
        %v1554 = vmul.f32 %v1430, 0.5
        %v1555 = vmul.f32 %v1432, 0.5
        %v1556 = vmul.f32 %v1536, 0.5
        %v1557 = vmul.f32 %v1538, 0.5
        %v1558 = vmul.f32 %v1436, 0.5
        %v1559 = vmul.f32 %v1438, 0.5
        %v1560 = vmul.f32 %v1542, 0.5
        %v1561 = vmul.f32 %v1544, 0.5
        %v1562 = vmul.f32 %v1440, 0.5
        %v1563 = vmul.f32 %v1442, 0.5
        %v1564 = vmul.f32 %v1546, 0.5
        %v1565 = vmul.f32 %v1548, 0.5
        %v1566 = vmul.f32 %v1426, 0.044715
        %v1567 = vmul.f32 %v1428, 0.044715
        %v1568 = vmul.f32 %v1532, 0.044715
        %v1569 = vmul.f32 %v1534, 0.044715
        %v1570 = vmul.f32 %v1430, 0.044715
        %v1571 = vmul.f32 %v1432, 0.044715
        %v1572 = vmul.f32 %v1536, 0.044715
        %v1573 = vmul.f32 %v1538, 0.044715
        %v1574 = vmul.f32 %v1436, 0.044715
        %v1575 = vmul.f32 %v1438, 0.044715
        %v1576 = vmul.f32 %v1542, 0.044715
        %v1577 = vmul.f32 %v1544, 0.044715
        %v1578 = vmul.f32 %v1440, 0.044715
        %v1579 = vmul.f32 %v1442, 0.044715
        %v1580 = vmul.f32 %v1546, 0.044715
        %v1581 = vmul.f32 %v1548, 0.044715
        %v1582 = vmul.f32 %v1566, %v1426
        %v1583 = vmul.f32 %v1567, %v1428
        %v1584 = vmul.f32 %v1568, %v1532
        %v1585 = vmul.f32 %v1569, %v1534
        %v1586 = vmul.f32 %v1570, %v1430
        %v1587 = vmul.f32 %v1571, %v1432
        %v1588 = vmul.f32 %v1572, %v1536
        %v1589 = vmul.f32 %v1573, %v1538
        %v1590 = vmul.f32 %v1574, %v1436
        %v1591 = vmul.f32 %v1575, %v1438
        %v1592 = vmul.f32 %v1576, %v1542
        %v1593 = vmul.f32 %v1577, %v1544
        %v1594 = vmul.f32 %v1578, %v1440
        %v1595 = vmul.f32 %v1579, %v1442
        %v1596 = vmul.f32 %v1580, %v1546
        %v1597 = vmul.f32 %v1581, %v1548
        %v1598 = vmul.f32 %v1582, %v1426
        %v1599 = vmul.f32 %v1583, %v1428
        %v1600 = vmul.f32 %v1584, %v1532
        %v1601 = vmul.f32 %v1585, %v1534
        %v1602 = vmul.f32 %v1586, %v1430
        %v1603 = vmul.f32 %v1587, %v1432
        %v1604 = vmul.f32 %v1588, %v1536
        %v1605 = vmul.f32 %v1589, %v1538
        %v1606 = vmul.f32 %v1590, %v1436
        %v1607 = vmul.f32 %v1591, %v1438
        %v1608 = vmul.f32 %v1592, %v1542
        %v1609 = vmul.f32 %v1593, %v1544
        %v1610 = vmul.f32 %v1594, %v1440
        %v1611 = vmul.f32 %v1595, %v1442
        %v1612 = vmul.f32 %v1596, %v1546
        %v1613 = vmul.f32 %v1597, %v1548
        %v1614 = vadd.f32 %v1426, %v1598
        %v1615 = vadd.f32 %v1428, %v1599
        %v1616 = vadd.f32 %v1532, %v1600
        %v1617 = vadd.f32 %v1534, %v1601
        %v1618 = vadd.f32 %v1430, %v1602
        %v1619 = vadd.f32 %v1432, %v1603
        %v1620 = vadd.f32 %v1536, %v1604
        %v1621 = vadd.f32 %v1538, %v1605
        %v1622 = vadd.f32 %v1436, %v1606
        %v1623 = vadd.f32 %v1438, %v1607
        %v1624 = vadd.f32 %v1542, %v1608
        %v1625 = vadd.f32 %v1544, %v1609
        %v1626 = vadd.f32 %v1440, %v1610
        %v1627 = vadd.f32 %v1442, %v1611
        %v1628 = vadd.f32 %v1546, %v1612
        %v1629 = vadd.f32 %v1548, %v1613
        %v1630 = vmul.f32 %v1614, 0.7978846
        %v1631 = vmul.f32 %v1615, 0.7978846
        %v1632 = vmul.f32 %v1616, 0.7978846
        %v1633 = vmul.f32 %v1617, 0.7978846
        %v1634 = vmul.f32 %v1618, 0.7978846
        %v1635 = vmul.f32 %v1619, 0.7978846
        %v1636 = vmul.f32 %v1620, 0.7978846
        %v1637 = vmul.f32 %v1621, 0.7978846
        %v1638 = vmul.f32 %v1622, 0.7978846
        %v1639 = vmul.f32 %v1623, 0.7978846
        %v1640 = vmul.f32 %v1624, 0.7978846
        %v1641 = vmul.f32 %v1625, 0.7978846
        %v1642 = vmul.f32 %v1626, 0.7978846
        %v1643 = vmul.f32 %v1627, 0.7978846
        %v1644 = vmul.f32 %v1628, 0.7978846
        %v1645 = vmul.f32 %v1629, 0.7978846
        %v1646 = vtanh.pop %v1630
        %v1647 = vtanh.pop %v1631
        %v1648 = vtanh.pop %v1632
        %v1649 = vtanh.pop %v1633
        %v1650 = vtanh.pop %v1634
        %v1651 = vtanh.pop %v1635
        %v1652 = vtanh.pop %v1636
        %v1653 = vtanh.pop %v1637
        %v1654 = vtanh.pop %v1638
        %v1655 = vtanh.pop %v1639
        %v1656 = vtanh.pop %v1640
        %v1657 = vtanh.pop %v1641
        %v1658 = vtanh.pop %v1642
        %v1659 = vtanh.pop %v1643
        %v1660 = vtanh.pop %v1644
        %v1661 = vtanh.pop %v1645
        %v1662 = vadd.f32 %v1646, 1.0
        %v1663 = vadd.f32 %v1647, 1.0
        %v1664 = vadd.f32 %v1648, 1.0
        %v1665 = vadd.f32 %v1649, 1.0
        %v1666 = vadd.f32 %v1650, 1.0
        %v1667 = vadd.f32 %v1651, 1.0
        %v1668 = vadd.f32 %v1652, 1.0
        %v1669 = vadd.f32 %v1653, 1.0
        %v1670 = vadd.f32 %v1654, 1.0
        %v1671 = vadd.f32 %v1655, 1.0
        %v1672 = vadd.f32 %v1656, 1.0
        %v1673 = vadd.f32 %v1657, 1.0
        %v1674 = vadd.f32 %v1658, 1.0
        %v1675 = vadd.f32 %v1659, 1.0
        %v1676 = vadd.f32 %v1660, 1.0
        %v1677 = vadd.f32 %v1661, 1.0
        %v1678 = vmul.f32 %v1550, %v1662
        %v1679 = vmul.f32 %v1551, %v1663
        %v1680 = vmul.f32 %v1552, %v1664
        %v1681 = vmul.f32 %v1553, %v1665
        %v1682 = vmul.f32 %v1554, %v1666
        %v1683 = vmul.f32 %v1555, %v1667
        %v1684 = vmul.f32 %v1556, %v1668
        %v1685 = vmul.f32 %v1557, %v1669
        %v1686 = vmul.f32 %v1558, %v1670
        %v1687 = vmul.f32 %v1559, %v1671
        %v1688 = vmul.f32 %v1560, %v1672
        %v1689 = vmul.f32 %v1561, %v1673
        %v1690 = vmul.f32 %v1562, %v1674
        %v1691 = vmul.f32 %v1563, %v1675
        %v1692 = vmul.f32 %v1564, %v1676
        %v1693 = vmul.f32 %v1565, %v1677
        %v1694 = vpack.c.bf16 %v1682, %v1678
        %v1695 = vpack.c.bf16 %v1683, %v1679
        %v1696 = vpack.c.bf16 %v1684, %v1680
        %v1697 = vpack.c.bf16 %v1685, %v1681
        %v1698 = vpack.c.bf16 %v1690, %v1686
        %v1699 = vpack.c.bf16 %v1691, %v1687
        %v1700 = vpack.c.bf16 %v1692, %v1688
        %v1701 = vpack.c.bf16 %v1693, %v1689
        %v1710 = vunpack.c.l.b16 %v1694
        %v1711 = vunpack.c.l.b16 %v1695
        %v1712 = vunpack.c.l.b16 %v1696
        %v1713 = vunpack.c.l.b16 %v1697
        %v1714 = vunpack.c.h.b16 %v1694
        %v1715 = vunpack.c.h.b16 %v1695
        %v1716 = vunpack.c.h.b16 %v1696
        %v1717 = vunpack.c.h.b16 %v1697
        %v1718 = vunpack.c.l.b16 %v1698
        %v1719 = vunpack.c.l.b16 %v1699
        %v1720 = vunpack.c.l.b16 %v1700
        %v1721 = vunpack.c.l.b16 %v1701
        %v1722 = vunpack.c.h.b16 %v1698
        %v1723 = vunpack.c.h.b16 %v1699
        %v1724 = vunpack.c.h.b16 %v1700
        %v1725 = vunpack.c.h.b16 %v1701
        %v1726 = vpack.c.b16 %v1711, %v1710
        %v1727 = vpack.c.b16 %v1713, %v1712
        %v1728 = vpack.c.b16 %v1715, %v1714
        %v1729 = vpack.c.b16 %v1717, %v1716
        %v1730 = vpack.c.b16 %v1719, %v1718
        %v1731 = vpack.c.b16 %v1721, %v1720
        %v1732 = vpack.c.b16 %v1723, %v1722
        %v1733 = vpack.c.b16 %v1725, %v1724
        %1742 = vst [vmem:[%s484] sm:$0xff] %v1726
        %1743 = vst [vmem:[%s484 + $0x8] sm:$0xff] %v1727
        %1744 = vst [vmem:[%s484 + $0x10] sm:$0xff] %v1728
        %1745 = vst [vmem:[%s484 + $0x18] sm:$0xff] %v1729
        %1746 = vst [vmem:[%s484 + $0x20] sm:$0xff] %v1730
        %1747 = vst [vmem:[%s484 + $0x28] sm:$0xff] %v1731
        %1748 = vst [vmem:[%s484 + $0x30] sm:$0xff] %v1732
        %1749 = vst [vmem:[%s484 + $0x38] sm:$0xff] %v1733
        %s1750 = sand.u32 %s114, 1
        %s1751 = sand.u32 %s114, 1
        %s1752 = smul.addr %s1751, 64
        %s1753 = scalar_lea.vmem [#allocation3], %s1752
        // Predicated region
        $region56: #{closed_call.25} parent=50 // pred_check
          %p1754 = pneg %p124
        $region57: #{closed_call.25} parent=50 // pred_check_branch
          %1756 = sbr.rel (%p1754) target = $region59
        $region58: #{closed_call.25} parent=50 // pred_region
          %s1757 = smul.u32 4, %s18
          %s1758 = smul.u32 4, %s19
          %s1759 = smul.addr %s1757, 16
          %s1760 = sadd.s32 %s1758, %s1759
          %s1761 = smul.addr %s1760, 4
          %s1762 = scalar_lea.vmem %s3, %s1761
          // Predicated region
          $region60: #{closed_call.25} parent=58 // pred_check
            _
          $region61: #{closed_call.25} parent=58 // pred_check_branch
            %1764 = sbr.rel (0) target = $region63
          $region62: #{closed_call.25} parent=58 // pred_region
            // Predicated region
            $region64: #{closed_call.25} parent=62 // pred_check
              _
            $region65: #{closed_call.25} parent=62 // pred_check_branch
              %1766 = sbr.rel (0) target = $region67
            $region66: #{closed_call.25} parent=62 // pred_region
              loop: start=0, step=1, limit=1
              $region68: #{closed_call.25} parent=66 // loop_pre_header
                _
              $region69: #{closed_call.25} parent=66 // loop_header
                %s1768 = sphi 0, %s1772
                %p1769 = scmp.ge.s32.totalorder %s1768, 1
                %s1773 = sphi %s1753, %s1753
                %s1774 = sphi %s1762, %s1762
              $region70: #{closed_call.25} parent=66 // loop_header_branch
                %1771 = sbr.rel (%p1769) target = $region74
              $region71: #{closed_call.25} parent=66 // loop_body
                %v1775 = vld [vmem:[%s1773] sm:$0xff]
                %1776 = vst [vmem:[%s1774] sm:$0xff] %v1775
                %v1777 = vld [vmem:[%s1773 + $0x8] sm:$0xff]
                %1778 = vst [vmem:[%s1774 + $0x8] sm:$0xff] %v1777
                %v1779 = vld [vmem:[%s1773 + $0x10] sm:$0xff]
                %1780 = vst [vmem:[%s1774 + $0x40] sm:$0xff] %v1779
                %v1781 = vld [vmem:[%s1773 + $0x18] sm:$0xff]
                %1782 = vst [vmem:[%s1774 + $0x48] sm:$0xff] %v1781
                %v1783 = vld [vmem:[%s1773 + $0x20] sm:$0xff]
                %1784 = vst [vmem:[%s1774 + $0x80] sm:$0xff] %v1783
                %v1785 = vld [vmem:[%s1773 + $0x28] sm:$0xff]
                %1786 = vst [vmem:[%s1774 + $0x88] sm:$0xff] %v1785
                %v1787 = vld [vmem:[%s1773 + $0x30] sm:$0xff]
                %1788 = vst [vmem:[%s1774 + $0xc0] sm:$0xff] %v1787
                %v1789 = vld [vmem:[%s1773 + $0x38] sm:$0xff]
                %1790 = vst [vmem:[%s1774 + $0xc8] sm:$0xff] %v1789
              $region72: #{closed_call.25} parent=66 // loop_footer
                %s1772 = sadd.s32 1, %s1768
              $region73: #{closed_call.25} parent=66 // loop_footer_branch
                %1767 = sbr.rel target = $region69
              $region74: #{closed_call.25} parent=66 // loop_exit
                _
            $region67: #{closed_call.25} parent=62 // pred_fallthru
              _
            // Predicated region
            $region75: #{closed_call.25} parent=62 // pred_check
              _
            $region76: #{closed_call.25} parent=62 // pred_check_branch
              %1792 = sbr.rel target = $region78
            $region77: #{closed_call.25} parent=62 // pred_region
              _
            $region78: #{closed_call.25} parent=62 // pred_fallthru
              _
          $region63: #{closed_call.25} parent=58 // pred_fallthru
            _
          %1793 = vnop
        $region59: #{closed_call.25} parent=50 // pred_fallthru
          _
      $region51: #{closed_call.25} parent=5 // pred_fallthru
        _
      %p1794 = scmp.le.s32.totalorder 2, %s9
      // Predicated region
      $region79: #{closed_call.25} parent=5 // pred_check
        %p1795 = pneg %p1794
      $region80: #{closed_call.25} parent=5 // pred_check_branch
        %1797 = sbr.rel (%p1795) target = $region82
      $region81: #{closed_call.25} parent=5 // pred_region
        %s1798 = ssub.s32 %s9, 2
        // Predicated region
        $region83: #{closed_call.25} parent=81 // pred_check
          %p1799 = pneg %p130
        $region84: #{closed_call.25} parent=81 // pred_check_branch
          %1801 = sbr.rel (%p1799) target = $region86
        $region85: #{closed_call.25} parent=81 // pred_region
          %s1802 = sand.u32 %s115, 1
          %s1803 = sand.u32 %s115, 1
          %s1804 = smul.addr %s1803, 64
          %s1805 = scalar_lea.vmem [#allocation3], %s1804
        $region86: #{closed_call.25} parent=81 // pred_fallthru
          _
      $region82: #{closed_call.25} parent=5 // pred_fallthru
        _
    $region6: #{closed_call.25} parent=1 // loop_footer
      %s13 = sadd.s32 1, %s9
    $region7: #{closed_call.25} parent=1 // loop_footer_branch
      %8 = sbr.rel target = $region3
    $region8: #{closed_call.25} parent=1 // loop_exit
      _

// kernel: patient_rnn_forward.3
$region0: #{patient_rnn_forward.3}
  #allocation0 [shape = 'u32[]', space=smem, size = 0x4, offset = 0x4, fixed_abs, tag = 'smem constant byte address 0x4 - core index']
  #allocation1 [shape = 'u32[144,128]{1,0:T(1,128)}', space=vmem, size = 0x12000, scoped, tag = 'internal scratch']
  %s0 = inlined_call_operand.vmem [shape: bf16[32,512], index: 0, kind: input, shape index: {}]
  %s1 = inlined_call_operand.vmem [shape: f32[1,512], index: 1, kind: input, shape index: {}]
  %s2 = inlined_call_operand.vmem [shape: f32[1,512], index: 2, kind: input, shape index: {}]
  %s3 = inlined_call_operand.vmem [shape: f32[32,512], index: 3, kind: output, shape index: {}]
  %s4 = sld [smem:[#allocation0]]
  $region22: #{patient_rnn_forward.3} parent=0
    _
  %s6 = ssub.s32 1, %s4
  %s7 = scalar_select 0, %s6, %s4
  // Predicated region
  $region2: #{patient_rnn_forward.3} parent=0 // pred_check
    _
  $region3: #{patient_rnn_forward.3} parent=0 // pred_check_branch
    %9 = sbr.rel (0) target = $region5
  $region4: #{patient_rnn_forward.3} parent=0 // pred_region
    _
  $region5: #{patient_rnn_forward.3} parent=0 // pred_fallthru
    _
  // Predicated region
  $region6: #{patient_rnn_forward.3} parent=0 // pred_check
    _
  $region7: #{patient_rnn_forward.3} parent=0 // pred_check_branch
    %11 = sbr.rel (0) target = $region9
  $region8: #{patient_rnn_forward.3} parent=0 // pred_region
    _
  $region9: #{patient_rnn_forward.3} parent=0 // pred_fallthru
    _
  // Predicated region
  $region10: #{patient_rnn_forward.3} parent=0 // pred_check
    _
  $region11: #{patient_rnn_forward.3} parent=0 // pred_check_branch
    %13 = sbr.rel (0) target = $region13
  $region12: #{patient_rnn_forward.3} parent=0 // pred_region
    _
  $region13: #{patient_rnn_forward.3} parent=0 // pred_fallthru
    _
  %v14 = vld [vmem:[%s0] sm:$0xff]
  %v15 = vld [vmem:[%s0 + $0x8] sm:$0xff]
  %v16 = vld [vmem:[%s0 + $0x10] sm:$0xff]
  %v17 = vld [vmem:[%s0 + $0x18] sm:$0xff]
  %v18 = vld [vmem:[%s0 + $0x20] sm:$0xff]
  %v19 = vld [vmem:[%s0 + $0x28] sm:$0xff]
  %v20 = vld [vmem:[%s0 + $0x30] sm:$0xff]
  %v21 = vld [vmem:[%s0 + $0x38] sm:$0xff]
  %v22 = vunpack.c.l.bf16 %v14
  %v23 = vunpack.c.h.bf16 %v14
  %v24 = vunpack.c.l.bf16 %v15
  %v25 = vunpack.c.h.bf16 %v15
  %v26 = vunpack.c.l.bf16 %v16
  %v27 = vunpack.c.h.bf16 %v16
  %v28 = vunpack.c.l.bf16 %v17
  %v29 = vunpack.c.h.bf16 %v17
  %v30 = vunpack.c.l.bf16 %v18
  %v31 = vunpack.c.h.bf16 %v18
  %v32 = vunpack.c.l.bf16 %v19
  %v33 = vunpack.c.h.bf16 %v19
  %v34 = vunpack.c.l.bf16 %v20
  %v35 = vunpack.c.h.bf16 %v20
  %v36 = vunpack.c.l.bf16 %v21
  %v37 = vunpack.c.h.bf16 %v21
  %v38 = vadd.f32 %v22, %v23
  %v39 = vadd.f32 %v38, %v24
  %v40 = vadd.f32 %v39, %v25
  %41 = vadd.xlane.f32.xlu0 %v40
  %v42 = vpop.xlane.xlu0 %41
  %v43 = vadd.f32 %v26, %v27
  %v44 = vadd.f32 %v43, %v28
  %v45 = vadd.f32 %v44, %v29
  %46 = vadd.xlane.f32.xlu0 %v45
  %v47 = vpop.xlane.xlu0 %46
  %v48 = vadd.f32 %v30, %v31
  %v49 = vadd.f32 %v48, %v32
  %v50 = vadd.f32 %v49, %v33
  %51 = vadd.xlane.f32.xlu0 %v50
  %v52 = vpop.xlane.xlu0 %51
  %v53 = vadd.f32 %v34, %v35
  %v54 = vadd.f32 %v53, %v36
  %v55 = vadd.f32 %v54, %v37
  %56 = vadd.xlane.f32.xlu0 %v55
  %v57 = vpop.xlane.xlu0 %56
  %v58 = vrcp.pop 512.0
  %v59 = vmul.f32 %v42, %v58
  %v60 = vmul.f32 %v47, %v58
  %v61 = vmul.f32 %v52, %v58
  %v62 = vmul.f32 %v57, %v58
  %v63 = vsub.f32 %v22, %v59
  %v64 = vsub.f32 %v23, %v59
  %v65 = vsub.f32 %v24, %v59
  %v66 = vsub.f32 %v25, %v59
  %v67 = vsub.f32 %v26, %v60
  %v68 = vsub.f32 %v27, %v60
  %v69 = vsub.f32 %v28, %v60
  %v70 = vsub.f32 %v29, %v60
  %v71 = vsub.f32 %v30, %v61
  %v72 = vsub.f32 %v31, %v61
  %v73 = vsub.f32 %v32, %v61
  %v74 = vsub.f32 %v33, %v61
  %v75 = vsub.f32 %v34, %v62
  %v76 = vsub.f32 %v35, %v62
  %v77 = vsub.f32 %v36, %v62
  %v78 = vsub.f32 %v37, %v62
  %v79 = vmul.f32 %v63, %v63
  %v80 = vmul.f32 %v64, %v64
  %v81 = vmul.f32 %v65, %v65
  %v82 = vmul.f32 %v66, %v66
  %v83 = vmul.f32 %v67, %v67
  %v84 = vmul.f32 %v68, %v68
  %v85 = vmul.f32 %v69, %v69
  %v86 = vmul.f32 %v70, %v70
  %v87 = vmul.f32 %v71, %v71
  %v88 = vmul.f32 %v72, %v72
  %v89 = vmul.f32 %v73, %v73
  %v90 = vmul.f32 %v74, %v74
  %v91 = vmul.f32 %v75, %v75
  %v92 = vmul.f32 %v76, %v76
  %v93 = vmul.f32 %v77, %v77
  %v94 = vmul.f32 %v78, %v78
  %v95 = vadd.f32 %v79, %v80
  %v96 = vadd.f32 %v95, %v81
  %v97 = vadd.f32 %v96, %v82
  %98 = vadd.xlane.f32.xlu0 %v97
  %v99 = vpop.xlane.xlu0 %98
  %v100 = vadd.f32 %v83, %v84
  %v101 = vadd.f32 %v100, %v85
  %v102 = vadd.f32 %v101, %v86
  %103 = vadd.xlane.f32.xlu0 %v102
  %v104 = vpop.xlane.xlu0 %103
  %v105 = vadd.f32 %v87, %v88
  %v106 = vadd.f32 %v105, %v89
  %v107 = vadd.f32 %v106, %v90
  %108 = vadd.xlane.f32.xlu0 %v107
  %v109 = vpop.xlane.xlu0 %108
  %v110 = vadd.f32 %v91, %v92
  %v111 = vadd.f32 %v110, %v93
  %v112 = vadd.f32 %v111, %v94
  %113 = vadd.xlane.f32.xlu0 %v112
  %v114 = vpop.xlane.xlu0 %113
  %v115 = vmul.f32 %v99, %v58
  %v116 = vmul.f32 %v104, %v58
  %v117 = vmul.f32 %v109, %v58
  %v118 = vmul.f32 %v114, %v58
  %v119 = vadd.f32 %v115, 1e-05
  %v120 = vadd.f32 %v116, 1e-05
  %v121 = vadd.f32 %v117, 1e-05
  %v122 = vadd.f32 %v118, 1e-05
  %v123 = vrsqrt.pop %v119
  %v124 = vrsqrt.pop %v120
  %v125 = vrsqrt.pop %v121
  %v126 = vrsqrt.pop %v122
  %v127 = vmul.f32 %v63, %v123
  %v128 = vmul.f32 %v64, %v123
  %v129 = vmul.f32 %v65, %v123
  %v130 = vmul.f32 %v66, %v123
  %v131 = vmul.f32 %v67, %v124
  %v132 = vmul.f32 %v68, %v124
  %v133 = vmul.f32 %v69, %v124
  %v134 = vmul.f32 %v70, %v124
  %v135 = vmul.f32 %v71, %v125
  %v136 = vmul.f32 %v72, %v125
  %v137 = vmul.f32 %v73, %v125
  %v138 = vmul.f32 %v74, %v125
  %v139 = vmul.f32 %v75, %v126
  %v140 = vmul.f32 %v76, %v126
  %v141 = vmul.f32 %v77, %v126
  %v142 = vmul.f32 %v78, %v126
  %v143 = vld [vmem:[%s1] sm:$0xf]
  %v145 = vlaneseq
  %v146 = vshrl.u32 %v145, 7
  %v147 = vsub.s32 0, %v146
  %v148 = vrot.slane %v143, %v147
  %v149 = vlaneseq
  %v150 = vshrl.u32 %v149, 7
  %v151 = vsub.s32 1, %v150
  %v152 = vrot.slane %v143, %v151
  %v153 = vlaneseq
  %v154 = vshrl.u32 %v153, 7
  %v155 = vsub.s32 2, %v154
  %v156 = vrot.slane %v143, %v155
  %v157 = vlaneseq
  %v158 = vshrl.u32 %v157, 7
  %v159 = vsub.s32 3, %v158
  %v160 = vrot.slane %v143, %v159
  %v165 = vmul.f32 %v127, %v148
  %v166 = vmul.f32 %v128, %v152
  %v167 = vmul.f32 %v129, %v156
  %v168 = vmul.f32 %v130, %v160
  %v169 = vmul.f32 %v131, %v148
  %v170 = vmul.f32 %v132, %v152
  %v171 = vmul.f32 %v133, %v156
  %v172 = vmul.f32 %v134, %v160
  %v173 = vmul.f32 %v135, %v148
  %v174 = vmul.f32 %v136, %v152
  %v175 = vmul.f32 %v137, %v156
  %v176 = vmul.f32 %v138, %v160
  %v177 = vmul.f32 %v139, %v148
  %v178 = vmul.f32 %v140, %v152
  %v179 = vmul.f32 %v141, %v156
  %v180 = vmul.f32 %v142, %v160
  %v181 = vld [vmem:[%s2] sm:$0xf]
  %v183 = vlaneseq
  %v184 = vshrl.u32 %v183, 7
  %v185 = vsub.s32 0, %v184
  %v186 = vrot.slane %v181, %v185
  %v187 = vlaneseq
  %v188 = vshrl.u32 %v187, 7
  %v189 = vsub.s32 1, %v188
  %v190 = vrot.slane %v181, %v189
  %v191 = vlaneseq
  %v192 = vshrl.u32 %v191, 7
  %v193 = vsub.s32 2, %v192
  %v194 = vrot.slane %v181, %v193
  %v195 = vlaneseq
  %v196 = vshrl.u32 %v195, 7
  %v197 = vsub.s32 3, %v196
  %v198 = vrot.slane %v181, %v197
  %v203 = vadd.f32 %v165, %v186
  %v204 = vadd.f32 %v166, %v190
  %v205 = vadd.f32 %v167, %v194
  %v206 = vadd.f32 %v168, %v198
  %v207 = vadd.f32 %v169, %v186
  %v208 = vadd.f32 %v170, %v190
  %v209 = vadd.f32 %v171, %v194
  %v210 = vadd.f32 %v172, %v198
  %v211 = vadd.f32 %v173, %v186
  %v212 = vadd.f32 %v174, %v190
  %v213 = vadd.f32 %v175, %v194
  %v214 = vadd.f32 %v176, %v198
  %v215 = vadd.f32 %v177, %v186
  %v216 = vadd.f32 %v178, %v190
  %v217 = vadd.f32 %v179, %v194
  %v218 = vadd.f32 %v180, %v198
  %219 = vst [vmem:[%s3] sm:$0xff] %v203
  %220 = vst [vmem:[%s3 + $0x8] sm:$0xff] %v204
  %221 = vst [vmem:[%s3 + $0x10] sm:$0xff] %v205
  %222 = vst [vmem:[%s3 + $0x18] sm:$0xff] %v206
  %223 = vst [vmem:[%s3 + $0x20] sm:$0xff] %v207
  %224 = vst [vmem:[%s3 + $0x28] sm:$0xff] %v208
  %225 = vst [vmem:[%s3 + $0x30] sm:$0xff] %v209
  %226 = vst [vmem:[%s3 + $0x38] sm:$0xff] %v210
  %227 = vst [vmem:[%s3 + $0x40] sm:$0xff] %v211
  %228 = vst [vmem:[%s3 + $0x48] sm:$0xff] %v212
  %229 = vst [vmem:[%s3 + $0x50] sm:$0xff] %v213
  %230 = vst [vmem:[%s3 + $0x58] sm:$0xff] %v214
  %231 = vst [vmem:[%s3 + $0x60] sm:$0xff] %v215
  %232 = vst [vmem:[%s3 + $0x68] sm:$0xff] %v216
  %233 = vst [vmem:[%s3 + $0x70] sm:$0xff] %v217
  %234 = vst [vmem:[%s3 + $0x78] sm:$0xff] %v218
  // Predicated region
  $region14: #{patient_rnn_forward.3} parent=0 // pred_check
    _
  $region15: #{patient_rnn_forward.3} parent=0 // pred_check_branch
    %236 = sbr.rel (0) target = $region17
  $region16: #{patient_rnn_forward.3} parent=0 // pred_region
    _
  $region17: #{patient_rnn_forward.3} parent=0 // pred_fallthru
    _
  // Predicated region
  $region18: #{patient_rnn_forward.3} parent=0 // pred_check
    _
  $region19: #{patient_rnn_forward.3} parent=0 // pred_check_branch
    %238 = sbr.rel (0) target = $region21
  $region20: #{patient_rnn_forward.3} parent=0 // pred_region
    _
  $region21: #{patient_rnn_forward.3} parent=0 // pred_fallthru
    _

// kernel: closed_call.26
$region0: #{closed_call.26}
  #allocation0 [shape = 'u32[]', space=smem, size = 0x4, offset = 0x4, fixed_abs, tag = 'smem constant byte address 0x4 - core index']
  #allocation1 [shape = 'u32[144,128]{1,0:T(1,128)}', space=vmem, size = 0x12000, scoped, tag = 'internal scratch']
  %s0 = inlined_call_operand.vmem [shape: bf16[32,2048], index: 0, kind: input, shape index: {}]
  %s1 = inlined_call_operand.vmem [shape: bf16[2048,512], index: 1, kind: input, shape index: {}]
  %s2 = inlined_call_operand.vmem [shape: f32[1,512], index: 2, kind: input, shape index: {}]
  %s3 = inlined_call_operand.vmem [shape: bf16[32,512], index: 3, kind: input, shape index: {}]
  %s4 = inlined_call_operand.vmem [shape: f32[1,512], index: 4, kind: input, shape index: {}]
  %s5 = inlined_call_operand.vmem [shape: f32[1,512], index: 5, kind: input, shape index: {}]
  %s6 = inlined_call_operand.vmem [shape: bf16[32,512], index: 6, kind: output, shape index: {}]
  %s7 = sld [smem:[#allocation0]]
  $region34: #{closed_call.26} parent=0
    _
  %s9 = ssub.s32 1, %s7
  %s10 = scalar_select 0, %s9, %s7
  // Predicated region
  $region2: #{closed_call.26} parent=0 // pred_check
    _
  $region3: #{closed_call.26} parent=0 // pred_check_branch
    %12 = sbr.rel (0) target = $region5
  $region4: #{closed_call.26} parent=0 // pred_region
    _
  $region5: #{closed_call.26} parent=0 // pred_fallthru
    _
  // Predicated region
  $region6: #{closed_call.26} parent=0 // pred_check
    _
  $region7: #{closed_call.26} parent=0 // pred_check_branch
    %14 = sbr.rel (0) target = $region9
  $region8: #{closed_call.26} parent=0 // pred_region
    _
  $region9: #{closed_call.26} parent=0 // pred_fallthru
    _
  // Predicated region
  $region10: #{closed_call.26} parent=0 // pred_check
    _
  $region11: #{closed_call.26} parent=0 // pred_check_branch
    %16 = sbr.rel (0) target = $region13
  $region12: #{closed_call.26} parent=0 // pred_region
    _
  $region13: #{closed_call.26} parent=0 // pred_fallthru
    _
  // Predicated region
  $region14: #{closed_call.26} parent=0 // pred_check
    _
  $region15: #{closed_call.26} parent=0 // pred_check_branch
    %18 = sbr.rel (0) target = $region17
  $region16: #{closed_call.26} parent=0 // pred_region
    _
  $region17: #{closed_call.26} parent=0 // pred_fallthru
    _
  // Predicated region
  $region18: #{closed_call.26} parent=0 // pred_check
    _
  $region19: #{closed_call.26} parent=0 // pred_check_branch
    %20 = sbr.rel (0) target = $region21
  $region20: #{closed_call.26} parent=0 // pred_region
    _
  $region21: #{closed_call.26} parent=0 // pred_fallthru
    _
  // Predicated region
  $region22: #{closed_call.26} parent=0 // pred_check
    _
  $region23: #{closed_call.26} parent=0 // pred_check_branch
    %22 = sbr.rel (0) target = $region25
  $region24: #{closed_call.26} parent=0 // pred_region
    _
  $region25: #{closed_call.26} parent=0 // pred_fallthru
    _
  %v23 = vld [vmem:[%s0] sm:$0xff]
  %v24 = vld [vmem:[%s0 + $0x8] sm:$0xff]
  %v25 = vld [vmem:[%s0 + $0x10] sm:$0xff]
  %v26 = vld [vmem:[%s0 + $0x18] sm:$0xff]
  %v27 = vld [vmem:[%s0 + $0x20] sm:$0xff]
  %v28 = vld [vmem:[%s0 + $0x28] sm:$0xff]
  %v29 = vld [vmem:[%s0 + $0x30] sm:$0xff]
  %v30 = vld [vmem:[%s0 + $0x38] sm:$0xff]
  %v31 = vld [vmem:[%s0 + $0x40] sm:$0xff]
  %v32 = vld [vmem:[%s0 + $0x48] sm:$0xff]
  %v33 = vld [vmem:[%s0 + $0x50] sm:$0xff]
  %v34 = vld [vmem:[%s0 + $0x58] sm:$0xff]
  %v35 = vld [vmem:[%s0 + $0x60] sm:$0xff]
  %v36 = vld [vmem:[%s0 + $0x68] sm:$0xff]
  %v37 = vld [vmem:[%s0 + $0x70] sm:$0xff]
  %v38 = vld [vmem:[%s0 + $0x78] sm:$0xff]
  %v39 = vld [vmem:[%s0 + $0x80] sm:$0xff]
  %v40 = vld [vmem:[%s0 + $0x88] sm:$0xff]
  %v41 = vld [vmem:[%s0 + $0x90] sm:$0xff]
  %v42 = vld [vmem:[%s0 + $0x98] sm:$0xff]
  %v43 = vld [vmem:[%s0 + $0xa0] sm:$0xff]
  %v44 = vld [vmem:[%s0 + $0xa8] sm:$0xff]
  %v45 = vld [vmem:[%s0 + $0xb0] sm:$0xff]
  %v46 = vld [vmem:[%s0 + $0xb8] sm:$0xff]
  %v47 = vld [vmem:[%s0 + $0xc0] sm:$0xff]
  %v48 = vld [vmem:[%s0 + $0xc8] sm:$0xff]
  %v49 = vld [vmem:[%s0 + $0xd0] sm:$0xff]
  %v50 = vld [vmem:[%s0 + $0xd8] sm:$0xff]
  %v51 = vld [vmem:[%s0 + $0xe0] sm:$0xff]
  %v52 = vld [vmem:[%s0 + $0xe8] sm:$0xff]
  %v53 = vld [vmem:[%s0 + $0xf0] sm:$0xff]
  %v54 = vld [vmem:[%s0 + $0xf8] sm:$0xff]
  %v55 = vld [vmem:[%s1] sm:$0xff]
  %v56 = vld [vmem:[%s1 + $0x8] sm:$0xff]
  %v57 = vld [vmem:[%s1 + $0x10] sm:$0xff]
  %v58 = vld [vmem:[%s1 + $0x18] sm:$0xff]
  %v59 = vld [vmem:[%s1 + $0x20] sm:$0xff]
  %v60 = vld [vmem:[%s1 + $0x28] sm:$0xff]
  %v61 = vld [vmem:[%s1 + $0x30] sm:$0xff]
  %v62 = vld [vmem:[%s1 + $0x38] sm:$0xff]
  %v63 = vld [vmem:[%s1 + $0x40] sm:$0xff]
  %v64 = vld [vmem:[%s1 + $0x48] sm:$0xff]
  %v65 = vld [vmem:[%s1 + $0x50] sm:$0xff]
  %v66 = vld [vmem:[%s1 + $0x58] sm:$0xff]
  %v67 = vld [vmem:[%s1 + $0x60] sm:$0xff]
  %v68 = vld [vmem:[%s1 + $0x68] sm:$0xff]
  %v69 = vld [vmem:[%s1 + $0x70] sm:$0xff]
  %v70 = vld [vmem:[%s1 + $0x78] sm:$0xff]
  %v71 = vld [vmem:[%s1 + $0x80] sm:$0xff]
  %v72 = vld [vmem:[%s1 + $0x88] sm:$0xff]
  %v73 = vld [vmem:[%s1 + $0x90] sm:$0xff]
  %v74 = vld [vmem:[%s1 + $0x98] sm:$0xff]
  %v75 = vld [vmem:[%s1 + $0xa0] sm:$0xff]
  %v76 = vld [vmem:[%s1 + $0xa8] sm:$0xff]
  %v77 = vld [vmem:[%s1 + $0xb0] sm:$0xff]
  %v78 = vld [vmem:[%s1 + $0xb8] sm:$0xff]
  %v79 = vld [vmem:[%s1 + $0xc0] sm:$0xff]
  %v80 = vld [vmem:[%s1 + $0xc8] sm:$0xff]
  %v81 = vld [vmem:[%s1 + $0xd0] sm:$0xff]
  %v82 = vld [vmem:[%s1 + $0xd8] sm:$0xff]
  %v83 = vld [vmem:[%s1 + $0xe0] sm:$0xff]
  %v84 = vld [vmem:[%s1 + $0xe8] sm:$0xff]
  %v85 = vld [vmem:[%s1 + $0xf0] sm:$0xff]
  %v86 = vld [vmem:[%s1 + $0xf8] sm:$0xff]
  %v87 = vld [vmem:[%s1 + $0x100] sm:$0xff]
  %v88 = vld [vmem:[%s1 + $0x108] sm:$0xff]
  %v89 = vld [vmem:[%s1 + $0x110] sm:$0xff]
  %v90 = vld [vmem:[%s1 + $0x118] sm:$0xff]
  %v91 = vld [vmem:[%s1 + $0x120] sm:$0xff]
  %v92 = vld [vmem:[%s1 + $0x128] sm:$0xff]
  %v93 = vld [vmem:[%s1 + $0x130] sm:$0xff]
  %v94 = vld [vmem:[%s1 + $0x138] sm:$0xff]
  %v95 = vld [vmem:[%s1 + $0x140] sm:$0xff]
  %v96 = vld [vmem:[%s1 + $0x148] sm:$0xff]
  %v97 = vld [vmem:[%s1 + $0x150] sm:$0xff]
  %v98 = vld [vmem:[%s1 + $0x158] sm:$0xff]
  %v99 = vld [vmem:[%s1 + $0x160] sm:$0xff]
  %v100 = vld [vmem:[%s1 + $0x168] sm:$0xff]
  %v101 = vld [vmem:[%s1 + $0x170] sm:$0xff]
  %v102 = vld [vmem:[%s1 + $0x178] sm:$0xff]
  %v103 = vld [vmem:[%s1 + $0x180] sm:$0xff]
  %v104 = vld [vmem:[%s1 + $0x188] sm:$0xff]
  %v105 = vld [vmem:[%s1 + $0x190] sm:$0xff]
  %v106 = vld [vmem:[%s1 + $0x198] sm:$0xff]
  %v107 = vld [vmem:[%s1 + $0x1a0] sm:$0xff]
  %v108 = vld [vmem:[%s1 + $0x1a8] sm:$0xff]
  %v109 = vld [vmem:[%s1 + $0x1b0] sm:$0xff]
  %v110 = vld [vmem:[%s1 + $0x1b8] sm:$0xff]
  %v111 = vld [vmem:[%s1 + $0x1c0] sm:$0xff]
  %v112 = vld [vmem:[%s1 + $0x1c8] sm:$0xff]
  %v113 = vld [vmem:[%s1 + $0x1d0] sm:$0xff]
  %v114 = vld [vmem:[%s1 + $0x1d8] sm:$0xff]
  %v115 = vld [vmem:[%s1 + $0x1e0] sm:$0xff]
  %v116 = vld [vmem:[%s1 + $0x1e8] sm:$0xff]
  %v117 = vld [vmem:[%s1 + $0x1f0] sm:$0xff]
  %v118 = vld [vmem:[%s1 + $0x1f8] sm:$0xff]
  %v119 = vld [vmem:[%s1 + $0x200] sm:$0xff]
  %v120 = vld [vmem:[%s1 + $0x208] sm:$0xff]
  %v121 = vld [vmem:[%s1 + $0x210] sm:$0xff]
  %v122 = vld [vmem:[%s1 + $0x218] sm:$0xff]
  %v123 = vld [vmem:[%s1 + $0x220] sm:$0xff]
  %v124 = vld [vmem:[%s1 + $0x228] sm:$0xff]
  %v125 = vld [vmem:[%s1 + $0x230] sm:$0xff]
  %v126 = vld [vmem:[%s1 + $0x238] sm:$0xff]
  %v127 = vld [vmem:[%s1 + $0x240] sm:$0xff]
  %v128 = vld [vmem:[%s1 + $0x248] sm:$0xff]
  %v129 = vld [vmem:[%s1 + $0x250] sm:$0xff]
  %v130 = vld [vmem:[%s1 + $0x258] sm:$0xff]
  %v131 = vld [vmem:[%s1 + $0x260] sm:$0xff]
  %v132 = vld [vmem:[%s1 + $0x268] sm:$0xff]
  %v133 = vld [vmem:[%s1 + $0x270] sm:$0xff]
  %v134 = vld [vmem:[%s1 + $0x278] sm:$0xff]
  %v135 = vld [vmem:[%s1 + $0x280] sm:$0xff]
  %v136 = vld [vmem:[%s1 + $0x288] sm:$0xff]
  %v137 = vld [vmem:[%s1 + $0x290] sm:$0xff]
  %v138 = vld [vmem:[%s1 + $0x298] sm:$0xff]
  %v139 = vld [vmem:[%s1 + $0x2a0] sm:$0xff]
  %v140 = vld [vmem:[%s1 + $0x2a8] sm:$0xff]
  %v141 = vld [vmem:[%s1 + $0x2b0] sm:$0xff]
  %v142 = vld [vmem:[%s1 + $0x2b8] sm:$0xff]
  %v143 = vld [vmem:[%s1 + $0x2c0] sm:$0xff]
  %v144 = vld [vmem:[%s1 + $0x2c8] sm:$0xff]
  %v145 = vld [vmem:[%s1 + $0x2d0] sm:$0xff]
  %v146 = vld [vmem:[%s1 + $0x2d8] sm:$0xff]
  %v147 = vld [vmem:[%s1 + $0x2e0] sm:$0xff]
  %v148 = vld [vmem:[%s1 + $0x2e8] sm:$0xff]
  %v149 = vld [vmem:[%s1 + $0x2f0] sm:$0xff]
  %v150 = vld [vmem:[%s1 + $0x2f8] sm:$0xff]
  %v151 = vld [vmem:[%s1 + $0x300] sm:$0xff]
  %v152 = vld [vmem:[%s1 + $0x308] sm:$0xff]
  %v153 = vld [vmem:[%s1 + $0x310] sm:$0xff]
  %v154 = vld [vmem:[%s1 + $0x318] sm:$0xff]
  %v155 = vld [vmem:[%s1 + $0x320] sm:$0xff]
  %v156 = vld [vmem:[%s1 + $0x328] sm:$0xff]
  %v157 = vld [vmem:[%s1 + $0x330] sm:$0xff]
  %v158 = vld [vmem:[%s1 + $0x338] sm:$0xff]
  %v159 = vld [vmem:[%s1 + $0x340] sm:$0xff]
  %v160 = vld [vmem:[%s1 + $0x348] sm:$0xff]
  %v161 = vld [vmem:[%s1 + $0x350] sm:$0xff]
  %v162 = vld [vmem:[%s1 + $0x358] sm:$0xff]
  %v163 = vld [vmem:[%s1 + $0x360] sm:$0xff]
  %v164 = vld [vmem:[%s1 + $0x368] sm:$0xff]
  %v165 = vld [vmem:[%s1 + $0x370] sm:$0xff]
  %v166 = vld [vmem:[%s1 + $0x378] sm:$0xff]
  %v167 = vld [vmem:[%s1 + $0x380] sm:$0xff]
  %v168 = vld [vmem:[%s1 + $0x388] sm:$0xff]
  %v169 = vld [vmem:[%s1 + $0x390] sm:$0xff]
  %v170 = vld [vmem:[%s1 + $0x398] sm:$0xff]
  %v171 = vld [vmem:[%s1 + $0x3a0] sm:$0xff]
  %v172 = vld [vmem:[%s1 + $0x3a8] sm:$0xff]
  %v173 = vld [vmem:[%s1 + $0x3b0] sm:$0xff]
  %v174 = vld [vmem:[%s1 + $0x3b8] sm:$0xff]
  %v175 = vld [vmem:[%s1 + $0x3c0] sm:$0xff]
  %v176 = vld [vmem:[%s1 + $0x3c8] sm:$0xff]
  %v177 = vld [vmem:[%s1 + $0x3d0] sm:$0xff]
  %v178 = vld [vmem:[%s1 + $0x3d8] sm:$0xff]
  %v179 = vld [vmem:[%s1 + $0x3e0] sm:$0xff]
  %v180 = vld [vmem:[%s1 + $0x3e8] sm:$0xff]
  %v181 = vld [vmem:[%s1 + $0x3f0] sm:$0xff]
  %v182 = vld [vmem:[%s1 + $0x3f8] sm:$0xff]
  %v183 = vld [vmem:[%s1 + $0x400] sm:$0xff]
  %v184 = vld [vmem:[%s1 + $0x408] sm:$0xff]
  %v185 = vld [vmem:[%s1 + $0x410] sm:$0xff]
  %v186 = vld [vmem:[%s1 + $0x418] sm:$0xff]
  %v187 = vld [vmem:[%s1 + $0x420] sm:$0xff]
  %v188 = vld [vmem:[%s1 + $0x428] sm:$0xff]
  %v189 = vld [vmem:[%s1 + $0x430] sm:$0xff]
  %v190 = vld [vmem:[%s1 + $0x438] sm:$0xff]
  %v191 = vld [vmem:[%s1 + $0x440] sm:$0xff]
  %v192 = vld [vmem:[%s1 + $0x448] sm:$0xff]
  %v193 = vld [vmem:[%s1 + $0x450] sm:$0xff]
  %v194 = vld [vmem:[%s1 + $0x458] sm:$0xff]
  %v195 = vld [vmem:[%s1 + $0x460] sm:$0xff]
  %v196 = vld [vmem:[%s1 + $0x468] sm:$0xff]
  %v197 = vld [vmem:[%s1 + $0x470] sm:$0xff]
  %v198 = vld [vmem:[%s1 + $0x478] sm:$0xff]
  %v199 = vld [vmem:[%s1 + $0x480] sm:$0xff]
  %v200 = vld [vmem:[%s1 + $0x488] sm:$0xff]
  %v201 = vld [vmem:[%s1 + $0x490] sm:$0xff]
  %v202 = vld [vmem:[%s1 + $0x498] sm:$0xff]
  %v203 = vld [vmem:[%s1 + $0x4a0] sm:$0xff]
  %v204 = vld [vmem:[%s1 + $0x4a8] sm:$0xff]
  %v205 = vld [vmem:[%s1 + $0x4b0] sm:$0xff]
  %v206 = vld [vmem:[%s1 + $0x4b8] sm:$0xff]
  %v207 = vld [vmem:[%s1 + $0x4c0] sm:$0xff]
  %v208 = vld [vmem:[%s1 + $0x4c8] sm:$0xff]
  %v209 = vld [vmem:[%s1 + $0x4d0] sm:$0xff]
  %v210 = vld [vmem:[%s1 + $0x4d8] sm:$0xff]
  %v211 = vld [vmem:[%s1 + $0x4e0] sm:$0xff]
  %v212 = vld [vmem:[%s1 + $0x4e8] sm:$0xff]
  %v213 = vld [vmem:[%s1 + $0x4f0] sm:$0xff]
  %v214 = vld [vmem:[%s1 + $0x4f8] sm:$0xff]
  %v215 = vld [vmem:[%s1 + $0x500] sm:$0xff]
  %v216 = vld [vmem:[%s1 + $0x508] sm:$0xff]
  %v217 = vld [vmem:[%s1 + $0x510] sm:$0xff]
  %v218 = vld [vmem:[%s1 + $0x518] sm:$0xff]
  %v219 = vld [vmem:[%s1 + $0x520] sm:$0xff]
  %v220 = vld [vmem:[%s1 + $0x528] sm:$0xff]
  %v221 = vld [vmem:[%s1 + $0x530] sm:$0xff]
  %v222 = vld [vmem:[%s1 + $0x538] sm:$0xff]
  %v223 = vld [vmem:[%s1 + $0x540] sm:$0xff]
  %v224 = vld [vmem:[%s1 + $0x548] sm:$0xff]
  %v225 = vld [vmem:[%s1 + $0x550] sm:$0xff]
  %v226 = vld [vmem:[%s1 + $0x558] sm:$0xff]
  %v227 = vld [vmem:[%s1 + $0x560] sm:$0xff]
  %v228 = vld [vmem:[%s1 + $0x568] sm:$0xff]
  %v229 = vld [vmem:[%s1 + $0x570] sm:$0xff]
  %v230 = vld [vmem:[%s1 + $0x578] sm:$0xff]
  %v231 = vld [vmem:[%s1 + $0x580] sm:$0xff]
  %v232 = vld [vmem:[%s1 + $0x588] sm:$0xff]
  %v233 = vld [vmem:[%s1 + $0x590] sm:$0xff]
  %v234 = vld [vmem:[%s1 + $0x598] sm:$0xff]
  %v235 = vld [vmem:[%s1 + $0x5a0] sm:$0xff]
  %v236 = vld [vmem:[%s1 + $0x5a8] sm:$0xff]
  %v237 = vld [vmem:[%s1 + $0x5b0] sm:$0xff]
  %v238 = vld [vmem:[%s1 + $0x5b8] sm:$0xff]
  %v239 = vld [vmem:[%s1 + $0x5c0] sm:$0xff]
  %v240 = vld [vmem:[%s1 + $0x5c8] sm:$0xff]
  %v241 = vld [vmem:[%s1 + $0x5d0] sm:$0xff]
  %v242 = vld [vmem:[%s1 + $0x5d8] sm:$0xff]
  %v243 = vld [vmem:[%s1 + $0x5e0] sm:$0xff]
  %v244 = vld [vmem:[%s1 + $0x5e8] sm:$0xff]
  %v245 = vld [vmem:[%s1 + $0x5f0] sm:$0xff]
  %v246 = vld [vmem:[%s1 + $0x5f8] sm:$0xff]
  %v247 = vld [vmem:[%s1 + $0x600] sm:$0xff]
  %v248 = vld [vmem:[%s1 + $0x608] sm:$0xff]
  %v249 = vld [vmem:[%s1 + $0x610] sm:$0xff]
  %v250 = vld [vmem:[%s1 + $0x618] sm:$0xff]
  %v251 = vld [vmem:[%s1 + $0x620] sm:$0xff]
  %v252 = vld [vmem:[%s1 + $0x628] sm:$0xff]
  %v253 = vld [vmem:[%s1 + $0x630] sm:$0xff]
  %v254 = vld [vmem:[%s1 + $0x638] sm:$0xff]
  %v255 = vld [vmem:[%s1 + $0x640] sm:$0xff]
  %v256 = vld [vmem:[%s1 + $0x648] sm:$0xff]
  %v257 = vld [vmem:[%s1 + $0x650] sm:$0xff]
  %v258 = vld [vmem:[%s1 + $0x658] sm:$0xff]
  %v259 = vld [vmem:[%s1 + $0x660] sm:$0xff]
  %v260 = vld [vmem:[%s1 + $0x668] sm:$0xff]
  %v261 = vld [vmem:[%s1 + $0x670] sm:$0xff]
  %v262 = vld [vmem:[%s1 + $0x678] sm:$0xff]
  %v263 = vld [vmem:[%s1 + $0x680] sm:$0xff]
  %v264 = vld [vmem:[%s1 + $0x688] sm:$0xff]
  %v265 = vld [vmem:[%s1 + $0x690] sm:$0xff]
  %v266 = vld [vmem:[%s1 + $0x698] sm:$0xff]
  %v267 = vld [vmem:[%s1 + $0x6a0] sm:$0xff]
  %v268 = vld [vmem:[%s1 + $0x6a8] sm:$0xff]
  %v269 = vld [vmem:[%s1 + $0x6b0] sm:$0xff]
  %v270 = vld [vmem:[%s1 + $0x6b8] sm:$0xff]
  %v271 = vld [vmem:[%s1 + $0x6c0] sm:$0xff]
  %v272 = vld [vmem:[%s1 + $0x6c8] sm:$0xff]
  %v273 = vld [vmem:[%s1 + $0x6d0] sm:$0xff]
  %v274 = vld [vmem:[%s1 + $0x6d8] sm:$0xff]
  %v275 = vld [vmem:[%s1 + $0x6e0] sm:$0xff]
  %v276 = vld [vmem:[%s1 + $0x6e8] sm:$0xff]
  %v277 = vld [vmem:[%s1 + $0x6f0] sm:$0xff]
  %v278 = vld [vmem:[%s1 + $0x6f8] sm:$0xff]
  %v279 = vld [vmem:[%s1 + $0x700] sm:$0xff]
  %v280 = vld [vmem:[%s1 + $0x708] sm:$0xff]
  %v281 = vld [vmem:[%s1 + $0x710] sm:$0xff]
  %v282 = vld [vmem:[%s1 + $0x718] sm:$0xff]
  %v283 = vld [vmem:[%s1 + $0x720] sm:$0xff]
  %v284 = vld [vmem:[%s1 + $0x728] sm:$0xff]
  %v285 = vld [vmem:[%s1 + $0x730] sm:$0xff]
  %v286 = vld [vmem:[%s1 + $0x738] sm:$0xff]
  %v287 = vld [vmem:[%s1 + $0x740] sm:$0xff]
  %v288 = vld [vmem:[%s1 + $0x748] sm:$0xff]
  %v289 = vld [vmem:[%s1 + $0x750] sm:$0xff]
  %v290 = vld [vmem:[%s1 + $0x758] sm:$0xff]
  %v291 = vld [vmem:[%s1 + $0x760] sm:$0xff]
  %v292 = vld [vmem:[%s1 + $0x768] sm:$0xff]
  %v293 = vld [vmem:[%s1 + $0x770] sm:$0xff]
  %v294 = vld [vmem:[%s1 + $0x778] sm:$0xff]
  %v295 = vld [vmem:[%s1 + $0x780] sm:$0xff]
  %v296 = vld [vmem:[%s1 + $0x788] sm:$0xff]
  %v297 = vld [vmem:[%s1 + $0x790] sm:$0xff]
  %v298 = vld [vmem:[%s1 + $0x798] sm:$0xff]
  %v299 = vld [vmem:[%s1 + $0x7a0] sm:$0xff]
  %v300 = vld [vmem:[%s1 + $0x7a8] sm:$0xff]
  %v301 = vld [vmem:[%s1 + $0x7b0] sm:$0xff]
  %v302 = vld [vmem:[%s1 + $0x7b8] sm:$0xff]
  %v303 = vld [vmem:[%s1 + $0x7c0] sm:$0xff]
  %v304 = vld [vmem:[%s1 + $0x7c8] sm:$0xff]
  %v305 = vld [vmem:[%s1 + $0x7d0] sm:$0xff]
  %v306 = vld [vmem:[%s1 + $0x7d8] sm:$0xff]
  %v307 = vld [vmem:[%s1 + $0x7e0] sm:$0xff]
  %v308 = vld [vmem:[%s1 + $0x7e8] sm:$0xff]
  %v309 = vld [vmem:[%s1 + $0x7f0] sm:$0xff]
  %v310 = vld [vmem:[%s1 + $0x7f8] sm:$0xff]
  %v311 = vld [vmem:[%s1 + $0x800] sm:$0xff]
  %v312 = vld [vmem:[%s1 + $0x808] sm:$0xff]
  %v313 = vld [vmem:[%s1 + $0x810] sm:$0xff]
  %v314 = vld [vmem:[%s1 + $0x818] sm:$0xff]
  %v315 = vld [vmem:[%s1 + $0x820] sm:$0xff]
  %v316 = vld [vmem:[%s1 + $0x828] sm:$0xff]
  %v317 = vld [vmem:[%s1 + $0x830] sm:$0xff]
  %v318 = vld [vmem:[%s1 + $0x838] sm:$0xff]
  %v319 = vld [vmem:[%s1 + $0x840] sm:$0xff]
  %v320 = vld [vmem:[%s1 + $0x848] sm:$0xff]
  %v321 = vld [vmem:[%s1 + $0x850] sm:$0xff]
  %v322 = vld [vmem:[%s1 + $0x858] sm:$0xff]
  %v323 = vld [vmem:[%s1 + $0x860] sm:$0xff]
  %v324 = vld [vmem:[%s1 + $0x868] sm:$0xff]
  %v325 = vld [vmem:[%s1 + $0x870] sm:$0xff]
  %v326 = vld [vmem:[%s1 + $0x878] sm:$0xff]
  %v327 = vld [vmem:[%s1 + $0x880] sm:$0xff]
  %v328 = vld [vmem:[%s1 + $0x888] sm:$0xff]
  %v329 = vld [vmem:[%s1 + $0x890] sm:$0xff]
  %v330 = vld [vmem:[%s1 + $0x898] sm:$0xff]
  %v331 = vld [vmem:[%s1 + $0x8a0] sm:$0xff]
  %v332 = vld [vmem:[%s1 + $0x8a8] sm:$0xff]
  %v333 = vld [vmem:[%s1 + $0x8b0] sm:$0xff]
  %v334 = vld [vmem:[%s1 + $0x8b8] sm:$0xff]
  %v335 = vld [vmem:[%s1 + $0x8c0] sm:$0xff]
  %v336 = vld [vmem:[%s1 + $0x8c8] sm:$0xff]
  %v337 = vld [vmem:[%s1 + $0x8d0] sm:$0xff]
  %v338 = vld [vmem:[%s1 + $0x8d8] sm:$0xff]
  %v339 = vld [vmem:[%s1 + $0x8e0] sm:$0xff]
  %v340 = vld [vmem:[%s1 + $0x8e8] sm:$0xff]
  %v341 = vld [vmem:[%s1 + $0x8f0] sm:$0xff]
  %v342 = vld [vmem:[%s1 + $0x8f8] sm:$0xff]
  %v343 = vld [vmem:[%s1 + $0x900] sm:$0xff]
  %v344 = vld [vmem:[%s1 + $0x908] sm:$0xff]
  %v345 = vld [vmem:[%s1 + $0x910] sm:$0xff]
  %v346 = vld [vmem:[%s1 + $0x918] sm:$0xff]
  %v347 = vld [vmem:[%s1 + $0x920] sm:$0xff]
  %v348 = vld [vmem:[%s1 + $0x928] sm:$0xff]
  %v349 = vld [vmem:[%s1 + $0x930] sm:$0xff]
  %v350 = vld [vmem:[%s1 + $0x938] sm:$0xff]
  %v351 = vld [vmem:[%s1 + $0x940] sm:$0xff]
  %v352 = vld [vmem:[%s1 + $0x948] sm:$0xff]
  %v353 = vld [vmem:[%s1 + $0x950] sm:$0xff]
  %v354 = vld [vmem:[%s1 + $0x958] sm:$0xff]
  %v355 = vld [vmem:[%s1 + $0x960] sm:$0xff]
  %v356 = vld [vmem:[%s1 + $0x968] sm:$0xff]
  %v357 = vld [vmem:[%s1 + $0x970] sm:$0xff]
  %v358 = vld [vmem:[%s1 + $0x978] sm:$0xff]
  %v359 = vld [vmem:[%s1 + $0x980] sm:$0xff]
  %v360 = vld [vmem:[%s1 + $0x988] sm:$0xff]
  %v361 = vld [vmem:[%s1 + $0x990] sm:$0xff]
  %v362 = vld [vmem:[%s1 + $0x998] sm:$0xff]
  %v363 = vld [vmem:[%s1 + $0x9a0] sm:$0xff]
  %v364 = vld [vmem:[%s1 + $0x9a8] sm:$0xff]
  %v365 = vld [vmem:[%s1 + $0x9b0] sm:$0xff]
  %v366 = vld [vmem:[%s1 + $0x9b8] sm:$0xff]
  %v367 = vld [vmem:[%s1 + $0x9c0] sm:$0xff]
  %v368 = vld [vmem:[%s1 + $0x9c8] sm:$0xff]
  %v369 = vld [vmem:[%s1 + $0x9d0] sm:$0xff]
  %v370 = vld [vmem:[%s1 + $0x9d8] sm:$0xff]
  %v371 = vld [vmem:[%s1 + $0x9e0] sm:$0xff]
  %v372 = vld [vmem:[%s1 + $0x9e8] sm:$0xff]
  %v373 = vld [vmem:[%s1 + $0x9f0] sm:$0xff]
  %v374 = vld [vmem:[%s1 + $0x9f8] sm:$0xff]
  %v375 = vld [vmem:[%s1 + $0xa00] sm:$0xff]
  %v376 = vld [vmem:[%s1 + $0xa08] sm:$0xff]
  %v377 = vld [vmem:[%s1 + $0xa10] sm:$0xff]
  %v378 = vld [vmem:[%s1 + $0xa18] sm:$0xff]
  %v379 = vld [vmem:[%s1 + $0xa20] sm:$0xff]
  %v380 = vld [vmem:[%s1 + $0xa28] sm:$0xff]
  %v381 = vld [vmem:[%s1 + $0xa30] sm:$0xff]
  %v382 = vld [vmem:[%s1 + $0xa38] sm:$0xff]
  %v383 = vld [vmem:[%s1 + $0xa40] sm:$0xff]
  %v384 = vld [vmem:[%s1 + $0xa48] sm:$0xff]
  %v385 = vld [vmem:[%s1 + $0xa50] sm:$0xff]
  %v386 = vld [vmem:[%s1 + $0xa58] sm:$0xff]
  %v387 = vld [vmem:[%s1 + $0xa60] sm:$0xff]
  %v388 = vld [vmem:[%s1 + $0xa68] sm:$0xff]
  %v389 = vld [vmem:[%s1 + $0xa70] sm:$0xff]
  %v390 = vld [vmem:[%s1 + $0xa78] sm:$0xff]
  %v391 = vld [vmem:[%s1 + $0xa80] sm:$0xff]
  %v392 = vld [vmem:[%s1 + $0xa88] sm:$0xff]
  %v393 = vld [vmem:[%s1 + $0xa90] sm:$0xff]
  %v394 = vld [vmem:[%s1 + $0xa98] sm:$0xff]
  %v395 = vld [vmem:[%s1 + $0xaa0] sm:$0xff]
  %v396 = vld [vmem:[%s1 + $0xaa8] sm:$0xff]
  %v397 = vld [vmem:[%s1 + $0xab0] sm:$0xff]
  %v398 = vld [vmem:[%s1 + $0xab8] sm:$0xff]
  %v399 = vld [vmem:[%s1 + $0xac0] sm:$0xff]
  %v400 = vld [vmem:[%s1 + $0xac8] sm:$0xff]
  %v401 = vld [vmem:[%s1 + $0xad0] sm:$0xff]
  %v402 = vld [vmem:[%s1 + $0xad8] sm:$0xff]
  %v403 = vld [vmem:[%s1 + $0xae0] sm:$0xff]
  %v404 = vld [vmem:[%s1 + $0xae8] sm:$0xff]
  %v405 = vld [vmem:[%s1 + $0xaf0] sm:$0xff]
  %v406 = vld [vmem:[%s1 + $0xaf8] sm:$0xff]
  %v407 = vld [vmem:[%s1 + $0xb00] sm:$0xff]
  %v408 = vld [vmem:[%s1 + $0xb08] sm:$0xff]
  %v409 = vld [vmem:[%s1 + $0xb10] sm:$0xff]
  %v410 = vld [vmem:[%s1 + $0xb18] sm:$0xff]
  %v411 = vld [vmem:[%s1 + $0xb20] sm:$0xff]
  %v412 = vld [vmem:[%s1 + $0xb28] sm:$0xff]
  %v413 = vld [vmem:[%s1 + $0xb30] sm:$0xff]
  %v414 = vld [vmem:[%s1 + $0xb38] sm:$0xff]
  %v415 = vld [vmem:[%s1 + $0xb40] sm:$0xff]
  %v416 = vld [vmem:[%s1 + $0xb48] sm:$0xff]
  %v417 = vld [vmem:[%s1 + $0xb50] sm:$0xff]
  %v418 = vld [vmem:[%s1 + $0xb58] sm:$0xff]
  %v419 = vld [vmem:[%s1 + $0xb60] sm:$0xff]
  %v420 = vld [vmem:[%s1 + $0xb68] sm:$0xff]
  %v421 = vld [vmem:[%s1 + $0xb70] sm:$0xff]
  %v422 = vld [vmem:[%s1 + $0xb78] sm:$0xff]
  %v423 = vld [vmem:[%s1 + $0xb80] sm:$0xff]
  %v424 = vld [vmem:[%s1 + $0xb88] sm:$0xff]
  %v425 = vld [vmem:[%s1 + $0xb90] sm:$0xff]
  %v426 = vld [vmem:[%s1 + $0xb98] sm:$0xff]
  %v427 = vld [vmem:[%s1 + $0xba0] sm:$0xff]
  %v428 = vld [vmem:[%s1 + $0xba8] sm:$0xff]
  %v429 = vld [vmem:[%s1 + $0xbb0] sm:$0xff]
  %v430 = vld [vmem:[%s1 + $0xbb8] sm:$0xff]
  %v431 = vld [vmem:[%s1 + $0xbc0] sm:$0xff]
  %v432 = vld [vmem:[%s1 + $0xbc8] sm:$0xff]
  %v433 = vld [vmem:[%s1 + $0xbd0] sm:$0xff]
  %v434 = vld [vmem:[%s1 + $0xbd8] sm:$0xff]
  %v435 = vld [vmem:[%s1 + $0xbe0] sm:$0xff]
  %v436 = vld [vmem:[%s1 + $0xbe8] sm:$0xff]
  %v437 = vld [vmem:[%s1 + $0xbf0] sm:$0xff]
  %v438 = vld [vmem:[%s1 + $0xbf8] sm:$0xff]
  %v439 = vld [vmem:[%s1 + $0xc00] sm:$0xff]
  %v440 = vld [vmem:[%s1 + $0xc08] sm:$0xff]
  %v441 = vld [vmem:[%s1 + $0xc10] sm:$0xff]
  %v442 = vld [vmem:[%s1 + $0xc18] sm:$0xff]
  %v443 = vld [vmem:[%s1 + $0xc20] sm:$0xff]
  %v444 = vld [vmem:[%s1 + $0xc28] sm:$0xff]
  %v445 = vld [vmem:[%s1 + $0xc30] sm:$0xff]
  %v446 = vld [vmem:[%s1 + $0xc38] sm:$0xff]
  %v447 = vld [vmem:[%s1 + $0xc40] sm:$0xff]
  %v448 = vld [vmem:[%s1 + $0xc48] sm:$0xff]
  %v449 = vld [vmem:[%s1 + $0xc50] sm:$0xff]
  %v450 = vld [vmem:[%s1 + $0xc58] sm:$0xff]
  %v451 = vld [vmem:[%s1 + $0xc60] sm:$0xff]
  %v452 = vld [vmem:[%s1 + $0xc68] sm:$0xff]
  %v453 = vld [vmem:[%s1 + $0xc70] sm:$0xff]
  %v454 = vld [vmem:[%s1 + $0xc78] sm:$0xff]
  %v455 = vld [vmem:[%s1 + $0xc80] sm:$0xff]
  %v456 = vld [vmem:[%s1 + $0xc88] sm:$0xff]
  %v457 = vld [vmem:[%s1 + $0xc90] sm:$0xff]
  %v458 = vld [vmem:[%s1 + $0xc98] sm:$0xff]
  %v459 = vld [vmem:[%s1 + $0xca0] sm:$0xff]
  %v460 = vld [vmem:[%s1 + $0xca8] sm:$0xff]
  %v461 = vld [vmem:[%s1 + $0xcb0] sm:$0xff]
  %v462 = vld [vmem:[%s1 + $0xcb8] sm:$0xff]
  %v463 = vld [vmem:[%s1 + $0xcc0] sm:$0xff]
  %v464 = vld [vmem:[%s1 + $0xcc8] sm:$0xff]
  %v465 = vld [vmem:[%s1 + $0xcd0] sm:$0xff]
  %v466 = vld [vmem:[%s1 + $0xcd8] sm:$0xff]
  %v467 = vld [vmem:[%s1 + $0xce0] sm:$0xff]
  %v468 = vld [vmem:[%s1 + $0xce8] sm:$0xff]
  %v469 = vld [vmem:[%s1 + $0xcf0] sm:$0xff]
  %v470 = vld [vmem:[%s1 + $0xcf8] sm:$0xff]
  %v471 = vld [vmem:[%s1 + $0xd00] sm:$0xff]
  %v472 = vld [vmem:[%s1 + $0xd08] sm:$0xff]
  %v473 = vld [vmem:[%s1 + $0xd10] sm:$0xff]
  %v474 = vld [vmem:[%s1 + $0xd18] sm:$0xff]
  %v475 = vld [vmem:[%s1 + $0xd20] sm:$0xff]
  %v476 = vld [vmem:[%s1 + $0xd28] sm:$0xff]
  %v477 = vld [vmem:[%s1 + $0xd30] sm:$0xff]
  %v478 = vld [vmem:[%s1 + $0xd38] sm:$0xff]
  %v479 = vld [vmem:[%s1 + $0xd40] sm:$0xff]
  %v480 = vld [vmem:[%s1 + $0xd48] sm:$0xff]
  %v481 = vld [vmem:[%s1 + $0xd50] sm:$0xff]
  %v482 = vld [vmem:[%s1 + $0xd58] sm:$0xff]
  %v483 = vld [vmem:[%s1 + $0xd60] sm:$0xff]
  %v484 = vld [vmem:[%s1 + $0xd68] sm:$0xff]
  %v485 = vld [vmem:[%s1 + $0xd70] sm:$0xff]
  %v486 = vld [vmem:[%s1 + $0xd78] sm:$0xff]
  %v487 = vld [vmem:[%s1 + $0xd80] sm:$0xff]
  %v488 = vld [vmem:[%s1 + $0xd88] sm:$0xff]
  %v489 = vld [vmem:[%s1 + $0xd90] sm:$0xff]
  %v490 = vld [vmem:[%s1 + $0xd98] sm:$0xff]
  %v491 = vld [vmem:[%s1 + $0xda0] sm:$0xff]
  %v492 = vld [vmem:[%s1 + $0xda8] sm:$0xff]
  %v493 = vld [vmem:[%s1 + $0xdb0] sm:$0xff]
  %v494 = vld [vmem:[%s1 + $0xdb8] sm:$0xff]
  %v495 = vld [vmem:[%s1 + $0xdc0] sm:$0xff]
  %v496 = vld [vmem:[%s1 + $0xdc8] sm:$0xff]
  %v497 = vld [vmem:[%s1 + $0xdd0] sm:$0xff]
  %v498 = vld [vmem:[%s1 + $0xdd8] sm:$0xff]
  %v499 = vld [vmem:[%s1 + $0xde0] sm:$0xff]
  %v500 = vld [vmem:[%s1 + $0xde8] sm:$0xff]
  %v501 = vld [vmem:[%s1 + $0xdf0] sm:$0xff]
  %v502 = vld [vmem:[%s1 + $0xdf8] sm:$0xff]
  %v503 = vld [vmem:[%s1 + $0xe00] sm:$0xff]
  %v504 = vld [vmem:[%s1 + $0xe08] sm:$0xff]
  %v505 = vld [vmem:[%s1 + $0xe10] sm:$0xff]
  %v506 = vld [vmem:[%s1 + $0xe18] sm:$0xff]
  %v507 = vld [vmem:[%s1 + $0xe20] sm:$0xff]
  %v508 = vld [vmem:[%s1 + $0xe28] sm:$0xff]
  %v509 = vld [vmem:[%s1 + $0xe30] sm:$0xff]
  %v510 = vld [vmem:[%s1 + $0xe38] sm:$0xff]
  %v511 = vld [vmem:[%s1 + $0xe40] sm:$0xff]
  %v512 = vld [vmem:[%s1 + $0xe48] sm:$0xff]
  %v513 = vld [vmem:[%s1 + $0xe50] sm:$0xff]
  %v514 = vld [vmem:[%s1 + $0xe58] sm:$0xff]
  %v515 = vld [vmem:[%s1 + $0xe60] sm:$0xff]
  %v516 = vld [vmem:[%s1 + $0xe68] sm:$0xff]
  %v517 = vld [vmem:[%s1 + $0xe70] sm:$0xff]
  %v518 = vld [vmem:[%s1 + $0xe78] sm:$0xff]
  %v519 = vld [vmem:[%s1 + $0xe80] sm:$0xff]
  %v520 = vld [vmem:[%s1 + $0xe88] sm:$0xff]
  %v521 = vld [vmem:[%s1 + $0xe90] sm:$0xff]
  %v522 = vld [vmem:[%s1 + $0xe98] sm:$0xff]
  %v523 = vld [vmem:[%s1 + $0xea0] sm:$0xff]
  %v524 = vld [vmem:[%s1 + $0xea8] sm:$0xff]
  %v525 = vld [vmem:[%s1 + $0xeb0] sm:$0xff]
  %v526 = vld [vmem:[%s1 + $0xeb8] sm:$0xff]
  %v527 = vld [vmem:[%s1 + $0xec0] sm:$0xff]
  %v528 = vld [vmem:[%s1 + $0xec8] sm:$0xff]
  %v529 = vld [vmem:[%s1 + $0xed0] sm:$0xff]
  %v530 = vld [vmem:[%s1 + $0xed8] sm:$0xff]
  %v531 = vld [vmem:[%s1 + $0xee0] sm:$0xff]
  %v532 = vld [vmem:[%s1 + $0xee8] sm:$0xff]
  %v533 = vld [vmem:[%s1 + $0xef0] sm:$0xff]
  %v534 = vld [vmem:[%s1 + $0xef8] sm:$0xff]
  %v535 = vld [vmem:[%s1 + $0xf00] sm:$0xff]
  %v536 = vld [vmem:[%s1 + $0xf08] sm:$0xff]
  %v537 = vld [vmem:[%s1 + $0xf10] sm:$0xff]
  %v538 = vld [vmem:[%s1 + $0xf18] sm:$0xff]
  %v539 = vld [vmem:[%s1 + $0xf20] sm:$0xff]
  %v540 = vld [vmem:[%s1 + $0xf28] sm:$0xff]
  %v541 = vld [vmem:[%s1 + $0xf30] sm:$0xff]
  %v542 = vld [vmem:[%s1 + $0xf38] sm:$0xff]
  %v543 = vld [vmem:[%s1 + $0xf40] sm:$0xff]
  %v544 = vld [vmem:[%s1 + $0xf48] sm:$0xff]
  %v545 = vld [vmem:[%s1 + $0xf50] sm:$0xff]
  %v546 = vld [vmem:[%s1 + $0xf58] sm:$0xff]
  %v547 = vld [vmem:[%s1 + $0xf60] sm:$0xff]
  %v548 = vld [vmem:[%s1 + $0xf68] sm:$0xff]
  %v549 = vld [vmem:[%s1 + $0xf70] sm:$0xff]
  %v550 = vld [vmem:[%s1 + $0xf78] sm:$0xff]
  %v551 = vld [vmem:[%s1 + $0xf80] sm:$0xff]
  %v552 = vld [vmem:[%s1 + $0xf88] sm:$0xff]
  %v553 = vld [vmem:[%s1 + $0xf90] sm:$0xff]
  %v554 = vld [vmem:[%s1 + $0xf98] sm:$0xff]
  %v555 = vld [vmem:[%s1 + $0xfa0] sm:$0xff]
  %v556 = vld [vmem:[%s1 + $0xfa8] sm:$0xff]
  %v557 = vld [vmem:[%s1 + $0xfb0] sm:$0xff]
  %v558 = vld [vmem:[%s1 + $0xfb8] sm:$0xff]
  %v559 = vld [vmem:[%s1 + $0xfc0] sm:$0xff]
  %v560 = vld [vmem:[%s1 + $0xfc8] sm:$0xff]
  %v561 = vld [vmem:[%s1 + $0xfd0] sm:$0xff]
  %v562 = vld [vmem:[%s1 + $0xfd8] sm:$0xff]
  %v563 = vld [vmem:[%s1 + $0xfe0] sm:$0xff]
  %v564 = vld [vmem:[%s1 + $0xfe8] sm:$0xff]
  %v565 = vld [vmem:[%s1 + $0xff0] sm:$0xff]
  %v566 = vld [vmem:[%s1 + $0xff8] sm:$0xff]
  %v567 = vld [vmem:[%s2] sm:$0xf]
  %v569 = vlaneseq
  %v570 = vshrl.u32 %v569, 7
  %v571 = vsub.s32 0, %v570
  %v572 = vrot.slane %v567, %v571
  %v573 = vlaneseq
  %v574 = vshrl.u32 %v573, 7
  %v575 = vsub.s32 1, %v574
  %v576 = vrot.slane %v567, %v575
  %v577 = vlaneseq
  %v578 = vshrl.u32 %v577, 7
  %v579 = vsub.s32 2, %v578
  %v580 = vrot.slane %v567, %v579
  %v581 = vlaneseq
  %v582 = vshrl.u32 %v581, 7
  %v583 = vsub.s32 3, %v582
  %v584 = vrot.slane %v567, %v583
  %v621 = vunpack.c.l.b16 %v23
  %v622 = vunpack.c.h.b16 %v23
  %v623 = vunpack.c.l.b16 %v24
  %v624 = vunpack.c.h.b16 %v24
  %v625 = vunpack.c.l.b16 %v25
  %v626 = vunpack.c.h.b16 %v25
  %v627 = vunpack.c.l.b16 %v26
  %v628 = vunpack.c.h.b16 %v26
  %v629 = vunpack.c.l.b16 %v27
  %v630 = vunpack.c.h.b16 %v27
  %v631 = vunpack.c.l.b16 %v28
  %v632 = vunpack.c.h.b16 %v28
  %v633 = vunpack.c.l.b16 %v29
  %v634 = vunpack.c.h.b16 %v29
  %v635 = vunpack.c.l.b16 %v30
  %v636 = vunpack.c.h.b16 %v30
  %v637 = vunpack.c.l.b16 %v31
  %v638 = vunpack.c.h.b16 %v31
  %v639 = vunpack.c.l.b16 %v32
  %v640 = vunpack.c.h.b16 %v32
  %v641 = vunpack.c.l.b16 %v33
  %v642 = vunpack.c.h.b16 %v33
  %v643 = vunpack.c.l.b16 %v34
  %v644 = vunpack.c.h.b16 %v34
  %v645 = vunpack.c.l.b16 %v35
  %v646 = vunpack.c.h.b16 %v35
  %v647 = vunpack.c.l.b16 %v36
  %v648 = vunpack.c.h.b16 %v36
  %v649 = vunpack.c.l.b16 %v37
  %v650 = vunpack.c.h.b16 %v37
  %v651 = vunpack.c.l.b16 %v38
  %v652 = vunpack.c.h.b16 %v38
  %v653 = vunpack.c.l.b16 %v39
  %v654 = vunpack.c.h.b16 %v39
  %v655 = vunpack.c.l.b16 %v40
  %v656 = vunpack.c.h.b16 %v40
  %v657 = vunpack.c.l.b16 %v41
  %v658 = vunpack.c.h.b16 %v41
  %v659 = vunpack.c.l.b16 %v42
  %v660 = vunpack.c.h.b16 %v42
  %v661 = vunpack.c.l.b16 %v43
  %v662 = vunpack.c.h.b16 %v43
  %v663 = vunpack.c.l.b16 %v44
  %v664 = vunpack.c.h.b16 %v44
  %v665 = vunpack.c.l.b16 %v45
  %v666 = vunpack.c.h.b16 %v45
  %v667 = vunpack.c.l.b16 %v46
  %v668 = vunpack.c.h.b16 %v46
  %v669 = vunpack.c.l.b16 %v47
  %v670 = vunpack.c.h.b16 %v47
  %v671 = vunpack.c.l.b16 %v48
  %v672 = vunpack.c.h.b16 %v48
  %v673 = vunpack.c.l.b16 %v49
  %v674 = vunpack.c.h.b16 %v49
  %v675 = vunpack.c.l.b16 %v50
  %v676 = vunpack.c.h.b16 %v50
  %v677 = vunpack.c.l.b16 %v51
  %v678 = vunpack.c.h.b16 %v51
  %v679 = vunpack.c.l.b16 %v52
  %v680 = vunpack.c.h.b16 %v52
  %v681 = vunpack.c.l.b16 %v53
  %v682 = vunpack.c.h.b16 %v53
  %v683 = vunpack.c.l.b16 %v54
  %v684 = vunpack.c.h.b16 %v54
  %v685 = vpack.c.b16 %v637, %v621
  %v686 = vpack.c.b16 %v638, %v622
  %v687 = vpack.c.b16 %v639, %v623
  %v688 = vpack.c.b16 %v640, %v624
  %v689 = vpack.c.b16 %v641, %v625
  %v690 = vpack.c.b16 %v642, %v626
  %v691 = vpack.c.b16 %v643, %v627
  %v692 = vpack.c.b16 %v644, %v628
  %v693 = vpack.c.b16 %v645, %v629
  %v694 = vpack.c.b16 %v646, %v630
  %v695 = vpack.c.b16 %v647, %v631
  %v696 = vpack.c.b16 %v648, %v632
  %v697 = vpack.c.b16 %v649, %v633
  %v698 = vpack.c.b16 %v650, %v634
  %v699 = vpack.c.b16 %v651, %v635
  %v700 = vpack.c.b16 %v652, %v636
  %v701 = vpack.c.b16 %v669, %v653
  %v702 = vpack.c.b16 %v670, %v654
  %v703 = vpack.c.b16 %v671, %v655
  %v704 = vpack.c.b16 %v672, %v656
  %v705 = vpack.c.b16 %v673, %v657
  %v706 = vpack.c.b16 %v674, %v658
  %v707 = vpack.c.b16 %v675, %v659
  %v708 = vpack.c.b16 %v676, %v660
  %v709 = vpack.c.b16 %v677, %v661
  %v710 = vpack.c.b16 %v678, %v662
  %v711 = vpack.c.b16 %v679, %v663
  %v712 = vpack.c.b16 %v680, %v664
  %v713 = vpack.c.b16 %v681, %v665
  %v714 = vpack.c.b16 %v682, %v666
  %v715 = vpack.c.b16 %v683, %v667
  %v716 = vpack.c.b16 %v684, %v668
  %v1261 = vunpack.c.l.b16 %v55
  %v1262 = vunpack.c.h.b16 %v55
  %v1263 = vunpack.c.l.b16 %v56
  %v1264 = vunpack.c.h.b16 %v56
  %v1265 = vunpack.c.l.b16 %v57
  %v1266 = vunpack.c.h.b16 %v57
  %v1267 = vunpack.c.l.b16 %v58
  %v1268 = vunpack.c.h.b16 %v58
  %v1269 = vunpack.c.l.b16 %v59
  %v1270 = vunpack.c.h.b16 %v59
  %v1271 = vunpack.c.l.b16 %v60
  %v1272 = vunpack.c.h.b16 %v60
  %v1273 = vunpack.c.l.b16 %v61
  %v1274 = vunpack.c.h.b16 %v61
  %v1275 = vunpack.c.l.b16 %v62
  %v1276 = vunpack.c.h.b16 %v62
  %v1277 = vunpack.c.l.b16 %v63
  %v1278 = vunpack.c.h.b16 %v63
  %v1279 = vunpack.c.l.b16 %v64
  %v1280 = vunpack.c.h.b16 %v64
  %v1281 = vunpack.c.l.b16 %v65
  %v1282 = vunpack.c.h.b16 %v65
  %v1283 = vunpack.c.l.b16 %v66
  %v1284 = vunpack.c.h.b16 %v66
  %v1285 = vunpack.c.l.b16 %v67
  %v1286 = vunpack.c.h.b16 %v67
  %v1287 = vunpack.c.l.b16 %v68
  %v1288 = vunpack.c.h.b16 %v68
  %v1289 = vunpack.c.l.b16 %v69
  %v1290 = vunpack.c.h.b16 %v69
  %v1291 = vunpack.c.l.b16 %v70
  %v1292 = vunpack.c.h.b16 %v70
  %v1293 = vunpack.c.l.b16 %v71
  %v1294 = vunpack.c.h.b16 %v71
  %v1295 = vunpack.c.l.b16 %v72
  %v1296 = vunpack.c.h.b16 %v72
  %v1297 = vunpack.c.l.b16 %v73
  %v1298 = vunpack.c.h.b16 %v73
  %v1299 = vunpack.c.l.b16 %v74
  %v1300 = vunpack.c.h.b16 %v74
  %v1301 = vunpack.c.l.b16 %v75
  %v1302 = vunpack.c.h.b16 %v75
  %v1303 = vunpack.c.l.b16 %v76
  %v1304 = vunpack.c.h.b16 %v76
  %v1305 = vunpack.c.l.b16 %v77
  %v1306 = vunpack.c.h.b16 %v77
  %v1307 = vunpack.c.l.b16 %v78
  %v1308 = vunpack.c.h.b16 %v78
  %v1309 = vunpack.c.l.b16 %v79
  %v1310 = vunpack.c.h.b16 %v79
  %v1311 = vunpack.c.l.b16 %v80
  %v1312 = vunpack.c.h.b16 %v80
  %v1313 = vunpack.c.l.b16 %v81
  %v1314 = vunpack.c.h.b16 %v81
  %v1315 = vunpack.c.l.b16 %v82
  %v1316 = vunpack.c.h.b16 %v82
  %v1317 = vunpack.c.l.b16 %v83
  %v1318 = vunpack.c.h.b16 %v83
  %v1319 = vunpack.c.l.b16 %v84
  %v1320 = vunpack.c.h.b16 %v84
  %v1321 = vunpack.c.l.b16 %v85
  %v1322 = vunpack.c.h.b16 %v85
  %v1323 = vunpack.c.l.b16 %v86
  %v1324 = vunpack.c.h.b16 %v86
  %v1325 = vunpack.c.l.b16 %v87
  %v1326 = vunpack.c.h.b16 %v87
  %v1327 = vunpack.c.l.b16 %v88
  %v1328 = vunpack.c.h.b16 %v88
  %v1329 = vunpack.c.l.b16 %v89
  %v1330 = vunpack.c.h.b16 %v89
  %v1331 = vunpack.c.l.b16 %v90
  %v1332 = vunpack.c.h.b16 %v90
  %v1333 = vunpack.c.l.b16 %v91
  %v1334 = vunpack.c.h.b16 %v91
  %v1335 = vunpack.c.l.b16 %v92
  %v1336 = vunpack.c.h.b16 %v92
  %v1337 = vunpack.c.l.b16 %v93
  %v1338 = vunpack.c.h.b16 %v93
  %v1339 = vunpack.c.l.b16 %v94
  %v1340 = vunpack.c.h.b16 %v94
  %v1341 = vunpack.c.l.b16 %v95
  %v1342 = vunpack.c.h.b16 %v95
  %v1343 = vunpack.c.l.b16 %v96
  %v1344 = vunpack.c.h.b16 %v96
  %v1345 = vunpack.c.l.b16 %v97
  %v1346 = vunpack.c.h.b16 %v97
  %v1347 = vunpack.c.l.b16 %v98
  %v1348 = vunpack.c.h.b16 %v98
  %v1349 = vunpack.c.l.b16 %v99
  %v1350 = vunpack.c.h.b16 %v99
  %v1351 = vunpack.c.l.b16 %v100
  %v1352 = vunpack.c.h.b16 %v100
  %v1353 = vunpack.c.l.b16 %v101
  %v1354 = vunpack.c.h.b16 %v101
  %v1355 = vunpack.c.l.b16 %v102
  %v1356 = vunpack.c.h.b16 %v102
  %v1357 = vunpack.c.l.b16 %v103
  %v1358 = vunpack.c.h.b16 %v103
  %v1359 = vunpack.c.l.b16 %v104
  %v1360 = vunpack.c.h.b16 %v104
  %v1361 = vunpack.c.l.b16 %v105
  %v1362 = vunpack.c.h.b16 %v105
  %v1363 = vunpack.c.l.b16 %v106
  %v1364 = vunpack.c.h.b16 %v106
  %v1365 = vunpack.c.l.b16 %v107
  %v1366 = vunpack.c.h.b16 %v107
  %v1367 = vunpack.c.l.b16 %v108
  %v1368 = vunpack.c.h.b16 %v108
  %v1369 = vunpack.c.l.b16 %v109
  %v1370 = vunpack.c.h.b16 %v109
  %v1371 = vunpack.c.l.b16 %v110
  %v1372 = vunpack.c.h.b16 %v110
  %v1373 = vunpack.c.l.b16 %v111
  %v1374 = vunpack.c.h.b16 %v111
  %v1375 = vunpack.c.l.b16 %v112
  %v1376 = vunpack.c.h.b16 %v112
  %v1377 = vunpack.c.l.b16 %v113
  %v1378 = vunpack.c.h.b16 %v113
  %v1379 = vunpack.c.l.b16 %v114
  %v1380 = vunpack.c.h.b16 %v114
  %v1381 = vunpack.c.l.b16 %v115
  %v1382 = vunpack.c.h.b16 %v115
  %v1383 = vunpack.c.l.b16 %v116
  %v1384 = vunpack.c.h.b16 %v116
  %v1385 = vunpack.c.l.b16 %v117
  %v1386 = vunpack.c.h.b16 %v117
  %v1387 = vunpack.c.l.b16 %v118
  %v1388 = vunpack.c.h.b16 %v118
  %v1389 = vunpack.c.l.b16 %v119
  %v1390 = vunpack.c.h.b16 %v119
  %v1391 = vunpack.c.l.b16 %v120
  %v1392 = vunpack.c.h.b16 %v120
  %v1393 = vunpack.c.l.b16 %v121
  %v1394 = vunpack.c.h.b16 %v121
  %v1395 = vunpack.c.l.b16 %v122
  %v1396 = vunpack.c.h.b16 %v122
  %v1397 = vunpack.c.l.b16 %v123
  %v1398 = vunpack.c.h.b16 %v123
  %v1399 = vunpack.c.l.b16 %v124
  %v1400 = vunpack.c.h.b16 %v124
  %v1401 = vunpack.c.l.b16 %v125
  %v1402 = vunpack.c.h.b16 %v125
  %v1403 = vunpack.c.l.b16 %v126
  %v1404 = vunpack.c.h.b16 %v126
  %v1405 = vunpack.c.l.b16 %v127
  %v1406 = vunpack.c.h.b16 %v127
  %v1407 = vunpack.c.l.b16 %v128
  %v1408 = vunpack.c.h.b16 %v128
  %v1409 = vunpack.c.l.b16 %v129
  %v1410 = vunpack.c.h.b16 %v129
  %v1411 = vunpack.c.l.b16 %v130
  %v1412 = vunpack.c.h.b16 %v130
  %v1413 = vunpack.c.l.b16 %v131
  %v1414 = vunpack.c.h.b16 %v131
  %v1415 = vunpack.c.l.b16 %v132
  %v1416 = vunpack.c.h.b16 %v132
  %v1417 = vunpack.c.l.b16 %v133
  %v1418 = vunpack.c.h.b16 %v133
  %v1419 = vunpack.c.l.b16 %v134
  %v1420 = vunpack.c.h.b16 %v134
  %v1421 = vunpack.c.l.b16 %v135
  %v1422 = vunpack.c.h.b16 %v135
  %v1423 = vunpack.c.l.b16 %v136
  %v1424 = vunpack.c.h.b16 %v136
  %v1425 = vunpack.c.l.b16 %v137
  %v1426 = vunpack.c.h.b16 %v137
  %v1427 = vunpack.c.l.b16 %v138
  %v1428 = vunpack.c.h.b16 %v138
  %v1429 = vunpack.c.l.b16 %v139
  %v1430 = vunpack.c.h.b16 %v139
  %v1431 = vunpack.c.l.b16 %v140
  %v1432 = vunpack.c.h.b16 %v140
  %v1433 = vunpack.c.l.b16 %v141
  %v1434 = vunpack.c.h.b16 %v141
  %v1435 = vunpack.c.l.b16 %v142
  %v1436 = vunpack.c.h.b16 %v142
  %v1437 = vunpack.c.l.b16 %v143
  %v1438 = vunpack.c.h.b16 %v143
  %v1439 = vunpack.c.l.b16 %v144
  %v1440 = vunpack.c.h.b16 %v144
  %v1441 = vunpack.c.l.b16 %v145
  %v1442 = vunpack.c.h.b16 %v145
  %v1443 = vunpack.c.l.b16 %v146
  %v1444 = vunpack.c.h.b16 %v146
  %v1445 = vunpack.c.l.b16 %v147
  %v1446 = vunpack.c.h.b16 %v147
  %v1447 = vunpack.c.l.b16 %v148
  %v1448 = vunpack.c.h.b16 %v148
  %v1449 = vunpack.c.l.b16 %v149
  %v1450 = vunpack.c.h.b16 %v149
  %v1451 = vunpack.c.l.b16 %v150
  %v1452 = vunpack.c.h.b16 %v150
  %v1453 = vunpack.c.l.b16 %v151
  %v1454 = vunpack.c.h.b16 %v151
  %v1455 = vunpack.c.l.b16 %v152
  %v1456 = vunpack.c.h.b16 %v152
  %v1457 = vunpack.c.l.b16 %v153
  %v1458 = vunpack.c.h.b16 %v153
  %v1459 = vunpack.c.l.b16 %v154
  %v1460 = vunpack.c.h.b16 %v154
  %v1461 = vunpack.c.l.b16 %v155
  %v1462 = vunpack.c.h.b16 %v155
  %v1463 = vunpack.c.l.b16 %v156
  %v1464 = vunpack.c.h.b16 %v156
  %v1465 = vunpack.c.l.b16 %v157
  %v1466 = vunpack.c.h.b16 %v157
  %v1467 = vunpack.c.l.b16 %v158
  %v1468 = vunpack.c.h.b16 %v158
  %v1469 = vunpack.c.l.b16 %v159
  %v1470 = vunpack.c.h.b16 %v159
  %v1471 = vunpack.c.l.b16 %v160
  %v1472 = vunpack.c.h.b16 %v160
  %v1473 = vunpack.c.l.b16 %v161
  %v1474 = vunpack.c.h.b16 %v161
  %v1475 = vunpack.c.l.b16 %v162
  %v1476 = vunpack.c.h.b16 %v162
  %v1477 = vunpack.c.l.b16 %v163
  %v1478 = vunpack.c.h.b16 %v163
  %v1479 = vunpack.c.l.b16 %v164
  %v1480 = vunpack.c.h.b16 %v164
  %v1481 = vunpack.c.l.b16 %v165
  %v1482 = vunpack.c.h.b16 %v165
  %v1483 = vunpack.c.l.b16 %v166
  %v1484 = vunpack.c.h.b16 %v166
  %v1485 = vunpack.c.l.b16 %v167
  %v1486 = vunpack.c.h.b16 %v167
  %v1487 = vunpack.c.l.b16 %v168
  %v1488 = vunpack.c.h.b16 %v168
  %v1489 = vunpack.c.l.b16 %v169
  %v1490 = vunpack.c.h.b16 %v169
  %v1491 = vunpack.c.l.b16 %v170
  %v1492 = vunpack.c.h.b16 %v170
  %v1493 = vunpack.c.l.b16 %v171
  %v1494 = vunpack.c.h.b16 %v171
  %v1495 = vunpack.c.l.b16 %v172
  %v1496 = vunpack.c.h.b16 %v172
  %v1497 = vunpack.c.l.b16 %v173
  %v1498 = vunpack.c.h.b16 %v173
  %v1499 = vunpack.c.l.b16 %v174
  %v1500 = vunpack.c.h.b16 %v174
  %v1501 = vunpack.c.l.b16 %v175
  %v1502 = vunpack.c.h.b16 %v175
  %v1503 = vunpack.c.l.b16 %v176
  %v1504 = vunpack.c.h.b16 %v176
  %v1505 = vunpack.c.l.b16 %v177
  %v1506 = vunpack.c.h.b16 %v177
  %v1507 = vunpack.c.l.b16 %v178
  %v1508 = vunpack.c.h.b16 %v178
  %v1509 = vunpack.c.l.b16 %v179
  %v1510 = vunpack.c.h.b16 %v179
  %v1511 = vunpack.c.l.b16 %v180
  %v1512 = vunpack.c.h.b16 %v180
  %v1513 = vunpack.c.l.b16 %v181
  %v1514 = vunpack.c.h.b16 %v181
  %v1515 = vunpack.c.l.b16 %v182
  %v1516 = vunpack.c.h.b16 %v182
  %v1517 = vunpack.c.l.b16 %v183
  %v1518 = vunpack.c.h.b16 %v183
  %v1519 = vunpack.c.l.b16 %v184
  %v1520 = vunpack.c.h.b16 %v184
  %v1521 = vunpack.c.l.b16 %v185
  %v1522 = vunpack.c.h.b16 %v185
  %v1523 = vunpack.c.l.b16 %v186
  %v1524 = vunpack.c.h.b16 %v186
  %v1525 = vunpack.c.l.b16 %v187
  %v1526 = vunpack.c.h.b16 %v187
  %v1527 = vunpack.c.l.b16 %v188
  %v1528 = vunpack.c.h.b16 %v188
  %v1529 = vunpack.c.l.b16 %v189
  %v1530 = vunpack.c.h.b16 %v189
  %v1531 = vunpack.c.l.b16 %v190
  %v1532 = vunpack.c.h.b16 %v190
  %v1533 = vunpack.c.l.b16 %v191
  %v1534 = vunpack.c.h.b16 %v191
  %v1535 = vunpack.c.l.b16 %v192
  %v1536 = vunpack.c.h.b16 %v192
  %v1537 = vunpack.c.l.b16 %v193
  %v1538 = vunpack.c.h.b16 %v193
  %v1539 = vunpack.c.l.b16 %v194
  %v1540 = vunpack.c.h.b16 %v194
  %v1541 = vunpack.c.l.b16 %v195
  %v1542 = vunpack.c.h.b16 %v195
  %v1543 = vunpack.c.l.b16 %v196
  %v1544 = vunpack.c.h.b16 %v196
  %v1545 = vunpack.c.l.b16 %v197
  %v1546 = vunpack.c.h.b16 %v197
  %v1547 = vunpack.c.l.b16 %v198
  %v1548 = vunpack.c.h.b16 %v198
  %v1549 = vunpack.c.l.b16 %v199
  %v1550 = vunpack.c.h.b16 %v199
  %v1551 = vunpack.c.l.b16 %v200
  %v1552 = vunpack.c.h.b16 %v200
  %v1553 = vunpack.c.l.b16 %v201
  %v1554 = vunpack.c.h.b16 %v201
  %v1555 = vunpack.c.l.b16 %v202
  %v1556 = vunpack.c.h.b16 %v202
  %v1557 = vunpack.c.l.b16 %v203
  %v1558 = vunpack.c.h.b16 %v203
  %v1559 = vunpack.c.l.b16 %v204
  %v1560 = vunpack.c.h.b16 %v204
  %v1561 = vunpack.c.l.b16 %v205
  %v1562 = vunpack.c.h.b16 %v205
  %v1563 = vunpack.c.l.b16 %v206
  %v1564 = vunpack.c.h.b16 %v206
  %v1565 = vunpack.c.l.b16 %v207
  %v1566 = vunpack.c.h.b16 %v207
  %v1567 = vunpack.c.l.b16 %v208
  %v1568 = vunpack.c.h.b16 %v208
  %v1569 = vunpack.c.l.b16 %v209
  %v1570 = vunpack.c.h.b16 %v209
  %v1571 = vunpack.c.l.b16 %v210
  %v1572 = vunpack.c.h.b16 %v210
  %v1573 = vunpack.c.l.b16 %v211
  %v1574 = vunpack.c.h.b16 %v211
  %v1575 = vunpack.c.l.b16 %v212
  %v1576 = vunpack.c.h.b16 %v212
  %v1577 = vunpack.c.l.b16 %v213
  %v1578 = vunpack.c.h.b16 %v213
  %v1579 = vunpack.c.l.b16 %v214
  %v1580 = vunpack.c.h.b16 %v214
  %v1581 = vunpack.c.l.b16 %v215
  %v1582 = vunpack.c.h.b16 %v215
  %v1583 = vunpack.c.l.b16 %v216
  %v1584 = vunpack.c.h.b16 %v216
  %v1585 = vunpack.c.l.b16 %v217
  %v1586 = vunpack.c.h.b16 %v217
  %v1587 = vunpack.c.l.b16 %v218
  %v1588 = vunpack.c.h.b16 %v218
  %v1589 = vunpack.c.l.b16 %v219
  %v1590 = vunpack.c.h.b16 %v219
  %v1591 = vunpack.c.l.b16 %v220
  %v1592 = vunpack.c.h.b16 %v220
  %v1593 = vunpack.c.l.b16 %v221
  %v1594 = vunpack.c.h.b16 %v221
  %v1595 = vunpack.c.l.b16 %v222
  %v1596 = vunpack.c.h.b16 %v222
  %v1597 = vunpack.c.l.b16 %v223
  %v1598 = vunpack.c.h.b16 %v223
  %v1599 = vunpack.c.l.b16 %v224
  %v1600 = vunpack.c.h.b16 %v224
  %v1601 = vunpack.c.l.b16 %v225
  %v1602 = vunpack.c.h.b16 %v225
  %v1603 = vunpack.c.l.b16 %v226
  %v1604 = vunpack.c.h.b16 %v226
  %v1605 = vunpack.c.l.b16 %v227
  %v1606 = vunpack.c.h.b16 %v227
  %v1607 = vunpack.c.l.b16 %v228
  %v1608 = vunpack.c.h.b16 %v228
  %v1609 = vunpack.c.l.b16 %v229
  %v1610 = vunpack.c.h.b16 %v229
  %v1611 = vunpack.c.l.b16 %v230
  %v1612 = vunpack.c.h.b16 %v230
  %v1613 = vunpack.c.l.b16 %v231
  %v1614 = vunpack.c.h.b16 %v231
  %v1615 = vunpack.c.l.b16 %v232
  %v1616 = vunpack.c.h.b16 %v232
  %v1617 = vunpack.c.l.b16 %v233
  %v1618 = vunpack.c.h.b16 %v233
  %v1619 = vunpack.c.l.b16 %v234
  %v1620 = vunpack.c.h.b16 %v234
  %v1621 = vunpack.c.l.b16 %v235
  %v1622 = vunpack.c.h.b16 %v235
  %v1623 = vunpack.c.l.b16 %v236
  %v1624 = vunpack.c.h.b16 %v236
  %v1625 = vunpack.c.l.b16 %v237
  %v1626 = vunpack.c.h.b16 %v237
  %v1627 = vunpack.c.l.b16 %v238
  %v1628 = vunpack.c.h.b16 %v238
  %v1629 = vunpack.c.l.b16 %v239
  %v1630 = vunpack.c.h.b16 %v239
  %v1631 = vunpack.c.l.b16 %v240
  %v1632 = vunpack.c.h.b16 %v240
  %v1633 = vunpack.c.l.b16 %v241
  %v1634 = vunpack.c.h.b16 %v241
  %v1635 = vunpack.c.l.b16 %v242
  %v1636 = vunpack.c.h.b16 %v242
  %v1637 = vunpack.c.l.b16 %v243
  %v1638 = vunpack.c.h.b16 %v243
  %v1639 = vunpack.c.l.b16 %v244
  %v1640 = vunpack.c.h.b16 %v244
  %v1641 = vunpack.c.l.b16 %v245
  %v1642 = vunpack.c.h.b16 %v245
  %v1643 = vunpack.c.l.b16 %v246
  %v1644 = vunpack.c.h.b16 %v246
  %v1645 = vunpack.c.l.b16 %v247
  %v1646 = vunpack.c.h.b16 %v247
  %v1647 = vunpack.c.l.b16 %v248
  %v1648 = vunpack.c.h.b16 %v248
  %v1649 = vunpack.c.l.b16 %v249
  %v1650 = vunpack.c.h.b16 %v249
  %v1651 = vunpack.c.l.b16 %v250
  %v1652 = vunpack.c.h.b16 %v250
  %v1653 = vunpack.c.l.b16 %v251
  %v1654 = vunpack.c.h.b16 %v251
  %v1655 = vunpack.c.l.b16 %v252
  %v1656 = vunpack.c.h.b16 %v252
  %v1657 = vunpack.c.l.b16 %v253
  %v1658 = vunpack.c.h.b16 %v253
  %v1659 = vunpack.c.l.b16 %v254
  %v1660 = vunpack.c.h.b16 %v254
  %v1661 = vunpack.c.l.b16 %v255
  %v1662 = vunpack.c.h.b16 %v255
  %v1663 = vunpack.c.l.b16 %v256
  %v1664 = vunpack.c.h.b16 %v256
  %v1665 = vunpack.c.l.b16 %v257
  %v1666 = vunpack.c.h.b16 %v257
  %v1667 = vunpack.c.l.b16 %v258
  %v1668 = vunpack.c.h.b16 %v258
  %v1669 = vunpack.c.l.b16 %v259
  %v1670 = vunpack.c.h.b16 %v259
  %v1671 = vunpack.c.l.b16 %v260
  %v1672 = vunpack.c.h.b16 %v260
  %v1673 = vunpack.c.l.b16 %v261
  %v1674 = vunpack.c.h.b16 %v261
  %v1675 = vunpack.c.l.b16 %v262
  %v1676 = vunpack.c.h.b16 %v262
  %v1677 = vunpack.c.l.b16 %v263
  %v1678 = vunpack.c.h.b16 %v263
  %v1679 = vunpack.c.l.b16 %v264
  %v1680 = vunpack.c.h.b16 %v264
  %v1681 = vunpack.c.l.b16 %v265
  %v1682 = vunpack.c.h.b16 %v265
  %v1683 = vunpack.c.l.b16 %v266
  %v1684 = vunpack.c.h.b16 %v266
  %v1685 = vunpack.c.l.b16 %v267
  %v1686 = vunpack.c.h.b16 %v267
  %v1687 = vunpack.c.l.b16 %v268
  %v1688 = vunpack.c.h.b16 %v268
  %v1689 = vunpack.c.l.b16 %v269
  %v1690 = vunpack.c.h.b16 %v269
  %v1691 = vunpack.c.l.b16 %v270
  %v1692 = vunpack.c.h.b16 %v270
  %v1693 = vunpack.c.l.b16 %v271
  %v1694 = vunpack.c.h.b16 %v271
  %v1695 = vunpack.c.l.b16 %v272
  %v1696 = vunpack.c.h.b16 %v272
  %v1697 = vunpack.c.l.b16 %v273
  %v1698 = vunpack.c.h.b16 %v273
  %v1699 = vunpack.c.l.b16 %v274
  %v1700 = vunpack.c.h.b16 %v274
  %v1701 = vunpack.c.l.b16 %v275
  %v1702 = vunpack.c.h.b16 %v275
  %v1703 = vunpack.c.l.b16 %v276
  %v1704 = vunpack.c.h.b16 %v276
  %v1705 = vunpack.c.l.b16 %v277
  %v1706 = vunpack.c.h.b16 %v277
  %v1707 = vunpack.c.l.b16 %v278
  %v1708 = vunpack.c.h.b16 %v278
  %v1709 = vunpack.c.l.b16 %v279
  %v1710 = vunpack.c.h.b16 %v279
  %v1711 = vunpack.c.l.b16 %v280
  %v1712 = vunpack.c.h.b16 %v280
  %v1713 = vunpack.c.l.b16 %v281
  %v1714 = vunpack.c.h.b16 %v281
  %v1715 = vunpack.c.l.b16 %v282
  %v1716 = vunpack.c.h.b16 %v282
  %v1717 = vunpack.c.l.b16 %v283
  %v1718 = vunpack.c.h.b16 %v283
  %v1719 = vunpack.c.l.b16 %v284
  %v1720 = vunpack.c.h.b16 %v284
  %v1721 = vunpack.c.l.b16 %v285
  %v1722 = vunpack.c.h.b16 %v285
  %v1723 = vunpack.c.l.b16 %v286
  %v1724 = vunpack.c.h.b16 %v286
  %v1725 = vunpack.c.l.b16 %v287
  %v1726 = vunpack.c.h.b16 %v287
  %v1727 = vunpack.c.l.b16 %v288
  %v1728 = vunpack.c.h.b16 %v288
  %v1729 = vunpack.c.l.b16 %v289
  %v1730 = vunpack.c.h.b16 %v289
  %v1731 = vunpack.c.l.b16 %v290
  %v1732 = vunpack.c.h.b16 %v290
  %v1733 = vunpack.c.l.b16 %v291
  %v1734 = vunpack.c.h.b16 %v291
  %v1735 = vunpack.c.l.b16 %v292
  %v1736 = vunpack.c.h.b16 %v292
  %v1737 = vunpack.c.l.b16 %v293
  %v1738 = vunpack.c.h.b16 %v293
  %v1739 = vunpack.c.l.b16 %v294
  %v1740 = vunpack.c.h.b16 %v294
  %v1741 = vunpack.c.l.b16 %v295
  %v1742 = vunpack.c.h.b16 %v295
  %v1743 = vunpack.c.l.b16 %v296
  %v1744 = vunpack.c.h.b16 %v296
  %v1745 = vunpack.c.l.b16 %v297
  %v1746 = vunpack.c.h.b16 %v297
  %v1747 = vunpack.c.l.b16 %v298
  %v1748 = vunpack.c.h.b16 %v298
  %v1749 = vunpack.c.l.b16 %v299
  %v1750 = vunpack.c.h.b16 %v299
  %v1751 = vunpack.c.l.b16 %v300
  %v1752 = vunpack.c.h.b16 %v300
  %v1753 = vunpack.c.l.b16 %v301
  %v1754 = vunpack.c.h.b16 %v301
  %v1755 = vunpack.c.l.b16 %v302
  %v1756 = vunpack.c.h.b16 %v302
  %v1757 = vunpack.c.l.b16 %v303
  %v1758 = vunpack.c.h.b16 %v303
  %v1759 = vunpack.c.l.b16 %v304
  %v1760 = vunpack.c.h.b16 %v304
  %v1761 = vunpack.c.l.b16 %v305
  %v1762 = vunpack.c.h.b16 %v305
  %v1763 = vunpack.c.l.b16 %v306
  %v1764 = vunpack.c.h.b16 %v306
  %v1765 = vunpack.c.l.b16 %v307
  %v1766 = vunpack.c.h.b16 %v307
  %v1767 = vunpack.c.l.b16 %v308
  %v1768 = vunpack.c.h.b16 %v308
  %v1769 = vunpack.c.l.b16 %v309
  %v1770 = vunpack.c.h.b16 %v309
  %v1771 = vunpack.c.l.b16 %v310
  %v1772 = vunpack.c.h.b16 %v310
  %v1773 = vunpack.c.l.b16 %v311
  %v1774 = vunpack.c.h.b16 %v311
  %v1775 = vunpack.c.l.b16 %v312
  %v1776 = vunpack.c.h.b16 %v312
  %v1777 = vunpack.c.l.b16 %v313
  %v1778 = vunpack.c.h.b16 %v313
  %v1779 = vunpack.c.l.b16 %v314
  %v1780 = vunpack.c.h.b16 %v314
  %v1781 = vunpack.c.l.b16 %v315
  %v1782 = vunpack.c.h.b16 %v315
  %v1783 = vunpack.c.l.b16 %v316
  %v1784 = vunpack.c.h.b16 %v316
  %v1785 = vunpack.c.l.b16 %v317
  %v1786 = vunpack.c.h.b16 %v317
  %v1787 = vunpack.c.l.b16 %v318
  %v1788 = vunpack.c.h.b16 %v318
  %v1789 = vunpack.c.l.b16 %v319
  %v1790 = vunpack.c.h.b16 %v319
  %v1791 = vunpack.c.l.b16 %v320
  %v1792 = vunpack.c.h.b16 %v320
  %v1793 = vunpack.c.l.b16 %v321
  %v1794 = vunpack.c.h.b16 %v321
  %v1795 = vunpack.c.l.b16 %v322
  %v1796 = vunpack.c.h.b16 %v322
  %v1797 = vunpack.c.l.b16 %v323
  %v1798 = vunpack.c.h.b16 %v323
  %v1799 = vunpack.c.l.b16 %v324
  %v1800 = vunpack.c.h.b16 %v324
  %v1801 = vunpack.c.l.b16 %v325
  %v1802 = vunpack.c.h.b16 %v325
  %v1803 = vunpack.c.l.b16 %v326
  %v1804 = vunpack.c.h.b16 %v326
  %v1805 = vunpack.c.l.b16 %v327
  %v1806 = vunpack.c.h.b16 %v327
  %v1807 = vunpack.c.l.b16 %v328
  %v1808 = vunpack.c.h.b16 %v328
  %v1809 = vunpack.c.l.b16 %v329
  %v1810 = vunpack.c.h.b16 %v329
  %v1811 = vunpack.c.l.b16 %v330
  %v1812 = vunpack.c.h.b16 %v330
  %v1813 = vunpack.c.l.b16 %v331
  %v1814 = vunpack.c.h.b16 %v331
  %v1815 = vunpack.c.l.b16 %v332
  %v1816 = vunpack.c.h.b16 %v332
  %v1817 = vunpack.c.l.b16 %v333
  %v1818 = vunpack.c.h.b16 %v333
  %v1819 = vunpack.c.l.b16 %v334
  %v1820 = vunpack.c.h.b16 %v334
  %v1821 = vunpack.c.l.b16 %v335
  %v1822 = vunpack.c.h.b16 %v335
  %v1823 = vunpack.c.l.b16 %v336
  %v1824 = vunpack.c.h.b16 %v336
  %v1825 = vunpack.c.l.b16 %v337
  %v1826 = vunpack.c.h.b16 %v337
  %v1827 = vunpack.c.l.b16 %v338
  %v1828 = vunpack.c.h.b16 %v338
  %v1829 = vunpack.c.l.b16 %v339
  %v1830 = vunpack.c.h.b16 %v339
  %v1831 = vunpack.c.l.b16 %v340
  %v1832 = vunpack.c.h.b16 %v340
  %v1833 = vunpack.c.l.b16 %v341
  %v1834 = vunpack.c.h.b16 %v341
  %v1835 = vunpack.c.l.b16 %v342
  %v1836 = vunpack.c.h.b16 %v342
  %v1837 = vunpack.c.l.b16 %v343
  %v1838 = vunpack.c.h.b16 %v343
  %v1839 = vunpack.c.l.b16 %v344
  %v1840 = vunpack.c.h.b16 %v344
  %v1841 = vunpack.c.l.b16 %v345
  %v1842 = vunpack.c.h.b16 %v345
  %v1843 = vunpack.c.l.b16 %v346
  %v1844 = vunpack.c.h.b16 %v346
  %v1845 = vunpack.c.l.b16 %v347
  %v1846 = vunpack.c.h.b16 %v347
  %v1847 = vunpack.c.l.b16 %v348
  %v1848 = vunpack.c.h.b16 %v348
  %v1849 = vunpack.c.l.b16 %v349
  %v1850 = vunpack.c.h.b16 %v349
  %v1851 = vunpack.c.l.b16 %v350
  %v1852 = vunpack.c.h.b16 %v350
  %v1853 = vunpack.c.l.b16 %v351
  %v1854 = vunpack.c.h.b16 %v351
  %v1855 = vunpack.c.l.b16 %v352
  %v1856 = vunpack.c.h.b16 %v352
  %v1857 = vunpack.c.l.b16 %v353
  %v1858 = vunpack.c.h.b16 %v353
  %v1859 = vunpack.c.l.b16 %v354
  %v1860 = vunpack.c.h.b16 %v354
  %v1861 = vunpack.c.l.b16 %v355
  %v1862 = vunpack.c.h.b16 %v355
  %v1863 = vunpack.c.l.b16 %v356
  %v1864 = vunpack.c.h.b16 %v356
  %v1865 = vunpack.c.l.b16 %v357
  %v1866 = vunpack.c.h.b16 %v357
  %v1867 = vunpack.c.l.b16 %v358
  %v1868 = vunpack.c.h.b16 %v358
  %v1869 = vunpack.c.l.b16 %v359
  %v1870 = vunpack.c.h.b16 %v359
  %v1871 = vunpack.c.l.b16 %v360
  %v1872 = vunpack.c.h.b16 %v360
  %v1873 = vunpack.c.l.b16 %v361
  %v1874 = vunpack.c.h.b16 %v361
  %v1875 = vunpack.c.l.b16 %v362
  %v1876 = vunpack.c.h.b16 %v362
  %v1877 = vunpack.c.l.b16 %v363
  %v1878 = vunpack.c.h.b16 %v363
  %v1879 = vunpack.c.l.b16 %v364
  %v1880 = vunpack.c.h.b16 %v364
  %v1881 = vunpack.c.l.b16 %v365
  %v1882 = vunpack.c.h.b16 %v365
  %v1883 = vunpack.c.l.b16 %v366
  %v1884 = vunpack.c.h.b16 %v366
  %v1885 = vunpack.c.l.b16 %v367
  %v1886 = vunpack.c.h.b16 %v367
  %v1887 = vunpack.c.l.b16 %v368
  %v1888 = vunpack.c.h.b16 %v368
  %v1889 = vunpack.c.l.b16 %v369
  %v1890 = vunpack.c.h.b16 %v369
  %v1891 = vunpack.c.l.b16 %v370
  %v1892 = vunpack.c.h.b16 %v370
  %v1893 = vunpack.c.l.b16 %v371
  %v1894 = vunpack.c.h.b16 %v371
  %v1895 = vunpack.c.l.b16 %v372
  %v1896 = vunpack.c.h.b16 %v372
  %v1897 = vunpack.c.l.b16 %v373
  %v1898 = vunpack.c.h.b16 %v373
  %v1899 = vunpack.c.l.b16 %v374
  %v1900 = vunpack.c.h.b16 %v374
  %v1901 = vunpack.c.l.b16 %v375
  %v1902 = vunpack.c.h.b16 %v375
  %v1903 = vunpack.c.l.b16 %v376
  %v1904 = vunpack.c.h.b16 %v376
  %v1905 = vunpack.c.l.b16 %v377
  %v1906 = vunpack.c.h.b16 %v377
  %v1907 = vunpack.c.l.b16 %v378
  %v1908 = vunpack.c.h.b16 %v378
  %v1909 = vunpack.c.l.b16 %v379
  %v1910 = vunpack.c.h.b16 %v379
  %v1911 = vunpack.c.l.b16 %v380
  %v1912 = vunpack.c.h.b16 %v380
  %v1913 = vunpack.c.l.b16 %v381
  %v1914 = vunpack.c.h.b16 %v381
  %v1915 = vunpack.c.l.b16 %v382
  %v1916 = vunpack.c.h.b16 %v382
  %v1917 = vunpack.c.l.b16 %v383
  %v1918 = vunpack.c.h.b16 %v383
  %v1919 = vunpack.c.l.b16 %v384
  %v1920 = vunpack.c.h.b16 %v384
  %v1921 = vunpack.c.l.b16 %v385
  %v1922 = vunpack.c.h.b16 %v385
  %v1923 = vunpack.c.l.b16 %v386
  %v1924 = vunpack.c.h.b16 %v386
  %v1925 = vunpack.c.l.b16 %v387
  %v1926 = vunpack.c.h.b16 %v387
  %v1927 = vunpack.c.l.b16 %v388
  %v1928 = vunpack.c.h.b16 %v388
  %v1929 = vunpack.c.l.b16 %v389
  %v1930 = vunpack.c.h.b16 %v389
  %v1931 = vunpack.c.l.b16 %v390
  %v1932 = vunpack.c.h.b16 %v390
  %v1933 = vunpack.c.l.b16 %v391
  %v1934 = vunpack.c.h.b16 %v391
  %v1935 = vunpack.c.l.b16 %v392
  %v1936 = vunpack.c.h.b16 %v392
  %v1937 = vunpack.c.l.b16 %v393
  %v1938 = vunpack.c.h.b16 %v393
  %v1939 = vunpack.c.l.b16 %v394
  %v1940 = vunpack.c.h.b16 %v394
  %v1941 = vunpack.c.l.b16 %v395
  %v1942 = vunpack.c.h.b16 %v395
  %v1943 = vunpack.c.l.b16 %v396
  %v1944 = vunpack.c.h.b16 %v396
  %v1945 = vunpack.c.l.b16 %v397
  %v1946 = vunpack.c.h.b16 %v397
  %v1947 = vunpack.c.l.b16 %v398
  %v1948 = vunpack.c.h.b16 %v398
  %v1949 = vunpack.c.l.b16 %v399
  %v1950 = vunpack.c.h.b16 %v399
  %v1951 = vunpack.c.l.b16 %v400
  %v1952 = vunpack.c.h.b16 %v400
  %v1953 = vunpack.c.l.b16 %v401
  %v1954 = vunpack.c.h.b16 %v401
  %v1955 = vunpack.c.l.b16 %v402
  %v1956 = vunpack.c.h.b16 %v402
  %v1957 = vunpack.c.l.b16 %v403
  %v1958 = vunpack.c.h.b16 %v403
  %v1959 = vunpack.c.l.b16 %v404
  %v1960 = vunpack.c.h.b16 %v404
  %v1961 = vunpack.c.l.b16 %v405
  %v1962 = vunpack.c.h.b16 %v405
  %v1963 = vunpack.c.l.b16 %v406
  %v1964 = vunpack.c.h.b16 %v406
  %v1965 = vunpack.c.l.b16 %v407
  %v1966 = vunpack.c.h.b16 %v407
  %v1967 = vunpack.c.l.b16 %v408
  %v1968 = vunpack.c.h.b16 %v408
  %v1969 = vunpack.c.l.b16 %v409
  %v1970 = vunpack.c.h.b16 %v409
  %v1971 = vunpack.c.l.b16 %v410
  %v1972 = vunpack.c.h.b16 %v410
  %v1973 = vunpack.c.l.b16 %v411
  %v1974 = vunpack.c.h.b16 %v411
  %v1975 = vunpack.c.l.b16 %v412
  %v1976 = vunpack.c.h.b16 %v412
  %v1977 = vunpack.c.l.b16 %v413
  %v1978 = vunpack.c.h.b16 %v413
  %v1979 = vunpack.c.l.b16 %v414
  %v1980 = vunpack.c.h.b16 %v414
  %v1981 = vunpack.c.l.b16 %v415
  %v1982 = vunpack.c.h.b16 %v415
  %v1983 = vunpack.c.l.b16 %v416
  %v1984 = vunpack.c.h.b16 %v416
  %v1985 = vunpack.c.l.b16 %v417
  %v1986 = vunpack.c.h.b16 %v417
  %v1987 = vunpack.c.l.b16 %v418
  %v1988 = vunpack.c.h.b16 %v418
  %v1989 = vunpack.c.l.b16 %v419
  %v1990 = vunpack.c.h.b16 %v419
  %v1991 = vunpack.c.l.b16 %v420
  %v1992 = vunpack.c.h.b16 %v420
  %v1993 = vunpack.c.l.b16 %v421
  %v1994 = vunpack.c.h.b16 %v421
  %v1995 = vunpack.c.l.b16 %v422
  %v1996 = vunpack.c.h.b16 %v422
  %v1997 = vunpack.c.l.b16 %v423
  %v1998 = vunpack.c.h.b16 %v423
  %v1999 = vunpack.c.l.b16 %v424
  %v2000 = vunpack.c.h.b16 %v424
  %v2001 = vunpack.c.l.b16 %v425
  %v2002 = vunpack.c.h.b16 %v425
  %v2003 = vunpack.c.l.b16 %v426
  %v2004 = vunpack.c.h.b16 %v426
  %v2005 = vunpack.c.l.b16 %v427
  %v2006 = vunpack.c.h.b16 %v427
  %v2007 = vunpack.c.l.b16 %v428
  %v2008 = vunpack.c.h.b16 %v428
  %v2009 = vunpack.c.l.b16 %v429
  %v2010 = vunpack.c.h.b16 %v429
  %v2011 = vunpack.c.l.b16 %v430
  %v2012 = vunpack.c.h.b16 %v430
  %v2013 = vunpack.c.l.b16 %v431
  %v2014 = vunpack.c.h.b16 %v431
  %v2015 = vunpack.c.l.b16 %v432
  %v2016 = vunpack.c.h.b16 %v432
  %v2017 = vunpack.c.l.b16 %v433
  %v2018 = vunpack.c.h.b16 %v433
  %v2019 = vunpack.c.l.b16 %v434
  %v2020 = vunpack.c.h.b16 %v434
  %v2021 = vunpack.c.l.b16 %v435
  %v2022 = vunpack.c.h.b16 %v435
  %v2023 = vunpack.c.l.b16 %v436
  %v2024 = vunpack.c.h.b16 %v436
  %v2025 = vunpack.c.l.b16 %v437
  %v2026 = vunpack.c.h.b16 %v437
  %v2027 = vunpack.c.l.b16 %v438
  %v2028 = vunpack.c.h.b16 %v438
  %v2029 = vunpack.c.l.b16 %v439
  %v2030 = vunpack.c.h.b16 %v439
  %v2031 = vunpack.c.l.b16 %v440
  %v2032 = vunpack.c.h.b16 %v440
  %v2033 = vunpack.c.l.b16 %v441
  %v2034 = vunpack.c.h.b16 %v441
  %v2035 = vunpack.c.l.b16 %v442
  %v2036 = vunpack.c.h.b16 %v442
  %v2037 = vunpack.c.l.b16 %v443
  %v2038 = vunpack.c.h.b16 %v443
  %v2039 = vunpack.c.l.b16 %v444
  %v2040 = vunpack.c.h.b16 %v444
  %v2041 = vunpack.c.l.b16 %v445
  %v2042 = vunpack.c.h.b16 %v445
  %v2043 = vunpack.c.l.b16 %v446
  %v2044 = vunpack.c.h.b16 %v446
  %v2045 = vunpack.c.l.b16 %v447
  %v2046 = vunpack.c.h.b16 %v447
  %v2047 = vunpack.c.l.b16 %v448
  %v2048 = vunpack.c.h.b16 %v448
  %v2049 = vunpack.c.l.b16 %v449
  %v2050 = vunpack.c.h.b16 %v449
  %v2051 = vunpack.c.l.b16 %v450
  %v2052 = vunpack.c.h.b16 %v450
  %v2053 = vunpack.c.l.b16 %v451
  %v2054 = vunpack.c.h.b16 %v451
  %v2055 = vunpack.c.l.b16 %v452
  %v2056 = vunpack.c.h.b16 %v452
  %v2057 = vunpack.c.l.b16 %v453
  %v2058 = vunpack.c.h.b16 %v453
  %v2059 = vunpack.c.l.b16 %v454
  %v2060 = vunpack.c.h.b16 %v454
  %v2061 = vunpack.c.l.b16 %v455
  %v2062 = vunpack.c.h.b16 %v455
  %v2063 = vunpack.c.l.b16 %v456
  %v2064 = vunpack.c.h.b16 %v456
  %v2065 = vunpack.c.l.b16 %v457
  %v2066 = vunpack.c.h.b16 %v457
  %v2067 = vunpack.c.l.b16 %v458
  %v2068 = vunpack.c.h.b16 %v458
  %v2069 = vunpack.c.l.b16 %v459
  %v2070 = vunpack.c.h.b16 %v459
  %v2071 = vunpack.c.l.b16 %v460
  %v2072 = vunpack.c.h.b16 %v460
  %v2073 = vunpack.c.l.b16 %v461
  %v2074 = vunpack.c.h.b16 %v461
  %v2075 = vunpack.c.l.b16 %v462
  %v2076 = vunpack.c.h.b16 %v462
  %v2077 = vunpack.c.l.b16 %v463
  %v2078 = vunpack.c.h.b16 %v463
  %v2079 = vunpack.c.l.b16 %v464
  %v2080 = vunpack.c.h.b16 %v464
  %v2081 = vunpack.c.l.b16 %v465
  %v2082 = vunpack.c.h.b16 %v465
  %v2083 = vunpack.c.l.b16 %v466
  %v2084 = vunpack.c.h.b16 %v466
  %v2085 = vunpack.c.l.b16 %v467
  %v2086 = vunpack.c.h.b16 %v467
  %v2087 = vunpack.c.l.b16 %v468
  %v2088 = vunpack.c.h.b16 %v468
  %v2089 = vunpack.c.l.b16 %v469
  %v2090 = vunpack.c.h.b16 %v469
  %v2091 = vunpack.c.l.b16 %v470
  %v2092 = vunpack.c.h.b16 %v470
  %v2093 = vunpack.c.l.b16 %v471
  %v2094 = vunpack.c.h.b16 %v471
  %v2095 = vunpack.c.l.b16 %v472
  %v2096 = vunpack.c.h.b16 %v472
  %v2097 = vunpack.c.l.b16 %v473
  %v2098 = vunpack.c.h.b16 %v473
  %v2099 = vunpack.c.l.b16 %v474
  %v2100 = vunpack.c.h.b16 %v474
  %v2101 = vunpack.c.l.b16 %v475
  %v2102 = vunpack.c.h.b16 %v475
  %v2103 = vunpack.c.l.b16 %v476
  %v2104 = vunpack.c.h.b16 %v476
  %v2105 = vunpack.c.l.b16 %v477
  %v2106 = vunpack.c.h.b16 %v477
  %v2107 = vunpack.c.l.b16 %v478
  %v2108 = vunpack.c.h.b16 %v478
  %v2109 = vunpack.c.l.b16 %v479
  %v2110 = vunpack.c.h.b16 %v479
  %v2111 = vunpack.c.l.b16 %v480
  %v2112 = vunpack.c.h.b16 %v480
  %v2113 = vunpack.c.l.b16 %v481
  %v2114 = vunpack.c.h.b16 %v481
  %v2115 = vunpack.c.l.b16 %v482
  %v2116 = vunpack.c.h.b16 %v482
  %v2117 = vunpack.c.l.b16 %v483
  %v2118 = vunpack.c.h.b16 %v483
  %v2119 = vunpack.c.l.b16 %v484
  %v2120 = vunpack.c.h.b16 %v484
  %v2121 = vunpack.c.l.b16 %v485
  %v2122 = vunpack.c.h.b16 %v485
  %v2123 = vunpack.c.l.b16 %v486
  %v2124 = vunpack.c.h.b16 %v486
  %v2125 = vunpack.c.l.b16 %v487
  %v2126 = vunpack.c.h.b16 %v487
  %v2127 = vunpack.c.l.b16 %v488
  %v2128 = vunpack.c.h.b16 %v488
  %v2129 = vunpack.c.l.b16 %v489
  %v2130 = vunpack.c.h.b16 %v489
  %v2131 = vunpack.c.l.b16 %v490
  %v2132 = vunpack.c.h.b16 %v490
  %v2133 = vunpack.c.l.b16 %v491
  %v2134 = vunpack.c.h.b16 %v491
  %v2135 = vunpack.c.l.b16 %v492
  %v2136 = vunpack.c.h.b16 %v492
  %v2137 = vunpack.c.l.b16 %v493
  %v2138 = vunpack.c.h.b16 %v493
  %v2139 = vunpack.c.l.b16 %v494
  %v2140 = vunpack.c.h.b16 %v494
  %v2141 = vunpack.c.l.b16 %v495
  %v2142 = vunpack.c.h.b16 %v495
  %v2143 = vunpack.c.l.b16 %v496
  %v2144 = vunpack.c.h.b16 %v496
  %v2145 = vunpack.c.l.b16 %v497
  %v2146 = vunpack.c.h.b16 %v497
  %v2147 = vunpack.c.l.b16 %v498
  %v2148 = vunpack.c.h.b16 %v498
  %v2149 = vunpack.c.l.b16 %v499
  %v2150 = vunpack.c.h.b16 %v499
  %v2151 = vunpack.c.l.b16 %v500
  %v2152 = vunpack.c.h.b16 %v500
  %v2153 = vunpack.c.l.b16 %v501
  %v2154 = vunpack.c.h.b16 %v501
  %v2155 = vunpack.c.l.b16 %v502
  %v2156 = vunpack.c.h.b16 %v502
  %v2157 = vunpack.c.l.b16 %v503
  %v2158 = vunpack.c.h.b16 %v503
  %v2159 = vunpack.c.l.b16 %v504
  %v2160 = vunpack.c.h.b16 %v504
  %v2161 = vunpack.c.l.b16 %v505
  %v2162 = vunpack.c.h.b16 %v505
  %v2163 = vunpack.c.l.b16 %v506
  %v2164 = vunpack.c.h.b16 %v506
  %v2165 = vunpack.c.l.b16 %v507
  %v2166 = vunpack.c.h.b16 %v507
  %v2167 = vunpack.c.l.b16 %v508
  %v2168 = vunpack.c.h.b16 %v508
  %v2169 = vunpack.c.l.b16 %v509
  %v2170 = vunpack.c.h.b16 %v509
  %v2171 = vunpack.c.l.b16 %v510
  %v2172 = vunpack.c.h.b16 %v510
  %v2173 = vunpack.c.l.b16 %v511
  %v2174 = vunpack.c.h.b16 %v511
  %v2175 = vunpack.c.l.b16 %v512
  %v2176 = vunpack.c.h.b16 %v512
  %v2177 = vunpack.c.l.b16 %v513
  %v2178 = vunpack.c.h.b16 %v513
  %v2179 = vunpack.c.l.b16 %v514
  %v2180 = vunpack.c.h.b16 %v514
  %v2181 = vunpack.c.l.b16 %v515
  %v2182 = vunpack.c.h.b16 %v515
  %v2183 = vunpack.c.l.b16 %v516
  %v2184 = vunpack.c.h.b16 %v516
  %v2185 = vunpack.c.l.b16 %v517
  %v2186 = vunpack.c.h.b16 %v517
  %v2187 = vunpack.c.l.b16 %v518
  %v2188 = vunpack.c.h.b16 %v518
  %v2189 = vunpack.c.l.b16 %v519
  %v2190 = vunpack.c.h.b16 %v519
  %v2191 = vunpack.c.l.b16 %v520
  %v2192 = vunpack.c.h.b16 %v520
  %v2193 = vunpack.c.l.b16 %v521
  %v2194 = vunpack.c.h.b16 %v521
  %v2195 = vunpack.c.l.b16 %v522
  %v2196 = vunpack.c.h.b16 %v522
  %v2197 = vunpack.c.l.b16 %v523
  %v2198 = vunpack.c.h.b16 %v523
  %v2199 = vunpack.c.l.b16 %v524
  %v2200 = vunpack.c.h.b16 %v524
  %v2201 = vunpack.c.l.b16 %v525
  %v2202 = vunpack.c.h.b16 %v525
  %v2203 = vunpack.c.l.b16 %v526
  %v2204 = vunpack.c.h.b16 %v526
  %v2205 = vunpack.c.l.b16 %v527
  %v2206 = vunpack.c.h.b16 %v527
  %v2207 = vunpack.c.l.b16 %v528
  %v2208 = vunpack.c.h.b16 %v528
  %v2209 = vunpack.c.l.b16 %v529
  %v2210 = vunpack.c.h.b16 %v529
  %v2211 = vunpack.c.l.b16 %v530
  %v2212 = vunpack.c.h.b16 %v530
  %v2213 = vunpack.c.l.b16 %v531
  %v2214 = vunpack.c.h.b16 %v531
  %v2215 = vunpack.c.l.b16 %v532
  %v2216 = vunpack.c.h.b16 %v532
  %v2217 = vunpack.c.l.b16 %v533
  %v2218 = vunpack.c.h.b16 %v533
  %v2219 = vunpack.c.l.b16 %v534
  %v2220 = vunpack.c.h.b16 %v534
  %v2221 = vunpack.c.l.b16 %v535
  %v2222 = vunpack.c.h.b16 %v535
  %v2223 = vunpack.c.l.b16 %v536
  %v2224 = vunpack.c.h.b16 %v536
  %v2225 = vunpack.c.l.b16 %v537
  %v2226 = vunpack.c.h.b16 %v537
  %v2227 = vunpack.c.l.b16 %v538
  %v2228 = vunpack.c.h.b16 %v538
  %v2229 = vunpack.c.l.b16 %v539
  %v2230 = vunpack.c.h.b16 %v539
  %v2231 = vunpack.c.l.b16 %v540
  %v2232 = vunpack.c.h.b16 %v540
  %v2233 = vunpack.c.l.b16 %v541
  %v2234 = vunpack.c.h.b16 %v541
  %v2235 = vunpack.c.l.b16 %v542
  %v2236 = vunpack.c.h.b16 %v542
  %v2237 = vunpack.c.l.b16 %v543
  %v2238 = vunpack.c.h.b16 %v543
  %v2239 = vunpack.c.l.b16 %v544
  %v2240 = vunpack.c.h.b16 %v544
  %v2241 = vunpack.c.l.b16 %v545
  %v2242 = vunpack.c.h.b16 %v545
  %v2243 = vunpack.c.l.b16 %v546
  %v2244 = vunpack.c.h.b16 %v546
  %v2245 = vunpack.c.l.b16 %v547
  %v2246 = vunpack.c.h.b16 %v547
  %v2247 = vunpack.c.l.b16 %v548
  %v2248 = vunpack.c.h.b16 %v548
  %v2249 = vunpack.c.l.b16 %v549
  %v2250 = vunpack.c.h.b16 %v549
  %v2251 = vunpack.c.l.b16 %v550
  %v2252 = vunpack.c.h.b16 %v550
  %v2253 = vunpack.c.l.b16 %v551
  %v2254 = vunpack.c.h.b16 %v551
  %v2255 = vunpack.c.l.b16 %v552
  %v2256 = vunpack.c.h.b16 %v552
  %v2257 = vunpack.c.l.b16 %v553
  %v2258 = vunpack.c.h.b16 %v553
  %v2259 = vunpack.c.l.b16 %v554
  %v2260 = vunpack.c.h.b16 %v554
  %v2261 = vunpack.c.l.b16 %v555
  %v2262 = vunpack.c.h.b16 %v555
  %v2263 = vunpack.c.l.b16 %v556
  %v2264 = vunpack.c.h.b16 %v556
  %v2265 = vunpack.c.l.b16 %v557
  %v2266 = vunpack.c.h.b16 %v557
  %v2267 = vunpack.c.l.b16 %v558
  %v2268 = vunpack.c.h.b16 %v558
  %v2269 = vunpack.c.l.b16 %v559
  %v2270 = vunpack.c.h.b16 %v559
  %v2271 = vunpack.c.l.b16 %v560
  %v2272 = vunpack.c.h.b16 %v560
  %v2273 = vunpack.c.l.b16 %v561
  %v2274 = vunpack.c.h.b16 %v561
  %v2275 = vunpack.c.l.b16 %v562
  %v2276 = vunpack.c.h.b16 %v562
  %v2277 = vunpack.c.l.b16 %v563
  %v2278 = vunpack.c.h.b16 %v563
  %v2279 = vunpack.c.l.b16 %v564
  %v2280 = vunpack.c.h.b16 %v564
  %v2281 = vunpack.c.l.b16 %v565
  %v2282 = vunpack.c.h.b16 %v565
  %v2283 = vunpack.c.l.b16 %v566
  %v2284 = vunpack.c.h.b16 %v566
  %v2285 = vpack.c.b16 %v1265, %v1261
  %v2286 = vpack.c.b16 %v1266, %v1262
  %v2287 = vpack.c.b16 %v1267, %v1263
  %v2288 = vpack.c.b16 %v1268, %v1264
  %v2289 = vpack.c.b16 %v1273, %v1269
  %v2290 = vpack.c.b16 %v1274, %v1270
  %v2291 = vpack.c.b16 %v1275, %v1271
  %v2292 = vpack.c.b16 %v1276, %v1272
  %v2293 = vpack.c.b16 %v1281, %v1277
  %v2294 = vpack.c.b16 %v1282, %v1278
  %v2295 = vpack.c.b16 %v1283, %v1279
  %v2296 = vpack.c.b16 %v1284, %v1280
  %v2297 = vpack.c.b16 %v1289, %v1285
  %v2298 = vpack.c.b16 %v1290, %v1286
  %v2299 = vpack.c.b16 %v1291, %v1287
  %v2300 = vpack.c.b16 %v1292, %v1288
  %v2301 = vpack.c.b16 %v1297, %v1293
  %v2302 = vpack.c.b16 %v1298, %v1294
  %v2303 = vpack.c.b16 %v1299, %v1295
  %v2304 = vpack.c.b16 %v1300, %v1296
  %v2305 = vpack.c.b16 %v1305, %v1301
  %v2306 = vpack.c.b16 %v1306, %v1302
  %v2307 = vpack.c.b16 %v1307, %v1303
  %v2308 = vpack.c.b16 %v1308, %v1304
  %v2309 = vpack.c.b16 %v1313, %v1309
  %v2310 = vpack.c.b16 %v1314, %v1310
  %v2311 = vpack.c.b16 %v1315, %v1311
  %v2312 = vpack.c.b16 %v1316, %v1312
  %v2313 = vpack.c.b16 %v1321, %v1317
  %v2314 = vpack.c.b16 %v1322, %v1318
  %v2315 = vpack.c.b16 %v1323, %v1319
  %v2316 = vpack.c.b16 %v1324, %v1320
  %v2317 = vpack.c.b16 %v1329, %v1325
  %v2318 = vpack.c.b16 %v1330, %v1326
  %v2319 = vpack.c.b16 %v1331, %v1327
  %v2320 = vpack.c.b16 %v1332, %v1328
  %v2321 = vpack.c.b16 %v1337, %v1333
  %v2322 = vpack.c.b16 %v1338, %v1334
  %v2323 = vpack.c.b16 %v1339, %v1335
  %v2324 = vpack.c.b16 %v1340, %v1336
  %v2325 = vpack.c.b16 %v1345, %v1341
  %v2326 = vpack.c.b16 %v1346, %v1342
  %v2327 = vpack.c.b16 %v1347, %v1343
  %v2328 = vpack.c.b16 %v1348, %v1344
  %v2329 = vpack.c.b16 %v1353, %v1349
  %v2330 = vpack.c.b16 %v1354, %v1350
  %v2331 = vpack.c.b16 %v1355, %v1351
  %v2332 = vpack.c.b16 %v1356, %v1352
  %v2333 = vpack.c.b16 %v1361, %v1357
  %v2334 = vpack.c.b16 %v1362, %v1358
  %v2335 = vpack.c.b16 %v1363, %v1359
  %v2336 = vpack.c.b16 %v1364, %v1360
  %v2337 = vpack.c.b16 %v1369, %v1365
  %v2338 = vpack.c.b16 %v1370, %v1366
  %v2339 = vpack.c.b16 %v1371, %v1367
  %v2340 = vpack.c.b16 %v1372, %v1368
  %v2341 = vpack.c.b16 %v1377, %v1373
  %v2342 = vpack.c.b16 %v1378, %v1374
  %v2343 = vpack.c.b16 %v1379, %v1375
  %v2344 = vpack.c.b16 %v1380, %v1376
  %v2345 = vpack.c.b16 %v1385, %v1381
  %v2346 = vpack.c.b16 %v1386, %v1382
  %v2347 = vpack.c.b16 %v1387, %v1383
  %v2348 = vpack.c.b16 %v1388, %v1384
  %v2349 = vpack.c.b16 %v1393, %v1389
  %v2350 = vpack.c.b16 %v1394, %v1390
  %v2351 = vpack.c.b16 %v1395, %v1391
  %v2352 = vpack.c.b16 %v1396, %v1392
  %v2353 = vpack.c.b16 %v1401, %v1397
  %v2354 = vpack.c.b16 %v1402, %v1398
  %v2355 = vpack.c.b16 %v1403, %v1399
  %v2356 = vpack.c.b16 %v1404, %v1400
  %v2357 = vpack.c.b16 %v1409, %v1405
  %v2358 = vpack.c.b16 %v1410, %v1406
  %v2359 = vpack.c.b16 %v1411, %v1407
  %v2360 = vpack.c.b16 %v1412, %v1408
  %v2361 = vpack.c.b16 %v1417, %v1413
  %v2362 = vpack.c.b16 %v1418, %v1414
  %v2363 = vpack.c.b16 %v1419, %v1415
  %v2364 = vpack.c.b16 %v1420, %v1416
  %v2365 = vpack.c.b16 %v1425, %v1421
  %v2366 = vpack.c.b16 %v1426, %v1422
  %v2367 = vpack.c.b16 %v1427, %v1423
  %v2368 = vpack.c.b16 %v1428, %v1424
  %v2369 = vpack.c.b16 %v1433, %v1429
  %v2370 = vpack.c.b16 %v1434, %v1430
  %v2371 = vpack.c.b16 %v1435, %v1431
  %v2372 = vpack.c.b16 %v1436, %v1432
  %v2373 = vpack.c.b16 %v1441, %v1437
  %v2374 = vpack.c.b16 %v1442, %v1438
  %v2375 = vpack.c.b16 %v1443, %v1439
  %v2376 = vpack.c.b16 %v1444, %v1440
  %v2377 = vpack.c.b16 %v1449, %v1445
  %v2378 = vpack.c.b16 %v1450, %v1446
  %v2379 = vpack.c.b16 %v1451, %v1447
  %v2380 = vpack.c.b16 %v1452, %v1448
  %v2381 = vpack.c.b16 %v1457, %v1453
  %v2382 = vpack.c.b16 %v1458, %v1454
  %v2383 = vpack.c.b16 %v1459, %v1455
  %v2384 = vpack.c.b16 %v1460, %v1456
  %v2385 = vpack.c.b16 %v1465, %v1461
  %v2386 = vpack.c.b16 %v1466, %v1462
  %v2387 = vpack.c.b16 %v1467, %v1463
  %v2388 = vpack.c.b16 %v1468, %v1464
  %v2389 = vpack.c.b16 %v1473, %v1469
  %v2390 = vpack.c.b16 %v1474, %v1470
  %v2391 = vpack.c.b16 %v1475, %v1471
  %v2392 = vpack.c.b16 %v1476, %v1472
  %v2393 = vpack.c.b16 %v1481, %v1477
  %v2394 = vpack.c.b16 %v1482, %v1478
  %v2395 = vpack.c.b16 %v1483, %v1479
  %v2396 = vpack.c.b16 %v1484, %v1480
  %v2397 = vpack.c.b16 %v1489, %v1485
  %v2398 = vpack.c.b16 %v1490, %v1486
  %v2399 = vpack.c.b16 %v1491, %v1487
  %v2400 = vpack.c.b16 %v1492, %v1488
  %v2401 = vpack.c.b16 %v1497, %v1493
  %v2402 = vpack.c.b16 %v1498, %v1494
  %v2403 = vpack.c.b16 %v1499, %v1495
  %v2404 = vpack.c.b16 %v1500, %v1496
  %v2405 = vpack.c.b16 %v1505, %v1501
  %v2406 = vpack.c.b16 %v1506, %v1502
  %v2407 = vpack.c.b16 %v1507, %v1503
  %v2408 = vpack.c.b16 %v1508, %v1504
  %v2409 = vpack.c.b16 %v1513, %v1509
  %v2410 = vpack.c.b16 %v1514, %v1510
  %v2411 = vpack.c.b16 %v1515, %v1511
  %v2412 = vpack.c.b16 %v1516, %v1512
  %v2413 = vpack.c.b16 %v1521, %v1517
  %v2414 = vpack.c.b16 %v1522, %v1518
  %v2415 = vpack.c.b16 %v1523, %v1519
  %v2416 = vpack.c.b16 %v1524, %v1520
  %v2417 = vpack.c.b16 %v1529, %v1525
  %v2418 = vpack.c.b16 %v1530, %v1526
  %v2419 = vpack.c.b16 %v1531, %v1527
  %v2420 = vpack.c.b16 %v1532, %v1528
  %v2421 = vpack.c.b16 %v1537, %v1533
  %v2422 = vpack.c.b16 %v1538, %v1534
  %v2423 = vpack.c.b16 %v1539, %v1535
  %v2424 = vpack.c.b16 %v1540, %v1536
  %v2425 = vpack.c.b16 %v1545, %v1541
  %v2426 = vpack.c.b16 %v1546, %v1542
  %v2427 = vpack.c.b16 %v1547, %v1543
  %v2428 = vpack.c.b16 %v1548, %v1544
  %v2429 = vpack.c.b16 %v1553, %v1549
  %v2430 = vpack.c.b16 %v1554, %v1550
  %v2431 = vpack.c.b16 %v1555, %v1551
  %v2432 = vpack.c.b16 %v1556, %v1552
  %v2433 = vpack.c.b16 %v1561, %v1557
  %v2434 = vpack.c.b16 %v1562, %v1558
  %v2435 = vpack.c.b16 %v1563, %v1559
  %v2436 = vpack.c.b16 %v1564, %v1560
  %v2437 = vpack.c.b16 %v1569, %v1565
  %v2438 = vpack.c.b16 %v1570, %v1566
  %v2439 = vpack.c.b16 %v1571, %v1567
  %v2440 = vpack.c.b16 %v1572, %v1568
  %v2441 = vpack.c.b16 %v1577, %v1573
  %v2442 = vpack.c.b16 %v1578, %v1574
  %v2443 = vpack.c.b16 %v1579, %v1575
  %v2444 = vpack.c.b16 %v1580, %v1576
  %v2445 = vpack.c.b16 %v1585, %v1581
  %v2446 = vpack.c.b16 %v1586, %v1582
  %v2447 = vpack.c.b16 %v1587, %v1583
  %v2448 = vpack.c.b16 %v1588, %v1584
  %v2449 = vpack.c.b16 %v1593, %v1589
  %v2450 = vpack.c.b16 %v1594, %v1590
  %v2451 = vpack.c.b16 %v1595, %v1591
  %v2452 = vpack.c.b16 %v1596, %v1592
  %v2453 = vpack.c.b16 %v1601, %v1597
  %v2454 = vpack.c.b16 %v1602, %v1598
  %v2455 = vpack.c.b16 %v1603, %v1599
  %v2456 = vpack.c.b16 %v1604, %v1600
  %v2457 = vpack.c.b16 %v1609, %v1605
  %v2458 = vpack.c.b16 %v1610, %v1606
  %v2459 = vpack.c.b16 %v1611, %v1607
  %v2460 = vpack.c.b16 %v1612, %v1608
  %v2461 = vpack.c.b16 %v1617, %v1613
  %v2462 = vpack.c.b16 %v1618, %v1614
  %v2463 = vpack.c.b16 %v1619, %v1615
  %v2464 = vpack.c.b16 %v1620, %v1616
  %v2465 = vpack.c.b16 %v1625, %v1621
  %v2466 = vpack.c.b16 %v1626, %v1622
  %v2467 = vpack.c.b16 %v1627, %v1623
  %v2468 = vpack.c.b16 %v1628, %v1624
  %v2469 = vpack.c.b16 %v1633, %v1629
  %v2470 = vpack.c.b16 %v1634, %v1630
  %v2471 = vpack.c.b16 %v1635, %v1631
  %v2472 = vpack.c.b16 %v1636, %v1632
  %v2473 = vpack.c.b16 %v1641, %v1637
  %v2474 = vpack.c.b16 %v1642, %v1638
  %v2475 = vpack.c.b16 %v1643, %v1639
  %v2476 = vpack.c.b16 %v1644, %v1640
  %v2477 = vpack.c.b16 %v1649, %v1645
  %v2478 = vpack.c.b16 %v1650, %v1646
  %v2479 = vpack.c.b16 %v1651, %v1647
  %v2480 = vpack.c.b16 %v1652, %v1648
  %v2481 = vpack.c.b16 %v1657, %v1653
  %v2482 = vpack.c.b16 %v1658, %v1654
  %v2483 = vpack.c.b16 %v1659, %v1655
  %v2484 = vpack.c.b16 %v1660, %v1656
  %v2485 = vpack.c.b16 %v1665, %v1661
  %v2486 = vpack.c.b16 %v1666, %v1662
  %v2487 = vpack.c.b16 %v1667, %v1663
  %v2488 = vpack.c.b16 %v1668, %v1664
  %v2489 = vpack.c.b16 %v1673, %v1669
  %v2490 = vpack.c.b16 %v1674, %v1670
  %v2491 = vpack.c.b16 %v1675, %v1671
  %v2492 = vpack.c.b16 %v1676, %v1672
  %v2493 = vpack.c.b16 %v1681, %v1677
  %v2494 = vpack.c.b16 %v1682, %v1678
  %v2495 = vpack.c.b16 %v1683, %v1679
  %v2496 = vpack.c.b16 %v1684, %v1680
  %v2497 = vpack.c.b16 %v1689, %v1685
  %v2498 = vpack.c.b16 %v1690, %v1686
  %v2499 = vpack.c.b16 %v1691, %v1687
  %v2500 = vpack.c.b16 %v1692, %v1688
  %v2501 = vpack.c.b16 %v1697, %v1693
  %v2502 = vpack.c.b16 %v1698, %v1694
  %v2503 = vpack.c.b16 %v1699, %v1695
  %v2504 = vpack.c.b16 %v1700, %v1696
  %v2505 = vpack.c.b16 %v1705, %v1701
  %v2506 = vpack.c.b16 %v1706, %v1702
  %v2507 = vpack.c.b16 %v1707, %v1703
  %v2508 = vpack.c.b16 %v1708, %v1704
  %v2509 = vpack.c.b16 %v1713, %v1709
  %v2510 = vpack.c.b16 %v1714, %v1710
  %v2511 = vpack.c.b16 %v1715, %v1711
  %v2512 = vpack.c.b16 %v1716, %v1712
  %v2513 = vpack.c.b16 %v1721, %v1717
  %v2514 = vpack.c.b16 %v1722, %v1718
  %v2515 = vpack.c.b16 %v1723, %v1719
  %v2516 = vpack.c.b16 %v1724, %v1720
  %v2517 = vpack.c.b16 %v1729, %v1725
  %v2518 = vpack.c.b16 %v1730, %v1726
  %v2519 = vpack.c.b16 %v1731, %v1727
  %v2520 = vpack.c.b16 %v1732, %v1728
  %v2521 = vpack.c.b16 %v1737, %v1733
  %v2522 = vpack.c.b16 %v1738, %v1734
  %v2523 = vpack.c.b16 %v1739, %v1735
  %v2524 = vpack.c.b16 %v1740, %v1736
  %v2525 = vpack.c.b16 %v1745, %v1741
  %v2526 = vpack.c.b16 %v1746, %v1742
  %v2527 = vpack.c.b16 %v1747, %v1743
  %v2528 = vpack.c.b16 %v1748, %v1744
  %v2529 = vpack.c.b16 %v1753, %v1749
  %v2530 = vpack.c.b16 %v1754, %v1750
  %v2531 = vpack.c.b16 %v1755, %v1751
  %v2532 = vpack.c.b16 %v1756, %v1752
  %v2533 = vpack.c.b16 %v1761, %v1757
  %v2534 = vpack.c.b16 %v1762, %v1758
  %v2535 = vpack.c.b16 %v1763, %v1759
  %v2536 = vpack.c.b16 %v1764, %v1760
  %v2537 = vpack.c.b16 %v1769, %v1765
  %v2538 = vpack.c.b16 %v1770, %v1766
  %v2539 = vpack.c.b16 %v1771, %v1767
  %v2540 = vpack.c.b16 %v1772, %v1768
  %v2541 = vpack.c.b16 %v1777, %v1773
  %v2542 = vpack.c.b16 %v1778, %v1774
  %v2543 = vpack.c.b16 %v1779, %v1775
  %v2544 = vpack.c.b16 %v1780, %v1776
  %v2545 = vpack.c.b16 %v1785, %v1781
  %v2546 = vpack.c.b16 %v1786, %v1782
  %v2547 = vpack.c.b16 %v1787, %v1783
  %v2548 = vpack.c.b16 %v1788, %v1784
  %v2549 = vpack.c.b16 %v1793, %v1789
  %v2550 = vpack.c.b16 %v1794, %v1790
  %v2551 = vpack.c.b16 %v1795, %v1791
  %v2552 = vpack.c.b16 %v1796, %v1792
  %v2553 = vpack.c.b16 %v1801, %v1797
  %v2554 = vpack.c.b16 %v1802, %v1798
  %v2555 = vpack.c.b16 %v1803, %v1799
  %v2556 = vpack.c.b16 %v1804, %v1800
  %v2557 = vpack.c.b16 %v1809, %v1805
  %v2558 = vpack.c.b16 %v1810, %v1806
  %v2559 = vpack.c.b16 %v1811, %v1807
  %v2560 = vpack.c.b16 %v1812, %v1808
  %v2561 = vpack.c.b16 %v1817, %v1813
  %v2562 = vpack.c.b16 %v1818, %v1814
  %v2563 = vpack.c.b16 %v1819, %v1815
  %v2564 = vpack.c.b16 %v1820, %v1816
  %v2565 = vpack.c.b16 %v1825, %v1821
  %v2566 = vpack.c.b16 %v1826, %v1822
  %v2567 = vpack.c.b16 %v1827, %v1823
  %v2568 = vpack.c.b16 %v1828, %v1824
  %v2569 = vpack.c.b16 %v1833, %v1829
  %v2570 = vpack.c.b16 %v1834, %v1830
  %v2571 = vpack.c.b16 %v1835, %v1831
  %v2572 = vpack.c.b16 %v1836, %v1832
  %v2573 = vpack.c.b16 %v1841, %v1837
  %v2574 = vpack.c.b16 %v1842, %v1838
  %v2575 = vpack.c.b16 %v1843, %v1839
  %v2576 = vpack.c.b16 %v1844, %v1840
  %v2577 = vpack.c.b16 %v1849, %v1845
  %v2578 = vpack.c.b16 %v1850, %v1846
  %v2579 = vpack.c.b16 %v1851, %v1847
  %v2580 = vpack.c.b16 %v1852, %v1848
  %v2581 = vpack.c.b16 %v1857, %v1853
  %v2582 = vpack.c.b16 %v1858, %v1854
  %v2583 = vpack.c.b16 %v1859, %v1855
  %v2584 = vpack.c.b16 %v1860, %v1856
  %v2585 = vpack.c.b16 %v1865, %v1861
  %v2586 = vpack.c.b16 %v1866, %v1862
  %v2587 = vpack.c.b16 %v1867, %v1863
  %v2588 = vpack.c.b16 %v1868, %v1864
  %v2589 = vpack.c.b16 %v1873, %v1869
  %v2590 = vpack.c.b16 %v1874, %v1870
  %v2591 = vpack.c.b16 %v1875, %v1871
  %v2592 = vpack.c.b16 %v1876, %v1872
  %v2593 = vpack.c.b16 %v1881, %v1877
  %v2594 = vpack.c.b16 %v1882, %v1878
  %v2595 = vpack.c.b16 %v1883, %v1879
  %v2596 = vpack.c.b16 %v1884, %v1880
  %v2597 = vpack.c.b16 %v1889, %v1885
  %v2598 = vpack.c.b16 %v1890, %v1886
  %v2599 = vpack.c.b16 %v1891, %v1887
  %v2600 = vpack.c.b16 %v1892, %v1888
  %v2601 = vpack.c.b16 %v1897, %v1893
  %v2602 = vpack.c.b16 %v1898, %v1894
  %v2603 = vpack.c.b16 %v1899, %v1895
  %v2604 = vpack.c.b16 %v1900, %v1896
  %v2605 = vpack.c.b16 %v1905, %v1901
  %v2606 = vpack.c.b16 %v1906, %v1902
  %v2607 = vpack.c.b16 %v1907, %v1903
  %v2608 = vpack.c.b16 %v1908, %v1904
  %v2609 = vpack.c.b16 %v1913, %v1909
  %v2610 = vpack.c.b16 %v1914, %v1910
  %v2611 = vpack.c.b16 %v1915, %v1911
  %v2612 = vpack.c.b16 %v1916, %v1912
  %v2613 = vpack.c.b16 %v1921, %v1917
  %v2614 = vpack.c.b16 %v1922, %v1918
  %v2615 = vpack.c.b16 %v1923, %v1919
  %v2616 = vpack.c.b16 %v1924, %v1920
  %v2617 = vpack.c.b16 %v1929, %v1925
  %v2618 = vpack.c.b16 %v1930, %v1926
  %v2619 = vpack.c.b16 %v1931, %v1927
  %v2620 = vpack.c.b16 %v1932, %v1928
  %v2621 = vpack.c.b16 %v1937, %v1933
  %v2622 = vpack.c.b16 %v1938, %v1934
  %v2623 = vpack.c.b16 %v1939, %v1935
  %v2624 = vpack.c.b16 %v1940, %v1936
  %v2625 = vpack.c.b16 %v1945, %v1941
  %v2626 = vpack.c.b16 %v1946, %v1942
  %v2627 = vpack.c.b16 %v1947, %v1943
  %v2628 = vpack.c.b16 %v1948, %v1944
  %v2629 = vpack.c.b16 %v1953, %v1949
  %v2630 = vpack.c.b16 %v1954, %v1950
  %v2631 = vpack.c.b16 %v1955, %v1951
  %v2632 = vpack.c.b16 %v1956, %v1952
  %v2633 = vpack.c.b16 %v1961, %v1957
  %v2634 = vpack.c.b16 %v1962, %v1958
  %v2635 = vpack.c.b16 %v1963, %v1959
  %v2636 = vpack.c.b16 %v1964, %v1960
  %v2637 = vpack.c.b16 %v1969, %v1965
  %v2638 = vpack.c.b16 %v1970, %v1966
  %v2639 = vpack.c.b16 %v1971, %v1967
  %v2640 = vpack.c.b16 %v1972, %v1968
  %v2641 = vpack.c.b16 %v1977, %v1973
  %v2642 = vpack.c.b16 %v1978, %v1974
  %v2643 = vpack.c.b16 %v1979, %v1975
  %v2644 = vpack.c.b16 %v1980, %v1976
  %v2645 = vpack.c.b16 %v1985, %v1981
  %v2646 = vpack.c.b16 %v1986, %v1982
  %v2647 = vpack.c.b16 %v1987, %v1983
  %v2648 = vpack.c.b16 %v1988, %v1984
  %v2649 = vpack.c.b16 %v1993, %v1989
  %v2650 = vpack.c.b16 %v1994, %v1990
  %v2651 = vpack.c.b16 %v1995, %v1991
  %v2652 = vpack.c.b16 %v1996, %v1992
  %v2653 = vpack.c.b16 %v2001, %v1997
  %v2654 = vpack.c.b16 %v2002, %v1998
  %v2655 = vpack.c.b16 %v2003, %v1999
  %v2656 = vpack.c.b16 %v2004, %v2000
  %v2657 = vpack.c.b16 %v2009, %v2005
  %v2658 = vpack.c.b16 %v2010, %v2006
  %v2659 = vpack.c.b16 %v2011, %v2007
  %v2660 = vpack.c.b16 %v2012, %v2008
  %v2661 = vpack.c.b16 %v2017, %v2013
  %v2662 = vpack.c.b16 %v2018, %v2014
  %v2663 = vpack.c.b16 %v2019, %v2015
  %v2664 = vpack.c.b16 %v2020, %v2016
  %v2665 = vpack.c.b16 %v2025, %v2021
  %v2666 = vpack.c.b16 %v2026, %v2022
  %v2667 = vpack.c.b16 %v2027, %v2023
  %v2668 = vpack.c.b16 %v2028, %v2024
  %v2669 = vpack.c.b16 %v2033, %v2029
  %v2670 = vpack.c.b16 %v2034, %v2030
  %v2671 = vpack.c.b16 %v2035, %v2031
  %v2672 = vpack.c.b16 %v2036, %v2032
  %v2673 = vpack.c.b16 %v2041, %v2037
  %v2674 = vpack.c.b16 %v2042, %v2038
  %v2675 = vpack.c.b16 %v2043, %v2039
  %v2676 = vpack.c.b16 %v2044, %v2040
  %v2677 = vpack.c.b16 %v2049, %v2045
  %v2678 = vpack.c.b16 %v2050, %v2046
  %v2679 = vpack.c.b16 %v2051, %v2047
  %v2680 = vpack.c.b16 %v2052, %v2048
  %v2681 = vpack.c.b16 %v2057, %v2053
  %v2682 = vpack.c.b16 %v2058, %v2054
  %v2683 = vpack.c.b16 %v2059, %v2055
  %v2684 = vpack.c.b16 %v2060, %v2056
  %v2685 = vpack.c.b16 %v2065, %v2061
  %v2686 = vpack.c.b16 %v2066, %v2062
  %v2687 = vpack.c.b16 %v2067, %v2063
  %v2688 = vpack.c.b16 %v2068, %v2064
  %v2689 = vpack.c.b16 %v2073, %v2069
  %v2690 = vpack.c.b16 %v2074, %v2070
  %v2691 = vpack.c.b16 %v2075, %v2071
  %v2692 = vpack.c.b16 %v2076, %v2072
  %v2693 = vpack.c.b16 %v2081, %v2077
  %v2694 = vpack.c.b16 %v2082, %v2078
  %v2695 = vpack.c.b16 %v2083, %v2079
  %v2696 = vpack.c.b16 %v2084, %v2080
  %v2697 = vpack.c.b16 %v2089, %v2085
  %v2698 = vpack.c.b16 %v2090, %v2086
  %v2699 = vpack.c.b16 %v2091, %v2087
  %v2700 = vpack.c.b16 %v2092, %v2088
  %v2701 = vpack.c.b16 %v2097, %v2093
  %v2702 = vpack.c.b16 %v2098, %v2094
  %v2703 = vpack.c.b16 %v2099, %v2095
  %v2704 = vpack.c.b16 %v2100, %v2096
  %v2705 = vpack.c.b16 %v2105, %v2101
  %v2706 = vpack.c.b16 %v2106, %v2102
  %v2707 = vpack.c.b16 %v2107, %v2103
  %v2708 = vpack.c.b16 %v2108, %v2104
  %v2709 = vpack.c.b16 %v2113, %v2109
  %v2710 = vpack.c.b16 %v2114, %v2110
  %v2711 = vpack.c.b16 %v2115, %v2111
  %v2712 = vpack.c.b16 %v2116, %v2112
  %v2713 = vpack.c.b16 %v2121, %v2117
  %v2714 = vpack.c.b16 %v2122, %v2118
  %v2715 = vpack.c.b16 %v2123, %v2119
  %v2716 = vpack.c.b16 %v2124, %v2120
  %v2717 = vpack.c.b16 %v2129, %v2125
  %v2718 = vpack.c.b16 %v2130, %v2126
  %v2719 = vpack.c.b16 %v2131, %v2127
  %v2720 = vpack.c.b16 %v2132, %v2128
  %v2721 = vpack.c.b16 %v2137, %v2133
  %v2722 = vpack.c.b16 %v2138, %v2134
  %v2723 = vpack.c.b16 %v2139, %v2135
  %v2724 = vpack.c.b16 %v2140, %v2136
  %v2725 = vpack.c.b16 %v2145, %v2141
  %v2726 = vpack.c.b16 %v2146, %v2142
  %v2727 = vpack.c.b16 %v2147, %v2143
  %v2728 = vpack.c.b16 %v2148, %v2144
  %v2729 = vpack.c.b16 %v2153, %v2149
  %v2730 = vpack.c.b16 %v2154, %v2150
  %v2731 = vpack.c.b16 %v2155, %v2151
  %v2732 = vpack.c.b16 %v2156, %v2152
  %v2733 = vpack.c.b16 %v2161, %v2157
  %v2734 = vpack.c.b16 %v2162, %v2158
  %v2735 = vpack.c.b16 %v2163, %v2159
  %v2736 = vpack.c.b16 %v2164, %v2160
  %v2737 = vpack.c.b16 %v2169, %v2165
  %v2738 = vpack.c.b16 %v2170, %v2166
  %v2739 = vpack.c.b16 %v2171, %v2167
  %v2740 = vpack.c.b16 %v2172, %v2168
  %v2741 = vpack.c.b16 %v2177, %v2173
  %v2742 = vpack.c.b16 %v2178, %v2174
  %v2743 = vpack.c.b16 %v2179, %v2175
  %v2744 = vpack.c.b16 %v2180, %v2176
  %v2745 = vpack.c.b16 %v2185, %v2181
  %v2746 = vpack.c.b16 %v2186, %v2182
  %v2747 = vpack.c.b16 %v2187, %v2183
  %v2748 = vpack.c.b16 %v2188, %v2184
  %v2749 = vpack.c.b16 %v2193, %v2189
  %v2750 = vpack.c.b16 %v2194, %v2190
  %v2751 = vpack.c.b16 %v2195, %v2191
  %v2752 = vpack.c.b16 %v2196, %v2192
  %v2753 = vpack.c.b16 %v2201, %v2197
  %v2754 = vpack.c.b16 %v2202, %v2198
  %v2755 = vpack.c.b16 %v2203, %v2199
  %v2756 = vpack.c.b16 %v2204, %v2200
  %v2757 = vpack.c.b16 %v2209, %v2205
  %v2758 = vpack.c.b16 %v2210, %v2206
  %v2759 = vpack.c.b16 %v2211, %v2207
  %v2760 = vpack.c.b16 %v2212, %v2208
  %v2761 = vpack.c.b16 %v2217, %v2213
  %v2762 = vpack.c.b16 %v2218, %v2214
  %v2763 = vpack.c.b16 %v2219, %v2215
  %v2764 = vpack.c.b16 %v2220, %v2216
  %v2765 = vpack.c.b16 %v2225, %v2221
  %v2766 = vpack.c.b16 %v2226, %v2222
  %v2767 = vpack.c.b16 %v2227, %v2223
  %v2768 = vpack.c.b16 %v2228, %v2224
  %v2769 = vpack.c.b16 %v2233, %v2229
  %v2770 = vpack.c.b16 %v2234, %v2230
  %v2771 = vpack.c.b16 %v2235, %v2231
  %v2772 = vpack.c.b16 %v2236, %v2232
  %v2773 = vpack.c.b16 %v2241, %v2237
  %v2774 = vpack.c.b16 %v2242, %v2238
  %v2775 = vpack.c.b16 %v2243, %v2239
  %v2776 = vpack.c.b16 %v2244, %v2240
  %v2777 = vpack.c.b16 %v2249, %v2245
  %v2778 = vpack.c.b16 %v2250, %v2246
  %v2779 = vpack.c.b16 %v2251, %v2247
  %v2780 = vpack.c.b16 %v2252, %v2248
  %v2781 = vpack.c.b16 %v2257, %v2253
  %v2782 = vpack.c.b16 %v2258, %v2254
  %v2783 = vpack.c.b16 %v2259, %v2255
  %v2784 = vpack.c.b16 %v2260, %v2256
  %v2785 = vpack.c.b16 %v2265, %v2261
  %v2786 = vpack.c.b16 %v2266, %v2262
  %v2787 = vpack.c.b16 %v2267, %v2263
  %v2788 = vpack.c.b16 %v2268, %v2264
  %v2789 = vpack.c.b16 %v2273, %v2269
  %v2790 = vpack.c.b16 %v2274, %v2270
  %v2791 = vpack.c.b16 %v2275, %v2271
  %v2792 = vpack.c.b16 %v2276, %v2272
  %v2793 = vpack.c.b16 %v2281, %v2277
  %v2794 = vpack.c.b16 %v2282, %v2278
  %v2795 = vpack.c.b16 %v2283, %v2279
  %v2796 = vpack.c.b16 %v2284, %v2280
  %3309 = vmatprep.subr.bf16.mxu0 %v2286
  %3310 = vmatpush1.bf16.msra.mxu0 %v2285
  %3311 = vmatprep.subr.bf16.mxu0 %v2290
  %3312 = vmatpush1.bf16.msra.mxu0 %v2289
  %3313 = vmatprep.subr.bf16.mxu0 %v2294
  %3314 = vmatpush1.bf16.msra.mxu0 %v2293
  %3315 = vmatprep.subr.bf16.mxu0 %v2298
  %3316 = vmatpush1.bf16.msra.mxu0 %v2297
  %3317 = vmatprep.subr.bf16.mxu0 %v2302
  %3318 = vmatpush1.bf16.msra.mxu0 %v2301
  %3319 = vmatprep.subr.bf16.mxu0 %v2306
  %3320 = vmatpush1.bf16.msra.mxu0 %v2305
  %3321 = vmatprep.subr.bf16.mxu0 %v2310
  %3322 = vmatpush1.bf16.msra.mxu0 %v2309
  %3323 = vmatprep.subr.bf16.mxu0 %v2314
  %3324 = vmatpush1.bf16.msra.mxu0 %v2313
  %3325 = vmatprep.subr.bf16.mxu0 %v2318
  %3326 = vmatpush1.bf16.msra.mxu0 %v2317
  %3327 = vmatprep.subr.bf16.mxu0 %v2322
  %3328 = vmatpush1.bf16.msra.mxu0 %v2321
  %3329 = vmatprep.subr.bf16.mxu0 %v2326
  %3330 = vmatpush1.bf16.msra.mxu0 %v2325
  %3331 = vmatprep.subr.bf16.mxu0 %v2330
  %3332 = vmatpush1.bf16.msra.mxu0 %v2329
  %3333 = vmatprep.subr.bf16.mxu0 %v2334
  %3334 = vmatpush1.bf16.msra.mxu0 %v2333
  %3335 = vmatprep.subr.bf16.mxu0 %v2338
  %3336 = vmatpush1.bf16.msra.mxu0 %v2337
  %3337 = vmatprep.subr.bf16.mxu0 %v2342
  %3338 = vmatpush1.bf16.msra.mxu0 %v2341
  %3339 = vmatprep.subr.bf16.mxu0 %v2346
  %3340 = vmatpush1.bf16.msra.mxu0 %v2345
  %3341 = vmatprep.mubr.bf16.mxu0 %v686
  %3342 = vmatmul.mubr.bf16.gmra.mrb[0].mxu0 %v685
  %v3343 = vpop.f32.mrb[0].mxu0
  %v3344 = vadd.f32 %v572, %v3343
  %v3345 = vpop.f32.mrb[0].mxu0
  %v3346 = vadd.f32 %v576, %v3345
  %v3347 = vpop.f32.mrb[0].mxu0
  %v3348 = vadd.f32 %v572, %v3347
  %v3349 = vpop.f32.mrb[0].mxu0
  %v3350 = vadd.f32 %v576, %v3349
  %3351 = vmatprep.mubr.bf16.mxu0 %v702
  %3352 = vmatmul.mubr.bf16.gmra.mrb[0].mxu0 %v701
  %v3353 = vpop.f32.mrb[0].mxu0
  %v3354 = vadd.f32 %v572, %v3353
  %v3355 = vpop.f32.mrb[0].mxu0
  %v3356 = vadd.f32 %v576, %v3355
  %v3357 = vpop.f32.mrb[0].mxu0
  %v3358 = vadd.f32 %v572, %v3357
  %v3359 = vpop.f32.mrb[0].mxu0
  %v3360 = vadd.f32 %v576, %v3359
  %3361 = vdwg.mxu0
  %3362 = vmatprep.subr.bf16.mxu0 %v2350
  %3363 = vmatpush1.bf16.msra.mxu0 %v2349
  %3364 = vmatprep.subr.bf16.mxu0 %v2354
  %3365 = vmatpush1.bf16.msra.mxu0 %v2353
  %3366 = vmatprep.subr.bf16.mxu0 %v2358
  %3367 = vmatpush1.bf16.msra.mxu0 %v2357
  %3368 = vmatprep.subr.bf16.mxu0 %v2362
  %3369 = vmatpush1.bf16.msra.mxu0 %v2361
  %3370 = vmatprep.subr.bf16.mxu0 %v2366
  %3371 = vmatpush1.bf16.msra.mxu0 %v2365
  %3372 = vmatprep.subr.bf16.mxu0 %v2370
  %3373 = vmatpush1.bf16.msra.mxu0 %v2369
  %3374 = vmatprep.subr.bf16.mxu0 %v2374
  %3375 = vmatpush1.bf16.msra.mxu0 %v2373
  %3376 = vmatprep.subr.bf16.mxu0 %v2378
  %3377 = vmatpush1.bf16.msra.mxu0 %v2377
  %3378 = vmatprep.subr.bf16.mxu0 %v2382
  %3379 = vmatpush1.bf16.msra.mxu0 %v2381
  %3380 = vmatprep.subr.bf16.mxu0 %v2386
  %3381 = vmatpush1.bf16.msra.mxu0 %v2385
  %3382 = vmatprep.subr.bf16.mxu0 %v2390
  %3383 = vmatpush1.bf16.msra.mxu0 %v2389
  %3384 = vmatprep.subr.bf16.mxu0 %v2394
  %3385 = vmatpush1.bf16.msra.mxu0 %v2393
  %3386 = vmatprep.subr.bf16.mxu0 %v2398
  %3387 = vmatpush1.bf16.msra.mxu0 %v2397
  %3388 = vmatprep.subr.bf16.mxu0 %v2402
  %3389 = vmatpush1.bf16.msra.mxu0 %v2401
  %3390 = vmatprep.subr.bf16.mxu0 %v2406
  %3391 = vmatpush1.bf16.msra.mxu0 %v2405
  %3392 = vmatprep.subr.bf16.mxu0 %v2410
  %3393 = vmatpush1.bf16.msra.mxu0 %v2409
  %3394 = vmatprep.mubr.bf16.mxu0 %v688
  %3395 = vmatmul.mubr.bf16.gmra.mrb[0].mxu0 %v687
  %v3396 = vpop.f32.mrb[0].mxu0
  %v3397 = vadd.f32 %v3344, %v3396
  %v3398 = vpop.f32.mrb[0].mxu0
  %v3399 = vadd.f32 %v3346, %v3398
  %v3400 = vpop.f32.mrb[0].mxu0
  %v3401 = vadd.f32 %v3348, %v3400
  %v3402 = vpop.f32.mrb[0].mxu0
  %v3403 = vadd.f32 %v3350, %v3402
  %3404 = vmatprep.mubr.bf16.mxu0 %v704
  %3405 = vmatmul.mubr.bf16.gmra.mrb[0].mxu0 %v703
  %v3406 = vpop.f32.mrb[0].mxu0
  %v3407 = vadd.f32 %v3354, %v3406
  %v3408 = vpop.f32.mrb[0].mxu0
  %v3409 = vadd.f32 %v3356, %v3408
  %v3410 = vpop.f32.mrb[0].mxu0
  %v3411 = vadd.f32 %v3358, %v3410
  %v3412 = vpop.f32.mrb[0].mxu0
  %v3413 = vadd.f32 %v3360, %v3412
  %3414 = vdwg.mxu0
  %3415 = vmatprep.subr.bf16.mxu0 %v2414
  %3416 = vmatpush1.bf16.msra.mxu0 %v2413
  %3417 = vmatprep.subr.bf16.mxu0 %v2418
  %3418 = vmatpush1.bf16.msra.mxu0 %v2417
  %3419 = vmatprep.subr.bf16.mxu0 %v2422
  %3420 = vmatpush1.bf16.msra.mxu0 %v2421
  %3421 = vmatprep.subr.bf16.mxu0 %v2426
  %3422 = vmatpush1.bf16.msra.mxu0 %v2425
  %3423 = vmatprep.subr.bf16.mxu0 %v2430
  %3424 = vmatpush1.bf16.msra.mxu0 %v2429
  %3425 = vmatprep.subr.bf16.mxu0 %v2434
  %3426 = vmatpush1.bf16.msra.mxu0 %v2433
  %3427 = vmatprep.subr.bf16.mxu0 %v2438
  %3428 = vmatpush1.bf16.msra.mxu0 %v2437
  %3429 = vmatprep.subr.bf16.mxu0 %v2442
  %3430 = vmatpush1.bf16.msra.mxu0 %v2441
  %3431 = vmatprep.subr.bf16.mxu0 %v2446
  %3432 = vmatpush1.bf16.msra.mxu0 %v2445
  %3433 = vmatprep.subr.bf16.mxu0 %v2450
  %3434 = vmatpush1.bf16.msra.mxu0 %v2449
  %3435 = vmatprep.subr.bf16.mxu0 %v2454
  %3436 = vmatpush1.bf16.msra.mxu0 %v2453
  %3437 = vmatprep.subr.bf16.mxu0 %v2458
  %3438 = vmatpush1.bf16.msra.mxu0 %v2457
  %3439 = vmatprep.subr.bf16.mxu0 %v2462
  %3440 = vmatpush1.bf16.msra.mxu0 %v2461
  %3441 = vmatprep.subr.bf16.mxu0 %v2466
  %3442 = vmatpush1.bf16.msra.mxu0 %v2465
  %3443 = vmatprep.subr.bf16.mxu0 %v2470
  %3444 = vmatpush1.bf16.msra.mxu0 %v2469
  %3445 = vmatprep.subr.bf16.mxu0 %v2474
  %3446 = vmatpush1.bf16.msra.mxu0 %v2473
  %3447 = vmatprep.mubr.bf16.mxu0 %v690
  %3448 = vmatmul.mubr.bf16.gmra.mrb[0].mxu0 %v689
  %v3449 = vpop.f32.mrb[0].mxu0
  %v3450 = vadd.f32 %v3397, %v3449
  %v3451 = vpop.f32.mrb[0].mxu0
  %v3452 = vadd.f32 %v3399, %v3451
  %v3453 = vpop.f32.mrb[0].mxu0
  %v3454 = vadd.f32 %v3401, %v3453
  %v3455 = vpop.f32.mrb[0].mxu0
  %v3456 = vadd.f32 %v3403, %v3455
  %3457 = vmatprep.mubr.bf16.mxu0 %v706
  %3458 = vmatmul.mubr.bf16.gmra.mrb[0].mxu0 %v705
  %v3459 = vpop.f32.mrb[0].mxu0
  %v3460 = vadd.f32 %v3407, %v3459
  %v3461 = vpop.f32.mrb[0].mxu0
  %v3462 = vadd.f32 %v3409, %v3461
  %v3463 = vpop.f32.mrb[0].mxu0
  %v3464 = vadd.f32 %v3411, %v3463
  %v3465 = vpop.f32.mrb[0].mxu0
  %v3466 = vadd.f32 %v3413, %v3465
  %3467 = vdwg.mxu0
  %3468 = vmatprep.subr.bf16.mxu0 %v2478
  %3469 = vmatpush1.bf16.msra.mxu0 %v2477
  %3470 = vmatprep.subr.bf16.mxu0 %v2482
  %3471 = vmatpush1.bf16.msra.mxu0 %v2481
  %3472 = vmatprep.subr.bf16.mxu0 %v2486
  %3473 = vmatpush1.bf16.msra.mxu0 %v2485
  %3474 = vmatprep.subr.bf16.mxu0 %v2490
  %3475 = vmatpush1.bf16.msra.mxu0 %v2489
  %3476 = vmatprep.subr.bf16.mxu0 %v2494
  %3477 = vmatpush1.bf16.msra.mxu0 %v2493
  %3478 = vmatprep.subr.bf16.mxu0 %v2498
  %3479 = vmatpush1.bf16.msra.mxu0 %v2497
  %3480 = vmatprep.subr.bf16.mxu0 %v2502
  %3481 = vmatpush1.bf16.msra.mxu0 %v2501
  %3482 = vmatprep.subr.bf16.mxu0 %v2506
  %3483 = vmatpush1.bf16.msra.mxu0 %v2505
  %3484 = vmatprep.subr.bf16.mxu0 %v2510
  %3485 = vmatpush1.bf16.msra.mxu0 %v2509
  %3486 = vmatprep.subr.bf16.mxu0 %v2514
  %3487 = vmatpush1.bf16.msra.mxu0 %v2513
  %3488 = vmatprep.subr.bf16.mxu0 %v2518
  %3489 = vmatpush1.bf16.msra.mxu0 %v2517
  %3490 = vmatprep.subr.bf16.mxu0 %v2522
  %3491 = vmatpush1.bf16.msra.mxu0 %v2521
  %3492 = vmatprep.subr.bf16.mxu0 %v2526
  %3493 = vmatpush1.bf16.msra.mxu0 %v2525
  %3494 = vmatprep.subr.bf16.mxu0 %v2530
  %3495 = vmatpush1.bf16.msra.mxu0 %v2529
  %3496 = vmatprep.subr.bf16.mxu0 %v2534
  %3497 = vmatpush1.bf16.msra.mxu0 %v2533
  %3498 = vmatprep.subr.bf16.mxu0 %v2538
  %3499 = vmatpush1.bf16.msra.mxu0 %v2537
  %3500 = vmatprep.mubr.bf16.mxu0 %v692
  %3501 = vmatmul.mubr.bf16.gmra.mrb[0].mxu0 %v691
  %v3502 = vpop.f32.mrb[0].mxu0
  %v3503 = vadd.f32 %v3450, %v3502
  %v3504 = vpop.f32.mrb[0].mxu0
  %v3505 = vadd.f32 %v3452, %v3504
  %v3506 = vpop.f32.mrb[0].mxu0
  %v3507 = vadd.f32 %v3454, %v3506
  %v3508 = vpop.f32.mrb[0].mxu0
  %v3509 = vadd.f32 %v3456, %v3508
  %3510 = vmatprep.mubr.bf16.mxu0 %v708
  %3511 = vmatmul.mubr.bf16.gmra.mrb[0].mxu0 %v707
  %v3512 = vpop.f32.mrb[0].mxu0
  %v3513 = vadd.f32 %v3460, %v3512
  %v3514 = vpop.f32.mrb[0].mxu0
  %v3515 = vadd.f32 %v3462, %v3514
  %v3516 = vpop.f32.mrb[0].mxu0
  %v3517 = vadd.f32 %v3464, %v3516
  %v3518 = vpop.f32.mrb[0].mxu0
  %v3519 = vadd.f32 %v3466, %v3518
  %3520 = vdwg.mxu0
  %3521 = vmatprep.subr.bf16.mxu0 %v2542
  %3522 = vmatpush1.bf16.msra.mxu0 %v2541
  %3523 = vmatprep.subr.bf16.mxu0 %v2546
  %3524 = vmatpush1.bf16.msra.mxu0 %v2545
  %3525 = vmatprep.subr.bf16.mxu0 %v2550
  %3526 = vmatpush1.bf16.msra.mxu0 %v2549
  %3527 = vmatprep.subr.bf16.mxu0 %v2554
  %3528 = vmatpush1.bf16.msra.mxu0 %v2553
  %3529 = vmatprep.subr.bf16.mxu0 %v2558
  %3530 = vmatpush1.bf16.msra.mxu0 %v2557
  %3531 = vmatprep.subr.bf16.mxu0 %v2562
  %3532 = vmatpush1.bf16.msra.mxu0 %v2561
  %3533 = vmatprep.subr.bf16.mxu0 %v2566
  %3534 = vmatpush1.bf16.msra.mxu0 %v2565
  %3535 = vmatprep.subr.bf16.mxu0 %v2570
  %3536 = vmatpush1.bf16.msra.mxu0 %v2569
  %3537 = vmatprep.subr.bf16.mxu0 %v2574
  %3538 = vmatpush1.bf16.msra.mxu0 %v2573
  %3539 = vmatprep.subr.bf16.mxu0 %v2578
  %3540 = vmatpush1.bf16.msra.mxu0 %v2577
  %3541 = vmatprep.subr.bf16.mxu0 %v2582
  %3542 = vmatpush1.bf16.msra.mxu0 %v2581
  %3543 = vmatprep.subr.bf16.mxu0 %v2586
  %3544 = vmatpush1.bf16.msra.mxu0 %v2585
  %3545 = vmatprep.subr.bf16.mxu0 %v2590
  %3546 = vmatpush1.bf16.msra.mxu0 %v2589
  %3547 = vmatprep.subr.bf16.mxu0 %v2594
  %3548 = vmatpush1.bf16.msra.mxu0 %v2593
  %3549 = vmatprep.subr.bf16.mxu0 %v2598
  %3550 = vmatpush1.bf16.msra.mxu0 %v2597
  %3551 = vmatprep.subr.bf16.mxu0 %v2602
  %3552 = vmatpush1.bf16.msra.mxu0 %v2601
  %3553 = vmatprep.mubr.bf16.mxu0 %v694
  %3554 = vmatmul.mubr.bf16.gmra.mrb[0].mxu0 %v693
  %v3555 = vpop.f32.mrb[0].mxu0
  %v3556 = vadd.f32 %v3503, %v3555
  %v3557 = vpop.f32.mrb[0].mxu0
  %v3558 = vadd.f32 %v3505, %v3557
  %v3559 = vpop.f32.mrb[0].mxu0
  %v3560 = vadd.f32 %v3507, %v3559
  %v3561 = vpop.f32.mrb[0].mxu0
  %v3562 = vadd.f32 %v3509, %v3561
  %3563 = vmatprep.mubr.bf16.mxu0 %v710
  %3564 = vmatmul.mubr.bf16.gmra.mrb[0].mxu0 %v709
  %v3565 = vpop.f32.mrb[0].mxu0
  %v3566 = vadd.f32 %v3513, %v3565
  %v3567 = vpop.f32.mrb[0].mxu0
  %v3568 = vadd.f32 %v3515, %v3567
  %v3569 = vpop.f32.mrb[0].mxu0
  %v3570 = vadd.f32 %v3517, %v3569
  %v3571 = vpop.f32.mrb[0].mxu0
  %v3572 = vadd.f32 %v3519, %v3571
  %3573 = vdwg.mxu0
  %3574 = vmatprep.subr.bf16.mxu0 %v2606
  %3575 = vmatpush1.bf16.msra.mxu0 %v2605
  %3576 = vmatprep.subr.bf16.mxu0 %v2610
  %3577 = vmatpush1.bf16.msra.mxu0 %v2609
  %3578 = vmatprep.subr.bf16.mxu0 %v2614
  %3579 = vmatpush1.bf16.msra.mxu0 %v2613
  %3580 = vmatprep.subr.bf16.mxu0 %v2618
  %3581 = vmatpush1.bf16.msra.mxu0 %v2617
  %3582 = vmatprep.subr.bf16.mxu0 %v2622
  %3583 = vmatpush1.bf16.msra.mxu0 %v2621
  %3584 = vmatprep.subr.bf16.mxu0 %v2626
  %3585 = vmatpush1.bf16.msra.mxu0 %v2625
  %3586 = vmatprep.subr.bf16.mxu0 %v2630
  %3587 = vmatpush1.bf16.msra.mxu0 %v2629
  %3588 = vmatprep.subr.bf16.mxu0 %v2634
  %3589 = vmatpush1.bf16.msra.mxu0 %v2633
  %3590 = vmatprep.subr.bf16.mxu0 %v2638
  %3591 = vmatpush1.bf16.msra.mxu0 %v2637
  %3592 = vmatprep.subr.bf16.mxu0 %v2642
  %3593 = vmatpush1.bf16.msra.mxu0 %v2641
  %3594 = vmatprep.subr.bf16.mxu0 %v2646
  %3595 = vmatpush1.bf16.msra.mxu0 %v2645
  %3596 = vmatprep.subr.bf16.mxu0 %v2650
  %3597 = vmatpush1.bf16.msra.mxu0 %v2649
  %3598 = vmatprep.subr.bf16.mxu0 %v2654
  %3599 = vmatpush1.bf16.msra.mxu0 %v2653
  %3600 = vmatprep.subr.bf16.mxu0 %v2658
  %3601 = vmatpush1.bf16.msra.mxu0 %v2657
  %3602 = vmatprep.subr.bf16.mxu0 %v2662
  %3603 = vmatpush1.bf16.msra.mxu0 %v2661
  %3604 = vmatprep.subr.bf16.mxu0 %v2666
  %3605 = vmatpush1.bf16.msra.mxu0 %v2665
  %3606 = vmatprep.mubr.bf16.mxu0 %v696
  %3607 = vmatmul.mubr.bf16.gmra.mrb[0].mxu0 %v695
  %v3608 = vpop.f32.mrb[0].mxu0
  %v3609 = vadd.f32 %v3556, %v3608
  %v3610 = vpop.f32.mrb[0].mxu0
  %v3611 = vadd.f32 %v3558, %v3610
  %v3612 = vpop.f32.mrb[0].mxu0
  %v3613 = vadd.f32 %v3560, %v3612
  %v3614 = vpop.f32.mrb[0].mxu0
  %v3615 = vadd.f32 %v3562, %v3614
  %3616 = vmatprep.mubr.bf16.mxu0 %v712
  %3617 = vmatmul.mubr.bf16.gmra.mrb[0].mxu0 %v711
  %v3618 = vpop.f32.mrb[0].mxu0
  %v3619 = vadd.f32 %v3566, %v3618
  %v3620 = vpop.f32.mrb[0].mxu0
  %v3621 = vadd.f32 %v3568, %v3620
  %v3622 = vpop.f32.mrb[0].mxu0
  %v3623 = vadd.f32 %v3570, %v3622
  %v3624 = vpop.f32.mrb[0].mxu0
  %v3625 = vadd.f32 %v3572, %v3624
  %3626 = vdwg.mxu0
  %3627 = vmatprep.subr.bf16.mxu0 %v2670
  %3628 = vmatpush1.bf16.msra.mxu0 %v2669
  %3629 = vmatprep.subr.bf16.mxu0 %v2674
  %3630 = vmatpush1.bf16.msra.mxu0 %v2673
  %3631 = vmatprep.subr.bf16.mxu0 %v2678
  %3632 = vmatpush1.bf16.msra.mxu0 %v2677
  %3633 = vmatprep.subr.bf16.mxu0 %v2682
  %3634 = vmatpush1.bf16.msra.mxu0 %v2681
  %3635 = vmatprep.subr.bf16.mxu0 %v2686
  %3636 = vmatpush1.bf16.msra.mxu0 %v2685
  %3637 = vmatprep.subr.bf16.mxu0 %v2690
  %3638 = vmatpush1.bf16.msra.mxu0 %v2689
  %3639 = vmatprep.subr.bf16.mxu0 %v2694
  %3640 = vmatpush1.bf16.msra.mxu0 %v2693
  %3641 = vmatprep.subr.bf16.mxu0 %v2698
  %3642 = vmatpush1.bf16.msra.mxu0 %v2697
  %3643 = vmatprep.subr.bf16.mxu0 %v2702
  %3644 = vmatpush1.bf16.msra.mxu0 %v2701
  %3645 = vmatprep.subr.bf16.mxu0 %v2706
  %3646 = vmatpush1.bf16.msra.mxu0 %v2705
  %3647 = vmatprep.subr.bf16.mxu0 %v2710
  %3648 = vmatpush1.bf16.msra.mxu0 %v2709
  %3649 = vmatprep.subr.bf16.mxu0 %v2714
  %3650 = vmatpush1.bf16.msra.mxu0 %v2713
  %3651 = vmatprep.subr.bf16.mxu0 %v2718
  %3652 = vmatpush1.bf16.msra.mxu0 %v2717
  %3653 = vmatprep.subr.bf16.mxu0 %v2722
  %3654 = vmatpush1.bf16.msra.mxu0 %v2721
  %3655 = vmatprep.subr.bf16.mxu0 %v2726
  %3656 = vmatpush1.bf16.msra.mxu0 %v2725
  %3657 = vmatprep.subr.bf16.mxu0 %v2730
  %3658 = vmatpush1.bf16.msra.mxu0 %v2729
  %3659 = vmatprep.mubr.bf16.mxu0 %v698
  %3660 = vmatmul.mubr.bf16.gmra.mrb[0].mxu0 %v697
  %v3661 = vpop.f32.mrb[0].mxu0
  %v3662 = vadd.f32 %v3609, %v3661
  %v3663 = vpop.f32.mrb[0].mxu0
  %v3664 = vadd.f32 %v3611, %v3663
  %v3665 = vpop.f32.mrb[0].mxu0
  %v3666 = vadd.f32 %v3613, %v3665
  %v3667 = vpop.f32.mrb[0].mxu0
  %v3668 = vadd.f32 %v3615, %v3667
  %3669 = vmatprep.mubr.bf16.mxu0 %v714
  %3670 = vmatmul.mubr.bf16.gmra.mrb[0].mxu0 %v713
  %v3671 = vpop.f32.mrb[0].mxu0
  %v3672 = vadd.f32 %v3619, %v3671
  %v3673 = vpop.f32.mrb[0].mxu0
  %v3674 = vadd.f32 %v3621, %v3673
  %v3675 = vpop.f32.mrb[0].mxu0
  %v3676 = vadd.f32 %v3623, %v3675
  %v3677 = vpop.f32.mrb[0].mxu0
  %v3678 = vadd.f32 %v3625, %v3677
  %3679 = vdwg.mxu0
  %3680 = vmatprep.subr.bf16.mxu0 %v2734
  %3681 = vmatpush1.bf16.msra.mxu0 %v2733
  %3682 = vmatprep.subr.bf16.mxu0 %v2738
  %3683 = vmatpush1.bf16.msra.mxu0 %v2737
  %3684 = vmatprep.subr.bf16.mxu0 %v2742
  %3685 = vmatpush1.bf16.msra.mxu0 %v2741
  %3686 = vmatprep.subr.bf16.mxu0 %v2746
  %3687 = vmatpush1.bf16.msra.mxu0 %v2745
  %3688 = vmatprep.subr.bf16.mxu0 %v2750
  %3689 = vmatpush1.bf16.msra.mxu0 %v2749
  %3690 = vmatprep.subr.bf16.mxu0 %v2754
  %3691 = vmatpush1.bf16.msra.mxu0 %v2753
  %3692 = vmatprep.subr.bf16.mxu0 %v2758
  %3693 = vmatpush1.bf16.msra.mxu0 %v2757
  %3694 = vmatprep.subr.bf16.mxu0 %v2762
  %3695 = vmatpush1.bf16.msra.mxu0 %v2761
  %3696 = vmatprep.subr.bf16.mxu0 %v2766
  %3697 = vmatpush1.bf16.msra.mxu0 %v2765
  %3698 = vmatprep.subr.bf16.mxu0 %v2770
  %3699 = vmatpush1.bf16.msra.mxu0 %v2769
  %3700 = vmatprep.subr.bf16.mxu0 %v2774
  %3701 = vmatpush1.bf16.msra.mxu0 %v2773
  %3702 = vmatprep.subr.bf16.mxu0 %v2778
  %3703 = vmatpush1.bf16.msra.mxu0 %v2777
  %3704 = vmatprep.subr.bf16.mxu0 %v2782
  %3705 = vmatpush1.bf16.msra.mxu0 %v2781
  %3706 = vmatprep.subr.bf16.mxu0 %v2786
  %3707 = vmatpush1.bf16.msra.mxu0 %v2785
  %3708 = vmatprep.subr.bf16.mxu0 %v2790
  %3709 = vmatpush1.bf16.msra.mxu0 %v2789
  %3710 = vmatprep.subr.bf16.mxu0 %v2794
  %3711 = vmatpush1.bf16.msra.mxu0 %v2793
  %3712 = vmatprep.mubr.bf16.mxu0 %v700
  %3713 = vmatmul.mubr.bf16.gmra.mrb[0].mxu0 %v699
  %v3714 = vpop.f32.mrb[0].mxu0
  %v3715 = vadd.f32 %v3662, %v3714
  %v3716 = vpop.f32.mrb[0].mxu0
  %v3717 = vadd.f32 %v3664, %v3716
  %v3718 = vpop.f32.mrb[0].mxu0
  %v3719 = vadd.f32 %v3666, %v3718
  %v3720 = vpop.f32.mrb[0].mxu0
  %v3721 = vadd.f32 %v3668, %v3720
  %3722 = vmatprep.mubr.bf16.mxu0 %v716
  %3723 = vmatmul.mubr.bf16.gmra.mrb[0].mxu0 %v715
  %v3724 = vpop.f32.mrb[0].mxu0
  %v3725 = vadd.f32 %v3672, %v3724
  %v3726 = vpop.f32.mrb[0].mxu0
  %v3727 = vadd.f32 %v3674, %v3726
  %v3728 = vpop.f32.mrb[0].mxu0
  %v3729 = vadd.f32 %v3676, %v3728
  %v3730 = vpop.f32.mrb[0].mxu0
  %v3731 = vadd.f32 %v3678, %v3730
  %3732 = vdwg.mxu0
  %3733 = vmatprep.subr.bf16.mxu0 %v2288
  %3734 = vmatpush1.bf16.msra.mxu0 %v2287
  %3735 = vmatprep.subr.bf16.mxu0 %v2292
  %3736 = vmatpush1.bf16.msra.mxu0 %v2291
  %3737 = vmatprep.subr.bf16.mxu0 %v2296
  %3738 = vmatpush1.bf16.msra.mxu0 %v2295
  %3739 = vmatprep.subr.bf16.mxu0 %v2300
  %3740 = vmatpush1.bf16.msra.mxu0 %v2299
  %3741 = vmatprep.subr.bf16.mxu0 %v2304
  %3742 = vmatpush1.bf16.msra.mxu0 %v2303
  %3743 = vmatprep.subr.bf16.mxu0 %v2308
  %3744 = vmatpush1.bf16.msra.mxu0 %v2307
  %3745 = vmatprep.subr.bf16.mxu0 %v2312
  %3746 = vmatpush1.bf16.msra.mxu0 %v2311
  %3747 = vmatprep.subr.bf16.mxu0 %v2316
  %3748 = vmatpush1.bf16.msra.mxu0 %v2315
  %3749 = vmatprep.subr.bf16.mxu0 %v2320
  %3750 = vmatpush1.bf16.msra.mxu0 %v2319
  %3751 = vmatprep.subr.bf16.mxu0 %v2324
  %3752 = vmatpush1.bf16.msra.mxu0 %v2323
  %3753 = vmatprep.subr.bf16.mxu0 %v2328
  %3754 = vmatpush1.bf16.msra.mxu0 %v2327
  %3755 = vmatprep.subr.bf16.mxu0 %v2332
  %3756 = vmatpush1.bf16.msra.mxu0 %v2331
  %3757 = vmatprep.subr.bf16.mxu0 %v2336
  %3758 = vmatpush1.bf16.msra.mxu0 %v2335
  %3759 = vmatprep.subr.bf16.mxu0 %v2340
  %3760 = vmatpush1.bf16.msra.mxu0 %v2339
  %3761 = vmatprep.subr.bf16.mxu0 %v2344
  %3762 = vmatpush1.bf16.msra.mxu0 %v2343
  %3763 = vmatprep.subr.bf16.mxu0 %v2348
  %3764 = vmatpush1.bf16.msra.mxu0 %v2347
  %3765 = vmatprep.mubr.bf16.mxu0 %v686
  %3766 = vmatmul.mubr.bf16.gmra.mrb[0].mxu0 %v685
  %v3767 = vpop.f32.mrb[0].mxu0
  %v3768 = vadd.f32 %v580, %v3767
  %v3769 = vpop.f32.mrb[0].mxu0
  %v3770 = vadd.f32 %v584, %v3769
  %v3771 = vpop.f32.mrb[0].mxu0
  %v3772 = vadd.f32 %v580, %v3771
  %v3773 = vpop.f32.mrb[0].mxu0
  %v3774 = vadd.f32 %v584, %v3773
  %3775 = vmatprep.mubr.bf16.mxu0 %v702
  %3776 = vmatmul.mubr.bf16.gmra.mrb[0].mxu0 %v701
  %v3777 = vpop.f32.mrb[0].mxu0
  %v3778 = vadd.f32 %v580, %v3777
  %v3779 = vpop.f32.mrb[0].mxu0
  %v3780 = vadd.f32 %v584, %v3779
  %v3781 = vpop.f32.mrb[0].mxu0
  %v3782 = vadd.f32 %v580, %v3781
  %v3783 = vpop.f32.mrb[0].mxu0
  %v3784 = vadd.f32 %v584, %v3783
  %3785 = vdwg.mxu0
  %3786 = vmatprep.subr.bf16.mxu0 %v2352
  %3787 = vmatpush1.bf16.msra.mxu0 %v2351
  %3788 = vmatprep.subr.bf16.mxu0 %v2356
  %3789 = vmatpush1.bf16.msra.mxu0 %v2355
  %3790 = vmatprep.subr.bf16.mxu0 %v2360
  %3791 = vmatpush1.bf16.msra.mxu0 %v2359
  %3792 = vmatprep.subr.bf16.mxu0 %v2364
  %3793 = vmatpush1.bf16.msra.mxu0 %v2363
  %3794 = vmatprep.subr.bf16.mxu0 %v2368
  %3795 = vmatpush1.bf16.msra.mxu0 %v2367
  %3796 = vmatprep.subr.bf16.mxu0 %v2372
  %3797 = vmatpush1.bf16.msra.mxu0 %v2371
  %3798 = vmatprep.subr.bf16.mxu0 %v2376
  %3799 = vmatpush1.bf16.msra.mxu0 %v2375
  %3800 = vmatprep.subr.bf16.mxu0 %v2380
  %3801 = vmatpush1.bf16.msra.mxu0 %v2379
  %3802 = vmatprep.subr.bf16.mxu0 %v2384
  %3803 = vmatpush1.bf16.msra.mxu0 %v2383
  %3804 = vmatprep.subr.bf16.mxu0 %v2388
  %3805 = vmatpush1.bf16.msra.mxu0 %v2387
  %3806 = vmatprep.subr.bf16.mxu0 %v2392
  %3807 = vmatpush1.bf16.msra.mxu0 %v2391
  %3808 = vmatprep.subr.bf16.mxu0 %v2396
  %3809 = vmatpush1.bf16.msra.mxu0 %v2395
  %3810 = vmatprep.subr.bf16.mxu0 %v2400
  %3811 = vmatpush1.bf16.msra.mxu0 %v2399
  %3812 = vmatprep.subr.bf16.mxu0 %v2404
  %3813 = vmatpush1.bf16.msra.mxu0 %v2403
  %3814 = vmatprep.subr.bf16.mxu0 %v2408
  %3815 = vmatpush1.bf16.msra.mxu0 %v2407
  %3816 = vmatprep.subr.bf16.mxu0 %v2412
  %3817 = vmatpush1.bf16.msra.mxu0 %v2411
  %3818 = vmatprep.mubr.bf16.mxu0 %v688
  %3819 = vmatmul.mubr.bf16.gmra.mrb[0].mxu0 %v687
  %v3820 = vpop.f32.mrb[0].mxu0
  %v3821 = vadd.f32 %v3768, %v3820
  %v3822 = vpop.f32.mrb[0].mxu0
  %v3823 = vadd.f32 %v3770, %v3822
  %v3824 = vpop.f32.mrb[0].mxu0
  %v3825 = vadd.f32 %v3772, %v3824
  %v3826 = vpop.f32.mrb[0].mxu0
  %v3827 = vadd.f32 %v3774, %v3826
  %3828 = vmatprep.mubr.bf16.mxu0 %v704
  %3829 = vmatmul.mubr.bf16.gmra.mrb[0].mxu0 %v703
  %v3830 = vpop.f32.mrb[0].mxu0
  %v3831 = vadd.f32 %v3778, %v3830
  %v3832 = vpop.f32.mrb[0].mxu0
  %v3833 = vadd.f32 %v3780, %v3832
  %v3834 = vpop.f32.mrb[0].mxu0
  %v3835 = vadd.f32 %v3782, %v3834
  %v3836 = vpop.f32.mrb[0].mxu0
  %v3837 = vadd.f32 %v3784, %v3836
  %3838 = vdwg.mxu0
  %3839 = vmatprep.subr.bf16.mxu0 %v2416
  %3840 = vmatpush1.bf16.msra.mxu0 %v2415
  %3841 = vmatprep.subr.bf16.mxu0 %v2420
  %3842 = vmatpush1.bf16.msra.mxu0 %v2419
  %3843 = vmatprep.subr.bf16.mxu0 %v2424
  %3844 = vmatpush1.bf16.msra.mxu0 %v2423
  %3845 = vmatprep.subr.bf16.mxu0 %v2428
  %3846 = vmatpush1.bf16.msra.mxu0 %v2427
  %3847 = vmatprep.subr.bf16.mxu0 %v2432
  %3848 = vmatpush1.bf16.msra.mxu0 %v2431
  %3849 = vmatprep.subr.bf16.mxu0 %v2436
  %3850 = vmatpush1.bf16.msra.mxu0 %v2435
  %3851 = vmatprep.subr.bf16.mxu0 %v2440
  %3852 = vmatpush1.bf16.msra.mxu0 %v2439
  %3853 = vmatprep.subr.bf16.mxu0 %v2444
  %3854 = vmatpush1.bf16.msra.mxu0 %v2443
  %3855 = vmatprep.subr.bf16.mxu0 %v2448
  %3856 = vmatpush1.bf16.msra.mxu0 %v2447
  %3857 = vmatprep.subr.bf16.mxu0 %v2452
  %3858 = vmatpush1.bf16.msra.mxu0 %v2451
  %3859 = vmatprep.subr.bf16.mxu0 %v2456
  %3860 = vmatpush1.bf16.msra.mxu0 %v2455
  %3861 = vmatprep.subr.bf16.mxu0 %v2460
  %3862 = vmatpush1.bf16.msra.mxu0 %v2459
  %3863 = vmatprep.subr.bf16.mxu0 %v2464
  %3864 = vmatpush1.bf16.msra.mxu0 %v2463
  %3865 = vmatprep.subr.bf16.mxu0 %v2468
  %3866 = vmatpush1.bf16.msra.mxu0 %v2467
  %3867 = vmatprep.subr.bf16.mxu0 %v2472
  %3868 = vmatpush1.bf16.msra.mxu0 %v2471
  %3869 = vmatprep.subr.bf16.mxu0 %v2476
  %3870 = vmatpush1.bf16.msra.mxu0 %v2475
  %3871 = vmatprep.mubr.bf16.mxu0 %v690
  %3872 = vmatmul.mubr.bf16.gmra.mrb[0].mxu0 %v689
  %v3873 = vpop.f32.mrb[0].mxu0
  %v3874 = vadd.f32 %v3821, %v3873
  %v3875 = vpop.f32.mrb[0].mxu0
  %v3876 = vadd.f32 %v3823, %v3875
  %v3877 = vpop.f32.mrb[0].mxu0
  %v3878 = vadd.f32 %v3825, %v3877
  %v3879 = vpop.f32.mrb[0].mxu0
  %v3880 = vadd.f32 %v3827, %v3879
  %3881 = vmatprep.mubr.bf16.mxu0 %v706
  %3882 = vmatmul.mubr.bf16.gmra.mrb[0].mxu0 %v705
  %v3883 = vpop.f32.mrb[0].mxu0
  %v3884 = vadd.f32 %v3831, %v3883
  %v3885 = vpop.f32.mrb[0].mxu0
  %v3886 = vadd.f32 %v3833, %v3885
  %v3887 = vpop.f32.mrb[0].mxu0
  %v3888 = vadd.f32 %v3835, %v3887
  %v3889 = vpop.f32.mrb[0].mxu0
  %v3890 = vadd.f32 %v3837, %v3889
  %3891 = vdwg.mxu0
  %3892 = vmatprep.subr.bf16.mxu0 %v2480
  %3893 = vmatpush1.bf16.msra.mxu0 %v2479
  %3894 = vmatprep.subr.bf16.mxu0 %v2484
  %3895 = vmatpush1.bf16.msra.mxu0 %v2483
  %3896 = vmatprep.subr.bf16.mxu0 %v2488
  %3897 = vmatpush1.bf16.msra.mxu0 %v2487
  %3898 = vmatprep.subr.bf16.mxu0 %v2492
  %3899 = vmatpush1.bf16.msra.mxu0 %v2491
  %3900 = vmatprep.subr.bf16.mxu0 %v2496
  %3901 = vmatpush1.bf16.msra.mxu0 %v2495
  %3902 = vmatprep.subr.bf16.mxu0 %v2500
  %3903 = vmatpush1.bf16.msra.mxu0 %v2499
  %3904 = vmatprep.subr.bf16.mxu0 %v2504
  %3905 = vmatpush1.bf16.msra.mxu0 %v2503
  %3906 = vmatprep.subr.bf16.mxu0 %v2508
  %3907 = vmatpush1.bf16.msra.mxu0 %v2507
  %3908 = vmatprep.subr.bf16.mxu0 %v2512
  %3909 = vmatpush1.bf16.msra.mxu0 %v2511
  %3910 = vmatprep.subr.bf16.mxu0 %v2516
  %3911 = vmatpush1.bf16.msra.mxu0 %v2515
  %3912 = vmatprep.subr.bf16.mxu0 %v2520
  %3913 = vmatpush1.bf16.msra.mxu0 %v2519
  %3914 = vmatprep.subr.bf16.mxu0 %v2524
  %3915 = vmatpush1.bf16.msra.mxu0 %v2523
  %3916 = vmatprep.subr.bf16.mxu0 %v2528
  %3917 = vmatpush1.bf16.msra.mxu0 %v2527
  %3918 = vmatprep.subr.bf16.mxu0 %v2532
  %3919 = vmatpush1.bf16.msra.mxu0 %v2531
  %3920 = vmatprep.subr.bf16.mxu0 %v2536
  %3921 = vmatpush1.bf16.msra.mxu0 %v2535
  %3922 = vmatprep.subr.bf16.mxu0 %v2540
  %3923 = vmatpush1.bf16.msra.mxu0 %v2539
  %3924 = vmatprep.mubr.bf16.mxu0 %v692
  %3925 = vmatmul.mubr.bf16.gmra.mrb[0].mxu0 %v691
  %v3926 = vpop.f32.mrb[0].mxu0
  %v3927 = vadd.f32 %v3874, %v3926
  %v3928 = vpop.f32.mrb[0].mxu0
  %v3929 = vadd.f32 %v3876, %v3928
  %v3930 = vpop.f32.mrb[0].mxu0
  %v3931 = vadd.f32 %v3878, %v3930
  %v3932 = vpop.f32.mrb[0].mxu0
  %v3933 = vadd.f32 %v3880, %v3932
  %3934 = vmatprep.mubr.bf16.mxu0 %v708
  %3935 = vmatmul.mubr.bf16.gmra.mrb[0].mxu0 %v707
  %v3936 = vpop.f32.mrb[0].mxu0
  %v3937 = vadd.f32 %v3884, %v3936
  %v3938 = vpop.f32.mrb[0].mxu0
  %v3939 = vadd.f32 %v3886, %v3938
  %v3940 = vpop.f32.mrb[0].mxu0
  %v3941 = vadd.f32 %v3888, %v3940
  %v3942 = vpop.f32.mrb[0].mxu0
  %v3943 = vadd.f32 %v3890, %v3942
  %3944 = vdwg.mxu0
  %3945 = vmatprep.subr.bf16.mxu0 %v2544
  %3946 = vmatpush1.bf16.msra.mxu0 %v2543
  %3947 = vmatprep.subr.bf16.mxu0 %v2548
  %3948 = vmatpush1.bf16.msra.mxu0 %v2547
  %3949 = vmatprep.subr.bf16.mxu0 %v2552
  %3950 = vmatpush1.bf16.msra.mxu0 %v2551
  %3951 = vmatprep.subr.bf16.mxu0 %v2556
  %3952 = vmatpush1.bf16.msra.mxu0 %v2555
  %3953 = vmatprep.subr.bf16.mxu0 %v2560
  %3954 = vmatpush1.bf16.msra.mxu0 %v2559
  %3955 = vmatprep.subr.bf16.mxu0 %v2564
  %3956 = vmatpush1.bf16.msra.mxu0 %v2563
  %3957 = vmatprep.subr.bf16.mxu0 %v2568
  %3958 = vmatpush1.bf16.msra.mxu0 %v2567
  %3959 = vmatprep.subr.bf16.mxu0 %v2572
  %3960 = vmatpush1.bf16.msra.mxu0 %v2571
  %3961 = vmatprep.subr.bf16.mxu0 %v2576
  %3962 = vmatpush1.bf16.msra.mxu0 %v2575
  %3963 = vmatprep.subr.bf16.mxu0 %v2580
  %3964 = vmatpush1.bf16.msra.mxu0 %v2579
  %3965 = vmatprep.subr.bf16.mxu0 %v2584
  %3966 = vmatpush1.bf16.msra.mxu0 %v2583
  %3967 = vmatprep.subr.bf16.mxu0 %v2588
  %3968 = vmatpush1.bf16.msra.mxu0 %v2587
  %3969 = vmatprep.subr.bf16.mxu0 %v2592
  %3970 = vmatpush1.bf16.msra.mxu0 %v2591
  %3971 = vmatprep.subr.bf16.mxu0 %v2596
  %3972 = vmatpush1.bf16.msra.mxu0 %v2595
  %3973 = vmatprep.subr.bf16.mxu0 %v2600
  %3974 = vmatpush1.bf16.msra.mxu0 %v2599
  %3975 = vmatprep.subr.bf16.mxu0 %v2604
  %3976 = vmatpush1.bf16.msra.mxu0 %v2603
  %3977 = vmatprep.mubr.bf16.mxu0 %v694
  %3978 = vmatmul.mubr.bf16.gmra.mrb[0].mxu0 %v693
  %v3979 = vpop.f32.mrb[0].mxu0
  %v3980 = vadd.f32 %v3927, %v3979
  %v3981 = vpop.f32.mrb[0].mxu0
  %v3982 = vadd.f32 %v3929, %v3981
  %v3983 = vpop.f32.mrb[0].mxu0
  %v3984 = vadd.f32 %v3931, %v3983
  %v3985 = vpop.f32.mrb[0].mxu0
  %v3986 = vadd.f32 %v3933, %v3985
  %3987 = vmatprep.mubr.bf16.mxu0 %v710
  %3988 = vmatmul.mubr.bf16.gmra.mrb[0].mxu0 %v709
  %v3989 = vpop.f32.mrb[0].mxu0
  %v3990 = vadd.f32 %v3937, %v3989
  %v3991 = vpop.f32.mrb[0].mxu0
  %v3992 = vadd.f32 %v3939, %v3991
  %v3993 = vpop.f32.mrb[0].mxu0
  %v3994 = vadd.f32 %v3941, %v3993
  %v3995 = vpop.f32.mrb[0].mxu0
  %v3996 = vadd.f32 %v3943, %v3995
  %3997 = vdwg.mxu0
  %3998 = vmatprep.subr.bf16.mxu0 %v2608
  %3999 = vmatpush1.bf16.msra.mxu0 %v2607
  %4000 = vmatprep.subr.bf16.mxu0 %v2612
  %4001 = vmatpush1.bf16.msra.mxu0 %v2611
  %4002 = vmatprep.subr.bf16.mxu0 %v2616
  %4003 = vmatpush1.bf16.msra.mxu0 %v2615
  %4004 = vmatprep.subr.bf16.mxu0 %v2620
  %4005 = vmatpush1.bf16.msra.mxu0 %v2619
  %4006 = vmatprep.subr.bf16.mxu0 %v2624
  %4007 = vmatpush1.bf16.msra.mxu0 %v2623
  %4008 = vmatprep.subr.bf16.mxu0 %v2628
  %4009 = vmatpush1.bf16.msra.mxu0 %v2627
  %4010 = vmatprep.subr.bf16.mxu0 %v2632
  %4011 = vmatpush1.bf16.msra.mxu0 %v2631
  %4012 = vmatprep.subr.bf16.mxu0 %v2636
  %4013 = vmatpush1.bf16.msra.mxu0 %v2635
  %4014 = vmatprep.subr.bf16.mxu0 %v2640
  %4015 = vmatpush1.bf16.msra.mxu0 %v2639
  %4016 = vmatprep.subr.bf16.mxu0 %v2644
  %4017 = vmatpush1.bf16.msra.mxu0 %v2643
  %4018 = vmatprep.subr.bf16.mxu0 %v2648
  %4019 = vmatpush1.bf16.msra.mxu0 %v2647
  %4020 = vmatprep.subr.bf16.mxu0 %v2652
  %4021 = vmatpush1.bf16.msra.mxu0 %v2651
  %4022 = vmatprep.subr.bf16.mxu0 %v2656
  %4023 = vmatpush1.bf16.msra.mxu0 %v2655
  %4024 = vmatprep.subr.bf16.mxu0 %v2660
  %4025 = vmatpush1.bf16.msra.mxu0 %v2659
  %4026 = vmatprep.subr.bf16.mxu0 %v2664
  %4027 = vmatpush1.bf16.msra.mxu0 %v2663
  %4028 = vmatprep.subr.bf16.mxu0 %v2668
  %4029 = vmatpush1.bf16.msra.mxu0 %v2667
  %4030 = vmatprep.mubr.bf16.mxu0 %v696
  %4031 = vmatmul.mubr.bf16.gmra.mrb[0].mxu0 %v695
  %v4032 = vpop.f32.mrb[0].mxu0
  %v4033 = vadd.f32 %v3980, %v4032
  %v4034 = vpop.f32.mrb[0].mxu0
  %v4035 = vadd.f32 %v3982, %v4034
  %v4036 = vpop.f32.mrb[0].mxu0
  %v4037 = vadd.f32 %v3984, %v4036
  %v4038 = vpop.f32.mrb[0].mxu0
  %v4039 = vadd.f32 %v3986, %v4038
  %4040 = vmatprep.mubr.bf16.mxu0 %v712
  %4041 = vmatmul.mubr.bf16.gmra.mrb[0].mxu0 %v711
  %v4042 = vpop.f32.mrb[0].mxu0
  %v4043 = vadd.f32 %v3990, %v4042
  %v4044 = vpop.f32.mrb[0].mxu0
  %v4045 = vadd.f32 %v3992, %v4044
  %v4046 = vpop.f32.mrb[0].mxu0
  %v4047 = vadd.f32 %v3994, %v4046
  %v4048 = vpop.f32.mrb[0].mxu0
  %v4049 = vadd.f32 %v3996, %v4048
  %4050 = vdwg.mxu0
  %4051 = vmatprep.subr.bf16.mxu0 %v2672
  %4052 = vmatpush1.bf16.msra.mxu0 %v2671
  %4053 = vmatprep.subr.bf16.mxu0 %v2676
  %4054 = vmatpush1.bf16.msra.mxu0 %v2675
  %4055 = vmatprep.subr.bf16.mxu0 %v2680
  %4056 = vmatpush1.bf16.msra.mxu0 %v2679
  %4057 = vmatprep.subr.bf16.mxu0 %v2684
  %4058 = vmatpush1.bf16.msra.mxu0 %v2683
  %4059 = vmatprep.subr.bf16.mxu0 %v2688
  %4060 = vmatpush1.bf16.msra.mxu0 %v2687
  %4061 = vmatprep.subr.bf16.mxu0 %v2692
  %4062 = vmatpush1.bf16.msra.mxu0 %v2691
  %4063 = vmatprep.subr.bf16.mxu0 %v2696
  %4064 = vmatpush1.bf16.msra.mxu0 %v2695
  %4065 = vmatprep.subr.bf16.mxu0 %v2700
  %4066 = vmatpush1.bf16.msra.mxu0 %v2699
  %4067 = vmatprep.subr.bf16.mxu0 %v2704
  %4068 = vmatpush1.bf16.msra.mxu0 %v2703
  %4069 = vmatprep.subr.bf16.mxu0 %v2708
  %4070 = vmatpush1.bf16.msra.mxu0 %v2707
  %4071 = vmatprep.subr.bf16.mxu0 %v2712
  %4072 = vmatpush1.bf16.msra.mxu0 %v2711
  %4073 = vmatprep.subr.bf16.mxu0 %v2716
  %4074 = vmatpush1.bf16.msra.mxu0 %v2715
  %4075 = vmatprep.subr.bf16.mxu0 %v2720
  %4076 = vmatpush1.bf16.msra.mxu0 %v2719
  %4077 = vmatprep.subr.bf16.mxu0 %v2724
  %4078 = vmatpush1.bf16.msra.mxu0 %v2723
  %4079 = vmatprep.subr.bf16.mxu0 %v2728
  %4080 = vmatpush1.bf16.msra.mxu0 %v2727
  %4081 = vmatprep.subr.bf16.mxu0 %v2732
  %4082 = vmatpush1.bf16.msra.mxu0 %v2731
  %4083 = vmatprep.mubr.bf16.mxu0 %v698
  %4084 = vmatmul.mubr.bf16.gmra.mrb[0].mxu0 %v697
  %v4085 = vpop.f32.mrb[0].mxu0
  %v4086 = vadd.f32 %v4033, %v4085
  %v4087 = vpop.f32.mrb[0].mxu0
  %v4088 = vadd.f32 %v4035, %v4087
  %v4089 = vpop.f32.mrb[0].mxu0
  %v4090 = vadd.f32 %v4037, %v4089
  %v4091 = vpop.f32.mrb[0].mxu0
  %v4092 = vadd.f32 %v4039, %v4091
  %4093 = vmatprep.mubr.bf16.mxu0 %v714
  %4094 = vmatmul.mubr.bf16.gmra.mrb[0].mxu0 %v713
  %v4095 = vpop.f32.mrb[0].mxu0
  %v4096 = vadd.f32 %v4043, %v4095
  %v4097 = vpop.f32.mrb[0].mxu0
  %v4098 = vadd.f32 %v4045, %v4097
  %v4099 = vpop.f32.mrb[0].mxu0
  %v4100 = vadd.f32 %v4047, %v4099
  %v4101 = vpop.f32.mrb[0].mxu0
  %v4102 = vadd.f32 %v4049, %v4101
  %4103 = vdwg.mxu0
  %4104 = vmatprep.subr.bf16.mxu0 %v2736
  %4105 = vmatpush1.bf16.msra.mxu0 %v2735
  %4106 = vmatprep.subr.bf16.mxu0 %v2740
  %4107 = vmatpush1.bf16.msra.mxu0 %v2739
  %4108 = vmatprep.subr.bf16.mxu0 %v2744
  %4109 = vmatpush1.bf16.msra.mxu0 %v2743
  %4110 = vmatprep.subr.bf16.mxu0 %v2748
  %4111 = vmatpush1.bf16.msra.mxu0 %v2747
  %4112 = vmatprep.subr.bf16.mxu0 %v2752
  %4113 = vmatpush1.bf16.msra.mxu0 %v2751
  %4114 = vmatprep.subr.bf16.mxu0 %v2756
  %4115 = vmatpush1.bf16.msra.mxu0 %v2755
  %4116 = vmatprep.subr.bf16.mxu0 %v2760
  %4117 = vmatpush1.bf16.msra.mxu0 %v2759
  %4118 = vmatprep.subr.bf16.mxu0 %v2764
  %4119 = vmatpush1.bf16.msra.mxu0 %v2763
  %4120 = vmatprep.subr.bf16.mxu0 %v2768
  %4121 = vmatpush1.bf16.msra.mxu0 %v2767
  %4122 = vmatprep.subr.bf16.mxu0 %v2772
  %4123 = vmatpush1.bf16.msra.mxu0 %v2771
  %4124 = vmatprep.subr.bf16.mxu0 %v2776
  %4125 = vmatpush1.bf16.msra.mxu0 %v2775
  %4126 = vmatprep.subr.bf16.mxu0 %v2780
  %4127 = vmatpush1.bf16.msra.mxu0 %v2779
  %4128 = vmatprep.subr.bf16.mxu0 %v2784
  %4129 = vmatpush1.bf16.msra.mxu0 %v2783
  %4130 = vmatprep.subr.bf16.mxu0 %v2788
  %4131 = vmatpush1.bf16.msra.mxu0 %v2787
  %4132 = vmatprep.subr.bf16.mxu0 %v2792
  %4133 = vmatpush1.bf16.msra.mxu0 %v2791
  %4134 = vmatprep.subr.bf16.mxu0 %v2796
  %4135 = vmatpush1.bf16.msra.mxu0 %v2795
  %4136 = vmatprep.mubr.bf16.mxu0 %v700
  %4137 = vmatmul.mubr.bf16.gmra.mrb[0].mxu0 %v699
  %v4138 = vpop.f32.mrb[0].mxu0
  %v4139 = vadd.f32 %v4086, %v4138
  %v4140 = vpop.f32.mrb[0].mxu0
  %v4141 = vadd.f32 %v4088, %v4140
  %v4142 = vpop.f32.mrb[0].mxu0
  %v4143 = vadd.f32 %v4090, %v4142
  %v4144 = vpop.f32.mrb[0].mxu0
  %v4145 = vadd.f32 %v4092, %v4144
  %4146 = vmatprep.mubr.bf16.mxu0 %v716
  %4147 = vmatmul.mubr.bf16.gmra.mrb[0].mxu0 %v715
  %v4148 = vpop.f32.mrb[0].mxu0
  %v4149 = vadd.f32 %v4096, %v4148
  %v4150 = vpop.f32.mrb[0].mxu0
  %v4151 = vadd.f32 %v4098, %v4150
  %v4152 = vpop.f32.mrb[0].mxu0
  %v4153 = vadd.f32 %v4100, %v4152
  %v4154 = vpop.f32.mrb[0].mxu0
  %v4155 = vadd.f32 %v4102, %v4154
  %4156 = vdwg.mxu0
  %v4157 = vld [vmem:[%s3] sm:$0xff]
  %v4158 = vld [vmem:[%s3 + $0x8] sm:$0xff]
  %v4159 = vld [vmem:[%s3 + $0x10] sm:$0xff]
  %v4160 = vld [vmem:[%s3 + $0x18] sm:$0xff]
  %v4161 = vld [vmem:[%s3 + $0x20] sm:$0xff]
  %v4162 = vld [vmem:[%s3 + $0x28] sm:$0xff]
  %v4163 = vld [vmem:[%s3 + $0x30] sm:$0xff]
  %v4164 = vld [vmem:[%s3 + $0x38] sm:$0xff]
  %v4165 = vunpack.c.l.bf16 %v4157
  %v4166 = vunpack.c.h.bf16 %v4157
  %v4167 = vunpack.c.l.bf16 %v4158
  %v4168 = vunpack.c.h.bf16 %v4158
  %v4169 = vunpack.c.l.bf16 %v4159
  %v4170 = vunpack.c.h.bf16 %v4159
  %v4171 = vunpack.c.l.bf16 %v4160
  %v4172 = vunpack.c.h.bf16 %v4160
  %v4173 = vunpack.c.l.bf16 %v4161
  %v4174 = vunpack.c.h.bf16 %v4161
  %v4175 = vunpack.c.l.bf16 %v4162
  %v4176 = vunpack.c.h.bf16 %v4162
  %v4177 = vunpack.c.l.bf16 %v4163
  %v4178 = vunpack.c.h.bf16 %v4163
  %v4179 = vunpack.c.l.bf16 %v4164
  %v4180 = vunpack.c.h.bf16 %v4164
  %v4181 = vadd.f32 %v3715, %v4165
  %v4182 = vadd.f32 %v3717, %v4166
  %v4183 = vadd.f32 %v4139, %v4167
  %v4184 = vadd.f32 %v4141, %v4168
  %v4185 = vadd.f32 %v3719, %v4169
  %v4186 = vadd.f32 %v3721, %v4170
  %v4187 = vadd.f32 %v4143, %v4171
  %v4188 = vadd.f32 %v4145, %v4172
  %v4189 = vadd.f32 %v3725, %v4173
  %v4190 = vadd.f32 %v3727, %v4174
  %v4191 = vadd.f32 %v4149, %v4175
  %v4192 = vadd.f32 %v4151, %v4176
  %v4193 = vadd.f32 %v3729, %v4177
  %v4194 = vadd.f32 %v3731, %v4178
  %v4195 = vadd.f32 %v4153, %v4179
  %v4196 = vadd.f32 %v4155, %v4180
  %v4197 = vadd.f32 %v4181, %v4182
  %v4198 = vadd.f32 %v4197, %v4183
  %v4199 = vadd.f32 %v4198, %v4184
  %4200 = vadd.xlane.f32.xlu0 %v4199
  %v4201 = vpop.xlane.xlu0 %4200
  %v4202 = vadd.f32 %v4185, %v4186
  %v4203 = vadd.f32 %v4202, %v4187
  %v4204 = vadd.f32 %v4203, %v4188
  %4205 = vadd.xlane.f32.xlu0 %v4204
  %v4206 = vpop.xlane.xlu0 %4205
  %v4207 = vadd.f32 %v4189, %v4190
  %v4208 = vadd.f32 %v4207, %v4191
  %v4209 = vadd.f32 %v4208, %v4192
  %4210 = vadd.xlane.f32.xlu0 %v4209
  %v4211 = vpop.xlane.xlu0 %4210
  %v4212 = vadd.f32 %v4193, %v4194
  %v4213 = vadd.f32 %v4212, %v4195
  %v4214 = vadd.f32 %v4213, %v4196
  %4215 = vadd.xlane.f32.xlu0 %v4214
  %v4216 = vpop.xlane.xlu0 %4215
  %v4217 = vrcp.pop 512.0
  %v4218 = vmul.f32 %v4201, %v4217
  %v4219 = vmul.f32 %v4206, %v4217
  %v4220 = vmul.f32 %v4211, %v4217
  %v4221 = vmul.f32 %v4216, %v4217
  %v4222 = vsub.f32 %v4181, %v4218
  %v4223 = vsub.f32 %v4182, %v4218
  %v4224 = vsub.f32 %v4183, %v4218
  %v4225 = vsub.f32 %v4184, %v4218
  %v4226 = vsub.f32 %v4185, %v4219
  %v4227 = vsub.f32 %v4186, %v4219
  %v4228 = vsub.f32 %v4187, %v4219
  %v4229 = vsub.f32 %v4188, %v4219
  %v4230 = vsub.f32 %v4189, %v4220
  %v4231 = vsub.f32 %v4190, %v4220
  %v4232 = vsub.f32 %v4191, %v4220
  %v4233 = vsub.f32 %v4192, %v4220
  %v4234 = vsub.f32 %v4193, %v4221
  %v4235 = vsub.f32 %v4194, %v4221
  %v4236 = vsub.f32 %v4195, %v4221
  %v4237 = vsub.f32 %v4196, %v4221
  %v4238 = vmul.f32 %v4222, %v4222
  %v4239 = vmul.f32 %v4223, %v4223
  %v4240 = vmul.f32 %v4224, %v4224
  %v4241 = vmul.f32 %v4225, %v4225
  %v4242 = vmul.f32 %v4226, %v4226
  %v4243 = vmul.f32 %v4227, %v4227
  %v4244 = vmul.f32 %v4228, %v4228
  %v4245 = vmul.f32 %v4229, %v4229
  %v4246 = vmul.f32 %v4230, %v4230
  %v4247 = vmul.f32 %v4231, %v4231
  %v4248 = vmul.f32 %v4232, %v4232
  %v4249 = vmul.f32 %v4233, %v4233
  %v4250 = vmul.f32 %v4234, %v4234
  %v4251 = vmul.f32 %v4235, %v4235
  %v4252 = vmul.f32 %v4236, %v4236
  %v4253 = vmul.f32 %v4237, %v4237
  %v4254 = vadd.f32 %v4238, %v4239
  %v4255 = vadd.f32 %v4254, %v4240
  %v4256 = vadd.f32 %v4255, %v4241
  %4257 = vadd.xlane.f32.xlu0 %v4256
  %v4258 = vpop.xlane.xlu0 %4257
  %v4259 = vadd.f32 %v4242, %v4243
  %v4260 = vadd.f32 %v4259, %v4244
  %v4261 = vadd.f32 %v4260, %v4245
  %4262 = vadd.xlane.f32.xlu0 %v4261
  %v4263 = vpop.xlane.xlu0 %4262
  %v4264 = vadd.f32 %v4246, %v4247
  %v4265 = vadd.f32 %v4264, %v4248
  %v4266 = vadd.f32 %v4265, %v4249
  %4267 = vadd.xlane.f32.xlu0 %v4266
  %v4268 = vpop.xlane.xlu0 %4267
  %v4269 = vadd.f32 %v4250, %v4251
  %v4270 = vadd.f32 %v4269, %v4252
  %v4271 = vadd.f32 %v4270, %v4253
  %4272 = vadd.xlane.f32.xlu0 %v4271
  %v4273 = vpop.xlane.xlu0 %4272
  %v4274 = vmul.f32 %v4258, %v4217
  %v4275 = vmul.f32 %v4263, %v4217
  %v4276 = vmul.f32 %v4268, %v4217
  %v4277 = vmul.f32 %v4273, %v4217
  %v4278 = vadd.f32 %v4274, 1e-05
  %v4279 = vadd.f32 %v4275, 1e-05
  %v4280 = vadd.f32 %v4276, 1e-05
  %v4281 = vadd.f32 %v4277, 1e-05
  %v4282 = vrsqrt.pop %v4278
  %v4283 = vrsqrt.pop %v4279
  %v4284 = vrsqrt.pop %v4280
  %v4285 = vrsqrt.pop %v4281
  %v4286 = vmul.f32 %v4222, %v4282
  %v4287 = vmul.f32 %v4223, %v4282
  %v4288 = vmul.f32 %v4224, %v4282
  %v4289 = vmul.f32 %v4225, %v4282
  %v4290 = vmul.f32 %v4226, %v4283
  %v4291 = vmul.f32 %v4227, %v4283
  %v4292 = vmul.f32 %v4228, %v4283
  %v4293 = vmul.f32 %v4229, %v4283
  %v4294 = vmul.f32 %v4230, %v4284
  %v4295 = vmul.f32 %v4231, %v4284
  %v4296 = vmul.f32 %v4232, %v4284
  %v4297 = vmul.f32 %v4233, %v4284
  %v4298 = vmul.f32 %v4234, %v4285
  %v4299 = vmul.f32 %v4235, %v4285
  %v4300 = vmul.f32 %v4236, %v4285
  %v4301 = vmul.f32 %v4237, %v4285
  %v4302 = vld [vmem:[%s4] sm:$0xf]
  %v4304 = vlaneseq
  %v4305 = vshrl.u32 %v4304, 7
  %v4306 = vsub.s32 0, %v4305
  %v4307 = vrot.slane %v4302, %v4306
  %v4308 = vlaneseq
  %v4309 = vshrl.u32 %v4308, 7
  %v4310 = vsub.s32 1, %v4309
  %v4311 = vrot.slane %v4302, %v4310
  %v4312 = vlaneseq
  %v4313 = vshrl.u32 %v4312, 7
  %v4314 = vsub.s32 2, %v4313
  %v4315 = vrot.slane %v4302, %v4314
  %v4316 = vlaneseq
  %v4317 = vshrl.u32 %v4316, 7
  %v4318 = vsub.s32 3, %v4317
  %v4319 = vrot.slane %v4302, %v4318
  %v4324 = vmul.f32 %v4286, %v4307
  %v4325 = vmul.f32 %v4287, %v4311
  %v4326 = vmul.f32 %v4288, %v4315
  %v4327 = vmul.f32 %v4289, %v4319
  %v4328 = vmul.f32 %v4290, %v4307
  %v4329 = vmul.f32 %v4291, %v4311
  %v4330 = vmul.f32 %v4292, %v4315
  %v4331 = vmul.f32 %v4293, %v4319
  %v4332 = vmul.f32 %v4294, %v4307
  %v4333 = vmul.f32 %v4295, %v4311
  %v4334 = vmul.f32 %v4296, %v4315
  %v4335 = vmul.f32 %v4297, %v4319
  %v4336 = vmul.f32 %v4298, %v4307
  %v4337 = vmul.f32 %v4299, %v4311
  %v4338 = vmul.f32 %v4300, %v4315
  %v4339 = vmul.f32 %v4301, %v4319
  %v4340 = vld [vmem:[%s5] sm:$0xf]
  %v4342 = vlaneseq
  %v4343 = vshrl.u32 %v4342, 7
  %v4344 = vsub.s32 0, %v4343
  %v4345 = vrot.slane %v4340, %v4344
  %v4346 = vlaneseq
  %v4347 = vshrl.u32 %v4346, 7
  %v4348 = vsub.s32 1, %v4347
  %v4349 = vrot.slane %v4340, %v4348
  %v4350 = vlaneseq
  %v4351 = vshrl.u32 %v4350, 7
  %v4352 = vsub.s32 2, %v4351
  %v4353 = vrot.slane %v4340, %v4352
  %v4354 = vlaneseq
  %v4355 = vshrl.u32 %v4354, 7
  %v4356 = vsub.s32 3, %v4355
  %v4357 = vrot.slane %v4340, %v4356
  %v4362 = vadd.f32 %v4324, %v4345
  %v4363 = vadd.f32 %v4325, %v4349
  %v4364 = vadd.f32 %v4326, %v4353
  %v4365 = vadd.f32 %v4327, %v4357
  %v4366 = vadd.f32 %v4328, %v4345
  %v4367 = vadd.f32 %v4329, %v4349
  %v4368 = vadd.f32 %v4330, %v4353
  %v4369 = vadd.f32 %v4331, %v4357
  %v4370 = vadd.f32 %v4332, %v4345
  %v4371 = vadd.f32 %v4333, %v4349
  %v4372 = vadd.f32 %v4334, %v4353
  %v4373 = vadd.f32 %v4335, %v4357
  %v4374 = vadd.f32 %v4336, %v4345
  %v4375 = vadd.f32 %v4337, %v4349
  %v4376 = vadd.f32 %v4338, %v4353
  %v4377 = vadd.f32 %v4339, %v4357
  %v4378 = vpack.c.bf16 %v4366, %v4362
  %v4379 = vpack.c.bf16 %v4367, %v4363
  %v4380 = vpack.c.bf16 %v4368, %v4364
  %v4381 = vpack.c.bf16 %v4369, %v4365
  %v4382 = vpack.c.bf16 %v4374, %v4370
  %v4383 = vpack.c.bf16 %v4375, %v4371
  %v4384 = vpack.c.bf16 %v4376, %v4372
  %v4385 = vpack.c.bf16 %v4377, %v4373
  %v4394 = vunpack.c.l.b16 %v4378
  %v4395 = vunpack.c.l.b16 %v4379
  %v4396 = vunpack.c.l.b16 %v4380
  %v4397 = vunpack.c.l.b16 %v4381
  %v4398 = vunpack.c.h.b16 %v4378
  %v4399 = vunpack.c.h.b16 %v4379
  %v4400 = vunpack.c.h.b16 %v4380
  %v4401 = vunpack.c.h.b16 %v4381
  %v4402 = vunpack.c.l.b16 %v4382
  %v4403 = vunpack.c.l.b16 %v4383
  %v4404 = vunpack.c.l.b16 %v4384
  %v4405 = vunpack.c.l.b16 %v4385
  %v4406 = vunpack.c.h.b16 %v4382
  %v4407 = vunpack.c.h.b16 %v4383
  %v4408 = vunpack.c.h.b16 %v4384
  %v4409 = vunpack.c.h.b16 %v4385
  %v4410 = vpack.c.b16 %v4395, %v4394
  %v4411 = vpack.c.b16 %v4397, %v4396
  %v4412 = vpack.c.b16 %v4399, %v4398
  %v4413 = vpack.c.b16 %v4401, %v4400
  %v4414 = vpack.c.b16 %v4403, %v4402
  %v4415 = vpack.c.b16 %v4405, %v4404
  %v4416 = vpack.c.b16 %v4407, %v4406
  %v4417 = vpack.c.b16 %v4409, %v4408
  %4426 = vst [vmem:[%s6] sm:$0xff] %v4410
  %4427 = vst [vmem:[%s6 + $0x8] sm:$0xff] %v4411
  %4428 = vst [vmem:[%s6 + $0x10] sm:$0xff] %v4412
  %4429 = vst [vmem:[%s6 + $0x18] sm:$0xff] %v4413
  %4430 = vst [vmem:[%s6 + $0x20] sm:$0xff] %v4414
  %4431 = vst [vmem:[%s6 + $0x28] sm:$0xff] %v4415
  %4432 = vst [vmem:[%s6 + $0x30] sm:$0xff] %v4416
  %4433 = vst [vmem:[%s6 + $0x38] sm:$0xff] %v4417
  // Predicated region
  $region26: #{closed_call.26} parent=0 // pred_check
    _
  $region27: #{closed_call.26} parent=0 // pred_check_branch
    %4435 = sbr.rel (0) target = $region29
  $region28: #{closed_call.26} parent=0 // pred_region
    _
  $region29: #{closed_call.26} parent=0 // pred_fallthru
    _
  // Predicated region
  $region30: #{closed_call.26} parent=0 // pred_check
    _
  $region31: #{closed_call.26} parent=0 // pred_check_branch
    %4437 = sbr.rel (0) target = $region33
  $region32: #{closed_call.26} parent=0 // pred_region
    _
  $region33: #{closed_call.26} parent=0 // pred_fallthru
    _

</llo_original>
